<compile_context>
chip_gen: v7x
topology: tpu7x:2x2x1
jax: 0.10.0
libtpu: 0.0.40
codegen_flags: <defaults>
</compile_context>

<pallas_src>
import math
import jax
import jax.numpy as jnp
from jax.experimental import pallas as pl
from jax.experimental.pallas import tpu as pltpu

# Hyper-parameters from the PyTorch module.
D_MODEL = 512
NHEAD = 8
HEAD_DIM = D_MODEL // NHEAD
DIM_FEEDFORWARD = 512
NUM_LAYERS = 4
MAX_GEN_LEN = 100
LN_EPS = 1e-5  # nn.LayerNorm default


def _round_up(x, m):
    return ((x + m - 1) // m) * m


def _layernorm(x, gamma, beta):
    mean = jnp.mean(x, axis=-1, keepdims=True)
    c = x - mean
    var = jnp.mean(c * c, axis=-1, keepdims=True)
    return c * jax.lax.rsqrt(var + LN_EPS) * gamma + beta


def decoder_layer_kernel(x_ref, mask_ref,
                         ln1g_ref, ln1b_ref, wqkv_ref, bqkv_ref,
                         wout_ref, bout_ref,
                         ln2g_ref, ln2b_ref, w1_ref, b1_ref, w2_ref, b2_ref,
                         out_ref):
    """One grid step = one decoder layer applied to the WHOLE batch.

    Residual stream lives in out_ref (constant output block index across the
    layer grid axis => stays resident in VMEM).  x_ref is only consumed at
    layer 0 (and, with a constant index map, is DMA'd only once)."""
    layer = pl.program_id(0)

    @pl.when(layer == 0)
    def _():
        out_ref[...] = x_ref[...]

    B, S, D = out_ref.shape
    N = B * S
    x = out_ref[...].reshape(N, D)          # (B*S, D) f32 residual
    mask = mask_ref[...]                    # (B, S, S) combined additive mask

    # --- pre-norm + fused QKV projection over all B*S rows ---
    nx = _layernorm(x, ln1g_ref[0], ln1b_ref[0])
    qkv = jnp.dot(nx.astype(jnp.bfloat16), wqkv_ref[0],
                  preferred_element_type=jnp.float32) + bqkv_ref[0]   # (N, 3D)

    # --- multi-head causal self-attention ---
    # Heads via static lane slices (no (S, H) axis transposes in-kernel); each
    # head's QK^T / PV is a single 3-D einsum batched over B.  The head-concat
    # + out-projection is folded into per-head row-slices of W_out:
    #   concat_h(o_h) @ W_out == sum_h o_h @ W_out[h*HD:(h+1)*HD, :]
    scale = 1.0 / math.sqrt(HEAD_DIM)
    wout = wout_ref[0]                      # (D, D) bf16
    attn = jnp.zeros((N, D), jnp.float32)
    for h in range(NHEAD):
        lo = h * HEAD_DIM
        q_h = (qkv[:, lo:lo + HEAD_DIM] * scale).reshape(B, S, HEAD_DIM)
        k_h = qkv[:, D + lo:D + lo + HEAD_DIM].reshape(B, S, HEAD_DIM)
        v_h = qkv[:, 2 * D + lo:2 * D + lo + HEAD_DIM].reshape(B, S, HEAD_DIM)
        s = jnp.einsum('bqd,bkd->bqk',
                       q_h.astype(jnp.bfloat16), k_h.astype(jnp.bfloat16),
                       preferred_element_type=jnp.float32)            # (B,S,S)
        s = s + mask
        s = s - jnp.max(s, axis=-1, keepdims=True)
        p = jnp.exp(s)
        # Divide -> EUP reciprocal + multiply (frees VALU slots).
        p = p * pl.reciprocal(jnp.sum(p, axis=-1, keepdims=True), approx=True)
        o_h = jnp.einsum('bqk,bkd->bqd',
                         p.astype(jnp.bfloat16), v_h.astype(jnp.bfloat16),
                         preferred_element_type=jnp.float32)          # (B,S,HD)
        attn = attn + jnp.dot(
            o_h.reshape(N, HEAD_DIM).astype(jnp.bfloat16),
            wout[lo:lo + HEAD_DIM, :],
            preferred_element_type=jnp.float32)
    x = x + attn + bout_ref[0]              # residual (dropout1 = identity, eval)

    # --- pre-norm + feed-forward ---
    nx2 = _layernorm(x, ln2g_ref[0], ln2b_ref[0])
    h1 = jnp.maximum(jnp.dot(nx2.astype(jnp.bfloat16), w1_ref[0],
                             preferred_element_type=jnp.float32) + b1_ref[0],
                     0.0)
    ff = jnp.dot(h1.astype(jnp.bfloat16), w2_ref[0],
                 preferred_element_type=jnp.float32) + b2_ref[0]
    out_ref[...] = (x + ff).reshape(B, S, D)  # residual (dropout2 = identity)


def final_proj_kernel(x_ref, g_ref, b_ref, w_ref, bias_ref, out_ref):
    nx = _layernorm(x_ref[...], g_ref[...], b_ref[...])
    out_ref[...] = jnp.dot(nx.astype(jnp.bfloat16), w_ref[...],
                           preferred_element_type=jnp.float32) + bias_ref[...]


def _decoder_stack(x_bsd, mask_bss, st):
    B, S, D = x_bsd.shape
    L = st["wqkv"].shape[0]

    def wspec(a):  # per-layer weight block, indexed only by the layer axis
        return pl.BlockSpec((1,) + a.shape[1:], lambda l: (l, 0, 0))

    in_specs = [
        pl.BlockSpec((B, S, D), lambda l: (0, 0, 0)),     # x (DMA'd once)
        pl.BlockSpec((B, S, S), lambda l: (0, 0, 0)),     # combined mask
        wspec(st["ln1g"]), wspec(st["ln1b"]),
        wspec(st["wqkv"]), wspec(st["bqkv"]),
        wspec(st["wout"]), wspec(st["bout"]),
        wspec(st["ln2g"]), wspec(st["ln2b"]),
        wspec(st["w1"]), wspec(st["b1"]),
        wspec(st["w2"]), wspec(st["b2"]),
    ]
    # NOTE: per-layer weight footprint ~3 MiB bf16 (x2 double-buffered) plus a
    # few tens of KiB of activations -- well under the default VMEM limit on
    # v5e/v6e/v7x, so vmem_limit_bytes is left at the default.
    return pl.pallas_call(
        decoder_layer_kernel,
        out_shape=jax.ShapeDtypeStruct((B, S, D), jnp.float32),
        grid_spec=pltpu.PrefetchScalarGridSpec(
            num_scalar_prefetch=0,
            grid=(L,),                       # layers sequential; batch in-block
            in_specs=in_specs,
            out_specs=pl.BlockSpec((B, S, D), lambda l: (0, 0, 0)),
        ),
        compiler_params=pltpu.CompilerParams(
            dimension_semantics=("arbitrary",),
        ),
    )(x_bsd, mask_bss,
      st["ln1g"], st["ln1b"], st["wqkv"], st["bqkv"], st["wout"], st["bout"],
      st["ln2g"], st["ln2b"], st["w1"], st["b1"], st["w2"], st["b2"])


def _final_projection(x2, fin):
    N, D = x2.shape
    V = fin["wproj"].shape[1]
    Np = _round_up(N, 8)
    Vp = _round_up(V, 128)                  # lane-dense vocab tiles
    xp = jnp.pad(x2, ((0, Np - N), (0, 0))) if Np != N else x2
    w, b = fin["wproj"], fin["bproj"]
    if Vp != V:
        w = jnp.pad(w, ((0, 0), (0, Vp - V)))
        b = jnp.pad(b, ((0, 0), (0, Vp - V)))

    tn = next(t for t in (256, 128, 64, 32, 16, 8) if Np % t == 0)
    tv = next(t for t in (512, 256, 128) if Vp % t == 0)
    # Vocab tile on the OUTER grid axis -> wproj (the dominant traffic) is the
    # slow-moving operand; on v7x the 2 TCs then split disjoint vocab columns.
    grid = (Vp // tv, Np // tn)

    out = pl.pallas_call(
        final_proj_kernel,
        out_shape=jax.ShapeDtypeStruct((Np, Vp), jnp.float32),
        grid_spec=pltpu.PrefetchScalarGridSpec(
            num_scalar_prefetch=0,
            grid=grid,
            in_specs=[
                pl.BlockSpec((tn, D), lambda j, i: (i, 0)),
                pl.BlockSpec((1, D), lambda j, i: (0, 0)),
                pl.BlockSpec((1, D), lambda j, i: (0, 0)),
                pl.BlockSpec((D, tv), lambda j, i: (0, j)),   # once per j
                pl.BlockSpec((1, tv), lambda j, i: (0, j)),
            ],
            out_specs=pl.BlockSpec((tn, tv), lambda j, i: (i, j)),
        ),
        compiler_params=pltpu.CompilerParams(
            dimension_semantics=("parallel", "arbitrary"),
        ),
    )(xp, fin["fng"], fin["fnb"], w, b)
    return out[:N, :V]


def make_positional_encoding(max_len, d_model):
    pos = jnp.arange(max_len, dtype=jnp.float32)[:, None]
    div = jnp.exp(jnp.arange(0, d_model, 2, dtype=jnp.float32)
                  * (-math.log(10000.0) / d_model))
    pe = jnp.zeros((max_len, d_model), jnp.float32)
    pe = pe.at[:, 0::2].set(jnp.sin(pos * div))
    pe = pe.at[:, 1::2].set(jnp.cos(pos * div))
    return pe


def init_params(key, vocab_size):
    D, FF, L = D_MODEL, DIM_FEEDFORWARD, NUM_LAYERS
    ks = jax.random.split(key, 2 + L)

    def nrm(k, shape, std=0.02):
        return std * jax.random.normal(k, shape, jnp.float32)

    emb = nrm(ks[0], (vocab_size, D), 1.0 / math.sqrt(D))
    emb = emb.at[0].set(0.0)          # padding_idx = 0 -> zero embedding row

    # Linear weights stored in kernel layout (in_features, out_features),
    # i.e. the transpose of the PyTorch (out, in) convention.
    names = ["ln1g", "ln1b", "wqkv", "bqkv", "wout", "bout",
             "ln2g", "ln2b", "w1", "b1", "w2", "b2"]
    lp = {n: [] for n in names}
    for i in range(L):
        lk = jax.random.split(ks[1 + i], 4)
        lp["ln1g"].append(jnp.ones((1, D), jnp.float32))
        lp["ln1b"].append(jnp.zeros((1, D), jnp.float32))
        lp["wqkv"].append(nrm(lk[0], (D, 3 * D)))
        lp["bqkv"].append(jnp.zeros((1, 3 * D), jnp.float32))
        lp["wout"].append(nrm(lk[1], (D, D)))
        lp["bout"].append(jnp.zeros((1, D), jnp.float32))
        lp["ln2g"].append(jnp.ones((1, D), jnp.float32))
        lp["ln2b"].append(jnp.zeros((1, D), jnp.float32))
        lp["w1"].append(nrm(lk[2], (D, FF)))
        lp["b1"].append(jnp.zeros((1, FF), jnp.float32))
        lp["w2"].append(nrm(lk[3], (FF, D)))
        lp["b2"].append(jnp.zeros((1, D), jnp.float32))
    stacks = {k: jnp.stack(v, axis=0) for k, v in lp.items()}
    # Matmul weights in bf16 (MXU-native, halves weight DMA); LayerNorm params
    # and biases stay f32.
    for w in ("wqkv", "wout", "w1", "w2"):
        stacks[w] = stacks[w].astype(jnp.bfloat16)

    fk = jax.random.split(ks[1 + L], 2)
    fin = {
        "fng": jnp.ones((1, D), jnp.float32),
        "fnb": jnp.zeros((1, D), jnp.float32),
        "wproj": nrm(fk[0], (D, vocab_size)).astype(jnp.bfloat16),
        "bproj": jnp.zeros((1, vocab_size), jnp.float32),
    }
    pe = make_positional_encoding(MAX_GEN_LEN + 50, D)
    return {"emb": emb, "pe": pe, "layers": stacks, "final": fin}


def transformer_forward(ids_sb, attn_mask, key_pad_mask_add, params):
    """ids_sb: (S, B) int32; attn_mask: (S, S) additive float;
    key_pad_mask_add: (B, S) additive float. Returns (S, B, V) logits."""
    S, B = ids_sb.shape
    D = D_MODEL
    x = params["emb"][ids_sb] * math.sqrt(D)            # (S, B, D)
    x = x + params["pe"][:S][:, None, :]
    x_bsd = jnp.transpose(x, (1, 0, 2)).astype(jnp.float32)      # (B, S, D)

    # Pre-combine causal + key-padding masks into one per-batch additive mask.
    mask_bss = (attn_mask.astype(jnp.float32)[None, :, :]
                + key_pad_mask_add.astype(jnp.float32)[:, None, :])  # (B, S, S)

    y_bsd = _decoder_stack(x_bsd, mask_bss, params["layers"])

    # Back to (S, B, D) BEFORE the vocab projection so logits already come out
    # in (S, B, V) order -- no N x V transpose of the logits afterwards.
    y_sbd = jnp.transpose(y_bsd, (1, 0, 2)).reshape(S * B, D)
    logits2 = _final_projection(y_sbd, params["final"])
    V = logits2.shape[-1]
    return logits2.reshape(S, B, V)


if __name__ == "__main__":
    S, B, VOCAB = 8, 2, 128
    key = jax.random.PRNGKey(0)
    k_params, k_ids = jax.random.split(key)

    params = init_params(k_params, VOCAB)

    ids = jax.random.randint(k_ids, (S, B), 1, VOCAB, dtype=jnp.int32)
    # Pad the last two positions of batch 1 (token id 0 = padding).
    ids = ids.at[6:, 1].set(0)
    key_pad = jnp.zeros((B, S), bool).at[1, 6:].set(True)

    # Causal mask (float additive, -1e9 stands in for -inf) and key-padding mask.
    rows = jnp.arange(S)
    attn_mask = jnp.where(rows[None, :] > rows[:, None], -1e9, 0.0).astype(jnp.float32)
    kpm_add = jnp.where(key_pad, -1e9, 0.0).astype(jnp.float32)

    logits = transformer_forward(ids, attn_mask, kpm_add, params)
    logits = jax.block_until_ready(logits)
    assert logits.shape == (S, B, VOCAB), logits.shape
    assert bool(jnp.all(jnp.isfinite(logits)))
    print("KERNEL_OK")
</pallas_src>

<mosaic_0001>
module attributes {stable_mosaic.version = 11 : i64} {
  func.func @decoder_layer_kernel(%arg0: i32, %arg1: memref<2x8x512xf32, #tpu.memory_space<vmem>>, %arg2: memref<2x8x8xf32, #tpu.memory_space<vmem>>, %arg3: memref<1x1x512xf32, #tpu.memory_space<vmem>>, %arg4: memref<1x1x512xf32, #tpu.memory_space<vmem>>, %arg5: memref<1x512x1536xbf16, #tpu.memory_space<vmem>>, %arg6: memref<1x1x1536xf32, #tpu.memory_space<vmem>>, %arg7: memref<1x512x512xbf16, #tpu.memory_space<vmem>>, %arg8: memref<1x1x512xf32, #tpu.memory_space<vmem>>, %arg9: memref<1x1x512xf32, #tpu.memory_space<vmem>>, %arg10: memref<1x1x512xf32, #tpu.memory_space<vmem>>, %arg11: memref<1x512x512xbf16, #tpu.memory_space<vmem>>, %arg12: memref<1x1x512xf32, #tpu.memory_space<vmem>>, %arg13: memref<1x512x512xbf16, #tpu.memory_space<vmem>>, %arg14: memref<1x1x512xf32, #tpu.memory_space<vmem>>, %arg15: memref<2x8x512xf32, #tpu.memory_space<vmem>>) attributes {dimension_semantics = [#tpu.dimension_semantics<arbitrary>], iteration_bounds = array<i64: 4>, scalar_prefetch = 0 : i64, scratch_operands = 0 : i64, tpu.core_type = #tpu.core_type<tc>, window_params = [{pipeline_mode = #tpu.pipeline_mode<synchronous>, transform_indices = @transform_0, window_bounds = array<i64: 2, 8, 512>}, {pipeline_mode = #tpu.pipeline_mode<synchronous>, transform_indices = @transform_1, window_bounds = array<i64: 2, 8, 8>}, {transform_indices = @transform_2, window_bounds = array<i64: 1, 1, 512>}, {transform_indices = @transform_3, window_bounds = array<i64: 1, 1, 512>}, {transform_indices = @transform_4, window_bounds = array<i64: 1, 512, 1536>}, {transform_indices = @transform_5, window_bounds = array<i64: 1, 1, 1536>}, {transform_indices = @transform_6, window_bounds = array<i64: 1, 512, 512>}, {transform_indices = @transform_7, window_bounds = array<i64: 1, 1, 512>}, {transform_indices = @transform_8, window_bounds = array<i64: 1, 1, 512>}, {transform_indices = @transform_9, window_bounds = array<i64: 1, 1, 512>}, {transform_indices = @transform_10, window_bounds = array<i64: 1, 512, 512>}, {transform_indices = @transform_11, window_bounds = array<i64: 1, 1, 512>}, {transform_indices = @transform_12, window_bounds = array<i64: 1, 512, 512>}, {transform_indices = @transform_13, window_bounds = array<i64: 1, 1, 512>}, {pipeline_mode = #tpu.pipeline_mode<synchronous>, transform_indices = @transform_14, window_bounds = array<i64: 2, 8, 512>}]} {
    %c0_i32 = arith.constant 0 : i32
    %0 = arith.cmpi eq, %arg0, %c0_i32 : i32
    %1 = arith.extui %0 : i1 to i32
    %c0_i32_0 = arith.constant 0 : i32
    %2 = arith.cmpi ne, %1, %c0_i32_0 : i32
    scf.if %2 {
      %c0_107 = arith.constant 0 : index
      %c0_108 = arith.constant 0 : index
      %c0_109 = arith.constant 0 : index
      %331 = vector.load %arg1[%c0_107, %c0_108, %c0_109] : memref<2x8x512xf32, #tpu.memory_space<vmem>>, vector<2x8x512xf32>
      %c0_110 = arith.constant 0 : index
      %c0_111 = arith.constant 0 : index
      %c0_112 = arith.constant 0 : index
      %332 = vector.load %arg15[%c0_110, %c0_111, %c0_112] : memref<2x8x512xf32, #tpu.memory_space<vmem>>, vector<2x8x512xf32>
      tpu.vector_store %arg15[%c0_110, %c0_111, %c0_112], %331 {strides = array<i32>} : memref<2x8x512xf32, #tpu.memory_space<vmem>>, vector<2x8x512xf32>,
    } else {
    }
    %c0 = arith.constant 0 : index
    %c0_1 = arith.constant 0 : index
    %c0_2 = arith.constant 0 : index
    %3 = vector.load %arg15[%c0, %c0_1, %c0_2] : memref<2x8x512xf32, #tpu.memory_space<vmem>>, vector<2x8x512xf32>
    %4 = vector.shape_cast %3 : vector<2x8x512xf32> to vector<16x512xf32>
    %c0_3 = arith.constant 0 : index
    %c0_4 = arith.constant 0 : index
    %c0_5 = arith.constant 0 : index
    %5 = vector.load %arg2[%c0_3, %c0_4, %c0_5] : memref<2x8x8xf32, #tpu.memory_space<vmem>>, vector<2x8x8xf32>
    %c0_6 = arith.constant 0 : index
    %c0_7 = arith.constant 0 : index
    %c0_8 = arith.constant 0 : index
    %6 = vector.load %arg3[%c0_6, %c0_7, %c0_8] : memref<1x1x512xf32, #tpu.memory_space<vmem>>, vector<1x1x512xf32>
    %7 = vector.shape_cast %6 : vector<1x1x512xf32> to vector<1x512xf32>
    %c0_9 = arith.constant 0 : index
    %c0_10 = arith.constant 0 : index
    %c0_11 = arith.constant 0 : index
    %8 = vector.load %arg4[%c0_9, %c0_10, %c0_11] : memref<1x1x512xf32, #tpu.memory_space<vmem>>, vector<1x1x512xf32>
    %9 = vector.shape_cast %8 : vector<1x1x512xf32> to vector<1x512xf32>
    %cst = arith.constant dense<0.000000e+00> : vector<16xf32>
    %10 = vector.multi_reduction <add>, %4, %cst [1] : vector<16x512xf32> to vector<16xf32>
    %11 = vector.shape_cast %10 : vector<16xf32> to vector<16x1xf32>
    %cst_12 = arith.constant 5.120000e+02 : f32
    %12 = vector.broadcast %cst_12 : f32 to vector<16x1xf32>
    %13 = arith.divf %11, %12 : vector<16x1xf32>
    %14 = vector.broadcast %13 : vector<16x1xf32> to vector<16x512xf32>
    %15 = arith.subf %4, %14 : vector<16x512xf32>
    %16 = arith.mulf %15, %15 : vector<16x512xf32>
    %cst_13 = arith.constant dense<0.000000e+00> : vector<16xf32>
    %17 = vector.multi_reduction <add>, %16, %cst_13 [1] : vector<16x512xf32> to vector<16xf32>
    %18 = vector.shape_cast %17 : vector<16xf32> to vector<16x1xf32>
    %cst_14 = arith.constant 5.120000e+02 : f32
    %19 = vector.broadcast %cst_14 : f32 to vector<16x1xf32>
    %20 = arith.divf %18, %19 : vector<16x1xf32>
    %cst_15 = arith.constant 9.99999974E-6 : f32
    %21 = vector.broadcast %cst_15 : f32 to vector<16x1xf32>
    %22 = arith.addf %20, %21 : vector<16x1xf32>
    %23 = math.rsqrt %22 : vector<16x1xf32>
    %24 = vector.broadcast %23 : vector<16x1xf32> to vector<16x512xf32>
    %25 = arith.mulf %15, %24 : vector<16x512xf32>
    %26 = vector.broadcast %7 : vector<1x512xf32> to vector<16x512xf32>
    %27 = arith.mulf %25, %26 : vector<16x512xf32>
    %28 = vector.broadcast %9 : vector<1x512xf32> to vector<16x512xf32>
    %29 = arith.addf %27, %28 : vector<16x512xf32>
    %30 = arith.truncf %29 : vector<16x512xf32> to vector<16x512xbf16>
    %c0_16 = arith.constant 0 : index
    %c0_17 = arith.constant 0 : index
    %c0_18 = arith.constant 0 : index
    %31 = vector.load %arg5[%c0_16, %c0_17, %c0_18] : memref<1x512x1536xbf16, #tpu.memory_space<vmem>>, vector<1x512x1536xbf16>
    %32 = vector.shape_cast %31 : vector<1x512x1536xbf16> to vector<512x1536xbf16>
    %cst_19 = arith.constant dense<0.000000e+00> : vector<16x1536xf32>
    %33 = tpu.matmul %30, %32, %cst_19 {dimension_numbers = #tpu.dot_dimension_numbers<[1], [0], [0], [1], [0, 0, 1, 1], [], []>} : vector<16x512xbf16>, vector<512x1536xbf16>, vector<16x1536xf32> -> vector<16x1536xf32>
    %c0_20 = arith.constant 0 : index
    %c0_21 = arith.constant 0 : index
    %c0_22 = arith.constant 0 : index
    %34 = vector.load %arg6[%c0_20, %c0_21, %c0_22] : memref<1x1x1536xf32, #tpu.memory_space<vmem>>, vector<1x1x1536xf32>
    %35 = vector.shape_cast %34 : vector<1x1x1536xf32> to vector<1x1536xf32>
    %36 = vector.broadcast %35 : vector<1x1536xf32> to vector<16x1536xf32>
    %37 = arith.addf %33, %36 : vector<16x1536xf32>
    %c0_23 = arith.constant 0 : index
    %c0_24 = arith.constant 0 : index
    %c0_25 = arith.constant 0 : index
    %38 = vector.load %arg7[%c0_23, %c0_24, %c0_25] : memref<1x512x512xbf16, #tpu.memory_space<vmem>>, vector<1x512x512xbf16>
    %39 = vector.shape_cast %38 : vector<1x512x512xbf16> to vector<512x512xbf16>
    %cst_26 = arith.constant 0.000000e+00 : f32
    %40 = vector.broadcast %cst_26 : f32 to vector<16x512xf32>
    %41 = vector.extract_strided_slice %37 {offsets = [0, 0], sizes = [16, 64], strides = [1, 1]} : vector<16x1536xf32> to vector<16x64xf32>
    %cst_27 = arith.constant 1.250000e-01 : f32
    %42 = vector.broadcast %cst_27 : f32 to vector<16x64xf32>
    %43 = arith.mulf %41, %42 : vector<16x64xf32>
    %44 = vector.shape_cast %43 : vector<16x64xf32> to vector<2x8x64xf32>
    %45 = vector.extract_strided_slice %37 {offsets = [0, 512], sizes = [16, 64], strides = [1, 1]} : vector<16x1536xf32> to vector<16x64xf32>
    %46 = vector.shape_cast %45 : vector<16x64xf32> to vector<2x8x64xf32>
    %47 = vector.extract_strided_slice %37 {offsets = [0, 1024], sizes = [16, 64], strides = [1, 1]} : vector<16x1536xf32> to vector<16x64xf32>
    %48 = vector.shape_cast %47 : vector<16x64xf32> to vector<2x8x64xf32>
    %49 = arith.truncf %44 : vector<2x8x64xf32> to vector<2x8x64xbf16>
    %50 = arith.truncf %46 : vector<2x8x64xf32> to vector<2x8x64xbf16>
    "tpu.trace_start"() <{level = 10 : i32, message = "bqd,bkd->bqk"}> : () -> ()
    %cst_28 = arith.constant dense<0.000000e+00> : vector<2x8x8xf32>
    %51 = tpu.matmul %49, %50, %cst_28 {dimension_numbers = #tpu.dot_dimension_numbers<[2], [2], [1], [1], [0, 0, 0, 1, 1, 1], [0], [0]>} : vector<2x8x64xbf16>, vector<2x8x64xbf16>, vector<2x8x8xf32> -> vector<2x8x8xf32>
    "tpu.trace_stop"() : () -> ()
    %52 = arith.addf %51, %5 : vector<2x8x8xf32>
    %cst_29 = arith.constant dense<0xFF800000> : vector<2x8xf32>
    %53 = vector.multi_reduction <maximumf>, %52, %cst_29 [2] : vector<2x8x8xf32> to vector<2x8xf32>
    %54 = vector.shape_cast %53 : vector<2x8xf32> to vector<2x8x1xf32>
    %55 = vector.broadcast %54 : vector<2x8x1xf32> to vector<2x8x8xf32>
    %56 = arith.subf %52, %55 : vector<2x8x8xf32>
    %57 = math.exp %56 : vector<2x8x8xf32>
    %cst_30 = arith.constant dense<0.000000e+00> : vector<2x8xf32>
    %58 = vector.multi_reduction <add>, %57, %cst_30 [2] : vector<2x8x8xf32> to vector<2x8xf32>
    %59 = vector.shape_cast %58 : vector<2x8xf32> to vector<2x8x1xf32>
    %60 = tpu.reciprocal %59 {approx = true} : vector<2x8x1xf32> -> vector<2x8x1xf32>
    %61 = vector.broadcast %60 : vector<2x8x1xf32> to vector<2x8x8xf32>
    %62 = arith.mulf %57, %61 : vector<2x8x8xf32>
    %63 = arith.truncf %62 : vector<2x8x8xf32> to vector<2x8x8xbf16>
    %64 = arith.truncf %48 : vector<2x8x64xf32> to vector<2x8x64xbf16>
    "tpu.trace_start"() <{level = 10 : i32, message = "bqk,bkd->bqd"}> : () -> ()
    %cst_31 = arith.constant dense<0.000000e+00> : vector<2x8x64xf32>
    %65 = tpu.matmul %63, %64, %cst_31 {dimension_numbers = #tpu.dot_dimension_numbers<[2], [1], [1], [2], [0, 0, 0, 1, 1, 2], [0], [0]>} : vector<2x8x8xbf16>, vector<2x8x64xbf16>, vector<2x8x64xf32> -> vector<2x8x64xf32>
    "tpu.trace_stop"() : () -> ()
    %66 = vector.shape_cast %65 : vector<2x8x64xf32> to vector<16x64xf32>
    %67 = arith.truncf %66 : vector<16x64xf32> to vector<16x64xbf16>
    %68 = vector.extract_strided_slice %39 {offsets = [0, 0], sizes = [64, 512], strides = [1, 1]} : vector<512x512xbf16> to vector<64x512xbf16>
    %cst_32 = arith.constant dense<0.000000e+00> : vector<16x512xf32>
    %69 = tpu.matmul %67, %68, %cst_32 {dimension_numbers = #tpu.dot_dimension_numbers<[1], [0], [0], [1], [0, 0, 1, 1], [], []>} : vector<16x64xbf16>, vector<64x512xbf16>, vector<16x512xf32> -> vector<16x512xf32>
    %70 = arith.addf %40, %69 : vector<16x512xf32>
    %71 = vector.extract_strided_slice %37 {offsets = [0, 64], sizes = [16, 64], strides = [1, 1]} : vector<16x1536xf32> to vector<16x64xf32>
    %cst_33 = arith.constant 1.250000e-01 : f32
    %72 = vector.broadcast %cst_33 : f32 to vector<16x64xf32>
    %73 = arith.mulf %71, %72 : vector<16x64xf32>
    %74 = vector.shape_cast %73 : vector<16x64xf32> to vector<2x8x64xf32>
    %75 = vector.extract_strided_slice %37 {offsets = [0, 576], sizes = [16, 64], strides = [1, 1]} : vector<16x1536xf32> to vector<16x64xf32>
    %76 = vector.shape_cast %75 : vector<16x64xf32> to vector<2x8x64xf32>
    %77 = vector.extract_strided_slice %37 {offsets = [0, 1088], sizes = [16, 64], strides = [1, 1]} : vector<16x1536xf32> to vector<16x64xf32>
    %78 = vector.shape_cast %77 : vector<16x64xf32> to vector<2x8x64xf32>
    %79 = arith.truncf %74 : vector<2x8x64xf32> to vector<2x8x64xbf16>
    %80 = arith.truncf %76 : vector<2x8x64xf32> to vector<2x8x64xbf16>
    "tpu.trace_start"() <{level = 10 : i32, message = "bqd,bkd->bqk"}> : () -> ()
    %cst_34 = arith.constant dense<0.000000e+00> : vector<2x8x8xf32>
    %81 = tpu.matmul %79, %80, %cst_34 {dimension_numbers = #tpu.dot_dimension_numbers<[2], [2], [1], [1], [0, 0, 0, 1, 1, 1], [0], [0]>} : vector<2x8x64xbf16>, vector<2x8x64xbf16>, vector<2x8x8xf32> -> vector<2x8x8xf32>
    "tpu.trace_stop"() : () -> ()
    %82 = arith.addf %81, %5 : vector<2x8x8xf32>
    %cst_35 = arith.constant dense<0xFF800000> : vector<2x8xf32>
    %83 = vector.multi_reduction <maximumf>, %82, %cst_35 [2] : vector<2x8x8xf32> to vector<2x8xf32>
    %84 = vector.shape_cast %83 : vector<2x8xf32> to vector<2x8x1xf32>
    %85 = vector.broadcast %84 : vector<2x8x1xf32> to vector<2x8x8xf32>
    %86 = arith.subf %82, %85 : vector<2x8x8xf32>
    %87 = math.exp %86 : vector<2x8x8xf32>
    %cst_36 = arith.constant dense<0.000000e+00> : vector<2x8xf32>
    %88 = vector.multi_reduction <add>, %87, %cst_36 [2] : vector<2x8x8xf32> to vector<2x8xf32>
    %89 = vector.shape_cast %88 : vector<2x8xf32> to vector<2x8x1xf32>
    %90 = tpu.reciprocal %89 {approx = true} : vector<2x8x1xf32> -> vector<2x8x1xf32>
    %91 = vector.broadcast %90 : vector<2x8x1xf32> to vector<2x8x8xf32>
    %92 = arith.mulf %87, %91 : vector<2x8x8xf32>
    %93 = arith.truncf %92 : vector<2x8x8xf32> to vector<2x8x8xbf16>
    %94 = arith.truncf %78 : vector<2x8x64xf32> to vector<2x8x64xbf16>
    "tpu.trace_start"() <{level = 10 : i32, message = "bqk,bkd->bqd"}> : () -> ()
    %cst_37 = arith.constant dense<0.000000e+00> : vector<2x8x64xf32>
    %95 = tpu.matmul %93, %94, %cst_37 {dimension_numbers = #tpu.dot_dimension_numbers<[2], [1], [1], [2], [0, 0, 0, 1, 1, 2], [0], [0]>} : vector<2x8x8xbf16>, vector<2x8x64xbf16>, vector<2x8x64xf32> -> vector<2x8x64xf32>
    "tpu.trace_stop"() : () -> ()
    %96 = vector.shape_cast %95 : vector<2x8x64xf32> to vector<16x64xf32>
    %97 = arith.truncf %96 : vector<16x64xf32> to vector<16x64xbf16>
    %98 = vector.extract_strided_slice %39 {offsets = [64, 0], sizes = [64, 512], strides = [1, 1]} : vector<512x512xbf16> to vector<64x512xbf16>
    %cst_38 = arith.constant dense<0.000000e+00> : vector<16x512xf32>
    %99 = tpu.matmul %97, %98, %cst_38 {dimension_numbers = #tpu.dot_dimension_numbers<[1], [0], [0], [1], [0, 0, 1, 1], [], []>} : vector<16x64xbf16>, vector<64x512xbf16>, vector<16x512xf32> -> vector<16x512xf32>
    %100 = arith.addf %70, %99 : vector<16x512xf32>
    %101 = vector.extract_strided_slice %37 {offsets = [0, 128], sizes = [16, 64], strides = [1, 1]} : vector<16x1536xf32> to vector<16x64xf32>
    %cst_39 = arith.constant 1.250000e-01 : f32
    %102 = vector.broadcast %cst_39 : f32 to vector<16x64xf32>
    %103 = arith.mulf %101, %102 : vector<16x64xf32>
    %104 = vector.shape_cast %103 : vector<16x64xf32> to vector<2x8x64xf32>
    %105 = vector.extract_strided_slice %37 {offsets = [0, 640], sizes = [16, 64], strides = [1, 1]} : vector<16x1536xf32> to vector<16x64xf32>
    %106 = vector.shape_cast %105 : vector<16x64xf32> to vector<2x8x64xf32>
    %107 = vector.extract_strided_slice %37 {offsets = [0, 1152], sizes = [16, 64], strides = [1, 1]} : vector<16x1536xf32> to vector<16x64xf32>
    %108 = vector.shape_cast %107 : vector<16x64xf32> to vector<2x8x64xf32>
    %109 = arith.truncf %104 : vector<2x8x64xf32> to vector<2x8x64xbf16>
    %110 = arith.truncf %106 : vector<2x8x64xf32> to vector<2x8x64xbf16>
    "tpu.trace_start"() <{level = 10 : i32, message = "bqd,bkd->bqk"}> : () -> ()
    %cst_40 = arith.constant dense<0.000000e+00> : vector<2x8x8xf32>
    %111 = tpu.matmul %109, %110, %cst_40 {dimension_numbers = #tpu.dot_dimension_numbers<[2], [2], [1], [1], [0, 0, 0, 1, 1, 1], [0], [0]>} : vector<2x8x64xbf16>, vector<2x8x64xbf16>, vector<2x8x8xf32> -> vector<2x8x8xf32>
    "tpu.trace_stop"() : () -> ()
    %112 = arith.addf %111, %5 : vector<2x8x8xf32>
    %cst_41 = arith.constant dense<0xFF800000> : vector<2x8xf32>
    %113 = vector.multi_reduction <maximumf>, %112, %cst_41 [2] : vector<2x8x8xf32> to vector<2x8xf32>
    %114 = vector.shape_cast %113 : vector<2x8xf32> to vector<2x8x1xf32>
    %115 = vector.broadcast %114 : vector<2x8x1xf32> to vector<2x8x8xf32>
    %116 = arith.subf %112, %115 : vector<2x8x8xf32>
    %117 = math.exp %116 : vector<2x8x8xf32>
    %cst_42 = arith.constant dense<0.000000e+00> : vector<2x8xf32>
    %118 = vector.multi_reduction <add>, %117, %cst_42 [2] : vector<2x8x8xf32> to vector<2x8xf32>
    %119 = vector.shape_cast %118 : vector<2x8xf32> to vector<2x8x1xf32>
    %120 = tpu.reciprocal %119 {approx = true} : vector<2x8x1xf32> -> vector<2x8x1xf32>
    %121 = vector.broadcast %120 : vector<2x8x1xf32> to vector<2x8x8xf32>
    %122 = arith.mulf %117, %121 : vector<2x8x8xf32>
    %123 = arith.truncf %122 : vector<2x8x8xf32> to vector<2x8x8xbf16>
    %124 = arith.truncf %108 : vector<2x8x64xf32> to vector<2x8x64xbf16>
    "tpu.trace_start"() <{level = 10 : i32, message = "bqk,bkd->bqd"}> : () -> ()
    %cst_43 = arith.constant dense<0.000000e+00> : vector<2x8x64xf32>
    %125 = tpu.matmul %123, %124, %cst_43 {dimension_numbers = #tpu.dot_dimension_numbers<[2], [1], [1], [2], [0, 0, 0, 1, 1, 2], [0], [0]>} : vector<2x8x8xbf16>, vector<2x8x64xbf16>, vector<2x8x64xf32> -> vector<2x8x64xf32>
    "tpu.trace_stop"() : () -> ()
    %126 = vector.shape_cast %125 : vector<2x8x64xf32> to vector<16x64xf32>
    %127 = arith.truncf %126 : vector<16x64xf32> to vector<16x64xbf16>
    %128 = vector.extract_strided_slice %39 {offsets = [128, 0], sizes = [64, 512], strides = [1, 1]} : vector<512x512xbf16> to vector<64x512xbf16>
    %cst_44 = arith.constant dense<0.000000e+00> : vector<16x512xf32>
    %129 = tpu.matmul %127, %128, %cst_44 {dimension_numbers = #tpu.dot_dimension_numbers<[1], [0], [0], [1], [0, 0, 1, 1], [], []>} : vector<16x64xbf16>, vector<64x512xbf16>, vector<16x512xf32> -> vector<16x512xf32>
    %130 = arith.addf %100, %129 : vector<16x512xf32>
    %131 = vector.extract_strided_slice %37 {offsets = [0, 192], sizes = [16, 64], strides = [1, 1]} : vector<16x1536xf32> to vector<16x64xf32>
    %cst_45 = arith.constant 1.250000e-01 : f32
    %132 = vector.broadcast %cst_45 : f32 to vector<16x64xf32>
    %133 = arith.mulf %131, %132 : vector<16x64xf32>
    %134 = vector.shape_cast %133 : vector<16x64xf32> to vector<2x8x64xf32>
    %135 = vector.extract_strided_slice %37 {offsets = [0, 704], sizes = [16, 64], strides = [1, 1]} : vector<16x1536xf32> to vector<16x64xf32>
    %136 = vector.shape_cast %135 : vector<16x64xf32> to vector<2x8x64xf32>
    %137 = vector.extract_strided_slice %37 {offsets = [0, 1216], sizes = [16, 64], strides = [1, 1]} : vector<16x1536xf32> to vector<16x64xf32>
    %138 = vector.shape_cast %137 : vector<16x64xf32> to vector<2x8x64xf32>
    %139 = arith.truncf %134 : vector<2x8x64xf32> to vector<2x8x64xbf16>
    %140 = arith.truncf %136 : vector<2x8x64xf32> to vector<2x8x64xbf16>
    "tpu.trace_start"() <{level = 10 : i32, message = "bqd,bkd->bqk"}> : () -> ()
    %cst_46 = arith.constant dense<0.000000e+00> : vector<2x8x8xf32>
    %141 = tpu.matmul %139, %140, %cst_46 {dimension_numbers = #tpu.dot_dimension_numbers<[2], [2], [1], [1], [0, 0, 0, 1, 1, 1], [0], [0]>} : vector<2x8x64xbf16>, vector<2x8x64xbf16>, vector<2x8x8xf32> -> vector<2x8x8xf32>
    "tpu.trace_stop"() : () -> ()
    %142 = arith.addf %141, %5 : vector<2x8x8xf32>
    %cst_47 = arith.constant dense<0xFF800000> : vector<2x8xf32>
    %143 = vector.multi_reduction <maximumf>, %142, %cst_47 [2] : vector<2x8x8xf32> to vector<2x8xf32>
    %144 = vector.shape_cast %143 : vector<2x8xf32> to vector<2x8x1xf32>
    %145 = vector.broadcast %144 : vector<2x8x1xf32> to vector<2x8x8xf32>
    %146 = arith.subf %142, %145 : vector<2x8x8xf32>
    %147 = math.exp %146 : vector<2x8x8xf32>
    %cst_48 = arith.constant dense<0.000000e+00> : vector<2x8xf32>
    %148 = vector.multi_reduction <add>, %147, %cst_48 [2] : vector<2x8x8xf32> to vector<2x8xf32>
    %149 = vector.shape_cast %148 : vector<2x8xf32> to vector<2x8x1xf32>
    %150 = tpu.reciprocal %149 {approx = true} : vector<2x8x1xf32> -> vector<2x8x1xf32>
    %151 = vector.broadcast %150 : vector<2x8x1xf32> to vector<2x8x8xf32>
    %152 = arith.mulf %147, %151 : vector<2x8x8xf32>
    %153 = arith.truncf %152 : vector<2x8x8xf32> to vector<2x8x8xbf16>
    %154 = arith.truncf %138 : vector<2x8x64xf32> to vector<2x8x64xbf16>
    "tpu.trace_start"() <{level = 10 : i32, message = "bqk,bkd->bqd"}> : () -> ()
    %cst_49 = arith.constant dense<0.000000e+00> : vector<2x8x64xf32>
    %155 = tpu.matmul %153, %154, %cst_49 {dimension_numbers = #tpu.dot_dimension_numbers<[2], [1], [1], [2], [0, 0, 0, 1, 1, 2], [0], [0]>} : vector<2x8x8xbf16>, vector<2x8x64xbf16>, vector<2x8x64xf32> -> vector<2x8x64xf32>
    "tpu.trace_stop"() : () -> ()
    %156 = vector.shape_cast %155 : vector<2x8x64xf32> to vector<16x64xf32>
    %157 = arith.truncf %156 : vector<16x64xf32> to vector<16x64xbf16>
    %158 = vector.extract_strided_slice %39 {offsets = [192, 0], sizes = [64, 512], strides = [1, 1]} : vector<512x512xbf16> to vector<64x512xbf16>
    %cst_50 = arith.constant dense<0.000000e+00> : vector<16x512xf32>
    %159 = tpu.matmul %157, %158, %cst_50 {dimension_numbers = #tpu.dot_dimension_numbers<[1], [0], [0], [1], [0, 0, 1, 1], [], []>} : vector<16x64xbf16>, vector<64x512xbf16>, vector<16x512xf32> -> vector<16x512xf32>
    %160 = arith.addf %130, %159 : vector<16x512xf32>
    %161 = vector.extract_strided_slice %37 {offsets = [0, 256], sizes = [16, 64], strides = [1, 1]} : vector<16x1536xf32> to vector<16x64xf32>
    %cst_51 = arith.constant 1.250000e-01 : f32
    %162 = vector.broadcast %cst_51 : f32 to vector<16x64xf32>
    %163 = arith.mulf %161, %162 : vector<16x64xf32>
    %164 = vector.shape_cast %163 : vector<16x64xf32> to vector<2x8x64xf32>
    %165 = vector.extract_strided_slice %37 {offsets = [0, 768], sizes = [16, 64], strides = [1, 1]} : vector<16x1536xf32> to vector<16x64xf32>
    %166 = vector.shape_cast %165 : vector<16x64xf32> to vector<2x8x64xf32>
    %167 = vector.extract_strided_slice %37 {offsets = [0, 1280], sizes = [16, 64], strides = [1, 1]} : vector<16x1536xf32> to vector<16x64xf32>
    %168 = vector.shape_cast %167 : vector<16x64xf32> to vector<2x8x64xf32>
    %169 = arith.truncf %164 : vector<2x8x64xf32> to vector<2x8x64xbf16>
    %170 = arith.truncf %166 : vector<2x8x64xf32> to vector<2x8x64xbf16>
    "tpu.trace_start"() <{level = 10 : i32, message = "bqd,bkd->bqk"}> : () -> ()
    %cst_52 = arith.constant dense<0.000000e+00> : vector<2x8x8xf32>
    %171 = tpu.matmul %169, %170, %cst_52 {dimension_numbers = #tpu.dot_dimension_numbers<[2], [2], [1], [1], [0, 0, 0, 1, 1, 1], [0], [0]>} : vector<2x8x64xbf16>, vector<2x8x64xbf16>, vector<2x8x8xf32> -> vector<2x8x8xf32>
    "tpu.trace_stop"() : () -> ()
    %172 = arith.addf %171, %5 : vector<2x8x8xf32>
    %cst_53 = arith.constant dense<0xFF800000> : vector<2x8xf32>
    %173 = vector.multi_reduction <maximumf>, %172, %cst_53 [2] : vector<2x8x8xf32> to vector<2x8xf32>
    %174 = vector.shape_cast %173 : vector<2x8xf32> to vector<2x8x1xf32>
    %175 = vector.broadcast %174 : vector<2x8x1xf32> to vector<2x8x8xf32>
    %176 = arith.subf %172, %175 : vector<2x8x8xf32>
    %177 = math.exp %176 : vector<2x8x8xf32>
    %cst_54 = arith.constant dense<0.000000e+00> : vector<2x8xf32>
    %178 = vector.multi_reduction <add>, %177, %cst_54 [2] : vector<2x8x8xf32> to vector<2x8xf32>
    %179 = vector.shape_cast %178 : vector<2x8xf32> to vector<2x8x1xf32>
    %180 = tpu.reciprocal %179 {approx = true} : vector<2x8x1xf32> -> vector<2x8x1xf32>
    %181 = vector.broadcast %180 : vector<2x8x1xf32> to vector<2x8x8xf32>
    %182 = arith.mulf %177, %181 : vector<2x8x8xf32>
    %183 = arith.truncf %182 : vector<2x8x8xf32> to vector<2x8x8xbf16>
    %184 = arith.truncf %168 : vector<2x8x64xf32> to vector<2x8x64xbf16>
    "tpu.trace_start"() <{level = 10 : i32, message = "bqk,bkd->bqd"}> : () -> ()
    %cst_55 = arith.constant dense<0.000000e+00> : vector<2x8x64xf32>
    %185 = tpu.matmul %183, %184, %cst_55 {dimension_numbers = #tpu.dot_dimension_numbers<[2], [1], [1], [2], [0, 0, 0, 1, 1, 2], [0], [0]>} : vector<2x8x8xbf16>, vector<2x8x64xbf16>, vector<2x8x64xf32> -> vector<2x8x64xf32>
    "tpu.trace_stop"() : () -> ()
    %186 = vector.shape_cast %185 : vector<2x8x64xf32> to vector<16x64xf32>
    %187 = arith.truncf %186 : vector<16x64xf32> to vector<16x64xbf16>
    %188 = vector.extract_strided_slice %39 {offsets = [256, 0], sizes = [64, 512], strides = [1, 1]} : vector<512x512xbf16> to vector<64x512xbf16>
    %cst_56 = arith.constant dense<0.000000e+00> : vector<16x512xf32>
    %189 = tpu.matmul %187, %188, %cst_56 {dimension_numbers = #tpu.dot_dimension_numbers<[1], [0], [0], [1], [0, 0, 1, 1], [], []>} : vector<16x64xbf16>, vector<64x512xbf16>, vector<16x512xf32> -> vector<16x512xf32>
    %190 = arith.addf %160, %189 : vector<16x512xf32>
    %191 = vector.extract_strided_slice %37 {offsets = [0, 320], sizes = [16, 64], strides = [1, 1]} : vector<16x1536xf32> to vector<16x64xf32>
    %cst_57 = arith.constant 1.250000e-01 : f32
    %192 = vector.broadcast %cst_57 : f32 to vector<16x64xf32>
    %193 = arith.mulf %191, %192 : vector<16x64xf32>
    %194 = vector.shape_cast %193 : vector<16x64xf32> to vector<2x8x64xf32>
    %195 = vector.extract_strided_slice %37 {offsets = [0, 832], sizes = [16, 64], strides = [1, 1]} : vector<16x1536xf32> to vector<16x64xf32>
    %196 = vector.shape_cast %195 : vector<16x64xf32> to vector<2x8x64xf32>
    %197 = vector.extract_strided_slice %37 {offsets = [0, 1344], sizes = [16, 64], strides = [1, 1]} : vector<16x1536xf32> to vector<16x64xf32>
    %198 = vector.shape_cast %197 : vector<16x64xf32> to vector<2x8x64xf32>
    %199 = arith.truncf %194 : vector<2x8x64xf32> to vector<2x8x64xbf16>
    %200 = arith.truncf %196 : vector<2x8x64xf32> to vector<2x8x64xbf16>
    "tpu.trace_start"() <{level = 10 : i32, message = "bqd,bkd->bqk"}> : () -> ()
    %cst_58 = arith.constant dense<0.000000e+00> : vector<2x8x8xf32>
    %201 = tpu.matmul %199, %200, %cst_58 {dimension_numbers = #tpu.dot_dimension_numbers<[2], [2], [1], [1], [0, 0, 0, 1, 1, 1], [0], [0]>} : vector<2x8x64xbf16>, vector<2x8x64xbf16>, vector<2x8x8xf32> -> vector<2x8x8xf32>
    "tpu.trace_stop"() : () -> ()
    %202 = arith.addf %201, %5 : vector<2x8x8xf32>
    %cst_59 = arith.constant dense<0xFF800000> : vector<2x8xf32>
    %203 = vector.multi_reduction <maximumf>, %202, %cst_59 [2] : vector<2x8x8xf32> to vector<2x8xf32>
    %204 = vector.shape_cast %203 : vector<2x8xf32> to vector<2x8x1xf32>
    %205 = vector.broadcast %204 : vector<2x8x1xf32> to vector<2x8x8xf32>
    %206 = arith.subf %202, %205 : vector<2x8x8xf32>
    %207 = math.exp %206 : vector<2x8x8xf32>
    %cst_60 = arith.constant dense<0.000000e+00> : vector<2x8xf32>
    %208 = vector.multi_reduction <add>, %207, %cst_60 [2] : vector<2x8x8xf32> to vector<2x8xf32>
    %209 = vector.shape_cast %208 : vector<2x8xf32> to vector<2x8x1xf32>
    %210 = tpu.reciprocal %209 {approx = true} : vector<2x8x1xf32> -> vector<2x8x1xf32>
    %211 = vector.broadcast %210 : vector<2x8x1xf32> to vector<2x8x8xf32>
    %212 = arith.mulf %207, %211 : vector<2x8x8xf32>
    %213 = arith.truncf %212 : vector<2x8x8xf32> to vector<2x8x8xbf16>
    %214 = arith.truncf %198 : vector<2x8x64xf32> to vector<2x8x64xbf16>
    "tpu.trace_start"() <{level = 10 : i32, message = "bqk,bkd->bqd"}> : () -> ()
    %cst_61 = arith.constant dense<0.000000e+00> : vector<2x8x64xf32>
    %215 = tpu.matmul %213, %214, %cst_61 {dimension_numbers = #tpu.dot_dimension_numbers<[2], [1], [1], [2], [0, 0, 0, 1, 1, 2], [0], [0]>} : vector<2x8x8xbf16>, vector<2x8x64xbf16>, vector<2x8x64xf32> -> vector<2x8x64xf32>
    "tpu.trace_stop"() : () -> ()
    %216 = vector.shape_cast %215 : vector<2x8x64xf32> to vector<16x64xf32>
    %217 = arith.truncf %216 : vector<16x64xf32> to vector<16x64xbf16>
    %218 = vector.extract_strided_slice %39 {offsets = [320, 0], sizes = [64, 512], strides = [1, 1]} : vector<512x512xbf16> to vector<64x512xbf16>
    %cst_62 = arith.constant dense<0.000000e+00> : vector<16x512xf32>
    %219 = tpu.matmul %217, %218, %cst_62 {dimension_numbers = #tpu.dot_dimension_numbers<[1], [0], [0], [1], [0, 0, 1, 1], [], []>} : vector<16x64xbf16>, vector<64x512xbf16>, vector<16x512xf32> -> vector<16x512xf32>
    %220 = arith.addf %190, %219 : vector<16x512xf32>
    %221 = vector.extract_strided_slice %37 {offsets = [0, 384], sizes = [16, 64], strides = [1, 1]} : vector<16x1536xf32> to vector<16x64xf32>
    %cst_63 = arith.constant 1.250000e-01 : f32
    %222 = vector.broadcast %cst_63 : f32 to vector<16x64xf32>
    %223 = arith.mulf %221, %222 : vector<16x64xf32>
    %224 = vector.shape_cast %223 : vector<16x64xf32> to vector<2x8x64xf32>
    %225 = vector.extract_strided_slice %37 {offsets = [0, 896], sizes = [16, 64], strides = [1, 1]} : vector<16x1536xf32> to vector<16x64xf32>
    %226 = vector.shape_cast %225 : vector<16x64xf32> to vector<2x8x64xf32>
    %227 = vector.extract_strided_slice %37 {offsets = [0, 1408], sizes = [16, 64], strides = [1, 1]} : vector<16x1536xf32> to vector<16x64xf32>
    %228 = vector.shape_cast %227 : vector<16x64xf32> to vector<2x8x64xf32>
    %229 = arith.truncf %224 : vector<2x8x64xf32> to vector<2x8x64xbf16>
    %230 = arith.truncf %226 : vector<2x8x64xf32> to vector<2x8x64xbf16>
    "tpu.trace_start"() <{level = 10 : i32, message = "bqd,bkd->bqk"}> : () -> ()
    %cst_64 = arith.constant dense<0.000000e+00> : vector<2x8x8xf32>
    %231 = tpu.matmul %229, %230, %cst_64 {dimension_numbers = #tpu.dot_dimension_numbers<[2], [2], [1], [1], [0, 0, 0, 1, 1, 1], [0], [0]>} : vector<2x8x64xbf16>, vector<2x8x64xbf16>, vector<2x8x8xf32> -> vector<2x8x8xf32>
    "tpu.trace_stop"() : () -> ()
    %232 = arith.addf %231, %5 : vector<2x8x8xf32>
    %cst_65 = arith.constant dense<0xFF800000> : vector<2x8xf32>
    %233 = vector.multi_reduction <maximumf>, %232, %cst_65 [2] : vector<2x8x8xf32> to vector<2x8xf32>
    %234 = vector.shape_cast %233 : vector<2x8xf32> to vector<2x8x1xf32>
    %235 = vector.broadcast %234 : vector<2x8x1xf32> to vector<2x8x8xf32>
    %236 = arith.subf %232, %235 : vector<2x8x8xf32>
    %237 = math.exp %236 : vector<2x8x8xf32>
    %cst_66 = arith.constant dense<0.000000e+00> : vector<2x8xf32>
    %238 = vector.multi_reduction <add>, %237, %cst_66 [2] : vector<2x8x8xf32> to vector<2x8xf32>
    %239 = vector.shape_cast %238 : vector<2x8xf32> to vector<2x8x1xf32>
    %240 = tpu.reciprocal %239 {approx = true} : vector<2x8x1xf32> -> vector<2x8x1xf32>
    %241 = vector.broadcast %240 : vector<2x8x1xf32> to vector<2x8x8xf32>
    %242 = arith.mulf %237, %241 : vector<2x8x8xf32>
    %243 = arith.truncf %242 : vector<2x8x8xf32> to vector<2x8x8xbf16>
    %244 = arith.truncf %228 : vector<2x8x64xf32> to vector<2x8x64xbf16>
    "tpu.trace_start"() <{level = 10 : i32, message = "bqk,bkd->bqd"}> : () -> ()
    %cst_67 = arith.constant dense<0.000000e+00> : vector<2x8x64xf32>
    %245 = tpu.matmul %243, %244, %cst_67 {dimension_numbers = #tpu.dot_dimension_numbers<[2], [1], [1], [2], [0, 0, 0, 1, 1, 2], [0], [0]>} : vector<2x8x8xbf16>, vector<2x8x64xbf16>, vector<2x8x64xf32> -> vector<2x8x64xf32>
    "tpu.trace_stop"() : () -> ()
    %246 = vector.shape_cast %245 : vector<2x8x64xf32> to vector<16x64xf32>
    %247 = arith.truncf %246 : vector<16x64xf32> to vector<16x64xbf16>
    %248 = vector.extract_strided_slice %39 {offsets = [384, 0], sizes = [64, 512], strides = [1, 1]} : vector<512x512xbf16> to vector<64x512xbf16>
    %cst_68 = arith.constant dense<0.000000e+00> : vector<16x512xf32>
    %249 = tpu.matmul %247, %248, %cst_68 {dimension_numbers = #tpu.dot_dimension_numbers<[1], [0], [0], [1], [0, 0, 1, 1], [], []>} : vector<16x64xbf16>, vector<64x512xbf16>, vector<16x512xf32> -> vector<16x512xf32>
    %250 = arith.addf %220, %249 : vector<16x512xf32>
    %251 = vector.extract_strided_slice %37 {offsets = [0, 448], sizes = [16, 64], strides = [1, 1]} : vector<16x1536xf32> to vector<16x64xf32>
    %cst_69 = arith.constant 1.250000e-01 : f32
    %252 = vector.broadcast %cst_69 : f32 to vector<16x64xf32>
    %253 = arith.mulf %251, %252 : vector<16x64xf32>
    %254 = vector.shape_cast %253 : vector<16x64xf32> to vector<2x8x64xf32>
    %255 = vector.extract_strided_slice %37 {offsets = [0, 960], sizes = [16, 64], strides = [1, 1]} : vector<16x1536xf32> to vector<16x64xf32>
    %256 = vector.shape_cast %255 : vector<16x64xf32> to vector<2x8x64xf32>
    %257 = vector.extract_strided_slice %37 {offsets = [0, 1472], sizes = [16, 64], strides = [1, 1]} : vector<16x1536xf32> to vector<16x64xf32>
    %258 = vector.shape_cast %257 : vector<16x64xf32> to vector<2x8x64xf32>
    %259 = arith.truncf %254 : vector<2x8x64xf32> to vector<2x8x64xbf16>
    %260 = arith.truncf %256 : vector<2x8x64xf32> to vector<2x8x64xbf16>
    "tpu.trace_start"() <{level = 10 : i32, message = "bqd,bkd->bqk"}> : () -> ()
    %cst_70 = arith.constant dense<0.000000e+00> : vector<2x8x8xf32>
    %261 = tpu.matmul %259, %260, %cst_70 {dimension_numbers = #tpu.dot_dimension_numbers<[2], [2], [1], [1], [0, 0, 0, 1, 1, 1], [0], [0]>} : vector<2x8x64xbf16>, vector<2x8x64xbf16>, vector<2x8x8xf32> -> vector<2x8x8xf32>
    "tpu.trace_stop"() : () -> ()
    %262 = arith.addf %261, %5 : vector<2x8x8xf32>
    %cst_71 = arith.constant dense<0xFF800000> : vector<2x8xf32>
    %263 = vector.multi_reduction <maximumf>, %262, %cst_71 [2] : vector<2x8x8xf32> to vector<2x8xf32>
    %264 = vector.shape_cast %263 : vector<2x8xf32> to vector<2x8x1xf32>
    %265 = vector.broadcast %264 : vector<2x8x1xf32> to vector<2x8x8xf32>
    %266 = arith.subf %262, %265 : vector<2x8x8xf32>
    %267 = math.exp %266 : vector<2x8x8xf32>
    %cst_72 = arith.constant dense<0.000000e+00> : vector<2x8xf32>
    %268 = vector.multi_reduction <add>, %267, %cst_72 [2] : vector<2x8x8xf32> to vector<2x8xf32>
    %269 = vector.shape_cast %268 : vector<2x8xf32> to vector<2x8x1xf32>
    %270 = tpu.reciprocal %269 {approx = true} : vector<2x8x1xf32> -> vector<2x8x1xf32>
    %271 = vector.broadcast %270 : vector<2x8x1xf32> to vector<2x8x8xf32>
    %272 = arith.mulf %267, %271 : vector<2x8x8xf32>
    %273 = arith.truncf %272 : vector<2x8x8xf32> to vector<2x8x8xbf16>
    %274 = arith.truncf %258 : vector<2x8x64xf32> to vector<2x8x64xbf16>
    "tpu.trace_start"() <{level = 10 : i32, message = "bqk,bkd->bqd"}> : () -> ()
    %cst_73 = arith.constant dense<0.000000e+00> : vector<2x8x64xf32>
    %275 = tpu.matmul %273, %274, %cst_73 {dimension_numbers = #tpu.dot_dimension_numbers<[2], [1], [1], [2], [0, 0, 0, 1, 1, 2], [0], [0]>} : vector<2x8x8xbf16>, vector<2x8x64xbf16>, vector<2x8x64xf32> -> vector<2x8x64xf32>
    "tpu.trace_stop"() : () -> ()
    %276 = vector.shape_cast %275 : vector<2x8x64xf32> to vector<16x64xf32>
    %277 = arith.truncf %276 : vector<16x64xf32> to vector<16x64xbf16>
    %278 = vector.extract_strided_slice %39 {offsets = [448, 0], sizes = [64, 512], strides = [1, 1]} : vector<512x512xbf16> to vector<64x512xbf16>
    %cst_74 = arith.constant dense<0.000000e+00> : vector<16x512xf32>
    %279 = tpu.matmul %277, %278, %cst_74 {dimension_numbers = #tpu.dot_dimension_numbers<[1], [0], [0], [1], [0, 0, 1, 1], [], []>} : vector<16x64xbf16>, vector<64x512xbf16>, vector<16x512xf32> -> vector<16x512xf32>
    %280 = arith.addf %250, %279 : vector<16x512xf32>
    %281 = arith.addf %4, %280 : vector<16x512xf32>
    %c0_75 = arith.constant 0 : index
    %c0_76 = arith.constant 0 : index
    %c0_77 = arith.constant 0 : index
    %282 = vector.load %arg8[%c0_75, %c0_76, %c0_77] : memref<1x1x512xf32, #tpu.memory_space<vmem>>, vector<1x1x512xf32>
    %283 = vector.shape_cast %282 : vector<1x1x512xf32> to vector<1x512xf32>
    %284 = vector.broadcast %283 : vector<1x512xf32> to vector<16x512xf32>
    %285 = arith.addf %281, %284 : vector<16x512xf32>
    %c0_78 = arith.constant 0 : index
    %c0_79 = arith.constant 0 : index
    %c0_80 = arith.constant 0 : index
    %286 = vector.load %arg9[%c0_78, %c0_79, %c0_80] : memref<1x1x512xf32, #tpu.memory_space<vmem>>, vector<1x1x512xf32>
    %287 = vector.shape_cast %286 : vector<1x1x512xf32> to vector<1x512xf32>
    %c0_81 = arith.constant 0 : index
    %c0_82 = arith.constant 0 : index
    %c0_83 = arith.constant 0 : index
    %288 = vector.load %arg10[%c0_81, %c0_82, %c0_83] : memref<1x1x512xf32, #tpu.memory_space<vmem>>, vector<1x1x512xf32>
    %289 = vector.shape_cast %288 : vector<1x1x512xf32> to vector<1x512xf32>
    %cst_84 = arith.constant dense<0.000000e+00> : vector<16xf32>
    %290 = vector.multi_reduction <add>, %285, %cst_84 [1] : vector<16x512xf32> to vector<16xf32>
    %291 = vector.shape_cast %290 : vector<16xf32> to vector<16x1xf32>
    %cst_85 = arith.constant 5.120000e+02 : f32
    %292 = vector.broadcast %cst_85 : f32 to vector<16x1xf32>
    %293 = arith.divf %291, %292 : vector<16x1xf32>
    %294 = vector.broadcast %293 : vector<16x1xf32> to vector<16x512xf32>
    %295 = arith.subf %285, %294 : vector<16x512xf32>
    %296 = arith.mulf %295, %295 : vector<16x512xf32>
    %cst_86 = arith.constant dense<0.000000e+00> : vector<16xf32>
    %297 = vector.multi_reduction <add>, %296, %cst_86 [1] : vector<16x512xf32> to vector<16xf32>
    %298 = vector.shape_cast %297 : vector<16xf32> to vector<16x1xf32>
    %cst_87 = arith.constant 5.120000e+02 : f32
    %299 = vector.broadcast %cst_87 : f32 to vector<16x1xf32>
    %300 = arith.divf %298, %299 : vector<16x1xf32>
    %cst_88 = arith.constant 9.99999974E-6 : f32
    %301 = vector.broadcast %cst_88 : f32 to vector<16x1xf32>
    %302 = arith.addf %300, %301 : vector<16x1xf32>
    %303 = math.rsqrt %302 : vector<16x1xf32>
    %304 = vector.broadcast %303 : vector<16x1xf32> to vector<16x512xf32>
    %305 = arith.mulf %295, %304 : vector<16x512xf32>
    %306 = vector.broadcast %287 : vector<1x512xf32> to vector<16x512xf32>
    %307 = arith.mulf %305, %306 : vector<16x512xf32>
    %308 = vector.broadcast %289 : vector<1x512xf32> to vector<16x512xf32>
    %309 = arith.addf %307, %308 : vector<16x512xf32>
    %310 = arith.truncf %309 : vector<16x512xf32> to vector<16x512xbf16>
    %c0_89 = arith.constant 0 : index
    %c0_90 = arith.constant 0 : index
    %c0_91 = arith.constant 0 : index
    %311 = vector.load %arg11[%c0_89, %c0_90, %c0_91] : memref<1x512x512xbf16, #tpu.memory_space<vmem>>, vector<1x512x512xbf16>
    %312 = vector.shape_cast %311 : vector<1x512x512xbf16> to vector<512x512xbf16>
    %cst_92 = arith.constant dense<0.000000e+00> : vector<16x512xf32>
    %313 = tpu.matmul %310, %312, %cst_92 {dimension_numbers = #tpu.dot_dimension_numbers<[1], [0], [0], [1], [0, 0, 1, 1], [], []>} : vector<16x512xbf16>, vector<512x512xbf16>, vector<16x512xf32> -> vector<16x512xf32>
    %c0_93 = arith.constant 0 : index
    %c0_94 = arith.constant 0 : index
    %c0_95 = arith.constant 0 : index
    %314 = vector.load %arg12[%c0_93, %c0_94, %c0_95] : memref<1x1x512xf32, #tpu.memory_space<vmem>>, vector<1x1x512xf32>
    %315 = vector.shape_cast %314 : vector<1x1x512xf32> to vector<1x512xf32>
    %316 = vector.broadcast %315 : vector<1x512xf32> to vector<16x512xf32>
    %317 = arith.addf %313, %316 : vector<16x512xf32>
    %cst_96 = arith.constant 0.000000e+00 : f32
    %318 = vector.broadcast %cst_96 : f32 to vector<16x512xf32>
    %319 = arith.maximumf %317, %318 : vector<16x512xf32>
    %320 = arith.truncf %319 : vector<16x512xf32> to vector<16x512xbf16>
    %c0_97 = arith.constant 0 : index
    %c0_98 = arith.constant 0 : index
    %c0_99 = arith.constant 0 : index
    %321 = vector.load %arg13[%c0_97, %c0_98, %c0_99] : memref<1x512x512xbf16, #tpu.memory_space<vmem>>, vector<1x512x512xbf16>
    %322 = vector.shape_cast %321 : vector<1x512x512xbf16> to vector<512x512xbf16>
    %cst_100 = arith.constant dense<0.000000e+00> : vector<16x512xf32>
    %323 = tpu.matmul %320, %322, %cst_100 {dimension_numbers = #tpu.dot_dimension_numbers<[1], [0], [0], [1], [0, 0, 1, 1], [], []>} : vector<16x512xbf16>, vector<512x512xbf16>, vector<16x512xf32> -> vector<16x512xf32>
    %c0_101 = arith.constant 0 : index
    %c0_102 = arith.constant 0 : index
    %c0_103 = arith.constant 0 : index
    %324 = vector.load %arg14[%c0_101, %c0_102, %c0_103] : memref<1x1x512xf32, #tpu.memory_space<vmem>>, vector<1x1x512xf32>
    %325 = vector.shape_cast %324 : vector<1x1x512xf32> to vector<1x512xf32>
    %326 = vector.broadcast %325 : vector<1x512xf32> to vector<16x512xf32>
    %327 = arith.addf %323, %326 : vector<16x512xf32>
    %328 = arith.addf %285, %327 : vector<16x512xf32>
    %329 = vector.shape_cast %328 : vector<16x512xf32> to vector<2x8x512xf32>
    %c0_104 = arith.constant 0 : index
    %c0_105 = arith.constant 0 : index
    %c0_106 = arith.constant 0 : index
    %330 = vector.load %arg15[%c0_104, %c0_105, %c0_106] : memref<2x8x512xf32, #tpu.memory_space<vmem>>, vector<2x8x512xf32>
    tpu.vector_store %arg15[%c0_104, %c0_105, %c0_106], %329 {strides = array<i32>} : memref<2x8x512xf32, #tpu.memory_space<vmem>>, vector<2x8x512xf32>,
    return
  }
  func.func @transform_0(%arg0: i32) -> (i32, i32, i32) {
    %c0_i32 = arith.constant 0 : i32
    %c0_i32_0 = arith.constant 0 : i32
    %c0_i32_1 = arith.constant 0 : i32
    %c0_i32_2 = arith.constant 0 : i32
    return %c0_i32, %c0_i32_0, %c0_i32_1 : i32, i32, i32
  }
  func.func @transform_1(%arg0: i32) -> (i32, i32, i32) {
    %c0_i32 = arith.constant 0 : i32
    %c0_i32_0 = arith.constant 0 : i32
    %c0_i32_1 = arith.constant 0 : i32
    %c0_i32_2 = arith.constant 0 : i32
    return %c0_i32, %c0_i32_0, %c0_i32_1 : i32, i32, i32
  }
  func.func @transform_2(%arg0: i32) -> (i32, i32, i32) {
    %c0_i32 = arith.constant 0 : i32
    %c0_i32_0 = arith.constant 0 : i32
    %c0_i32_1 = arith.constant 0 : i32
    return %arg0, %c0_i32, %c0_i32_0 : i32, i32, i32
  }
  func.func @transform_3(%arg0: i32) -> (i32, i32, i32) {
    %c0_i32 = arith.constant 0 : i32
    %c0_i32_0 = arith.constant 0 : i32
    %c0_i32_1 = arith.constant 0 : i32
    return %arg0, %c0_i32, %c0_i32_0 : i32, i32, i32
  }
  func.func @transform_4(%arg0: i32) -> (i32, i32, i32) {
    %c0_i32 = arith.constant 0 : i32
    %c0_i32_0 = arith.constant 0 : i32
    %c0_i32_1 = arith.constant 0 : i32
    return %arg0, %c0_i32, %c0_i32_0 : i32, i32, i32
  }
  func.func @transform_5(%arg0: i32) -> (i32, i32, i32) {
    %c0_i32 = arith.constant 0 : i32
    %c0_i32_0 = arith.constant 0 : i32
    %c0_i32_1 = arith.constant 0 : i32
    return %arg0, %c0_i32, %c0_i32_0 : i32, i32, i32
  }
  func.func @transform_6(%arg0: i32) -> (i32, i32, i32) {
    %c0_i32 = arith.constant 0 : i32
    %c0_i32_0 = arith.constant 0 : i32
    %c0_i32_1 = arith.constant 0 : i32
    return %arg0, %c0_i32, %c0_i32_0 : i32, i32, i32
  }
  func.func @transform_7(%arg0: i32) -> (i32, i32, i32) {
    %c0_i32 = arith.constant 0 : i32
    %c0_i32_0 = arith.constant 0 : i32
    %c0_i32_1 = arith.constant 0 : i32
    return %arg0, %c0_i32, %c0_i32_0 : i32, i32, i32
  }
  func.func @transform_8(%arg0: i32) -> (i32, i32, i32) {
    %c0_i32 = arith.constant 0 : i32
    %c0_i32_0 = arith.constant 0 : i32
    %c0_i32_1 = arith.constant 0 : i32
    return %arg0, %c0_i32, %c0_i32_0 : i32, i32, i32
  }
  func.func @transform_9(%arg0: i32) -> (i32, i32, i32) {
    %c0_i32 = arith.constant 0 : i32
    %c0_i32_0 = arith.constant 0 : i32
    %c0_i32_1 = arith.constant 0 : i32
    return %arg0, %c0_i32, %c0_i32_0 : i32, i32, i32
  }
  func.func @transform_10(%arg0: i32) -> (i32, i32, i32) {
    %c0_i32 = arith.constant 0 : i32
    %c0_i32_0 = arith.constant 0 : i32
    %c0_i32_1 = arith.constant 0 : i32
    return %arg0, %c0_i32, %c0_i32_0 : i32, i32, i32
  }
  func.func @transform_11(%arg0: i32) -> (i32, i32, i32) {
    %c0_i32 = arith.constant 0 : i32
    %c0_i32_0 = arith.constant 0 : i32
    %c0_i32_1 = arith.constant 0 : i32
    return %arg0, %c0_i32, %c0_i32_0 : i32, i32, i32
  }
  func.func @transform_12(%arg0: i32) -> (i32, i32, i32) {
    %c0_i32 = arith.constant 0 : i32
    %c0_i32_0 = arith.constant 0 : i32
    %c0_i32_1 = arith.constant 0 : i32
    return %arg0, %c0_i32, %c0_i32_0 : i32, i32, i32
  }
  func.func @transform_13(%arg0: i32) -> (i32, i32, i32) {
    %c0_i32 = arith.constant 0 : i32
    %c0_i32_0 = arith.constant 0 : i32
    %c0_i32_1 = arith.constant 0 : i32
    return %arg0, %c0_i32, %c0_i32_0 : i32, i32, i32
  }
  func.func @transform_14(%arg0: i32) -> (i32, i32, i32) {
    %c0_i32 = arith.constant 0 : i32
    %c0_i32_0 = arith.constant 0 : i32
    %c0_i32_1 = arith.constant 0 : i32
    %c0_i32_2 = arith.constant 0 : i32
    return %c0_i32, %c0_i32_0, %c0_i32_1 : i32, i32, i32
  }
}

</mosaic_0001>

<llo_original>
// kernel: tpu_custom_call.1
$region0: #{tpu_custom_call.1}
  #allocation0 [shape = 'u32[]', space=smem, size = 0x4, offset = 0x4, fixed_abs, tag = 'smem constant byte address 0x4 - core index']
  #allocation1 [shape = 'u32[144,128]{1,0:T(1,128)}', space=vmem, size = 0x12000, scoped, tag = 'internal scratch']
  %s0 = inlined_call_operand.hbm [shape: f32[2,8,512], index: 0, kind: input, shape index: {}]
  %s1 = inlined_call_operand.hbm [shape: f32[2,8,8], index: 1, kind: input, shape index: {}]
  %s2 = inlined_call_operand.hbm [shape: f32[4,1,512], index: 2, kind: input, shape index: {}]
  %s3 = inlined_call_operand.hbm [shape: f32[4,1,512], index: 3, kind: input, shape index: {}]
  %s4 = inlined_call_operand.hbm [shape: bf16[4,512,1536], index: 4, kind: input, shape index: {}]
  %s5 = inlined_call_operand.hbm [shape: f32[4,1,1536], index: 5, kind: input, shape index: {}]
  %s6 = inlined_call_operand.hbm [shape: bf16[4,512,512], index: 6, kind: input, shape index: {}]
  %s7 = inlined_call_operand.hbm [shape: f32[4,1,512], index: 7, kind: input, shape index: {}]
  %s8 = inlined_call_operand.hbm [shape: f32[4,1,512], index: 8, kind: input, shape index: {}]
  %s9 = inlined_call_operand.hbm [shape: f32[4,1,512], index: 9, kind: input, shape index: {}]
  %s10 = inlined_call_operand.hbm [shape: bf16[4,512,512], index: 10, kind: input, shape index: {}]
  %s11 = inlined_call_operand.hbm [shape: f32[4,1,512], index: 11, kind: input, shape index: {}]
  %s12 = inlined_call_operand.hbm [shape: bf16[4,512,512], index: 12, kind: input, shape index: {}]
  %s13 = inlined_call_operand.hbm [shape: f32[4,1,512], index: 13, kind: input, shape index: {}]
  %s14 = inlined_call_operand.hbm [shape: f32[2,8,512], index: 14, kind: output, shape index: {}]
  %s15 = sld [smem:[#allocation0]]
  $region149: #{tpu_custom_call.1} parent=0
    _
  %s17 = ssub.s32 1, %s15
  %s18 = scalar_select 0, %s17, %s15
  $region1: #{tpu_custom_call.1} parent=0
    #allocation2 [shape = 'u8[32768]{0}', space=vmem, size = 0x8000, scoped, tag = 'input window, operand 0, single buffered']
    #allocation3 [shape = 's32[2]{0}', space=sflag, size = 0x8, scoped, tag = 'scoped memory for tpu_custom_call.1']
    #allocation4 [shape = 's32[2]{0}', space=sflag, size = 0x8, scoped, tag = 'scoped memory for tpu_custom_call.1']
    #allocation5 [shape = 'u8[8192]{0}', space=vmem, size = 0x2000, scoped, tag = 'input window, operand 1, single buffered']
    #allocation6 [shape = 's32[1]{0}', space=sflag, size = 0x4, scoped, tag = 'scoped memory for tpu_custom_call.1']
    #allocation7 [shape = 'u8[4096]{0}', space=vmem, size = 0x1000, scoped, tag = 'input window, operand 2']
    #allocation8 [shape = 'u8[4096]{0}', space=vmem, size = 0x1000, scoped, tag = 'input window, operand 3']
    #allocation9 [shape = 'u8[3145728]{0}', space=vmem, size = 0x300000, scoped, tag = 'input window, operand 4']
    #allocation10 [shape = 'u8[12288]{0}', space=vmem, size = 0x3000, scoped, tag = 'input window, operand 5']
    #allocation11 [shape = 'u8[1048576]{0}', space=vmem, size = 0x100000, scoped, tag = 'input window, operand 6']
    #allocation12 [shape = 'u8[4096]{0}', space=vmem, size = 0x1000, scoped, tag = 'input window, operand 7']
    #allocation13 [shape = 'u8[4096]{0}', space=vmem, size = 0x1000, scoped, tag = 'input window, operand 8']
    #allocation14 [shape = 'u8[4096]{0}', space=vmem, size = 0x1000, scoped, tag = 'input window, operand 9']
    #allocation15 [shape = 'u8[1048576]{0}', space=vmem, size = 0x100000, scoped, tag = 'input window, operand 10']
    #allocation16 [shape = 'u8[4096]{0}', space=vmem, size = 0x1000, scoped, tag = 'input window, operand 11']
    #allocation17 [shape = 'u8[1048576]{0}', space=vmem, size = 0x100000, scoped, tag = 'input window, operand 12']
    #allocation18 [shape = 'u8[4096]{0}', space=vmem, size = 0x1000, scoped, tag = 'input window, operand 13']
    #allocation19 [shape = 'u8[32768]{0}', space=vmem, size = 0x8000, scoped, tag = 'output window, operand 0, single buffered']
    %19 = vsyncpa [#allocation3], 0
    %20 = vsyncpa [#allocation6], 0
    %21 = vsyncpa [#allocation4], 0
    loop: start=0, step=1, limit=6
    $region2: #{tpu_custom_call.1} parent=1 // loop_pre_header
      _
    $region3: #{tpu_custom_call.1} parent=1 // loop_header
      %s23 = sphi 0, %s27
      %p24 = scmp.ge.s32.totalorder %s23, 6
      %s31 = sphi 0, %s31
      %s33 = sphi 0, %s31
      %s34 = sphi 0, %s33
      %s48 = sphi 0, %s34
      %s52 = sphi 0, %s52
      %s54 = sphi 0, %s52
      %s55 = sphi 0, %s54
      %s69 = sphi 0, %s55
      %s75 = sphi 0, %s77
      %s78 = sphi 0, %s75
      %s79 = sphi 0, %s78
      %s95 = sphi 0, %s79
      %s101 = sphi 0, %s103
      %s104 = sphi 0, %s101
      %s105 = sphi 0, %s104
      %s121 = sphi 0, %s105
      %s127 = sphi 0, %s129
      %s130 = sphi 0, %s127
      %s131 = sphi 0, %s130
      %s147 = sphi 0, %s131
      %s153 = sphi 0, %s155
      %s156 = sphi 0, %s153
      %s157 = sphi 0, %s156
      %s173 = sphi 0, %s157
      %s179 = sphi 0, %s181
      %s182 = sphi 0, %s179
      %s183 = sphi 0, %s182
      %s199 = sphi 0, %s183
      %s205 = sphi 0, %s207
      %s208 = sphi 0, %s205
      %s209 = sphi 0, %s208
      %s225 = sphi 0, %s209
      %s231 = sphi 0, %s233
      %s234 = sphi 0, %s231
      %s235 = sphi 0, %s234
      %s251 = sphi 0, %s235
      %s257 = sphi 0, %s259
      %s260 = sphi 0, %s257
      %s261 = sphi 0, %s260
      %s277 = sphi 0, %s261
      %s283 = sphi 0, %s285
      %s286 = sphi 0, %s283
      %s287 = sphi 0, %s286
      %s303 = sphi 0, %s287
      %s309 = sphi 0, %s311
      %s312 = sphi 0, %s309
      %s313 = sphi 0, %s312
      %s329 = sphi 0, %s313
      %s335 = sphi 0, %s337
      %s338 = sphi 0, %s335
      %s339 = sphi 0, %s338
      %s355 = sphi 0, %s339
      %s361 = sphi 0, %s363
      %s364 = sphi 0, %s361
      %s365 = sphi 0, %s364
      %s381 = sphi 0, %s365
      %s385 = sphi 0, %s385
      %s387 = sphi 0, %s385
      %s388 = sphi 0, %s387
      %s402 = sphi 0, %s388
    $region4: #{tpu_custom_call.1} parent=1 // loop_header_branch
      %26 = sbr.rel (%p24) target = $region8
    $region5: #{tpu_custom_call.1} parent=1 // loop_body
      %s28 = ssub.s32 %s23, 1
      %s29 = ssub.s32 %s23, 2
      %s30 = sadd.s32 %s23, 1
      %s32 = sadd.s32 %s31, 1
      %p35 = scmp.eq.s32.totalorder %s23, 3
      %p36 = scmp.ne.s32.totalorder %s31, %s33
      %p37 = scmp.eq.s32.totalorder %s23, 0
      %p38 = por %p36, %p37
      %p39 = scmp.ne.s32.totalorder %s31, %s33
      %p40 = scmp.eq.s32.totalorder %s28, 3
      %p41 = por %p39, %p40
      %p42 = scmp.ne.s32.totalorder %s33, %s34
      %p43 = scmp.eq.s32.totalorder %s28, 0
      %p44 = por %p42, %p43
      %p45 = scmp.ne.s32.totalorder %s33, %s34
      %p46 = scmp.eq.s32.totalorder %s29, 3
      %p47 = por %p45, %p46
      %p49 = scmp.ne.s32.totalorder %s34, %s48
      %p50 = scmp.eq.s32.totalorder %s29, 0
      %p51 = por %p49, %p50
      %s53 = sadd.s32 %s52, 1
      %p56 = scmp.eq.s32.totalorder %s23, 3
      %p57 = scmp.ne.s32.totalorder %s52, %s54
      %p58 = scmp.eq.s32.totalorder %s23, 0
      %p59 = por %p57, %p58
      %p60 = scmp.ne.s32.totalorder %s52, %s54
      %p61 = scmp.eq.s32.totalorder %s28, 3
      %p62 = por %p60, %p61
      %p63 = scmp.ne.s32.totalorder %s54, %s55
      %p64 = scmp.eq.s32.totalorder %s28, 0
      %p65 = por %p63, %p64
      %p66 = scmp.ne.s32.totalorder %s54, %s55
      %p67 = scmp.eq.s32.totalorder %s29, 3
      %p68 = por %p66, %p67
      %p70 = scmp.ne.s32.totalorder %s55, %s69
      %p71 = scmp.eq.s32.totalorder %s29, 0
      %p72 = por %p70, %p71
      %s73 = ssub.s32 %s23, %s30
      %p74 = scmp.eq.s32.totalorder %s73, 0
      %s76 = sadd.s32 %s75, 1
      %s77 = scalar_select %p74, %s75, %s76
      %p80 = pneg %p74
      %p81 = scmp.eq.s32.totalorder %s23, 3
      %p82 = por %p80, %p81
      %p83 = scmp.ne.s32.totalorder %s75, %s78
      %p84 = scmp.eq.s32.totalorder %s23, 0
      %p85 = por %p83, %p84
      %p86 = scmp.ne.s32.totalorder %s75, %s78
      %p87 = scmp.eq.s32.totalorder %s28, 3
      %p88 = por %p86, %p87
      %p89 = scmp.ne.s32.totalorder %s78, %s79
      %p90 = scmp.eq.s32.totalorder %s28, 0
      %p91 = por %p89, %p90
      %p92 = scmp.ne.s32.totalorder %s78, %s79
      %p93 = scmp.eq.s32.totalorder %s29, 3
      %p94 = por %p92, %p93
      %p96 = scmp.ne.s32.totalorder %s79, %s95
      %p97 = scmp.eq.s32.totalorder %s29, 0
      %p98 = por %p96, %p97
      %s99 = ssub.s32 %s23, %s30
      %p100 = scmp.eq.s32.totalorder %s99, 0
      %s102 = sadd.s32 %s101, 1
      %s103 = scalar_select %p100, %s101, %s102
      %p106 = pneg %p100
      %p107 = scmp.eq.s32.totalorder %s23, 3
      %p108 = por %p106, %p107
      %p109 = scmp.ne.s32.totalorder %s101, %s104
      %p110 = scmp.eq.s32.totalorder %s23, 0
      %p111 = por %p109, %p110
      %p112 = scmp.ne.s32.totalorder %s101, %s104
      %p113 = scmp.eq.s32.totalorder %s28, 3
      %p114 = por %p112, %p113
      %p115 = scmp.ne.s32.totalorder %s104, %s105
      %p116 = scmp.eq.s32.totalorder %s28, 0
      %p117 = por %p115, %p116
      %p118 = scmp.ne.s32.totalorder %s104, %s105
      %p119 = scmp.eq.s32.totalorder %s29, 3
      %p120 = por %p118, %p119
      %p122 = scmp.ne.s32.totalorder %s105, %s121
      %p123 = scmp.eq.s32.totalorder %s29, 0
      %p124 = por %p122, %p123
      %s125 = ssub.s32 %s23, %s30
      %p126 = scmp.eq.s32.totalorder %s125, 0
      %s128 = sadd.s32 %s127, 1
      %s129 = scalar_select %p126, %s127, %s128
      %p132 = pneg %p126
      %p133 = scmp.eq.s32.totalorder %s23, 3
      %p134 = por %p132, %p133
      %p135 = scmp.ne.s32.totalorder %s127, %s130
      %p136 = scmp.eq.s32.totalorder %s23, 0
      %p137 = por %p135, %p136
      %p138 = scmp.ne.s32.totalorder %s127, %s130
      %p139 = scmp.eq.s32.totalorder %s28, 3
      %p140 = por %p138, %p139
      %p141 = scmp.ne.s32.totalorder %s130, %s131
      %p142 = scmp.eq.s32.totalorder %s28, 0
      %p143 = por %p141, %p142
      %p144 = scmp.ne.s32.totalorder %s130, %s131
      %p145 = scmp.eq.s32.totalorder %s29, 3
      %p146 = por %p144, %p145
      %p148 = scmp.ne.s32.totalorder %s131, %s147
      %p149 = scmp.eq.s32.totalorder %s29, 0
      %p150 = por %p148, %p149
      %s151 = ssub.s32 %s23, %s30
      %p152 = scmp.eq.s32.totalorder %s151, 0
      %s154 = sadd.s32 %s153, 1
      %s155 = scalar_select %p152, %s153, %s154
      %p158 = pneg %p152
      %p159 = scmp.eq.s32.totalorder %s23, 3
      %p160 = por %p158, %p159
      %p161 = scmp.ne.s32.totalorder %s153, %s156
      %p162 = scmp.eq.s32.totalorder %s23, 0
      %p163 = por %p161, %p162
      %p164 = scmp.ne.s32.totalorder %s153, %s156
      %p165 = scmp.eq.s32.totalorder %s28, 3
      %p166 = por %p164, %p165
      %p167 = scmp.ne.s32.totalorder %s156, %s157
      %p168 = scmp.eq.s32.totalorder %s28, 0
      %p169 = por %p167, %p168
      %p170 = scmp.ne.s32.totalorder %s156, %s157
      %p171 = scmp.eq.s32.totalorder %s29, 3
      %p172 = por %p170, %p171
      %p174 = scmp.ne.s32.totalorder %s157, %s173
      %p175 = scmp.eq.s32.totalorder %s29, 0
      %p176 = por %p174, %p175
      %s177 = ssub.s32 %s23, %s30
      %p178 = scmp.eq.s32.totalorder %s177, 0
      %s180 = sadd.s32 %s179, 1
      %s181 = scalar_select %p178, %s179, %s180
      %p184 = pneg %p178
      %p185 = scmp.eq.s32.totalorder %s23, 3
      %p186 = por %p184, %p185
      %p187 = scmp.ne.s32.totalorder %s179, %s182
      %p188 = scmp.eq.s32.totalorder %s23, 0
      %p189 = por %p187, %p188
      %p190 = scmp.ne.s32.totalorder %s179, %s182
      %p191 = scmp.eq.s32.totalorder %s28, 3
      %p192 = por %p190, %p191
      %p193 = scmp.ne.s32.totalorder %s182, %s183
      %p194 = scmp.eq.s32.totalorder %s28, 0
      %p195 = por %p193, %p194
      %p196 = scmp.ne.s32.totalorder %s182, %s183
      %p197 = scmp.eq.s32.totalorder %s29, 3
      %p198 = por %p196, %p197
      %p200 = scmp.ne.s32.totalorder %s183, %s199
      %p201 = scmp.eq.s32.totalorder %s29, 0
      %p202 = por %p200, %p201
      %s203 = ssub.s32 %s23, %s30
      %p204 = scmp.eq.s32.totalorder %s203, 0
      %s206 = sadd.s32 %s205, 1
      %s207 = scalar_select %p204, %s205, %s206
      %p210 = pneg %p204
      %p211 = scmp.eq.s32.totalorder %s23, 3
      %p212 = por %p210, %p211
      %p213 = scmp.ne.s32.totalorder %s205, %s208
      %p214 = scmp.eq.s32.totalorder %s23, 0
      %p215 = por %p213, %p214
      %p216 = scmp.ne.s32.totalorder %s205, %s208
      %p217 = scmp.eq.s32.totalorder %s28, 3
      %p218 = por %p216, %p217
      %p219 = scmp.ne.s32.totalorder %s208, %s209
      %p220 = scmp.eq.s32.totalorder %s28, 0
      %p221 = por %p219, %p220
      %p222 = scmp.ne.s32.totalorder %s208, %s209
      %p223 = scmp.eq.s32.totalorder %s29, 3
      %p224 = por %p222, %p223
      %p226 = scmp.ne.s32.totalorder %s209, %s225
      %p227 = scmp.eq.s32.totalorder %s29, 0
      %p228 = por %p226, %p227
      %s229 = ssub.s32 %s23, %s30
      %p230 = scmp.eq.s32.totalorder %s229, 0
      %s232 = sadd.s32 %s231, 1
      %s233 = scalar_select %p230, %s231, %s232
      %p236 = pneg %p230
      %p237 = scmp.eq.s32.totalorder %s23, 3
      %p238 = por %p236, %p237
      %p239 = scmp.ne.s32.totalorder %s231, %s234
      %p240 = scmp.eq.s32.totalorder %s23, 0
      %p241 = por %p239, %p240
      %p242 = scmp.ne.s32.totalorder %s231, %s234
      %p243 = scmp.eq.s32.totalorder %s28, 3
      %p244 = por %p242, %p243
      %p245 = scmp.ne.s32.totalorder %s234, %s235
      %p246 = scmp.eq.s32.totalorder %s28, 0
      %p247 = por %p245, %p246
      %p248 = scmp.ne.s32.totalorder %s234, %s235
      %p249 = scmp.eq.s32.totalorder %s29, 3
      %p250 = por %p248, %p249
      %p252 = scmp.ne.s32.totalorder %s235, %s251
      %p253 = scmp.eq.s32.totalorder %s29, 0
      %p254 = por %p252, %p253
      %s255 = ssub.s32 %s23, %s30
      %p256 = scmp.eq.s32.totalorder %s255, 0
      %s258 = sadd.s32 %s257, 1
      %s259 = scalar_select %p256, %s257, %s258
      %p262 = pneg %p256
      %p263 = scmp.eq.s32.totalorder %s23, 3
      %p264 = por %p262, %p263
      %p265 = scmp.ne.s32.totalorder %s257, %s260
      %p266 = scmp.eq.s32.totalorder %s23, 0
      %p267 = por %p265, %p266
      %p268 = scmp.ne.s32.totalorder %s257, %s260
      %p269 = scmp.eq.s32.totalorder %s28, 3
      %p270 = por %p268, %p269
      %p271 = scmp.ne.s32.totalorder %s260, %s261
      %p272 = scmp.eq.s32.totalorder %s28, 0
      %p273 = por %p271, %p272
      %p274 = scmp.ne.s32.totalorder %s260, %s261
      %p275 = scmp.eq.s32.totalorder %s29, 3
      %p276 = por %p274, %p275
      %p278 = scmp.ne.s32.totalorder %s261, %s277
      %p279 = scmp.eq.s32.totalorder %s29, 0
      %p280 = por %p278, %p279
      %s281 = ssub.s32 %s23, %s30
      %p282 = scmp.eq.s32.totalorder %s281, 0
      %s284 = sadd.s32 %s283, 1
      %s285 = scalar_select %p282, %s283, %s284
      %p288 = pneg %p282
      %p289 = scmp.eq.s32.totalorder %s23, 3
      %p290 = por %p288, %p289
      %p291 = scmp.ne.s32.totalorder %s283, %s286
      %p292 = scmp.eq.s32.totalorder %s23, 0
      %p293 = por %p291, %p292
      %p294 = scmp.ne.s32.totalorder %s283, %s286
      %p295 = scmp.eq.s32.totalorder %s28, 3
      %p296 = por %p294, %p295
      %p297 = scmp.ne.s32.totalorder %s286, %s287
      %p298 = scmp.eq.s32.totalorder %s28, 0
      %p299 = por %p297, %p298
      %p300 = scmp.ne.s32.totalorder %s286, %s287
      %p301 = scmp.eq.s32.totalorder %s29, 3
      %p302 = por %p300, %p301
      %p304 = scmp.ne.s32.totalorder %s287, %s303
      %p305 = scmp.eq.s32.totalorder %s29, 0
      %p306 = por %p304, %p305
      %s307 = ssub.s32 %s23, %s30
      %p308 = scmp.eq.s32.totalorder %s307, 0
      %s310 = sadd.s32 %s309, 1
      %s311 = scalar_select %p308, %s309, %s310
      %p314 = pneg %p308
      %p315 = scmp.eq.s32.totalorder %s23, 3
      %p316 = por %p314, %p315
      %p317 = scmp.ne.s32.totalorder %s309, %s312
      %p318 = scmp.eq.s32.totalorder %s23, 0
      %p319 = por %p317, %p318
      %p320 = scmp.ne.s32.totalorder %s309, %s312
      %p321 = scmp.eq.s32.totalorder %s28, 3
      %p322 = por %p320, %p321
      %p323 = scmp.ne.s32.totalorder %s312, %s313
      %p324 = scmp.eq.s32.totalorder %s28, 0
      %p325 = por %p323, %p324
      %p326 = scmp.ne.s32.totalorder %s312, %s313
      %p327 = scmp.eq.s32.totalorder %s29, 3
      %p328 = por %p326, %p327
      %p330 = scmp.ne.s32.totalorder %s313, %s329
      %p331 = scmp.eq.s32.totalorder %s29, 0
      %p332 = por %p330, %p331
      %s333 = ssub.s32 %s23, %s30
      %p334 = scmp.eq.s32.totalorder %s333, 0
      %s336 = sadd.s32 %s335, 1
      %s337 = scalar_select %p334, %s335, %s336
      %p340 = pneg %p334
      %p341 = scmp.eq.s32.totalorder %s23, 3
      %p342 = por %p340, %p341
      %p343 = scmp.ne.s32.totalorder %s335, %s338
      %p344 = scmp.eq.s32.totalorder %s23, 0
      %p345 = por %p343, %p344
      %p346 = scmp.ne.s32.totalorder %s335, %s338
      %p347 = scmp.eq.s32.totalorder %s28, 3
      %p348 = por %p346, %p347
      %p349 = scmp.ne.s32.totalorder %s338, %s339
      %p350 = scmp.eq.s32.totalorder %s28, 0
      %p351 = por %p349, %p350
      %p352 = scmp.ne.s32.totalorder %s338, %s339
      %p353 = scmp.eq.s32.totalorder %s29, 3
      %p354 = por %p352, %p353
      %p356 = scmp.ne.s32.totalorder %s339, %s355
      %p357 = scmp.eq.s32.totalorder %s29, 0
      %p358 = por %p356, %p357
      %s359 = ssub.s32 %s23, %s30
      %p360 = scmp.eq.s32.totalorder %s359, 0
      %s362 = sadd.s32 %s361, 1
      %s363 = scalar_select %p360, %s361, %s362
      %p366 = pneg %p360
      %p367 = scmp.eq.s32.totalorder %s23, 3
      %p368 = por %p366, %p367
      %p369 = scmp.ne.s32.totalorder %s361, %s364
      %p370 = scmp.eq.s32.totalorder %s23, 0
      %p371 = por %p369, %p370
      %p372 = scmp.ne.s32.totalorder %s361, %s364
      %p373 = scmp.eq.s32.totalorder %s28, 3
      %p374 = por %p372, %p373
      %p375 = scmp.ne.s32.totalorder %s364, %s365
      %p376 = scmp.eq.s32.totalorder %s28, 0
      %p377 = por %p375, %p376
      %p378 = scmp.ne.s32.totalorder %s364, %s365
      %p379 = scmp.eq.s32.totalorder %s29, 3
      %p380 = por %p378, %p379
      %p382 = scmp.ne.s32.totalorder %s365, %s381
      %p383 = scmp.eq.s32.totalorder %s29, 0
      %p384 = por %p382, %p383
      %s386 = sadd.s32 %s385, 1
      %p389 = scmp.eq.s32.totalorder %s23, 3
      %p390 = scmp.ne.s32.totalorder %s385, %s387
      %p391 = scmp.eq.s32.totalorder %s23, 0
      %p392 = por %p390, %p391
      %p393 = scmp.ne.s32.totalorder %s385, %s387
      %p394 = scmp.eq.s32.totalorder %s28, 3
      %p395 = por %p393, %p394
      %p396 = scmp.ne.s32.totalorder %s387, %s388
      %p397 = scmp.eq.s32.totalorder %s28, 0
      %p398 = por %p396, %p397
      %p399 = scmp.ne.s32.totalorder %s387, %s388
      %p400 = scmp.eq.s32.totalorder %s29, 3
      %p401 = por %p399, %p400
      %p403 = scmp.ne.s32.totalorder %s388, %s402
      %p404 = scmp.eq.s32.totalorder %s29, 0
      %p405 = por %p403, %p404
      %p406 = scmp.le.s32.totalorder 1, %s23
      %p407 = scmp.lt.s32.totalorder %s23, 5
      %p408 = pnand %p406, %p407
      %p409 = pneg %p408
      // Predicated region
      $region9: #{tpu_custom_call.1} parent=5 // pred_check
        _
      $region10: #{tpu_custom_call.1} parent=5 // pred_check_branch
        %411 = sbr.rel (%p408) target = $region12
      $region11: #{tpu_custom_call.1} parent=5 // pred_region
        %s412 = ssub.s32 %s23, 1
        // Predicated region
        $region13: #{tpu_custom_call.1} parent=11 // pred_check
          %p413 = pneg %p44
        $region14: #{tpu_custom_call.1} parent=11 // pred_check_branch
          %415 = sbr.rel (%p413) target = $region16
        $region15: #{tpu_custom_call.1} parent=11 // pred_region
          %s417 = ssub.s32 1024, 1024
          %418 = vsyncadd [#allocation3], %s417
          %s419 = sshll.u32 [#allocation2], 4
          %s420 = int_to_ptr.vmem [resolvable:$true] %s419
          %425 = dma.hbm_to_vmem [thread:$0]  %s0, 1024, %s420, [#allocation3], 512, 512, 32
        $region16: #{tpu_custom_call.1} parent=11 // pred_fallthru
          _
        // Predicated region
        $region17: #{tpu_custom_call.1} parent=11 // pred_check
          %p426 = pneg %p65
        $region18: #{tpu_custom_call.1} parent=11 // pred_check_branch
          %428 = sbr.rel (%p426) target = $region20
        $region19: #{tpu_custom_call.1} parent=11 // pred_region
          %s430 = ssub.s32 256, 256
          %431 = vsyncadd [#allocation6], %s430
          %s432 = sshll.u32 [#allocation5], 4
          %s433 = int_to_ptr.vmem [resolvable:$true] %s432
          %438 = dma.hbm_to_vmem [thread:$0]  %s1, 256, %s433, [#allocation6], 128, 128, 8
        $region20: #{tpu_custom_call.1} parent=11 // pred_fallthru
          _
      $region12: #{tpu_custom_call.1} parent=5 // pred_fallthru
        _
      %p439 = scmp.lt.s32.totalorder %s23, 4
      // Predicated region
      $region21: #{tpu_custom_call.1} parent=5 // pred_check
        %p440 = pneg %p439
      $region22: #{tpu_custom_call.1} parent=5 // pred_check_branch
        %442 = sbr.rel (%p440) target = $region24
      $region23: #{tpu_custom_call.1} parent=5 // pred_region
        // Predicated region
        $region25: #{tpu_custom_call.1} parent=23 // pred_check
          %p443 = pneg %p85
        $region26: #{tpu_custom_call.1} parent=23 // pred_check_branch
          %445 = sbr.rel (%p443) target = $region28
        $region27: #{tpu_custom_call.1} parent=23 // pred_region
          %s446 = sand.u32 %s23, 1
          %s447 = scalar_lea.sflag [#allocation3], %s446
          %s448 = sand.u32 %s75, 1
          %s449 = smul.addr %s448, 4
          %s450 = scalar_lea.vmem [#allocation7], %s449
          %s452 = ssub.s32 64, 64
          %453 = vsyncadd %s447, %s452
          %s454 = smul.addr %s23, 4
          %s455 = smul.addr %s454, 16
          %s456 = scalar_lea.hbm %s2, %s455
          %s458 = sshll.u32 %s450, 4
          %s459 = int_to_ptr.vmem [resolvable:$true] %s458
          %461 = dma.hbm_to_vmem [thread:$0]  %s456, 64, %s459, %s447
        $region28: #{tpu_custom_call.1} parent=23 // pred_fallthru
          _
        // Predicated region
        $region29: #{tpu_custom_call.1} parent=23 // pred_check
          %p462 = pneg %p111
        $region30: #{tpu_custom_call.1} parent=23 // pred_check_branch
          %464 = sbr.rel (%p462) target = $region32
        $region31: #{tpu_custom_call.1} parent=23 // pred_region
          %s465 = sand.u32 %s23, 1
          %s466 = scalar_lea.sflag [#allocation3], %s465
          %s467 = sand.u32 %s101, 1
          %s468 = smul.addr %s467, 4
          %s469 = scalar_lea.vmem [#allocation8], %s468
          %s471 = ssub.s32 64, 64
          %472 = vsyncadd %s466, %s471
          %s473 = smul.addr %s23, 4
          %s474 = smul.addr %s473, 16
          %s475 = scalar_lea.hbm %s3, %s474
          %s477 = sshll.u32 %s469, 4
          %s478 = int_to_ptr.vmem [resolvable:$true] %s477
          %480 = dma.hbm_to_vmem [thread:$0]  %s475, 64, %s478, %s466
        $region32: #{tpu_custom_call.1} parent=23 // pred_fallthru
          _
        // Predicated region
        $region33: #{tpu_custom_call.1} parent=23 // pred_check
          %p481 = pneg %p137
        $region34: #{tpu_custom_call.1} parent=23 // pred_check_branch
          %483 = sbr.rel (%p481) target = $region36
        $region35: #{tpu_custom_call.1} parent=23 // pred_region
          %s484 = sand.u32 %s23, 1
          %s485 = scalar_lea.sflag [#allocation3], %s484
          %s486 = sand.u32 %s127, 1
          %s487 = smul.addr %s486, 3072
          %s488 = scalar_lea.vmem [#allocation9], %s487
          %s490 = ssub.s32 49152, 49152
          %491 = vsyncadd %s485, %s490
          %s492 = smul.addr %s23, 768
          %s493 = smul.addr %s492, 64
          %s494 = scalar_lea.hbm %s4, %s493
          %s495 = sshll.u32 %s488, 4
          %s496 = int_to_ptr.vmem [resolvable:$true] %s495
          %501 = dma.hbm_to_vmem [thread:$0]  %s494, 49152, %s496, %s485, 768, 768, 48
        $region36: #{tpu_custom_call.1} parent=23 // pred_fallthru
          _
        // Predicated region
        $region37: #{tpu_custom_call.1} parent=23 // pred_check
          %p502 = pneg %p163
        $region38: #{tpu_custom_call.1} parent=23 // pred_check_branch
          %504 = sbr.rel (%p502) target = $region40
        $region39: #{tpu_custom_call.1} parent=23 // pred_region
          %s505 = sand.u32 %s23, 1
          %s506 = scalar_lea.sflag [#allocation3], %s505
          %s507 = sand.u32 %s153, 1
          %s508 = smul.addr %s507, 12
          %s509 = scalar_lea.vmem [#allocation10], %s508
          %s511 = ssub.s32 192, 192
          %512 = vsyncadd %s506, %s511
          %s513 = smul.addr %s23, 12
          %s514 = smul.addr %s513, 16
          %s515 = scalar_lea.hbm %s5, %s514
          %s517 = sshll.u32 %s509, 4
          %s518 = int_to_ptr.vmem [resolvable:$true] %s517
          %520 = dma.hbm_to_vmem [thread:$0]  %s515, 192, %s518, %s506
        $region40: #{tpu_custom_call.1} parent=23 // pred_fallthru
          _
        // Predicated region
        $region41: #{tpu_custom_call.1} parent=23 // pred_check
          %p521 = pneg %p189
        $region42: #{tpu_custom_call.1} parent=23 // pred_check_branch
          %523 = sbr.rel (%p521) target = $region44
        $region43: #{tpu_custom_call.1} parent=23 // pred_region
          %s524 = sand.u32 %s23, 1
          %s525 = scalar_lea.sflag [#allocation3], %s524
          %s526 = sand.u32 %s179, 1
          %s527 = smul.addr %s526, 1024
          %s528 = scalar_lea.vmem [#allocation11], %s527
          %s530 = ssub.s32 16384, 16384
          %531 = vsyncadd %s525, %s530
          %s532 = smul.addr %s23, 256
          %s533 = smul.addr %s532, 64
          %s534 = scalar_lea.hbm %s6, %s533
          %s535 = sshll.u32 %s528, 4
          %s536 = int_to_ptr.vmem [resolvable:$true] %s535
          %541 = dma.hbm_to_vmem [thread:$0]  %s534, 16384, %s536, %s525, 256, 256, 16
        $region44: #{tpu_custom_call.1} parent=23 // pred_fallthru
          _
        // Predicated region
        $region45: #{tpu_custom_call.1} parent=23 // pred_check
          %p542 = pneg %p215
        $region46: #{tpu_custom_call.1} parent=23 // pred_check_branch
          %544 = sbr.rel (%p542) target = $region48
        $region47: #{tpu_custom_call.1} parent=23 // pred_region
          %s545 = sand.u32 %s23, 1
          %s546 = scalar_lea.sflag [#allocation3], %s545
          %s547 = sand.u32 %s205, 1
          %s548 = smul.addr %s547, 4
          %s549 = scalar_lea.vmem [#allocation12], %s548
          %s551 = ssub.s32 64, 64
          %552 = vsyncadd %s546, %s551
          %s553 = smul.addr %s23, 4
          %s554 = smul.addr %s553, 16
          %s555 = scalar_lea.hbm %s7, %s554
          %s557 = sshll.u32 %s549, 4
          %s558 = int_to_ptr.vmem [resolvable:$true] %s557
          %560 = dma.hbm_to_vmem [thread:$0]  %s555, 64, %s558, %s546
        $region48: #{tpu_custom_call.1} parent=23 // pred_fallthru
          _
        // Predicated region
        $region49: #{tpu_custom_call.1} parent=23 // pred_check
          %p561 = pneg %p241
        $region50: #{tpu_custom_call.1} parent=23 // pred_check_branch
          %563 = sbr.rel (%p561) target = $region52
        $region51: #{tpu_custom_call.1} parent=23 // pred_region
          %s564 = sand.u32 %s23, 1
          %s565 = scalar_lea.sflag [#allocation3], %s564
          %s566 = sand.u32 %s231, 1
          %s567 = smul.addr %s566, 4
          %s568 = scalar_lea.vmem [#allocation13], %s567
          %s570 = ssub.s32 64, 64
          %571 = vsyncadd %s565, %s570
          %s572 = smul.addr %s23, 4
          %s573 = smul.addr %s572, 16
          %s574 = scalar_lea.hbm %s8, %s573
          %s576 = sshll.u32 %s568, 4
          %s577 = int_to_ptr.vmem [resolvable:$true] %s576
          %579 = dma.hbm_to_vmem [thread:$0]  %s574, 64, %s577, %s565
        $region52: #{tpu_custom_call.1} parent=23 // pred_fallthru
          _
        // Predicated region
        $region53: #{tpu_custom_call.1} parent=23 // pred_check
          %p580 = pneg %p267
        $region54: #{tpu_custom_call.1} parent=23 // pred_check_branch
          %582 = sbr.rel (%p580) target = $region56
        $region55: #{tpu_custom_call.1} parent=23 // pred_region
          %s583 = sand.u32 %s23, 1
          %s584 = scalar_lea.sflag [#allocation3], %s583
          %s585 = sand.u32 %s257, 1
          %s586 = smul.addr %s585, 4
          %s587 = scalar_lea.vmem [#allocation14], %s586
          %s589 = ssub.s32 64, 64
          %590 = vsyncadd %s584, %s589
          %s591 = smul.addr %s23, 4
          %s592 = smul.addr %s591, 16
          %s593 = scalar_lea.hbm %s9, %s592
          %s595 = sshll.u32 %s587, 4
          %s596 = int_to_ptr.vmem [resolvable:$true] %s595
          %598 = dma.hbm_to_vmem [thread:$0]  %s593, 64, %s596, %s584
        $region56: #{tpu_custom_call.1} parent=23 // pred_fallthru
          _
        // Predicated region
        $region57: #{tpu_custom_call.1} parent=23 // pred_check
          %p599 = pneg %p293
        $region58: #{tpu_custom_call.1} parent=23 // pred_check_branch
          %601 = sbr.rel (%p599) target = $region60
        $region59: #{tpu_custom_call.1} parent=23 // pred_region
          %s602 = sand.u32 %s23, 1
          %s603 = scalar_lea.sflag [#allocation3], %s602
          %s604 = sand.u32 %s283, 1
          %s605 = smul.addr %s604, 1024
          %s606 = scalar_lea.vmem [#allocation15], %s605
          %s608 = ssub.s32 16384, 16384
          %609 = vsyncadd %s603, %s608
          %s610 = smul.addr %s23, 256
          %s611 = smul.addr %s610, 64
          %s612 = scalar_lea.hbm %s10, %s611
          %s613 = sshll.u32 %s606, 4
          %s614 = int_to_ptr.vmem [resolvable:$true] %s613
          %619 = dma.hbm_to_vmem [thread:$0]  %s612, 16384, %s614, %s603, 256, 256, 16
        $region60: #{tpu_custom_call.1} parent=23 // pred_fallthru
          _
        // Predicated region
        $region61: #{tpu_custom_call.1} parent=23 // pred_check
          %p620 = pneg %p319
        $region62: #{tpu_custom_call.1} parent=23 // pred_check_branch
          %622 = sbr.rel (%p620) target = $region64
        $region63: #{tpu_custom_call.1} parent=23 // pred_region
          %s623 = sand.u32 %s23, 1
          %s624 = scalar_lea.sflag [#allocation3], %s623
          %s625 = sand.u32 %s309, 1
          %s626 = smul.addr %s625, 4
          %s627 = scalar_lea.vmem [#allocation16], %s626
          %s629 = ssub.s32 64, 64
          %630 = vsyncadd %s624, %s629
          %s631 = smul.addr %s23, 4
          %s632 = smul.addr %s631, 16
          %s633 = scalar_lea.hbm %s11, %s632
          %s635 = sshll.u32 %s627, 4
          %s636 = int_to_ptr.vmem [resolvable:$true] %s635
          %638 = dma.hbm_to_vmem [thread:$0]  %s633, 64, %s636, %s624
        $region64: #{tpu_custom_call.1} parent=23 // pred_fallthru
          _
        // Predicated region
        $region65: #{tpu_custom_call.1} parent=23 // pred_check
          %p639 = pneg %p345
        $region66: #{tpu_custom_call.1} parent=23 // pred_check_branch
          %641 = sbr.rel (%p639) target = $region68
        $region67: #{tpu_custom_call.1} parent=23 // pred_region
          %s642 = sand.u32 %s23, 1
          %s643 = scalar_lea.sflag [#allocation3], %s642
          %s644 = sand.u32 %s335, 1
          %s645 = smul.addr %s644, 1024
          %s646 = scalar_lea.vmem [#allocation17], %s645
          %s648 = ssub.s32 16384, 16384
          %649 = vsyncadd %s643, %s648
          %s650 = smul.addr %s23, 256
          %s651 = smul.addr %s650, 64
          %s652 = scalar_lea.hbm %s12, %s651
          %s653 = sshll.u32 %s646, 4
          %s654 = int_to_ptr.vmem [resolvable:$true] %s653
          %659 = dma.hbm_to_vmem [thread:$0]  %s652, 16384, %s654, %s643, 256, 256, 16
        $region68: #{tpu_custom_call.1} parent=23 // pred_fallthru
          _
        // Predicated region
        $region69: #{tpu_custom_call.1} parent=23 // pred_check
          %p660 = pneg %p371
        $region70: #{tpu_custom_call.1} parent=23 // pred_check_branch
          %662 = sbr.rel (%p660) target = $region72
        $region71: #{tpu_custom_call.1} parent=23 // pred_region
          %s663 = sand.u32 %s23, 1
          %s664 = scalar_lea.sflag [#allocation3], %s663
          %s665 = sand.u32 %s361, 1
          %s666 = smul.addr %s665, 4
          %s667 = scalar_lea.vmem [#allocation18], %s666
          %s669 = ssub.s32 64, 64
          %670 = vsyncadd %s664, %s669
          %s671 = smul.addr %s23, 4
          %s672 = smul.addr %s671, 16
          %s673 = scalar_lea.hbm %s13, %s672
          %s675 = sshll.u32 %s667, 4
          %s676 = int_to_ptr.vmem [resolvable:$true] %s675
          %678 = dma.hbm_to_vmem [thread:$0]  %s673, 64, %s676, %s664
        $region72: #{tpu_custom_call.1} parent=23 // pred_fallthru
          _
      $region24: #{tpu_custom_call.1} parent=5 // pred_fallthru
        _
      %p679 = scmp.le.s32.totalorder 1, %s23
      %p680 = scmp.lt.s32.totalorder %s23, 5
      %p681 = pnand %p679, %p680
      %p682 = pneg %p681
      // Predicated region
      $region73: #{tpu_custom_call.1} parent=5 // pred_check
        _
      $region74: #{tpu_custom_call.1} parent=5 // pred_check_branch
        %684 = sbr.rel (%p681) target = $region76
      $region75: #{tpu_custom_call.1} parent=5 // pred_region
        %s685 = ssub.s32 %s23, 1
        // Predicated region
        $region77: #{tpu_custom_call.1} parent=75 // pred_check
          %p686 = pneg %p44
        $region78: #{tpu_custom_call.1} parent=75 // pred_check_branch
          %688 = sbr.rel (%p686) target = $region80
        $region79: #{tpu_custom_call.1} parent=75 // pred_region
          %689 = dma.done [#allocation3], 1024
        $region80: #{tpu_custom_call.1} parent=75 // pred_fallthru
          _
        // Predicated region
        $region81: #{tpu_custom_call.1} parent=75 // pred_check
          %p690 = pneg %p65
        $region82: #{tpu_custom_call.1} parent=75 // pred_check_branch
          %692 = sbr.rel (%p690) target = $region84
        $region83: #{tpu_custom_call.1} parent=75 // pred_region
          %693 = dma.done [#allocation6], 256
        $region84: #{tpu_custom_call.1} parent=75 // pred_fallthru
          _
        %s694 = sand.u32 %s28, 1
        %s695 = scalar_lea.sflag [#allocation3], %s694
        %s696 = sand.u32 %s78, 1
        %s697 = smul.addr %s696, 4
        %s698 = scalar_lea.vmem [#allocation7], %s697
        // Predicated region
        $region85: #{tpu_custom_call.1} parent=75 // pred_check
          %p699 = pneg %p91
        $region86: #{tpu_custom_call.1} parent=75 // pred_check_branch
          %701 = sbr.rel (%p699) target = $region88
        $region87: #{tpu_custom_call.1} parent=75 // pred_region
          %702 = dma.done %s695, 64
        $region88: #{tpu_custom_call.1} parent=75 // pred_fallthru
          _
        %s703 = sand.u32 %s28, 1
        %s704 = scalar_lea.sflag [#allocation3], %s703
        %s705 = sand.u32 %s104, 1
        %s706 = smul.addr %s705, 4
        %s707 = scalar_lea.vmem [#allocation8], %s706
        // Predicated region
        $region89: #{tpu_custom_call.1} parent=75 // pred_check
          %p708 = pneg %p117
        $region90: #{tpu_custom_call.1} parent=75 // pred_check_branch
          %710 = sbr.rel (%p708) target = $region92
        $region91: #{tpu_custom_call.1} parent=75 // pred_region
          %711 = dma.done %s704, 64
        $region92: #{tpu_custom_call.1} parent=75 // pred_fallthru
          _
        %s712 = sand.u32 %s28, 1
        %s713 = scalar_lea.sflag [#allocation3], %s712
        %s714 = sand.u32 %s130, 1
        %s715 = smul.addr %s714, 3072
        %s716 = scalar_lea.vmem [#allocation9], %s715
        // Predicated region
        $region93: #{tpu_custom_call.1} parent=75 // pred_check
          %p717 = pneg %p143
        $region94: #{tpu_custom_call.1} parent=75 // pred_check_branch
          %719 = sbr.rel (%p717) target = $region96
        $region95: #{tpu_custom_call.1} parent=75 // pred_region
          %720 = dma.done %s713, 49152
        $region96: #{tpu_custom_call.1} parent=75 // pred_fallthru
          _
        %s721 = sand.u32 %s28, 1
        %s722 = scalar_lea.sflag [#allocation3], %s721
        %s723 = sand.u32 %s156, 1
        %s724 = smul.addr %s723, 12
        %s725 = scalar_lea.vmem [#allocation10], %s724
        // Predicated region
        $region97: #{tpu_custom_call.1} parent=75 // pred_check
          %p726 = pneg %p169
        $region98: #{tpu_custom_call.1} parent=75 // pred_check_branch
          %728 = sbr.rel (%p726) target = $region100
        $region99: #{tpu_custom_call.1} parent=75 // pred_region
          %729 = dma.done %s722, 192
        $region100: #{tpu_custom_call.1} parent=75 // pred_fallthru
          _
        %s730 = sand.u32 %s28, 1
        %s731 = scalar_lea.sflag [#allocation3], %s730
        %s732 = sand.u32 %s182, 1
        %s733 = smul.addr %s732, 1024
        %s734 = scalar_lea.vmem [#allocation11], %s733
        // Predicated region
        $region101: #{tpu_custom_call.1} parent=75 // pred_check
          %p735 = pneg %p195
        $region102: #{tpu_custom_call.1} parent=75 // pred_check_branch
          %737 = sbr.rel (%p735) target = $region104
        $region103: #{tpu_custom_call.1} parent=75 // pred_region
          %738 = dma.done %s731, 16384
        $region104: #{tpu_custom_call.1} parent=75 // pred_fallthru
          _
        %s739 = sand.u32 %s28, 1
        %s740 = scalar_lea.sflag [#allocation3], %s739
        %s741 = sand.u32 %s208, 1
        %s742 = smul.addr %s741, 4
        %s743 = scalar_lea.vmem [#allocation12], %s742
        // Predicated region
        $region105: #{tpu_custom_call.1} parent=75 // pred_check
          %p744 = pneg %p221
        $region106: #{tpu_custom_call.1} parent=75 // pred_check_branch
          %746 = sbr.rel (%p744) target = $region108
        $region107: #{tpu_custom_call.1} parent=75 // pred_region
          %747 = dma.done %s740, 64
        $region108: #{tpu_custom_call.1} parent=75 // pred_fallthru
          _
        %s748 = sand.u32 %s28, 1
        %s749 = scalar_lea.sflag [#allocation3], %s748
        %s750 = sand.u32 %s234, 1
        %s751 = smul.addr %s750, 4
        %s752 = scalar_lea.vmem [#allocation13], %s751
        // Predicated region
        $region109: #{tpu_custom_call.1} parent=75 // pred_check
          %p753 = pneg %p247
        $region110: #{tpu_custom_call.1} parent=75 // pred_check_branch
          %755 = sbr.rel (%p753) target = $region112
        $region111: #{tpu_custom_call.1} parent=75 // pred_region
          %756 = dma.done %s749, 64
        $region112: #{tpu_custom_call.1} parent=75 // pred_fallthru
          _
        %s757 = sand.u32 %s28, 1
        %s758 = scalar_lea.sflag [#allocation3], %s757
        %s759 = sand.u32 %s260, 1
        %s760 = smul.addr %s759, 4
        %s761 = scalar_lea.vmem [#allocation14], %s760
        // Predicated region
        $region113: #{tpu_custom_call.1} parent=75 // pred_check
          %p762 = pneg %p273
        $region114: #{tpu_custom_call.1} parent=75 // pred_check_branch
          %764 = sbr.rel (%p762) target = $region116
        $region115: #{tpu_custom_call.1} parent=75 // pred_region
          %765 = dma.done %s758, 64
        $region116: #{tpu_custom_call.1} parent=75 // pred_fallthru
          _
        %s766 = sand.u32 %s28, 1
        %s767 = scalar_lea.sflag [#allocation3], %s766
        %s768 = sand.u32 %s286, 1
        %s769 = smul.addr %s768, 1024
        %s770 = scalar_lea.vmem [#allocation15], %s769
        // Predicated region
        $region117: #{tpu_custom_call.1} parent=75 // pred_check
          %p771 = pneg %p299
        $region118: #{tpu_custom_call.1} parent=75 // pred_check_branch
          %773 = sbr.rel (%p771) target = $region120
        $region119: #{tpu_custom_call.1} parent=75 // pred_region
          %774 = dma.done %s767, 16384
        $region120: #{tpu_custom_call.1} parent=75 // pred_fallthru
          _
        %s775 = sand.u32 %s28, 1
        %s776 = scalar_lea.sflag [#allocation3], %s775
        %s777 = sand.u32 %s312, 1
        %s778 = smul.addr %s777, 4
        %s779 = scalar_lea.vmem [#allocation16], %s778
        // Predicated region
        $region121: #{tpu_custom_call.1} parent=75 // pred_check
          %p780 = pneg %p325
        $region122: #{tpu_custom_call.1} parent=75 // pred_check_branch
          %782 = sbr.rel (%p780) target = $region124
        $region123: #{tpu_custom_call.1} parent=75 // pred_region
          %783 = dma.done %s776, 64
        $region124: #{tpu_custom_call.1} parent=75 // pred_fallthru
          _
        %s784 = sand.u32 %s28, 1
        %s785 = scalar_lea.sflag [#allocation3], %s784
        %s786 = sand.u32 %s338, 1
        %s787 = smul.addr %s786, 1024
        %s788 = scalar_lea.vmem [#allocation17], %s787
        // Predicated region
        $region125: #{tpu_custom_call.1} parent=75 // pred_check
          %p789 = pneg %p351
        $region126: #{tpu_custom_call.1} parent=75 // pred_check_branch
          %791 = sbr.rel (%p789) target = $region128
        $region127: #{tpu_custom_call.1} parent=75 // pred_region
          %792 = dma.done %s785, 16384
        $region128: #{tpu_custom_call.1} parent=75 // pred_fallthru
          _
        %s793 = sand.u32 %s28, 1
        %s794 = scalar_lea.sflag [#allocation3], %s793
        %s795 = sand.u32 %s364, 1
        %s796 = smul.addr %s795, 4
        %s797 = scalar_lea.vmem [#allocation18], %s796
        // Predicated region
        $region129: #{tpu_custom_call.1} parent=75 // pred_check
          %p798 = pneg %p377
        $region130: #{tpu_custom_call.1} parent=75 // pred_check_branch
          %800 = sbr.rel (%p798) target = $region132
        $region131: #{tpu_custom_call.1} parent=75 // pred_region
          %801 = dma.done %s794, 64
        $region132: #{tpu_custom_call.1} parent=75 // pred_fallthru
          _
        %p802 = pneg %p44
        %p803 = pneg %p41
        %p804 = pneg %p65
        %p805 = pneg %p62
        %s806 = sand.u32 %s28, 1
        %s807 = scalar_lea.sflag [#allocation3], %s806
        %s808 = sand.u32 %s78, 1
        %s809 = smul.addr %s808, 4
        %s810 = scalar_lea.vmem [#allocation7], %s809
        %p811 = pneg %p91
        %p812 = pneg %p88
        %s813 = sand.u32 %s28, 1
        %s814 = scalar_lea.sflag [#allocation3], %s813
        %s815 = sand.u32 %s104, 1
        %s816 = smul.addr %s815, 4
        %s817 = scalar_lea.vmem [#allocation8], %s816
        %p818 = pneg %p117
        %p819 = pneg %p114
        %s820 = sand.u32 %s28, 1
        %s821 = scalar_lea.sflag [#allocation3], %s820
        %s822 = sand.u32 %s130, 1
        %s823 = smul.addr %s822, 3072
        %s824 = scalar_lea.vmem [#allocation9], %s823
        %p825 = pneg %p143
        %p826 = pneg %p140
        %s827 = sand.u32 %s28, 1
        %s828 = scalar_lea.sflag [#allocation3], %s827
        %s829 = sand.u32 %s156, 1
        %s830 = smul.addr %s829, 12
        %s831 = scalar_lea.vmem [#allocation10], %s830
        %p832 = pneg %p169
        %p833 = pneg %p166
        %s834 = sand.u32 %s28, 1
        %s835 = scalar_lea.sflag [#allocation3], %s834
        %s836 = sand.u32 %s182, 1
        %s837 = smul.addr %s836, 1024
        %s838 = scalar_lea.vmem [#allocation11], %s837
        %p839 = pneg %p195
        %p840 = pneg %p192
        %s841 = sand.u32 %s28, 1
        %s842 = scalar_lea.sflag [#allocation3], %s841
        %s843 = sand.u32 %s208, 1
        %s844 = smul.addr %s843, 4
        %s845 = scalar_lea.vmem [#allocation12], %s844
        %p846 = pneg %p221
        %p847 = pneg %p218
        %s848 = sand.u32 %s28, 1
        %s849 = scalar_lea.sflag [#allocation3], %s848
        %s850 = sand.u32 %s234, 1
        %s851 = smul.addr %s850, 4
        %s852 = scalar_lea.vmem [#allocation13], %s851
        %p853 = pneg %p247
        %p854 = pneg %p244
        %s855 = sand.u32 %s28, 1
        %s856 = scalar_lea.sflag [#allocation3], %s855
        %s857 = sand.u32 %s260, 1
        %s858 = smul.addr %s857, 4
        %s859 = scalar_lea.vmem [#allocation14], %s858
        %p860 = pneg %p273
        %p861 = pneg %p270
        %s862 = sand.u32 %s28, 1
        %s863 = scalar_lea.sflag [#allocation3], %s862
        %s864 = sand.u32 %s286, 1
        %s865 = smul.addr %s864, 1024
        %s866 = scalar_lea.vmem [#allocation15], %s865
        %p867 = pneg %p299
        %p868 = pneg %p296
        %s869 = sand.u32 %s28, 1
        %s870 = scalar_lea.sflag [#allocation3], %s869
        %s871 = sand.u32 %s312, 1
        %s872 = smul.addr %s871, 4
        %s873 = scalar_lea.vmem [#allocation16], %s872
        %p874 = pneg %p325
        %p875 = pneg %p322
        %s876 = sand.u32 %s28, 1
        %s877 = scalar_lea.sflag [#allocation3], %s876
        %s878 = sand.u32 %s338, 1
        %s879 = smul.addr %s878, 1024
        %s880 = scalar_lea.vmem [#allocation17], %s879
        %p881 = pneg %p351
        %p882 = pneg %p348
        %s883 = sand.u32 %s28, 1
        %s884 = scalar_lea.sflag [#allocation3], %s883
        %s885 = sand.u32 %s364, 1
        %s886 = smul.addr %s885, 4
        %s887 = scalar_lea.vmem [#allocation18], %s886
        %p888 = pneg %p377
        %p889 = pneg %p374
        %p890 = pneg %p398
        %p891 = pneg %p395
        %p893 = scmp.eq.s32.totalorder %s28, 0
        // Predicated region
        $region133: #{tpu_custom_call.1} parent=75 // pred_check
          %p894 = pneg %p893
        $region134: #{tpu_custom_call.1} parent=75 // pred_check_branch
          %896 = sbr.rel (%p894) target = $region136
        $region135: #{tpu_custom_call.1} parent=75 // pred_region
          %v897 = vld [vmem:[#allocation2] sm:$0xff]
          %v898 = vld [vmem:[#allocation2 + $0x8] sm:$0xff]
          %v899 = vld [vmem:[#allocation2 + $0x10] sm:$0xff]
          %v900 = vld [vmem:[#allocation2 + $0x18] sm:$0xff]
          %v901 = vld [vmem:[#allocation2 + $0x20] sm:$0xff]
          %v902 = vld [vmem:[#allocation2 + $0x28] sm:$0xff]
          %v903 = vld [vmem:[#allocation2 + $0x30] sm:$0xff]
          %v904 = vld [vmem:[#allocation2 + $0x38] sm:$0xff]
          %905 = vst [vmem:[#allocation19] sm:$0xff] %v897
          %906 = vst [vmem:[#allocation19 + $0x8] sm:$0xff] %v898
          %907 = vst [vmem:[#allocation19 + $0x10] sm:$0xff] %v899
          %908 = vst [vmem:[#allocation19 + $0x18] sm:$0xff] %v900
          %909 = vst [vmem:[#allocation19 + $0x20] sm:$0xff] %v901
          %910 = vst [vmem:[#allocation19 + $0x28] sm:$0xff] %v902
          %911 = vst [vmem:[#allocation19 + $0x30] sm:$0xff] %v903
          %912 = vst [vmem:[#allocation19 + $0x38] sm:$0xff] %v904
        $region136: #{tpu_custom_call.1} parent=75 // pred_fallthru
          _
        %v913 = vld [vmem:[#allocation19] sm:$0xff]
        %v914 = vld [vmem:[#allocation19 + $0x8] sm:$0xff]
        %v915 = vld [vmem:[#allocation19 + $0x10] sm:$0xff]
        %v916 = vld [vmem:[#allocation19 + $0x18] sm:$0xff]
        %v917 = vld [vmem:[#allocation19 + $0x20] sm:$0xff]
        %v918 = vld [vmem:[#allocation19 + $0x28] sm:$0xff]
        %v919 = vld [vmem:[#allocation19 + $0x30] sm:$0xff]
        %v920 = vld [vmem:[#allocation19 + $0x38] sm:$0xff]
        %v921 = vld [vmem:[#allocation5] sm:$0xff]
        %v922 = vld [vmem:[#allocation5 + $0x8] sm:$0xff]
        %v923 = vld [vmem:[%s698] sm:$0xf]
        %v924 = vld [vmem:[%s707] sm:$0xf]
        %v925 = vadd.f32 %v913, %v914
        %v926 = vadd.f32 %v925, %v915
        %v927 = vadd.f32 %v926, %v916
        %928 = vadd.xlane.f32.xlu0 %v927
        %v929 = vpop.xlane.xlu0 %928
        %v930 = vadd.f32 %v917, %v918
        %v931 = vadd.f32 %v930, %v919
        %v932 = vadd.f32 %v931, %v920
        %933 = vadd.xlane.f32.xlu0 %v932
        %v934 = vpop.xlane.xlu0 %933
        %v935 = vrcp.pop 512.0
        %v936 = vmul.f32 %v929, %v935
        %v937 = vmul.f32 %v934, %v935
        %v938 = vsub.f32 %v913, %v936
        %v939 = vsub.f32 %v914, %v936
        %v940 = vsub.f32 %v915, %v936
        %v941 = vsub.f32 %v916, %v936
        %v942 = vsub.f32 %v917, %v937
        %v943 = vsub.f32 %v918, %v937
        %v944 = vsub.f32 %v919, %v937
        %v945 = vsub.f32 %v920, %v937
        %v946 = vmul.f32 %v938, %v938
        %v947 = vmul.f32 %v939, %v939
        %v948 = vmul.f32 %v940, %v940
        %v949 = vmul.f32 %v941, %v941
        %v950 = vmul.f32 %v942, %v942
        %v951 = vmul.f32 %v943, %v943
        %v952 = vmul.f32 %v944, %v944
        %v953 = vmul.f32 %v945, %v945
        %v954 = vadd.f32 %v946, %v947
        %v955 = vadd.f32 %v954, %v948
        %v956 = vadd.f32 %v955, %v949
        %957 = vadd.xlane.f32.xlu0 %v956
        %v958 = vpop.xlane.xlu0 %957
        %v959 = vadd.f32 %v950, %v951
        %v960 = vadd.f32 %v959, %v952
        %v961 = vadd.f32 %v960, %v953
        %962 = vadd.xlane.f32.xlu0 %v961
        %v963 = vpop.xlane.xlu0 %962
        %v964 = vmul.f32 %v958, %v935
        %v965 = vmul.f32 %v963, %v935
        %v966 = vadd.f32 %v964, 1e-05
        %v967 = vadd.f32 %v965, 1e-05
        %v968 = vrsqrt.pop %v966
        %v969 = vrsqrt.pop %v967
        %v970 = vmul.f32 %v938, %v968
        %v971 = vmul.f32 %v939, %v968
        %v972 = vmul.f32 %v940, %v968
        %v973 = vmul.f32 %v941, %v968
        %v974 = vmul.f32 %v942, %v969
        %v975 = vmul.f32 %v943, %v969
        %v976 = vmul.f32 %v944, %v969
        %v977 = vmul.f32 %v945, %v969
        %v979 = vlaneseq
        %v980 = vshrl.u32 %v979, 7
        %v981 = vsub.s32 0, %v980
        %v982 = vrot.slane %v923, %v981
        %v983 = vlaneseq
        %v984 = vshrl.u32 %v983, 7
        %v985 = vsub.s32 1, %v984
        %v986 = vrot.slane %v923, %v985
        %v987 = vlaneseq
        %v988 = vshrl.u32 %v987, 7
        %v989 = vsub.s32 2, %v988
        %v990 = vrot.slane %v923, %v989
        %v991 = vlaneseq
        %v992 = vshrl.u32 %v991, 7
        %v993 = vsub.s32 3, %v992
        %v994 = vrot.slane %v923, %v993
        %v999 = vmul.f32 %v970, %v982
        %v1000 = vmul.f32 %v971, %v986
        %v1001 = vmul.f32 %v972, %v990
        %v1002 = vmul.f32 %v973, %v994
        %v1003 = vmul.f32 %v974, %v982
        %v1004 = vmul.f32 %v975, %v986
        %v1005 = vmul.f32 %v976, %v990
        %v1006 = vmul.f32 %v977, %v994
        %v1008 = vlaneseq
        %v1009 = vshrl.u32 %v1008, 7
        %v1010 = vsub.s32 0, %v1009
        %v1011 = vrot.slane %v924, %v1010
        %v1012 = vlaneseq
        %v1013 = vshrl.u32 %v1012, 7
        %v1014 = vsub.s32 1, %v1013
        %v1015 = vrot.slane %v924, %v1014
        %v1016 = vlaneseq
        %v1017 = vshrl.u32 %v1016, 7
        %v1018 = vsub.s32 2, %v1017
        %v1019 = vrot.slane %v924, %v1018
        %v1020 = vlaneseq
        %v1021 = vshrl.u32 %v1020, 7
        %v1022 = vsub.s32 3, %v1021
        %v1023 = vrot.slane %v924, %v1022
        %v1028 = vadd.f32 %v999, %v1011
        %v1029 = vadd.f32 %v1000, %v1015
        %v1030 = vadd.f32 %v1001, %v1019
        %v1031 = vadd.f32 %v1002, %v1023
        %v1032 = vadd.f32 %v1003, %v1011
        %v1033 = vadd.f32 %v1004, %v1015
        %v1034 = vadd.f32 %v1005, %v1019
        %v1035 = vadd.f32 %v1006, %v1023
        %v1036 = vpack.c.bf16 %v1032, %v1028
        %v1037 = vpack.c.bf16 %v1033, %v1029
        %v1038 = vpack.c.bf16 %v1034, %v1030
        %v1039 = vpack.c.bf16 %v1035, %v1031
        %v1040 = vld [vmem:[%s716] sm:$0xff]
        %v1041 = vld [vmem:[%s716 + $0x8] sm:$0xff]
        %v1042 = vld [vmem:[%s716 + $0x10] sm:$0xff]
        %v1043 = vld [vmem:[%s716 + $0x18] sm:$0xff]
        %v1044 = vld [vmem:[%s716 + $0x20] sm:$0xff]
        %v1045 = vld [vmem:[%s716 + $0x28] sm:$0xff]
        %v1046 = vld [vmem:[%s716 + $0x30] sm:$0xff]
        %v1047 = vld [vmem:[%s716 + $0x38] sm:$0xff]
        %v1048 = vld [vmem:[%s716 + $0x40] sm:$0xff]
        %v1049 = vld [vmem:[%s716 + $0x48] sm:$0xff]
        %v1050 = vld [vmem:[%s716 + $0x50] sm:$0xff]
        %v1051 = vld [vmem:[%s716 + $0x58] sm:$0xff]
        %v1052 = vld [vmem:[%s716 + $0x60] sm:$0xff]
        %v1053 = vld [vmem:[%s716 + $0x68] sm:$0xff]
        %v1054 = vld [vmem:[%s716 + $0x70] sm:$0xff]
        %v1055 = vld [vmem:[%s716 + $0x78] sm:$0xff]
        %v1056 = vld [vmem:[%s716 + $0x80] sm:$0xff]
        %v1057 = vld [vmem:[%s716 + $0x88] sm:$0xff]
        %v1058 = vld [vmem:[%s716 + $0x90] sm:$0xff]
        %v1059 = vld [vmem:[%s716 + $0x98] sm:$0xff]
        %v1060 = vld [vmem:[%s716 + $0xa0] sm:$0xff]
        %v1061 = vld [vmem:[%s716 + $0xa8] sm:$0xff]
        %v1062 = vld [vmem:[%s716 + $0xb0] sm:$0xff]
        %v1063 = vld [vmem:[%s716 + $0xb8] sm:$0xff]
        %v1064 = vld [vmem:[%s716 + $0xc0] sm:$0xff]
        %v1065 = vld [vmem:[%s716 + $0xc8] sm:$0xff]
        %v1066 = vld [vmem:[%s716 + $0xd0] sm:$0xff]
        %v1067 = vld [vmem:[%s716 + $0xd8] sm:$0xff]
        %v1068 = vld [vmem:[%s716 + $0xe0] sm:$0xff]
        %v1069 = vld [vmem:[%s716 + $0xe8] sm:$0xff]
        %v1070 = vld [vmem:[%s716 + $0xf0] sm:$0xff]
        %v1071 = vld [vmem:[%s716 + $0xf8] sm:$0xff]
        %v1072 = vld [vmem:[%s716 + $0x100] sm:$0xff]
        %v1073 = vld [vmem:[%s716 + $0x108] sm:$0xff]
        %v1074 = vld [vmem:[%s716 + $0x110] sm:$0xff]
        %v1075 = vld [vmem:[%s716 + $0x118] sm:$0xff]
        %v1076 = vld [vmem:[%s716 + $0x120] sm:$0xff]
        %v1077 = vld [vmem:[%s716 + $0x128] sm:$0xff]
        %v1078 = vld [vmem:[%s716 + $0x130] sm:$0xff]
        %v1079 = vld [vmem:[%s716 + $0x138] sm:$0xff]
        %v1080 = vld [vmem:[%s716 + $0x140] sm:$0xff]
        %v1081 = vld [vmem:[%s716 + $0x148] sm:$0xff]
        %v1082 = vld [vmem:[%s716 + $0x150] sm:$0xff]
        %v1083 = vld [vmem:[%s716 + $0x158] sm:$0xff]
        %v1084 = vld [vmem:[%s716 + $0x160] sm:$0xff]
        %v1085 = vld [vmem:[%s716 + $0x168] sm:$0xff]
        %v1086 = vld [vmem:[%s716 + $0x170] sm:$0xff]
        %v1087 = vld [vmem:[%s716 + $0x178] sm:$0xff]
        %v1088 = vld [vmem:[%s716 + $0x180] sm:$0xff]
        %v1089 = vld [vmem:[%s716 + $0x188] sm:$0xff]
        %v1090 = vld [vmem:[%s716 + $0x190] sm:$0xff]
        %v1091 = vld [vmem:[%s716 + $0x198] sm:$0xff]
        %v1092 = vld [vmem:[%s716 + $0x1a0] sm:$0xff]
        %v1093 = vld [vmem:[%s716 + $0x1a8] sm:$0xff]
        %v1094 = vld [vmem:[%s716 + $0x1b0] sm:$0xff]
        %v1095 = vld [vmem:[%s716 + $0x1b8] sm:$0xff]
        %v1096 = vld [vmem:[%s716 + $0x1c0] sm:$0xff]
        %v1097 = vld [vmem:[%s716 + $0x1c8] sm:$0xff]
        %v1098 = vld [vmem:[%s716 + $0x1d0] sm:$0xff]
        %v1099 = vld [vmem:[%s716 + $0x1d8] sm:$0xff]
        %v1100 = vld [vmem:[%s716 + $0x1e0] sm:$0xff]
        %v1101 = vld [vmem:[%s716 + $0x1e8] sm:$0xff]
        %v1102 = vld [vmem:[%s716 + $0x1f0] sm:$0xff]
        %v1103 = vld [vmem:[%s716 + $0x1f8] sm:$0xff]
        %v1104 = vld [vmem:[%s716 + $0x200] sm:$0xff]
        %v1105 = vld [vmem:[%s716 + $0x208] sm:$0xff]
        %v1106 = vld [vmem:[%s716 + $0x210] sm:$0xff]
        %v1107 = vld [vmem:[%s716 + $0x218] sm:$0xff]
        %v1108 = vld [vmem:[%s716 + $0x220] sm:$0xff]
        %v1109 = vld [vmem:[%s716 + $0x228] sm:$0xff]
        %v1110 = vld [vmem:[%s716 + $0x230] sm:$0xff]
        %v1111 = vld [vmem:[%s716 + $0x238] sm:$0xff]
        %v1112 = vld [vmem:[%s716 + $0x240] sm:$0xff]
        %v1113 = vld [vmem:[%s716 + $0x248] sm:$0xff]
        %v1114 = vld [vmem:[%s716 + $0x250] sm:$0xff]
        %v1115 = vld [vmem:[%s716 + $0x258] sm:$0xff]
        %v1116 = vld [vmem:[%s716 + $0x260] sm:$0xff]
        %v1117 = vld [vmem:[%s716 + $0x268] sm:$0xff]
        %v1118 = vld [vmem:[%s716 + $0x270] sm:$0xff]
        %v1119 = vld [vmem:[%s716 + $0x278] sm:$0xff]
        %v1120 = vld [vmem:[%s716 + $0x280] sm:$0xff]
        %v1121 = vld [vmem:[%s716 + $0x288] sm:$0xff]
        %v1122 = vld [vmem:[%s716 + $0x290] sm:$0xff]
        %v1123 = vld [vmem:[%s716 + $0x298] sm:$0xff]
        %v1124 = vld [vmem:[%s716 + $0x2a0] sm:$0xff]
        %v1125 = vld [vmem:[%s716 + $0x2a8] sm:$0xff]
        %v1126 = vld [vmem:[%s716 + $0x2b0] sm:$0xff]
        %v1127 = vld [vmem:[%s716 + $0x2b8] sm:$0xff]
        %v1128 = vld [vmem:[%s716 + $0x2c0] sm:$0xff]
        %v1129 = vld [vmem:[%s716 + $0x2c8] sm:$0xff]
        %v1130 = vld [vmem:[%s716 + $0x2d0] sm:$0xff]
        %v1131 = vld [vmem:[%s716 + $0x2d8] sm:$0xff]
        %v1132 = vld [vmem:[%s716 + $0x2e0] sm:$0xff]
        %v1133 = vld [vmem:[%s716 + $0x2e8] sm:$0xff]
        %v1134 = vld [vmem:[%s716 + $0x2f0] sm:$0xff]
        %v1135 = vld [vmem:[%s716 + $0x2f8] sm:$0xff]
        %v1136 = vld [vmem:[%s716 + $0x300] sm:$0xff]
        %v1137 = vld [vmem:[%s716 + $0x308] sm:$0xff]
        %v1138 = vld [vmem:[%s716 + $0x310] sm:$0xff]
        %v1139 = vld [vmem:[%s716 + $0x318] sm:$0xff]
        %v1140 = vld [vmem:[%s716 + $0x320] sm:$0xff]
        %v1141 = vld [vmem:[%s716 + $0x328] sm:$0xff]
        %v1142 = vld [vmem:[%s716 + $0x330] sm:$0xff]
        %v1143 = vld [vmem:[%s716 + $0x338] sm:$0xff]
        %v1144 = vld [vmem:[%s716 + $0x340] sm:$0xff]
        %v1145 = vld [vmem:[%s716 + $0x348] sm:$0xff]
        %v1146 = vld [vmem:[%s716 + $0x350] sm:$0xff]
        %v1147 = vld [vmem:[%s716 + $0x358] sm:$0xff]
        %v1148 = vld [vmem:[%s716 + $0x360] sm:$0xff]
        %v1149 = vld [vmem:[%s716 + $0x368] sm:$0xff]
        %v1150 = vld [vmem:[%s716 + $0x370] sm:$0xff]
        %v1151 = vld [vmem:[%s716 + $0x378] sm:$0xff]
        %v1152 = vld [vmem:[%s716 + $0x380] sm:$0xff]
        %v1153 = vld [vmem:[%s716 + $0x388] sm:$0xff]
        %v1154 = vld [vmem:[%s716 + $0x390] sm:$0xff]
        %v1155 = vld [vmem:[%s716 + $0x398] sm:$0xff]
        %v1156 = vld [vmem:[%s716 + $0x3a0] sm:$0xff]
        %v1157 = vld [vmem:[%s716 + $0x3a8] sm:$0xff]
        %v1158 = vld [vmem:[%s716 + $0x3b0] sm:$0xff]
        %v1159 = vld [vmem:[%s716 + $0x3b8] sm:$0xff]
        %v1160 = vld [vmem:[%s716 + $0x3c0] sm:$0xff]
        %v1161 = vld [vmem:[%s716 + $0x3c8] sm:$0xff]
        %v1162 = vld [vmem:[%s716 + $0x3d0] sm:$0xff]
        %v1163 = vld [vmem:[%s716 + $0x3d8] sm:$0xff]
        %v1164 = vld [vmem:[%s716 + $0x3e0] sm:$0xff]
        %v1165 = vld [vmem:[%s716 + $0x3e8] sm:$0xff]
        %v1166 = vld [vmem:[%s716 + $0x3f0] sm:$0xff]
        %v1167 = vld [vmem:[%s716 + $0x3f8] sm:$0xff]
        %v1168 = vld [vmem:[%s716 + $0x400] sm:$0xff]
        %v1169 = vld [vmem:[%s716 + $0x408] sm:$0xff]
        %v1170 = vld [vmem:[%s716 + $0x410] sm:$0xff]
        %v1171 = vld [vmem:[%s716 + $0x418] sm:$0xff]
        %v1172 = vld [vmem:[%s716 + $0x420] sm:$0xff]
        %v1173 = vld [vmem:[%s716 + $0x428] sm:$0xff]
        %v1174 = vld [vmem:[%s716 + $0x430] sm:$0xff]
        %v1175 = vld [vmem:[%s716 + $0x438] sm:$0xff]
        %v1176 = vld [vmem:[%s716 + $0x440] sm:$0xff]
        %v1177 = vld [vmem:[%s716 + $0x448] sm:$0xff]
        %v1178 = vld [vmem:[%s716 + $0x450] sm:$0xff]
        %v1179 = vld [vmem:[%s716 + $0x458] sm:$0xff]
        %v1180 = vld [vmem:[%s716 + $0x460] sm:$0xff]
        %v1181 = vld [vmem:[%s716 + $0x468] sm:$0xff]
        %v1182 = vld [vmem:[%s716 + $0x470] sm:$0xff]
        %v1183 = vld [vmem:[%s716 + $0x478] sm:$0xff]
        %v1184 = vld [vmem:[%s716 + $0x480] sm:$0xff]
        %v1185 = vld [vmem:[%s716 + $0x488] sm:$0xff]
        %v1186 = vld [vmem:[%s716 + $0x490] sm:$0xff]
        %v1187 = vld [vmem:[%s716 + $0x498] sm:$0xff]
        %v1188 = vld [vmem:[%s716 + $0x4a0] sm:$0xff]
        %v1189 = vld [vmem:[%s716 + $0x4a8] sm:$0xff]
        %v1190 = vld [vmem:[%s716 + $0x4b0] sm:$0xff]
        %v1191 = vld [vmem:[%s716 + $0x4b8] sm:$0xff]
        %v1192 = vld [vmem:[%s716 + $0x4c0] sm:$0xff]
        %v1193 = vld [vmem:[%s716 + $0x4c8] sm:$0xff]
        %v1194 = vld [vmem:[%s716 + $0x4d0] sm:$0xff]
        %v1195 = vld [vmem:[%s716 + $0x4d8] sm:$0xff]
        %v1196 = vld [vmem:[%s716 + $0x4e0] sm:$0xff]
        %v1197 = vld [vmem:[%s716 + $0x4e8] sm:$0xff]
        %v1198 = vld [vmem:[%s716 + $0x4f0] sm:$0xff]
        %v1199 = vld [vmem:[%s716 + $0x4f8] sm:$0xff]
        %v1200 = vld [vmem:[%s716 + $0x500] sm:$0xff]
        %v1201 = vld [vmem:[%s716 + $0x508] sm:$0xff]
        %v1202 = vld [vmem:[%s716 + $0x510] sm:$0xff]
        %v1203 = vld [vmem:[%s716 + $0x518] sm:$0xff]
        %v1204 = vld [vmem:[%s716 + $0x520] sm:$0xff]
        %v1205 = vld [vmem:[%s716 + $0x528] sm:$0xff]
        %v1206 = vld [vmem:[%s716 + $0x530] sm:$0xff]
        %v1207 = vld [vmem:[%s716 + $0x538] sm:$0xff]
        %v1208 = vld [vmem:[%s716 + $0x540] sm:$0xff]
        %v1209 = vld [vmem:[%s716 + $0x548] sm:$0xff]
        %v1210 = vld [vmem:[%s716 + $0x550] sm:$0xff]
        %v1211 = vld [vmem:[%s716 + $0x558] sm:$0xff]
        %v1212 = vld [vmem:[%s716 + $0x560] sm:$0xff]
        %v1213 = vld [vmem:[%s716 + $0x568] sm:$0xff]
        %v1214 = vld [vmem:[%s716 + $0x570] sm:$0xff]
        %v1215 = vld [vmem:[%s716 + $0x578] sm:$0xff]
        %v1216 = vld [vmem:[%s716 + $0x580] sm:$0xff]
        %v1217 = vld [vmem:[%s716 + $0x588] sm:$0xff]
        %v1218 = vld [vmem:[%s716 + $0x590] sm:$0xff]
        %v1219 = vld [vmem:[%s716 + $0x598] sm:$0xff]
        %v1220 = vld [vmem:[%s716 + $0x5a0] sm:$0xff]
        %v1221 = vld [vmem:[%s716 + $0x5a8] sm:$0xff]
        %v1222 = vld [vmem:[%s716 + $0x5b0] sm:$0xff]
        %v1223 = vld [vmem:[%s716 + $0x5b8] sm:$0xff]
        %v1224 = vld [vmem:[%s716 + $0x5c0] sm:$0xff]
        %v1225 = vld [vmem:[%s716 + $0x5c8] sm:$0xff]
        %v1226 = vld [vmem:[%s716 + $0x5d0] sm:$0xff]
        %v1227 = vld [vmem:[%s716 + $0x5d8] sm:$0xff]
        %v1228 = vld [vmem:[%s716 + $0x5e0] sm:$0xff]
        %v1229 = vld [vmem:[%s716 + $0x5e8] sm:$0xff]
        %v1230 = vld [vmem:[%s716 + $0x5f0] sm:$0xff]
        %v1231 = vld [vmem:[%s716 + $0x5f8] sm:$0xff]
        %v1232 = vld [vmem:[%s716 + $0x600] sm:$0xff]
        %v1233 = vld [vmem:[%s716 + $0x608] sm:$0xff]
        %v1234 = vld [vmem:[%s716 + $0x610] sm:$0xff]
        %v1235 = vld [vmem:[%s716 + $0x618] sm:$0xff]
        %v1236 = vld [vmem:[%s716 + $0x620] sm:$0xff]
        %v1237 = vld [vmem:[%s716 + $0x628] sm:$0xff]
        %v1238 = vld [vmem:[%s716 + $0x630] sm:$0xff]
        %v1239 = vld [vmem:[%s716 + $0x638] sm:$0xff]
        %v1240 = vld [vmem:[%s716 + $0x640] sm:$0xff]
        %v1241 = vld [vmem:[%s716 + $0x648] sm:$0xff]
        %v1242 = vld [vmem:[%s716 + $0x650] sm:$0xff]
        %v1243 = vld [vmem:[%s716 + $0x658] sm:$0xff]
        %v1244 = vld [vmem:[%s716 + $0x660] sm:$0xff]
        %v1245 = vld [vmem:[%s716 + $0x668] sm:$0xff]
        %v1246 = vld [vmem:[%s716 + $0x670] sm:$0xff]
        %v1247 = vld [vmem:[%s716 + $0x678] sm:$0xff]
        %v1248 = vld [vmem:[%s716 + $0x680] sm:$0xff]
        %v1249 = vld [vmem:[%s716 + $0x688] sm:$0xff]
        %v1250 = vld [vmem:[%s716 + $0x690] sm:$0xff]
        %v1251 = vld [vmem:[%s716 + $0x698] sm:$0xff]
        %v1252 = vld [vmem:[%s716 + $0x6a0] sm:$0xff]
        %v1253 = vld [vmem:[%s716 + $0x6a8] sm:$0xff]
        %v1254 = vld [vmem:[%s716 + $0x6b0] sm:$0xff]
        %v1255 = vld [vmem:[%s716 + $0x6b8] sm:$0xff]
        %v1256 = vld [vmem:[%s716 + $0x6c0] sm:$0xff]
        %v1257 = vld [vmem:[%s716 + $0x6c8] sm:$0xff]
        %v1258 = vld [vmem:[%s716 + $0x6d0] sm:$0xff]
        %v1259 = vld [vmem:[%s716 + $0x6d8] sm:$0xff]
        %v1260 = vld [vmem:[%s716 + $0x6e0] sm:$0xff]
        %v1261 = vld [vmem:[%s716 + $0x6e8] sm:$0xff]
        %v1262 = vld [vmem:[%s716 + $0x6f0] sm:$0xff]
        %v1263 = vld [vmem:[%s716 + $0x6f8] sm:$0xff]
        %v1264 = vld [vmem:[%s716 + $0x700] sm:$0xff]
        %v1265 = vld [vmem:[%s716 + $0x708] sm:$0xff]
        %v1266 = vld [vmem:[%s716 + $0x710] sm:$0xff]
        %v1267 = vld [vmem:[%s716 + $0x718] sm:$0xff]
        %v1268 = vld [vmem:[%s716 + $0x720] sm:$0xff]
        %v1269 = vld [vmem:[%s716 + $0x728] sm:$0xff]
        %v1270 = vld [vmem:[%s716 + $0x730] sm:$0xff]
        %v1271 = vld [vmem:[%s716 + $0x738] sm:$0xff]
        %v1272 = vld [vmem:[%s716 + $0x740] sm:$0xff]
        %v1273 = vld [vmem:[%s716 + $0x748] sm:$0xff]
        %v1274 = vld [vmem:[%s716 + $0x750] sm:$0xff]
        %v1275 = vld [vmem:[%s716 + $0x758] sm:$0xff]
        %v1276 = vld [vmem:[%s716 + $0x760] sm:$0xff]
        %v1277 = vld [vmem:[%s716 + $0x768] sm:$0xff]
        %v1278 = vld [vmem:[%s716 + $0x770] sm:$0xff]
        %v1279 = vld [vmem:[%s716 + $0x778] sm:$0xff]
        %v1280 = vld [vmem:[%s716 + $0x780] sm:$0xff]
        %v1281 = vld [vmem:[%s716 + $0x788] sm:$0xff]
        %v1282 = vld [vmem:[%s716 + $0x790] sm:$0xff]
        %v1283 = vld [vmem:[%s716 + $0x798] sm:$0xff]
        %v1284 = vld [vmem:[%s716 + $0x7a0] sm:$0xff]
        %v1285 = vld [vmem:[%s716 + $0x7a8] sm:$0xff]
        %v1286 = vld [vmem:[%s716 + $0x7b0] sm:$0xff]
        %v1287 = vld [vmem:[%s716 + $0x7b8] sm:$0xff]
        %v1288 = vld [vmem:[%s716 + $0x7c0] sm:$0xff]
        %v1289 = vld [vmem:[%s716 + $0x7c8] sm:$0xff]
        %v1290 = vld [vmem:[%s716 + $0x7d0] sm:$0xff]
        %v1291 = vld [vmem:[%s716 + $0x7d8] sm:$0xff]
        %v1292 = vld [vmem:[%s716 + $0x7e0] sm:$0xff]
        %v1293 = vld [vmem:[%s716 + $0x7e8] sm:$0xff]
        %v1294 = vld [vmem:[%s716 + $0x7f0] sm:$0xff]
        %v1295 = vld [vmem:[%s716 + $0x7f8] sm:$0xff]
        %v1296 = vld [vmem:[%s716 + $0x800] sm:$0xff]
        %v1297 = vld [vmem:[%s716 + $0x808] sm:$0xff]
        %v1298 = vld [vmem:[%s716 + $0x810] sm:$0xff]
        %v1299 = vld [vmem:[%s716 + $0x818] sm:$0xff]
        %v1300 = vld [vmem:[%s716 + $0x820] sm:$0xff]
        %v1301 = vld [vmem:[%s716 + $0x828] sm:$0xff]
        %v1302 = vld [vmem:[%s716 + $0x830] sm:$0xff]
        %v1303 = vld [vmem:[%s716 + $0x838] sm:$0xff]
        %v1304 = vld [vmem:[%s716 + $0x840] sm:$0xff]
        %v1305 = vld [vmem:[%s716 + $0x848] sm:$0xff]
        %v1306 = vld [vmem:[%s716 + $0x850] sm:$0xff]
        %v1307 = vld [vmem:[%s716 + $0x858] sm:$0xff]
        %v1308 = vld [vmem:[%s716 + $0x860] sm:$0xff]
        %v1309 = vld [vmem:[%s716 + $0x868] sm:$0xff]
        %v1310 = vld [vmem:[%s716 + $0x870] sm:$0xff]
        %v1311 = vld [vmem:[%s716 + $0x878] sm:$0xff]
        %v1312 = vld [vmem:[%s716 + $0x880] sm:$0xff]
        %v1313 = vld [vmem:[%s716 + $0x888] sm:$0xff]
        %v1314 = vld [vmem:[%s716 + $0x890] sm:$0xff]
        %v1315 = vld [vmem:[%s716 + $0x898] sm:$0xff]
        %v1316 = vld [vmem:[%s716 + $0x8a0] sm:$0xff]
        %v1317 = vld [vmem:[%s716 + $0x8a8] sm:$0xff]
        %v1318 = vld [vmem:[%s716 + $0x8b0] sm:$0xff]
        %v1319 = vld [vmem:[%s716 + $0x8b8] sm:$0xff]
        %v1320 = vld [vmem:[%s716 + $0x8c0] sm:$0xff]
        %v1321 = vld [vmem:[%s716 + $0x8c8] sm:$0xff]
        %v1322 = vld [vmem:[%s716 + $0x8d0] sm:$0xff]
        %v1323 = vld [vmem:[%s716 + $0x8d8] sm:$0xff]
        %v1324 = vld [vmem:[%s716 + $0x8e0] sm:$0xff]
        %v1325 = vld [vmem:[%s716 + $0x8e8] sm:$0xff]
        %v1326 = vld [vmem:[%s716 + $0x8f0] sm:$0xff]
        %v1327 = vld [vmem:[%s716 + $0x8f8] sm:$0xff]
        %v1328 = vld [vmem:[%s716 + $0x900] sm:$0xff]
        %v1329 = vld [vmem:[%s716 + $0x908] sm:$0xff]
        %v1330 = vld [vmem:[%s716 + $0x910] sm:$0xff]
        %v1331 = vld [vmem:[%s716 + $0x918] sm:$0xff]
        %v1332 = vld [vmem:[%s716 + $0x920] sm:$0xff]
        %v1333 = vld [vmem:[%s716 + $0x928] sm:$0xff]
        %v1334 = vld [vmem:[%s716 + $0x930] sm:$0xff]
        %v1335 = vld [vmem:[%s716 + $0x938] sm:$0xff]
        %v1336 = vld [vmem:[%s716 + $0x940] sm:$0xff]
        %v1337 = vld [vmem:[%s716 + $0x948] sm:$0xff]
        %v1338 = vld [vmem:[%s716 + $0x950] sm:$0xff]
        %v1339 = vld [vmem:[%s716 + $0x958] sm:$0xff]
        %v1340 = vld [vmem:[%s716 + $0x960] sm:$0xff]
        %v1341 = vld [vmem:[%s716 + $0x968] sm:$0xff]
        %v1342 = vld [vmem:[%s716 + $0x970] sm:$0xff]
        %v1343 = vld [vmem:[%s716 + $0x978] sm:$0xff]
        %v1344 = vld [vmem:[%s716 + $0x980] sm:$0xff]
        %v1345 = vld [vmem:[%s716 + $0x988] sm:$0xff]
        %v1346 = vld [vmem:[%s716 + $0x990] sm:$0xff]
        %v1347 = vld [vmem:[%s716 + $0x998] sm:$0xff]
        %v1348 = vld [vmem:[%s716 + $0x9a0] sm:$0xff]
        %v1349 = vld [vmem:[%s716 + $0x9a8] sm:$0xff]
        %v1350 = vld [vmem:[%s716 + $0x9b0] sm:$0xff]
        %v1351 = vld [vmem:[%s716 + $0x9b8] sm:$0xff]
        %v1352 = vld [vmem:[%s716 + $0x9c0] sm:$0xff]
        %v1353 = vld [vmem:[%s716 + $0x9c8] sm:$0xff]
        %v1354 = vld [vmem:[%s716 + $0x9d0] sm:$0xff]
        %v1355 = vld [vmem:[%s716 + $0x9d8] sm:$0xff]
        %v1356 = vld [vmem:[%s716 + $0x9e0] sm:$0xff]
        %v1357 = vld [vmem:[%s716 + $0x9e8] sm:$0xff]
        %v1358 = vld [vmem:[%s716 + $0x9f0] sm:$0xff]
        %v1359 = vld [vmem:[%s716 + $0x9f8] sm:$0xff]
        %v1360 = vld [vmem:[%s716 + $0xa00] sm:$0xff]
        %v1361 = vld [vmem:[%s716 + $0xa08] sm:$0xff]
        %v1362 = vld [vmem:[%s716 + $0xa10] sm:$0xff]
        %v1363 = vld [vmem:[%s716 + $0xa18] sm:$0xff]
        %v1364 = vld [vmem:[%s716 + $0xa20] sm:$0xff]
        %v1365 = vld [vmem:[%s716 + $0xa28] sm:$0xff]
        %v1366 = vld [vmem:[%s716 + $0xa30] sm:$0xff]
        %v1367 = vld [vmem:[%s716 + $0xa38] sm:$0xff]
        %v1368 = vld [vmem:[%s716 + $0xa40] sm:$0xff]
        %v1369 = vld [vmem:[%s716 + $0xa48] sm:$0xff]
        %v1370 = vld [vmem:[%s716 + $0xa50] sm:$0xff]
        %v1371 = vld [vmem:[%s716 + $0xa58] sm:$0xff]
        %v1372 = vld [vmem:[%s716 + $0xa60] sm:$0xff]
        %v1373 = vld [vmem:[%s716 + $0xa68] sm:$0xff]
        %v1374 = vld [vmem:[%s716 + $0xa70] sm:$0xff]
        %v1375 = vld [vmem:[%s716 + $0xa78] sm:$0xff]
        %v1376 = vld [vmem:[%s716 + $0xa80] sm:$0xff]
        %v1377 = vld [vmem:[%s716 + $0xa88] sm:$0xff]
        %v1378 = vld [vmem:[%s716 + $0xa90] sm:$0xff]
        %v1379 = vld [vmem:[%s716 + $0xa98] sm:$0xff]
        %v1380 = vld [vmem:[%s716 + $0xaa0] sm:$0xff]
        %v1381 = vld [vmem:[%s716 + $0xaa8] sm:$0xff]
        %v1382 = vld [vmem:[%s716 + $0xab0] sm:$0xff]
        %v1383 = vld [vmem:[%s716 + $0xab8] sm:$0xff]
        %v1384 = vld [vmem:[%s716 + $0xac0] sm:$0xff]
        %v1385 = vld [vmem:[%s716 + $0xac8] sm:$0xff]
        %v1386 = vld [vmem:[%s716 + $0xad0] sm:$0xff]
        %v1387 = vld [vmem:[%s716 + $0xad8] sm:$0xff]
        %v1388 = vld [vmem:[%s716 + $0xae0] sm:$0xff]
        %v1389 = vld [vmem:[%s716 + $0xae8] sm:$0xff]
        %v1390 = vld [vmem:[%s716 + $0xaf0] sm:$0xff]
        %v1391 = vld [vmem:[%s716 + $0xaf8] sm:$0xff]
        %v1392 = vld [vmem:[%s716 + $0xb00] sm:$0xff]
        %v1393 = vld [vmem:[%s716 + $0xb08] sm:$0xff]
        %v1394 = vld [vmem:[%s716 + $0xb10] sm:$0xff]
        %v1395 = vld [vmem:[%s716 + $0xb18] sm:$0xff]
        %v1396 = vld [vmem:[%s716 + $0xb20] sm:$0xff]
        %v1397 = vld [vmem:[%s716 + $0xb28] sm:$0xff]
        %v1398 = vld [vmem:[%s716 + $0xb30] sm:$0xff]
        %v1399 = vld [vmem:[%s716 + $0xb38] sm:$0xff]
        %v1400 = vld [vmem:[%s716 + $0xb40] sm:$0xff]
        %v1401 = vld [vmem:[%s716 + $0xb48] sm:$0xff]
        %v1402 = vld [vmem:[%s716 + $0xb50] sm:$0xff]
        %v1403 = vld [vmem:[%s716 + $0xb58] sm:$0xff]
        %v1404 = vld [vmem:[%s716 + $0xb60] sm:$0xff]
        %v1405 = vld [vmem:[%s716 + $0xb68] sm:$0xff]
        %v1406 = vld [vmem:[%s716 + $0xb70] sm:$0xff]
        %v1407 = vld [vmem:[%s716 + $0xb78] sm:$0xff]
        %v1408 = vld [vmem:[%s716 + $0xb80] sm:$0xff]
        %v1409 = vld [vmem:[%s716 + $0xb88] sm:$0xff]
        %v1410 = vld [vmem:[%s716 + $0xb90] sm:$0xff]
        %v1411 = vld [vmem:[%s716 + $0xb98] sm:$0xff]
        %v1412 = vld [vmem:[%s716 + $0xba0] sm:$0xff]
        %v1413 = vld [vmem:[%s716 + $0xba8] sm:$0xff]
        %v1414 = vld [vmem:[%s716 + $0xbb0] sm:$0xff]
        %v1415 = vld [vmem:[%s716 + $0xbb8] sm:$0xff]
        %v1416 = vld [vmem:[%s716 + $0xbc0] sm:$0xff]
        %v1417 = vld [vmem:[%s716 + $0xbc8] sm:$0xff]
        %v1418 = vld [vmem:[%s716 + $0xbd0] sm:$0xff]
        %v1419 = vld [vmem:[%s716 + $0xbd8] sm:$0xff]
        %v1420 = vld [vmem:[%s716 + $0xbe0] sm:$0xff]
        %v1421 = vld [vmem:[%s716 + $0xbe8] sm:$0xff]
        %v1422 = vld [vmem:[%s716 + $0xbf0] sm:$0xff]
        %v1423 = vld [vmem:[%s716 + $0xbf8] sm:$0xff]
        %v1424 = vld [vmem:[%s725] sm:$0xff]
        %v1425 = vld [vmem:[%s725 + $0x8] sm:$0xf]
        %v1428 = vlaneseq
        %v1429 = vshrl.u32 %v1428, 7
        %v1430 = vsub.s32 0, %v1429
        %v1431 = vrot.slane %v1424, %v1430
        %v1432 = vlaneseq
        %v1433 = vshrl.u32 %v1432, 7
        %v1434 = vsub.s32 1, %v1433
        %v1435 = vrot.slane %v1424, %v1434
        %v1436 = vlaneseq
        %v1437 = vshrl.u32 %v1436, 7
        %v1438 = vsub.s32 2, %v1437
        %v1439 = vrot.slane %v1424, %v1438
        %v1440 = vlaneseq
        %v1441 = vshrl.u32 %v1440, 7
        %v1442 = vsub.s32 3, %v1441
        %v1443 = vrot.slane %v1424, %v1442
        %v1444 = vlaneseq
        %v1445 = vshrl.u32 %v1444, 7
        %v1446 = vsub.s32 4, %v1445
        %v1447 = vrot.slane %v1424, %v1446
        %v1448 = vlaneseq
        %v1449 = vshrl.u32 %v1448, 7
        %v1450 = vsub.s32 5, %v1449
        %v1451 = vrot.slane %v1424, %v1450
        %v1452 = vlaneseq
        %v1453 = vshrl.u32 %v1452, 7
        %v1454 = vsub.s32 6, %v1453
        %v1455 = vrot.slane %v1424, %v1454
        %v1456 = vlaneseq
        %v1457 = vshrl.u32 %v1456, 7
        %v1458 = vsub.s32 7, %v1457
        %v1459 = vrot.slane %v1424, %v1458
        %v1460 = vlaneseq
        %v1461 = vshrl.u32 %v1460, 7
        %v1462 = vsub.s32 0, %v1461
        %v1463 = vrot.slane %v1425, %v1462
        %v1464 = vlaneseq
        %v1465 = vshrl.u32 %v1464, 7
        %v1466 = vsub.s32 1, %v1465
        %v1467 = vrot.slane %v1425, %v1466
        %v1468 = vlaneseq
        %v1469 = vshrl.u32 %v1468, 7
        %v1470 = vsub.s32 2, %v1469
        %v1471 = vrot.slane %v1425, %v1470
        %v1472 = vlaneseq
        %v1473 = vshrl.u32 %v1472, 7
        %v1474 = vsub.s32 3, %v1473
        %v1475 = vrot.slane %v1425, %v1474
        %v1872 = vunpack.c.l.b16 %v1040
        %v1873 = vunpack.c.h.b16 %v1040
        %v1874 = vunpack.c.l.b16 %v1041
        %v1875 = vunpack.c.h.b16 %v1041
        %v1876 = vunpack.c.l.b16 %v1042
        %v1877 = vunpack.c.h.b16 %v1042
        %v1878 = vunpack.c.l.b16 %v1043
        %v1879 = vunpack.c.h.b16 %v1043
        %v1880 = vunpack.c.l.b16 %v1044
        %v1881 = vunpack.c.h.b16 %v1044
        %v1882 = vunpack.c.l.b16 %v1045
        %v1883 = vunpack.c.h.b16 %v1045
        %v1884 = vunpack.c.l.b16 %v1046
        %v1885 = vunpack.c.h.b16 %v1046
        %v1886 = vunpack.c.l.b16 %v1047
        %v1887 = vunpack.c.h.b16 %v1047
        %v1888 = vunpack.c.l.b16 %v1048
        %v1889 = vunpack.c.h.b16 %v1048
        %v1890 = vunpack.c.l.b16 %v1049
        %v1891 = vunpack.c.h.b16 %v1049
        %v1892 = vunpack.c.l.b16 %v1050
        %v1893 = vunpack.c.h.b16 %v1050
        %v1894 = vunpack.c.l.b16 %v1051
        %v1895 = vunpack.c.h.b16 %v1051
        %v1896 = vunpack.c.l.b16 %v1052
        %v1897 = vunpack.c.h.b16 %v1052
        %v1898 = vunpack.c.l.b16 %v1053
        %v1899 = vunpack.c.h.b16 %v1053
        %v1900 = vunpack.c.l.b16 %v1054
        %v1901 = vunpack.c.h.b16 %v1054
        %v1902 = vunpack.c.l.b16 %v1055
        %v1903 = vunpack.c.h.b16 %v1055
        %v1904 = vunpack.c.l.b16 %v1056
        %v1905 = vunpack.c.h.b16 %v1056
        %v1906 = vunpack.c.l.b16 %v1057
        %v1907 = vunpack.c.h.b16 %v1057
        %v1908 = vunpack.c.l.b16 %v1058
        %v1909 = vunpack.c.h.b16 %v1058
        %v1910 = vunpack.c.l.b16 %v1059
        %v1911 = vunpack.c.h.b16 %v1059
        %v1912 = vunpack.c.l.b16 %v1060
        %v1913 = vunpack.c.h.b16 %v1060
        %v1914 = vunpack.c.l.b16 %v1061
        %v1915 = vunpack.c.h.b16 %v1061
        %v1916 = vunpack.c.l.b16 %v1062
        %v1917 = vunpack.c.h.b16 %v1062
        %v1918 = vunpack.c.l.b16 %v1063
        %v1919 = vunpack.c.h.b16 %v1063
        %v1920 = vunpack.c.l.b16 %v1064
        %v1921 = vunpack.c.h.b16 %v1064
        %v1922 = vunpack.c.l.b16 %v1065
        %v1923 = vunpack.c.h.b16 %v1065
        %v1924 = vunpack.c.l.b16 %v1066
        %v1925 = vunpack.c.h.b16 %v1066
        %v1926 = vunpack.c.l.b16 %v1067
        %v1927 = vunpack.c.h.b16 %v1067
        %v1928 = vunpack.c.l.b16 %v1068
        %v1929 = vunpack.c.h.b16 %v1068
        %v1930 = vunpack.c.l.b16 %v1069
        %v1931 = vunpack.c.h.b16 %v1069
        %v1932 = vunpack.c.l.b16 %v1070
        %v1933 = vunpack.c.h.b16 %v1070
        %v1934 = vunpack.c.l.b16 %v1071
        %v1935 = vunpack.c.h.b16 %v1071
        %v1936 = vunpack.c.l.b16 %v1072
        %v1937 = vunpack.c.h.b16 %v1072
        %v1938 = vunpack.c.l.b16 %v1073
        %v1939 = vunpack.c.h.b16 %v1073
        %v1940 = vunpack.c.l.b16 %v1074
        %v1941 = vunpack.c.h.b16 %v1074
        %v1942 = vunpack.c.l.b16 %v1075
        %v1943 = vunpack.c.h.b16 %v1075
        %v1944 = vunpack.c.l.b16 %v1076
        %v1945 = vunpack.c.h.b16 %v1076
        %v1946 = vunpack.c.l.b16 %v1077
        %v1947 = vunpack.c.h.b16 %v1077
        %v1948 = vunpack.c.l.b16 %v1078
        %v1949 = vunpack.c.h.b16 %v1078
        %v1950 = vunpack.c.l.b16 %v1079
        %v1951 = vunpack.c.h.b16 %v1079
        %v1952 = vunpack.c.l.b16 %v1080
        %v1953 = vunpack.c.h.b16 %v1080
        %v1954 = vunpack.c.l.b16 %v1081
        %v1955 = vunpack.c.h.b16 %v1081
        %v1956 = vunpack.c.l.b16 %v1082
        %v1957 = vunpack.c.h.b16 %v1082
        %v1958 = vunpack.c.l.b16 %v1083
        %v1959 = vunpack.c.h.b16 %v1083
        %v1960 = vunpack.c.l.b16 %v1084
        %v1961 = vunpack.c.h.b16 %v1084
        %v1962 = vunpack.c.l.b16 %v1085
        %v1963 = vunpack.c.h.b16 %v1085
        %v1964 = vunpack.c.l.b16 %v1086
        %v1965 = vunpack.c.h.b16 %v1086
        %v1966 = vunpack.c.l.b16 %v1087
        %v1967 = vunpack.c.h.b16 %v1087
        %v1968 = vunpack.c.l.b16 %v1088
        %v1969 = vunpack.c.h.b16 %v1088
        %v1970 = vunpack.c.l.b16 %v1089
        %v1971 = vunpack.c.h.b16 %v1089
        %v1972 = vunpack.c.l.b16 %v1090
        %v1973 = vunpack.c.h.b16 %v1090
        %v1974 = vunpack.c.l.b16 %v1091
        %v1975 = vunpack.c.h.b16 %v1091
        %v1976 = vunpack.c.l.b16 %v1092
        %v1977 = vunpack.c.h.b16 %v1092
        %v1978 = vunpack.c.l.b16 %v1093
        %v1979 = vunpack.c.h.b16 %v1093
        %v1980 = vunpack.c.l.b16 %v1094
        %v1981 = vunpack.c.h.b16 %v1094
        %v1982 = vunpack.c.l.b16 %v1095
        %v1983 = vunpack.c.h.b16 %v1095
        %v1984 = vunpack.c.l.b16 %v1096
        %v1985 = vunpack.c.h.b16 %v1096
        %v1986 = vunpack.c.l.b16 %v1097
        %v1987 = vunpack.c.h.b16 %v1097
        %v1988 = vunpack.c.l.b16 %v1098
        %v1989 = vunpack.c.h.b16 %v1098
        %v1990 = vunpack.c.l.b16 %v1099
        %v1991 = vunpack.c.h.b16 %v1099
        %v1992 = vunpack.c.l.b16 %v1100
        %v1993 = vunpack.c.h.b16 %v1100
        %v1994 = vunpack.c.l.b16 %v1101
        %v1995 = vunpack.c.h.b16 %v1101
        %v1996 = vunpack.c.l.b16 %v1102
        %v1997 = vunpack.c.h.b16 %v1102
        %v1998 = vunpack.c.l.b16 %v1103
        %v1999 = vunpack.c.h.b16 %v1103
        %v2000 = vunpack.c.l.b16 %v1104
        %v2001 = vunpack.c.h.b16 %v1104
        %v2002 = vunpack.c.l.b16 %v1105
        %v2003 = vunpack.c.h.b16 %v1105
        %v2004 = vunpack.c.l.b16 %v1106
        %v2005 = vunpack.c.h.b16 %v1106
        %v2006 = vunpack.c.l.b16 %v1107
        %v2007 = vunpack.c.h.b16 %v1107
        %v2008 = vunpack.c.l.b16 %v1108
        %v2009 = vunpack.c.h.b16 %v1108
        %v2010 = vunpack.c.l.b16 %v1109
        %v2011 = vunpack.c.h.b16 %v1109
        %v2012 = vunpack.c.l.b16 %v1110
        %v2013 = vunpack.c.h.b16 %v1110
        %v2014 = vunpack.c.l.b16 %v1111
        %v2015 = vunpack.c.h.b16 %v1111
        %v2016 = vunpack.c.l.b16 %v1112
        %v2017 = vunpack.c.h.b16 %v1112
        %v2018 = vunpack.c.l.b16 %v1113
        %v2019 = vunpack.c.h.b16 %v1113
        %v2020 = vunpack.c.l.b16 %v1114
        %v2021 = vunpack.c.h.b16 %v1114
        %v2022 = vunpack.c.l.b16 %v1115
        %v2023 = vunpack.c.h.b16 %v1115
        %v2024 = vunpack.c.l.b16 %v1116
        %v2025 = vunpack.c.h.b16 %v1116
        %v2026 = vunpack.c.l.b16 %v1117
        %v2027 = vunpack.c.h.b16 %v1117
        %v2028 = vunpack.c.l.b16 %v1118
        %v2029 = vunpack.c.h.b16 %v1118
        %v2030 = vunpack.c.l.b16 %v1119
        %v2031 = vunpack.c.h.b16 %v1119
        %v2032 = vunpack.c.l.b16 %v1120
        %v2033 = vunpack.c.h.b16 %v1120
        %v2034 = vunpack.c.l.b16 %v1121
        %v2035 = vunpack.c.h.b16 %v1121
        %v2036 = vunpack.c.l.b16 %v1122
        %v2037 = vunpack.c.h.b16 %v1122
        %v2038 = vunpack.c.l.b16 %v1123
        %v2039 = vunpack.c.h.b16 %v1123
        %v2040 = vunpack.c.l.b16 %v1124
        %v2041 = vunpack.c.h.b16 %v1124
        %v2042 = vunpack.c.l.b16 %v1125
        %v2043 = vunpack.c.h.b16 %v1125
        %v2044 = vunpack.c.l.b16 %v1126
        %v2045 = vunpack.c.h.b16 %v1126
        %v2046 = vunpack.c.l.b16 %v1127
        %v2047 = vunpack.c.h.b16 %v1127
        %v2048 = vunpack.c.l.b16 %v1128
        %v2049 = vunpack.c.h.b16 %v1128
        %v2050 = vunpack.c.l.b16 %v1129
        %v2051 = vunpack.c.h.b16 %v1129
        %v2052 = vunpack.c.l.b16 %v1130
        %v2053 = vunpack.c.h.b16 %v1130
        %v2054 = vunpack.c.l.b16 %v1131
        %v2055 = vunpack.c.h.b16 %v1131
        %v2056 = vunpack.c.l.b16 %v1132
        %v2057 = vunpack.c.h.b16 %v1132
        %v2058 = vunpack.c.l.b16 %v1133
        %v2059 = vunpack.c.h.b16 %v1133
        %v2060 = vunpack.c.l.b16 %v1134
        %v2061 = vunpack.c.h.b16 %v1134
        %v2062 = vunpack.c.l.b16 %v1135
        %v2063 = vunpack.c.h.b16 %v1135
        %v2064 = vunpack.c.l.b16 %v1136
        %v2065 = vunpack.c.h.b16 %v1136
        %v2066 = vunpack.c.l.b16 %v1137
        %v2067 = vunpack.c.h.b16 %v1137
        %v2068 = vunpack.c.l.b16 %v1138
        %v2069 = vunpack.c.h.b16 %v1138
        %v2070 = vunpack.c.l.b16 %v1139
        %v2071 = vunpack.c.h.b16 %v1139
        %v2072 = vunpack.c.l.b16 %v1140
        %v2073 = vunpack.c.h.b16 %v1140
        %v2074 = vunpack.c.l.b16 %v1141
        %v2075 = vunpack.c.h.b16 %v1141
        %v2076 = vunpack.c.l.b16 %v1142
        %v2077 = vunpack.c.h.b16 %v1142
        %v2078 = vunpack.c.l.b16 %v1143
        %v2079 = vunpack.c.h.b16 %v1143
        %v2080 = vunpack.c.l.b16 %v1144
        %v2081 = vunpack.c.h.b16 %v1144
        %v2082 = vunpack.c.l.b16 %v1145
        %v2083 = vunpack.c.h.b16 %v1145
        %v2084 = vunpack.c.l.b16 %v1146
        %v2085 = vunpack.c.h.b16 %v1146
        %v2086 = vunpack.c.l.b16 %v1147
        %v2087 = vunpack.c.h.b16 %v1147
        %v2088 = vunpack.c.l.b16 %v1148
        %v2089 = vunpack.c.h.b16 %v1148
        %v2090 = vunpack.c.l.b16 %v1149
        %v2091 = vunpack.c.h.b16 %v1149
        %v2092 = vunpack.c.l.b16 %v1150
        %v2093 = vunpack.c.h.b16 %v1150
        %v2094 = vunpack.c.l.b16 %v1151
        %v2095 = vunpack.c.h.b16 %v1151
        %v2096 = vunpack.c.l.b16 %v1152
        %v2097 = vunpack.c.h.b16 %v1152
        %v2098 = vunpack.c.l.b16 %v1153
        %v2099 = vunpack.c.h.b16 %v1153
        %v2100 = vunpack.c.l.b16 %v1154
        %v2101 = vunpack.c.h.b16 %v1154
        %v2102 = vunpack.c.l.b16 %v1155
        %v2103 = vunpack.c.h.b16 %v1155
        %v2104 = vunpack.c.l.b16 %v1156
        %v2105 = vunpack.c.h.b16 %v1156
        %v2106 = vunpack.c.l.b16 %v1157
        %v2107 = vunpack.c.h.b16 %v1157
        %v2108 = vunpack.c.l.b16 %v1158
        %v2109 = vunpack.c.h.b16 %v1158
        %v2110 = vunpack.c.l.b16 %v1159
        %v2111 = vunpack.c.h.b16 %v1159
        %v2112 = vunpack.c.l.b16 %v1160
        %v2113 = vunpack.c.h.b16 %v1160
        %v2114 = vunpack.c.l.b16 %v1161
        %v2115 = vunpack.c.h.b16 %v1161
        %v2116 = vunpack.c.l.b16 %v1162
        %v2117 = vunpack.c.h.b16 %v1162
        %v2118 = vunpack.c.l.b16 %v1163
        %v2119 = vunpack.c.h.b16 %v1163
        %v2120 = vunpack.c.l.b16 %v1164
        %v2121 = vunpack.c.h.b16 %v1164
        %v2122 = vunpack.c.l.b16 %v1165
        %v2123 = vunpack.c.h.b16 %v1165
        %v2124 = vunpack.c.l.b16 %v1166
        %v2125 = vunpack.c.h.b16 %v1166
        %v2126 = vunpack.c.l.b16 %v1167
        %v2127 = vunpack.c.h.b16 %v1167
        %v2128 = vunpack.c.l.b16 %v1168
        %v2129 = vunpack.c.h.b16 %v1168
        %v2130 = vunpack.c.l.b16 %v1169
        %v2131 = vunpack.c.h.b16 %v1169
        %v2132 = vunpack.c.l.b16 %v1170
        %v2133 = vunpack.c.h.b16 %v1170
        %v2134 = vunpack.c.l.b16 %v1171
        %v2135 = vunpack.c.h.b16 %v1171
        %v2136 = vunpack.c.l.b16 %v1172
        %v2137 = vunpack.c.h.b16 %v1172
        %v2138 = vunpack.c.l.b16 %v1173
        %v2139 = vunpack.c.h.b16 %v1173
        %v2140 = vunpack.c.l.b16 %v1174
        %v2141 = vunpack.c.h.b16 %v1174
        %v2142 = vunpack.c.l.b16 %v1175
        %v2143 = vunpack.c.h.b16 %v1175
        %v2144 = vunpack.c.l.b16 %v1176
        %v2145 = vunpack.c.h.b16 %v1176
        %v2146 = vunpack.c.l.b16 %v1177
        %v2147 = vunpack.c.h.b16 %v1177
        %v2148 = vunpack.c.l.b16 %v1178
        %v2149 = vunpack.c.h.b16 %v1178
        %v2150 = vunpack.c.l.b16 %v1179
        %v2151 = vunpack.c.h.b16 %v1179
        %v2152 = vunpack.c.l.b16 %v1180
        %v2153 = vunpack.c.h.b16 %v1180
        %v2154 = vunpack.c.l.b16 %v1181
        %v2155 = vunpack.c.h.b16 %v1181
        %v2156 = vunpack.c.l.b16 %v1182
        %v2157 = vunpack.c.h.b16 %v1182
        %v2158 = vunpack.c.l.b16 %v1183
        %v2159 = vunpack.c.h.b16 %v1183
        %v2160 = vunpack.c.l.b16 %v1184
        %v2161 = vunpack.c.h.b16 %v1184
        %v2162 = vunpack.c.l.b16 %v1185
        %v2163 = vunpack.c.h.b16 %v1185
        %v2164 = vunpack.c.l.b16 %v1186
        %v2165 = vunpack.c.h.b16 %v1186
        %v2166 = vunpack.c.l.b16 %v1187
        %v2167 = vunpack.c.h.b16 %v1187
        %v2168 = vunpack.c.l.b16 %v1188
        %v2169 = vunpack.c.h.b16 %v1188
        %v2170 = vunpack.c.l.b16 %v1189
        %v2171 = vunpack.c.h.b16 %v1189
        %v2172 = vunpack.c.l.b16 %v1190
        %v2173 = vunpack.c.h.b16 %v1190
        %v2174 = vunpack.c.l.b16 %v1191
        %v2175 = vunpack.c.h.b16 %v1191
        %v2176 = vunpack.c.l.b16 %v1192
        %v2177 = vunpack.c.h.b16 %v1192
        %v2178 = vunpack.c.l.b16 %v1193
        %v2179 = vunpack.c.h.b16 %v1193
        %v2180 = vunpack.c.l.b16 %v1194
        %v2181 = vunpack.c.h.b16 %v1194
        %v2182 = vunpack.c.l.b16 %v1195
        %v2183 = vunpack.c.h.b16 %v1195
        %v2184 = vunpack.c.l.b16 %v1196
        %v2185 = vunpack.c.h.b16 %v1196
        %v2186 = vunpack.c.l.b16 %v1197
        %v2187 = vunpack.c.h.b16 %v1197
        %v2188 = vunpack.c.l.b16 %v1198
        %v2189 = vunpack.c.h.b16 %v1198
        %v2190 = vunpack.c.l.b16 %v1199
        %v2191 = vunpack.c.h.b16 %v1199
        %v2192 = vunpack.c.l.b16 %v1200
        %v2193 = vunpack.c.h.b16 %v1200
        %v2194 = vunpack.c.l.b16 %v1201
        %v2195 = vunpack.c.h.b16 %v1201
        %v2196 = vunpack.c.l.b16 %v1202
        %v2197 = vunpack.c.h.b16 %v1202
        %v2198 = vunpack.c.l.b16 %v1203
        %v2199 = vunpack.c.h.b16 %v1203
        %v2200 = vunpack.c.l.b16 %v1204
        %v2201 = vunpack.c.h.b16 %v1204
        %v2202 = vunpack.c.l.b16 %v1205
        %v2203 = vunpack.c.h.b16 %v1205
        %v2204 = vunpack.c.l.b16 %v1206
        %v2205 = vunpack.c.h.b16 %v1206
        %v2206 = vunpack.c.l.b16 %v1207
        %v2207 = vunpack.c.h.b16 %v1207
        %v2208 = vunpack.c.l.b16 %v1208
        %v2209 = vunpack.c.h.b16 %v1208
        %v2210 = vunpack.c.l.b16 %v1209
        %v2211 = vunpack.c.h.b16 %v1209
        %v2212 = vunpack.c.l.b16 %v1210
        %v2213 = vunpack.c.h.b16 %v1210
        %v2214 = vunpack.c.l.b16 %v1211
        %v2215 = vunpack.c.h.b16 %v1211
        %v2216 = vunpack.c.l.b16 %v1212
        %v2217 = vunpack.c.h.b16 %v1212
        %v2218 = vunpack.c.l.b16 %v1213
        %v2219 = vunpack.c.h.b16 %v1213
        %v2220 = vunpack.c.l.b16 %v1214
        %v2221 = vunpack.c.h.b16 %v1214
        %v2222 = vunpack.c.l.b16 %v1215
        %v2223 = vunpack.c.h.b16 %v1215
        %v2224 = vunpack.c.l.b16 %v1216
        %v2225 = vunpack.c.h.b16 %v1216
        %v2226 = vunpack.c.l.b16 %v1217
        %v2227 = vunpack.c.h.b16 %v1217
        %v2228 = vunpack.c.l.b16 %v1218
        %v2229 = vunpack.c.h.b16 %v1218
        %v2230 = vunpack.c.l.b16 %v1219
        %v2231 = vunpack.c.h.b16 %v1219
        %v2232 = vunpack.c.l.b16 %v1220
        %v2233 = vunpack.c.h.b16 %v1220
        %v2234 = vunpack.c.l.b16 %v1221
        %v2235 = vunpack.c.h.b16 %v1221
        %v2236 = vunpack.c.l.b16 %v1222
        %v2237 = vunpack.c.h.b16 %v1222
        %v2238 = vunpack.c.l.b16 %v1223
        %v2239 = vunpack.c.h.b16 %v1223
        %v2240 = vunpack.c.l.b16 %v1224
        %v2241 = vunpack.c.h.b16 %v1224
        %v2242 = vunpack.c.l.b16 %v1225
        %v2243 = vunpack.c.h.b16 %v1225
        %v2244 = vunpack.c.l.b16 %v1226
        %v2245 = vunpack.c.h.b16 %v1226
        %v2246 = vunpack.c.l.b16 %v1227
        %v2247 = vunpack.c.h.b16 %v1227
        %v2248 = vunpack.c.l.b16 %v1228
        %v2249 = vunpack.c.h.b16 %v1228
        %v2250 = vunpack.c.l.b16 %v1229
        %v2251 = vunpack.c.h.b16 %v1229
        %v2252 = vunpack.c.l.b16 %v1230
        %v2253 = vunpack.c.h.b16 %v1230
        %v2254 = vunpack.c.l.b16 %v1231
        %v2255 = vunpack.c.h.b16 %v1231
        %v2256 = vunpack.c.l.b16 %v1232
        %v2257 = vunpack.c.h.b16 %v1232
        %v2258 = vunpack.c.l.b16 %v1233
        %v2259 = vunpack.c.h.b16 %v1233
        %v2260 = vunpack.c.l.b16 %v1234
        %v2261 = vunpack.c.h.b16 %v1234
        %v2262 = vunpack.c.l.b16 %v1235
        %v2263 = vunpack.c.h.b16 %v1235
        %v2264 = vunpack.c.l.b16 %v1236
        %v2265 = vunpack.c.h.b16 %v1236
        %v2266 = vunpack.c.l.b16 %v1237
        %v2267 = vunpack.c.h.b16 %v1237
        %v2268 = vunpack.c.l.b16 %v1238
        %v2269 = vunpack.c.h.b16 %v1238
        %v2270 = vunpack.c.l.b16 %v1239
        %v2271 = vunpack.c.h.b16 %v1239
        %v2272 = vunpack.c.l.b16 %v1240
        %v2273 = vunpack.c.h.b16 %v1240
        %v2274 = vunpack.c.l.b16 %v1241
        %v2275 = vunpack.c.h.b16 %v1241
        %v2276 = vunpack.c.l.b16 %v1242
        %v2277 = vunpack.c.h.b16 %v1242
        %v2278 = vunpack.c.l.b16 %v1243
        %v2279 = vunpack.c.h.b16 %v1243
        %v2280 = vunpack.c.l.b16 %v1244
        %v2281 = vunpack.c.h.b16 %v1244
        %v2282 = vunpack.c.l.b16 %v1245
        %v2283 = vunpack.c.h.b16 %v1245
        %v2284 = vunpack.c.l.b16 %v1246
        %v2285 = vunpack.c.h.b16 %v1246
        %v2286 = vunpack.c.l.b16 %v1247
        %v2287 = vunpack.c.h.b16 %v1247
        %v2288 = vunpack.c.l.b16 %v1248
        %v2289 = vunpack.c.h.b16 %v1248
        %v2290 = vunpack.c.l.b16 %v1249
        %v2291 = vunpack.c.h.b16 %v1249
        %v2292 = vunpack.c.l.b16 %v1250
        %v2293 = vunpack.c.h.b16 %v1250
        %v2294 = vunpack.c.l.b16 %v1251
        %v2295 = vunpack.c.h.b16 %v1251
        %v2296 = vunpack.c.l.b16 %v1252
        %v2297 = vunpack.c.h.b16 %v1252
        %v2298 = vunpack.c.l.b16 %v1253
        %v2299 = vunpack.c.h.b16 %v1253
        %v2300 = vunpack.c.l.b16 %v1254
        %v2301 = vunpack.c.h.b16 %v1254
        %v2302 = vunpack.c.l.b16 %v1255
        %v2303 = vunpack.c.h.b16 %v1255
        %v2304 = vunpack.c.l.b16 %v1256
        %v2305 = vunpack.c.h.b16 %v1256
        %v2306 = vunpack.c.l.b16 %v1257
        %v2307 = vunpack.c.h.b16 %v1257
        %v2308 = vunpack.c.l.b16 %v1258
        %v2309 = vunpack.c.h.b16 %v1258
        %v2310 = vunpack.c.l.b16 %v1259
        %v2311 = vunpack.c.h.b16 %v1259
        %v2312 = vunpack.c.l.b16 %v1260
        %v2313 = vunpack.c.h.b16 %v1260
        %v2314 = vunpack.c.l.b16 %v1261
        %v2315 = vunpack.c.h.b16 %v1261
        %v2316 = vunpack.c.l.b16 %v1262
        %v2317 = vunpack.c.h.b16 %v1262
        %v2318 = vunpack.c.l.b16 %v1263
        %v2319 = vunpack.c.h.b16 %v1263
        %v2320 = vunpack.c.l.b16 %v1264
        %v2321 = vunpack.c.h.b16 %v1264
        %v2322 = vunpack.c.l.b16 %v1265
        %v2323 = vunpack.c.h.b16 %v1265
        %v2324 = vunpack.c.l.b16 %v1266
        %v2325 = vunpack.c.h.b16 %v1266
        %v2326 = vunpack.c.l.b16 %v1267
        %v2327 = vunpack.c.h.b16 %v1267
        %v2328 = vunpack.c.l.b16 %v1268
        %v2329 = vunpack.c.h.b16 %v1268
        %v2330 = vunpack.c.l.b16 %v1269
        %v2331 = vunpack.c.h.b16 %v1269
        %v2332 = vunpack.c.l.b16 %v1270
        %v2333 = vunpack.c.h.b16 %v1270
        %v2334 = vunpack.c.l.b16 %v1271
        %v2335 = vunpack.c.h.b16 %v1271
        %v2336 = vunpack.c.l.b16 %v1272
        %v2337 = vunpack.c.h.b16 %v1272
        %v2338 = vunpack.c.l.b16 %v1273
        %v2339 = vunpack.c.h.b16 %v1273
        %v2340 = vunpack.c.l.b16 %v1274
        %v2341 = vunpack.c.h.b16 %v1274
        %v2342 = vunpack.c.l.b16 %v1275
        %v2343 = vunpack.c.h.b16 %v1275
        %v2344 = vunpack.c.l.b16 %v1276
        %v2345 = vunpack.c.h.b16 %v1276
        %v2346 = vunpack.c.l.b16 %v1277
        %v2347 = vunpack.c.h.b16 %v1277
        %v2348 = vunpack.c.l.b16 %v1278
        %v2349 = vunpack.c.h.b16 %v1278
        %v2350 = vunpack.c.l.b16 %v1279
        %v2351 = vunpack.c.h.b16 %v1279
        %v2352 = vunpack.c.l.b16 %v1280
        %v2353 = vunpack.c.h.b16 %v1280
        %v2354 = vunpack.c.l.b16 %v1281
        %v2355 = vunpack.c.h.b16 %v1281
        %v2356 = vunpack.c.l.b16 %v1282
        %v2357 = vunpack.c.h.b16 %v1282
        %v2358 = vunpack.c.l.b16 %v1283
        %v2359 = vunpack.c.h.b16 %v1283
        %v2360 = vunpack.c.l.b16 %v1284
        %v2361 = vunpack.c.h.b16 %v1284
        %v2362 = vunpack.c.l.b16 %v1285
        %v2363 = vunpack.c.h.b16 %v1285
        %v2364 = vunpack.c.l.b16 %v1286
        %v2365 = vunpack.c.h.b16 %v1286
        %v2366 = vunpack.c.l.b16 %v1287
        %v2367 = vunpack.c.h.b16 %v1287
        %v2368 = vunpack.c.l.b16 %v1288
        %v2369 = vunpack.c.h.b16 %v1288
        %v2370 = vunpack.c.l.b16 %v1289
        %v2371 = vunpack.c.h.b16 %v1289
        %v2372 = vunpack.c.l.b16 %v1290
        %v2373 = vunpack.c.h.b16 %v1290
        %v2374 = vunpack.c.l.b16 %v1291
        %v2375 = vunpack.c.h.b16 %v1291
        %v2376 = vunpack.c.l.b16 %v1292
        %v2377 = vunpack.c.h.b16 %v1292
        %v2378 = vunpack.c.l.b16 %v1293
        %v2379 = vunpack.c.h.b16 %v1293
        %v2380 = vunpack.c.l.b16 %v1294
        %v2381 = vunpack.c.h.b16 %v1294
        %v2382 = vunpack.c.l.b16 %v1295
        %v2383 = vunpack.c.h.b16 %v1295
        %v2384 = vunpack.c.l.b16 %v1296
        %v2385 = vunpack.c.h.b16 %v1296
        %v2386 = vunpack.c.l.b16 %v1297
        %v2387 = vunpack.c.h.b16 %v1297
        %v2388 = vunpack.c.l.b16 %v1298
        %v2389 = vunpack.c.h.b16 %v1298
        %v2390 = vunpack.c.l.b16 %v1299
        %v2391 = vunpack.c.h.b16 %v1299
        %v2392 = vunpack.c.l.b16 %v1300
        %v2393 = vunpack.c.h.b16 %v1300
        %v2394 = vunpack.c.l.b16 %v1301
        %v2395 = vunpack.c.h.b16 %v1301
        %v2396 = vunpack.c.l.b16 %v1302
        %v2397 = vunpack.c.h.b16 %v1302
        %v2398 = vunpack.c.l.b16 %v1303
        %v2399 = vunpack.c.h.b16 %v1303
        %v2400 = vunpack.c.l.b16 %v1304
        %v2401 = vunpack.c.h.b16 %v1304
        %v2402 = vunpack.c.l.b16 %v1305
        %v2403 = vunpack.c.h.b16 %v1305
        %v2404 = vunpack.c.l.b16 %v1306
        %v2405 = vunpack.c.h.b16 %v1306
        %v2406 = vunpack.c.l.b16 %v1307
        %v2407 = vunpack.c.h.b16 %v1307
        %v2408 = vunpack.c.l.b16 %v1308
        %v2409 = vunpack.c.h.b16 %v1308
        %v2410 = vunpack.c.l.b16 %v1309
        %v2411 = vunpack.c.h.b16 %v1309
        %v2412 = vunpack.c.l.b16 %v1310
        %v2413 = vunpack.c.h.b16 %v1310
        %v2414 = vunpack.c.l.b16 %v1311
        %v2415 = vunpack.c.h.b16 %v1311
        %v2416 = vunpack.c.l.b16 %v1312
        %v2417 = vunpack.c.h.b16 %v1312
        %v2418 = vunpack.c.l.b16 %v1313
        %v2419 = vunpack.c.h.b16 %v1313
        %v2420 = vunpack.c.l.b16 %v1314
        %v2421 = vunpack.c.h.b16 %v1314
        %v2422 = vunpack.c.l.b16 %v1315
        %v2423 = vunpack.c.h.b16 %v1315
        %v2424 = vunpack.c.l.b16 %v1316
        %v2425 = vunpack.c.h.b16 %v1316
        %v2426 = vunpack.c.l.b16 %v1317
        %v2427 = vunpack.c.h.b16 %v1317
        %v2428 = vunpack.c.l.b16 %v1318
        %v2429 = vunpack.c.h.b16 %v1318
        %v2430 = vunpack.c.l.b16 %v1319
        %v2431 = vunpack.c.h.b16 %v1319
        %v2432 = vunpack.c.l.b16 %v1320
        %v2433 = vunpack.c.h.b16 %v1320
        %v2434 = vunpack.c.l.b16 %v1321
        %v2435 = vunpack.c.h.b16 %v1321
        %v2436 = vunpack.c.l.b16 %v1322
        %v2437 = vunpack.c.h.b16 %v1322
        %v2438 = vunpack.c.l.b16 %v1323
        %v2439 = vunpack.c.h.b16 %v1323
        %v2440 = vunpack.c.l.b16 %v1324
        %v2441 = vunpack.c.h.b16 %v1324
        %v2442 = vunpack.c.l.b16 %v1325
        %v2443 = vunpack.c.h.b16 %v1325
        %v2444 = vunpack.c.l.b16 %v1326
        %v2445 = vunpack.c.h.b16 %v1326
        %v2446 = vunpack.c.l.b16 %v1327
        %v2447 = vunpack.c.h.b16 %v1327
        %v2448 = vunpack.c.l.b16 %v1328
        %v2449 = vunpack.c.h.b16 %v1328
        %v2450 = vunpack.c.l.b16 %v1329
        %v2451 = vunpack.c.h.b16 %v1329
        %v2452 = vunpack.c.l.b16 %v1330
        %v2453 = vunpack.c.h.b16 %v1330
        %v2454 = vunpack.c.l.b16 %v1331
        %v2455 = vunpack.c.h.b16 %v1331
        %v2456 = vunpack.c.l.b16 %v1332
        %v2457 = vunpack.c.h.b16 %v1332
        %v2458 = vunpack.c.l.b16 %v1333
        %v2459 = vunpack.c.h.b16 %v1333
        %v2460 = vunpack.c.l.b16 %v1334
        %v2461 = vunpack.c.h.b16 %v1334
        %v2462 = vunpack.c.l.b16 %v1335
        %v2463 = vunpack.c.h.b16 %v1335
        %v2464 = vunpack.c.l.b16 %v1336
        %v2465 = vunpack.c.h.b16 %v1336
        %v2466 = vunpack.c.l.b16 %v1337
        %v2467 = vunpack.c.h.b16 %v1337
        %v2468 = vunpack.c.l.b16 %v1338
        %v2469 = vunpack.c.h.b16 %v1338
        %v2470 = vunpack.c.l.b16 %v1339
        %v2471 = vunpack.c.h.b16 %v1339
        %v2472 = vunpack.c.l.b16 %v1340
        %v2473 = vunpack.c.h.b16 %v1340
        %v2474 = vunpack.c.l.b16 %v1341
        %v2475 = vunpack.c.h.b16 %v1341
        %v2476 = vunpack.c.l.b16 %v1342
        %v2477 = vunpack.c.h.b16 %v1342
        %v2478 = vunpack.c.l.b16 %v1343
        %v2479 = vunpack.c.h.b16 %v1343
        %v2480 = vunpack.c.l.b16 %v1344
        %v2481 = vunpack.c.h.b16 %v1344
        %v2482 = vunpack.c.l.b16 %v1345
        %v2483 = vunpack.c.h.b16 %v1345
        %v2484 = vunpack.c.l.b16 %v1346
        %v2485 = vunpack.c.h.b16 %v1346
        %v2486 = vunpack.c.l.b16 %v1347
        %v2487 = vunpack.c.h.b16 %v1347
        %v2488 = vunpack.c.l.b16 %v1348
        %v2489 = vunpack.c.h.b16 %v1348
        %v2490 = vunpack.c.l.b16 %v1349
        %v2491 = vunpack.c.h.b16 %v1349
        %v2492 = vunpack.c.l.b16 %v1350
        %v2493 = vunpack.c.h.b16 %v1350
        %v2494 = vunpack.c.l.b16 %v1351
        %v2495 = vunpack.c.h.b16 %v1351
        %v2496 = vunpack.c.l.b16 %v1352
        %v2497 = vunpack.c.h.b16 %v1352
        %v2498 = vunpack.c.l.b16 %v1353
        %v2499 = vunpack.c.h.b16 %v1353
        %v2500 = vunpack.c.l.b16 %v1354
        %v2501 = vunpack.c.h.b16 %v1354
        %v2502 = vunpack.c.l.b16 %v1355
        %v2503 = vunpack.c.h.b16 %v1355
        %v2504 = vunpack.c.l.b16 %v1356
        %v2505 = vunpack.c.h.b16 %v1356
        %v2506 = vunpack.c.l.b16 %v1357
        %v2507 = vunpack.c.h.b16 %v1357
        %v2508 = vunpack.c.l.b16 %v1358
        %v2509 = vunpack.c.h.b16 %v1358
        %v2510 = vunpack.c.l.b16 %v1359
        %v2511 = vunpack.c.h.b16 %v1359
        %v2512 = vunpack.c.l.b16 %v1360
        %v2513 = vunpack.c.h.b16 %v1360
        %v2514 = vunpack.c.l.b16 %v1361
        %v2515 = vunpack.c.h.b16 %v1361
        %v2516 = vunpack.c.l.b16 %v1362
        %v2517 = vunpack.c.h.b16 %v1362
        %v2518 = vunpack.c.l.b16 %v1363
        %v2519 = vunpack.c.h.b16 %v1363
        %v2520 = vunpack.c.l.b16 %v1364
        %v2521 = vunpack.c.h.b16 %v1364
        %v2522 = vunpack.c.l.b16 %v1365
        %v2523 = vunpack.c.h.b16 %v1365
        %v2524 = vunpack.c.l.b16 %v1366
        %v2525 = vunpack.c.h.b16 %v1366
        %v2526 = vunpack.c.l.b16 %v1367
        %v2527 = vunpack.c.h.b16 %v1367
        %v2528 = vunpack.c.l.b16 %v1368
        %v2529 = vunpack.c.h.b16 %v1368
        %v2530 = vunpack.c.l.b16 %v1369
        %v2531 = vunpack.c.h.b16 %v1369
        %v2532 = vunpack.c.l.b16 %v1370
        %v2533 = vunpack.c.h.b16 %v1370
        %v2534 = vunpack.c.l.b16 %v1371
        %v2535 = vunpack.c.h.b16 %v1371
        %v2536 = vunpack.c.l.b16 %v1372
        %v2537 = vunpack.c.h.b16 %v1372
        %v2538 = vunpack.c.l.b16 %v1373
        %v2539 = vunpack.c.h.b16 %v1373
        %v2540 = vunpack.c.l.b16 %v1374
        %v2541 = vunpack.c.h.b16 %v1374
        %v2542 = vunpack.c.l.b16 %v1375
        %v2543 = vunpack.c.h.b16 %v1375
        %v2544 = vunpack.c.l.b16 %v1376
        %v2545 = vunpack.c.h.b16 %v1376
        %v2546 = vunpack.c.l.b16 %v1377
        %v2547 = vunpack.c.h.b16 %v1377
        %v2548 = vunpack.c.l.b16 %v1378
        %v2549 = vunpack.c.h.b16 %v1378
        %v2550 = vunpack.c.l.b16 %v1379
        %v2551 = vunpack.c.h.b16 %v1379
        %v2552 = vunpack.c.l.b16 %v1380
        %v2553 = vunpack.c.h.b16 %v1380
        %v2554 = vunpack.c.l.b16 %v1381
        %v2555 = vunpack.c.h.b16 %v1381
        %v2556 = vunpack.c.l.b16 %v1382
        %v2557 = vunpack.c.h.b16 %v1382
        %v2558 = vunpack.c.l.b16 %v1383
        %v2559 = vunpack.c.h.b16 %v1383
        %v2560 = vunpack.c.l.b16 %v1384
        %v2561 = vunpack.c.h.b16 %v1384
        %v2562 = vunpack.c.l.b16 %v1385
        %v2563 = vunpack.c.h.b16 %v1385
        %v2564 = vunpack.c.l.b16 %v1386
        %v2565 = vunpack.c.h.b16 %v1386
        %v2566 = vunpack.c.l.b16 %v1387
        %v2567 = vunpack.c.h.b16 %v1387
        %v2568 = vunpack.c.l.b16 %v1388
        %v2569 = vunpack.c.h.b16 %v1388
        %v2570 = vunpack.c.l.b16 %v1389
        %v2571 = vunpack.c.h.b16 %v1389
        %v2572 = vunpack.c.l.b16 %v1390
        %v2573 = vunpack.c.h.b16 %v1390
        %v2574 = vunpack.c.l.b16 %v1391
        %v2575 = vunpack.c.h.b16 %v1391
        %v2576 = vunpack.c.l.b16 %v1392
        %v2577 = vunpack.c.h.b16 %v1392
        %v2578 = vunpack.c.l.b16 %v1393
        %v2579 = vunpack.c.h.b16 %v1393
        %v2580 = vunpack.c.l.b16 %v1394
        %v2581 = vunpack.c.h.b16 %v1394
        %v2582 = vunpack.c.l.b16 %v1395
        %v2583 = vunpack.c.h.b16 %v1395
        %v2584 = vunpack.c.l.b16 %v1396
        %v2585 = vunpack.c.h.b16 %v1396
        %v2586 = vunpack.c.l.b16 %v1397
        %v2587 = vunpack.c.h.b16 %v1397
        %v2588 = vunpack.c.l.b16 %v1398
        %v2589 = vunpack.c.h.b16 %v1398
        %v2590 = vunpack.c.l.b16 %v1399
        %v2591 = vunpack.c.h.b16 %v1399
        %v2592 = vunpack.c.l.b16 %v1400
        %v2593 = vunpack.c.h.b16 %v1400
        %v2594 = vunpack.c.l.b16 %v1401
        %v2595 = vunpack.c.h.b16 %v1401
        %v2596 = vunpack.c.l.b16 %v1402
        %v2597 = vunpack.c.h.b16 %v1402
        %v2598 = vunpack.c.l.b16 %v1403
        %v2599 = vunpack.c.h.b16 %v1403
        %v2600 = vunpack.c.l.b16 %v1404
        %v2601 = vunpack.c.h.b16 %v1404
        %v2602 = vunpack.c.l.b16 %v1405
        %v2603 = vunpack.c.h.b16 %v1405
        %v2604 = vunpack.c.l.b16 %v1406
        %v2605 = vunpack.c.h.b16 %v1406
        %v2606 = vunpack.c.l.b16 %v1407
        %v2607 = vunpack.c.h.b16 %v1407
        %v2608 = vunpack.c.l.b16 %v1408
        %v2609 = vunpack.c.h.b16 %v1408
        %v2610 = vunpack.c.l.b16 %v1409
        %v2611 = vunpack.c.h.b16 %v1409
        %v2612 = vunpack.c.l.b16 %v1410
        %v2613 = vunpack.c.h.b16 %v1410
        %v2614 = vunpack.c.l.b16 %v1411
        %v2615 = vunpack.c.h.b16 %v1411
        %v2616 = vunpack.c.l.b16 %v1412
        %v2617 = vunpack.c.h.b16 %v1412
        %v2618 = vunpack.c.l.b16 %v1413
        %v2619 = vunpack.c.h.b16 %v1413
        %v2620 = vunpack.c.l.b16 %v1414
        %v2621 = vunpack.c.h.b16 %v1414
        %v2622 = vunpack.c.l.b16 %v1415
        %v2623 = vunpack.c.h.b16 %v1415
        %v2624 = vunpack.c.l.b16 %v1416
        %v2625 = vunpack.c.h.b16 %v1416
        %v2626 = vunpack.c.l.b16 %v1417
        %v2627 = vunpack.c.h.b16 %v1417
        %v2628 = vunpack.c.l.b16 %v1418
        %v2629 = vunpack.c.h.b16 %v1418
        %v2630 = vunpack.c.l.b16 %v1419
        %v2631 = vunpack.c.h.b16 %v1419
        %v2632 = vunpack.c.l.b16 %v1420
        %v2633 = vunpack.c.h.b16 %v1420
        %v2634 = vunpack.c.l.b16 %v1421
        %v2635 = vunpack.c.h.b16 %v1421
        %v2636 = vunpack.c.l.b16 %v1422
        %v2637 = vunpack.c.h.b16 %v1422
        %v2638 = vunpack.c.l.b16 %v1423
        %v2639 = vunpack.c.h.b16 %v1423
        %v2640 = vpack.c.b16 %v1884, %v1872
        %v2641 = vpack.c.b16 %v1885, %v1873
        %v2642 = vpack.c.b16 %v1886, %v1874
        %v2643 = vpack.c.b16 %v1887, %v1875
        %v2644 = vpack.c.b16 %v1888, %v1876
        %v2645 = vpack.c.b16 %v1889, %v1877
        %v2646 = vpack.c.b16 %v1890, %v1878
        %v2647 = vpack.c.b16 %v1891, %v1879
        %v2648 = vpack.c.b16 %v1892, %v1880
        %v2649 = vpack.c.b16 %v1893, %v1881
        %v2650 = vpack.c.b16 %v1894, %v1882
        %v2651 = vpack.c.b16 %v1895, %v1883
        %v2652 = vpack.c.b16 %v1908, %v1896
        %v2653 = vpack.c.b16 %v1909, %v1897
        %v2654 = vpack.c.b16 %v1910, %v1898
        %v2655 = vpack.c.b16 %v1911, %v1899
        %v2656 = vpack.c.b16 %v1912, %v1900
        %v2657 = vpack.c.b16 %v1913, %v1901
        %v2658 = vpack.c.b16 %v1914, %v1902
        %v2659 = vpack.c.b16 %v1915, %v1903
        %v2660 = vpack.c.b16 %v1916, %v1904
        %v2661 = vpack.c.b16 %v1917, %v1905
        %v2662 = vpack.c.b16 %v1918, %v1906
        %v2663 = vpack.c.b16 %v1919, %v1907
        %v2664 = vpack.c.b16 %v1932, %v1920
        %v2665 = vpack.c.b16 %v1933, %v1921
        %v2666 = vpack.c.b16 %v1934, %v1922
        %v2667 = vpack.c.b16 %v1935, %v1923
        %v2668 = vpack.c.b16 %v1936, %v1924
        %v2669 = vpack.c.b16 %v1937, %v1925
        %v2670 = vpack.c.b16 %v1938, %v1926
        %v2671 = vpack.c.b16 %v1939, %v1927
        %v2672 = vpack.c.b16 %v1940, %v1928
        %v2673 = vpack.c.b16 %v1941, %v1929
        %v2674 = vpack.c.b16 %v1942, %v1930
        %v2675 = vpack.c.b16 %v1943, %v1931
        %v2676 = vpack.c.b16 %v1956, %v1944
        %v2677 = vpack.c.b16 %v1957, %v1945
        %v2678 = vpack.c.b16 %v1958, %v1946
        %v2679 = vpack.c.b16 %v1959, %v1947
        %v2680 = vpack.c.b16 %v1960, %v1948
        %v2681 = vpack.c.b16 %v1961, %v1949
        %v2682 = vpack.c.b16 %v1962, %v1950
        %v2683 = vpack.c.b16 %v1963, %v1951
        %v2684 = vpack.c.b16 %v1964, %v1952
        %v2685 = vpack.c.b16 %v1965, %v1953
        %v2686 = vpack.c.b16 %v1966, %v1954
        %v2687 = vpack.c.b16 %v1967, %v1955
        %v2688 = vpack.c.b16 %v1980, %v1968
        %v2689 = vpack.c.b16 %v1981, %v1969
        %v2690 = vpack.c.b16 %v1982, %v1970
        %v2691 = vpack.c.b16 %v1983, %v1971
        %v2692 = vpack.c.b16 %v1984, %v1972
        %v2693 = vpack.c.b16 %v1985, %v1973
        %v2694 = vpack.c.b16 %v1986, %v1974
        %v2695 = vpack.c.b16 %v1987, %v1975
        %v2696 = vpack.c.b16 %v1988, %v1976
        %v2697 = vpack.c.b16 %v1989, %v1977
        %v2698 = vpack.c.b16 %v1990, %v1978
        %v2699 = vpack.c.b16 %v1991, %v1979
        %v2700 = vpack.c.b16 %v2004, %v1992
        %v2701 = vpack.c.b16 %v2005, %v1993
        %v2702 = vpack.c.b16 %v2006, %v1994
        %v2703 = vpack.c.b16 %v2007, %v1995
        %v2704 = vpack.c.b16 %v2008, %v1996
        %v2705 = vpack.c.b16 %v2009, %v1997
        %v2706 = vpack.c.b16 %v2010, %v1998
        %v2707 = vpack.c.b16 %v2011, %v1999
        %v2708 = vpack.c.b16 %v2012, %v2000
        %v2709 = vpack.c.b16 %v2013, %v2001
        %v2710 = vpack.c.b16 %v2014, %v2002
        %v2711 = vpack.c.b16 %v2015, %v2003
        %v2712 = vpack.c.b16 %v2028, %v2016
        %v2713 = vpack.c.b16 %v2029, %v2017
        %v2714 = vpack.c.b16 %v2030, %v2018
        %v2715 = vpack.c.b16 %v2031, %v2019
        %v2716 = vpack.c.b16 %v2032, %v2020
        %v2717 = vpack.c.b16 %v2033, %v2021
        %v2718 = vpack.c.b16 %v2034, %v2022
        %v2719 = vpack.c.b16 %v2035, %v2023
        %v2720 = vpack.c.b16 %v2036, %v2024
        %v2721 = vpack.c.b16 %v2037, %v2025
        %v2722 = vpack.c.b16 %v2038, %v2026
        %v2723 = vpack.c.b16 %v2039, %v2027
        %v2724 = vpack.c.b16 %v2052, %v2040
        %v2725 = vpack.c.b16 %v2053, %v2041
        %v2726 = vpack.c.b16 %v2054, %v2042
        %v2727 = vpack.c.b16 %v2055, %v2043
        %v2728 = vpack.c.b16 %v2056, %v2044
        %v2729 = vpack.c.b16 %v2057, %v2045
        %v2730 = vpack.c.b16 %v2058, %v2046
        %v2731 = vpack.c.b16 %v2059, %v2047
        %v2732 = vpack.c.b16 %v2060, %v2048
        %v2733 = vpack.c.b16 %v2061, %v2049
        %v2734 = vpack.c.b16 %v2062, %v2050
        %v2735 = vpack.c.b16 %v2063, %v2051
        %v2736 = vpack.c.b16 %v2076, %v2064
        %v2737 = vpack.c.b16 %v2077, %v2065
        %v2738 = vpack.c.b16 %v2078, %v2066
        %v2739 = vpack.c.b16 %v2079, %v2067
        %v2740 = vpack.c.b16 %v2080, %v2068
        %v2741 = vpack.c.b16 %v2081, %v2069
        %v2742 = vpack.c.b16 %v2082, %v2070
        %v2743 = vpack.c.b16 %v2083, %v2071
        %v2744 = vpack.c.b16 %v2084, %v2072
        %v2745 = vpack.c.b16 %v2085, %v2073
        %v2746 = vpack.c.b16 %v2086, %v2074
        %v2747 = vpack.c.b16 %v2087, %v2075
        %v2748 = vpack.c.b16 %v2100, %v2088
        %v2749 = vpack.c.b16 %v2101, %v2089
        %v2750 = vpack.c.b16 %v2102, %v2090
        %v2751 = vpack.c.b16 %v2103, %v2091
        %v2752 = vpack.c.b16 %v2104, %v2092
        %v2753 = vpack.c.b16 %v2105, %v2093
        %v2754 = vpack.c.b16 %v2106, %v2094
        %v2755 = vpack.c.b16 %v2107, %v2095
        %v2756 = vpack.c.b16 %v2108, %v2096
        %v2757 = vpack.c.b16 %v2109, %v2097
        %v2758 = vpack.c.b16 %v2110, %v2098
        %v2759 = vpack.c.b16 %v2111, %v2099
        %v2760 = vpack.c.b16 %v2124, %v2112
        %v2761 = vpack.c.b16 %v2125, %v2113
        %v2762 = vpack.c.b16 %v2126, %v2114
        %v2763 = vpack.c.b16 %v2127, %v2115
        %v2764 = vpack.c.b16 %v2128, %v2116
        %v2765 = vpack.c.b16 %v2129, %v2117
        %v2766 = vpack.c.b16 %v2130, %v2118
        %v2767 = vpack.c.b16 %v2131, %v2119
        %v2768 = vpack.c.b16 %v2132, %v2120
        %v2769 = vpack.c.b16 %v2133, %v2121
        %v2770 = vpack.c.b16 %v2134, %v2122
        %v2771 = vpack.c.b16 %v2135, %v2123
        %v2772 = vpack.c.b16 %v2148, %v2136
        %v2773 = vpack.c.b16 %v2149, %v2137
        %v2774 = vpack.c.b16 %v2150, %v2138
        %v2775 = vpack.c.b16 %v2151, %v2139
        %v2776 = vpack.c.b16 %v2152, %v2140
        %v2777 = vpack.c.b16 %v2153, %v2141
        %v2778 = vpack.c.b16 %v2154, %v2142
        %v2779 = vpack.c.b16 %v2155, %v2143
        %v2780 = vpack.c.b16 %v2156, %v2144
        %v2781 = vpack.c.b16 %v2157, %v2145
        %v2782 = vpack.c.b16 %v2158, %v2146
        %v2783 = vpack.c.b16 %v2159, %v2147
        %v2784 = vpack.c.b16 %v2172, %v2160
        %v2785 = vpack.c.b16 %v2173, %v2161
        %v2786 = vpack.c.b16 %v2174, %v2162
        %v2787 = vpack.c.b16 %v2175, %v2163
        %v2788 = vpack.c.b16 %v2176, %v2164
        %v2789 = vpack.c.b16 %v2177, %v2165
        %v2790 = vpack.c.b16 %v2178, %v2166
        %v2791 = vpack.c.b16 %v2179, %v2167
        %v2792 = vpack.c.b16 %v2180, %v2168
        %v2793 = vpack.c.b16 %v2181, %v2169
        %v2794 = vpack.c.b16 %v2182, %v2170
        %v2795 = vpack.c.b16 %v2183, %v2171
        %v2796 = vpack.c.b16 %v2196, %v2184
        %v2797 = vpack.c.b16 %v2197, %v2185
        %v2798 = vpack.c.b16 %v2198, %v2186
        %v2799 = vpack.c.b16 %v2199, %v2187
        %v2800 = vpack.c.b16 %v2200, %v2188
        %v2801 = vpack.c.b16 %v2201, %v2189
        %v2802 = vpack.c.b16 %v2202, %v2190
        %v2803 = vpack.c.b16 %v2203, %v2191
        %v2804 = vpack.c.b16 %v2204, %v2192
        %v2805 = vpack.c.b16 %v2205, %v2193
        %v2806 = vpack.c.b16 %v2206, %v2194
        %v2807 = vpack.c.b16 %v2207, %v2195
        %v2808 = vpack.c.b16 %v2220, %v2208
        %v2809 = vpack.c.b16 %v2221, %v2209
        %v2810 = vpack.c.b16 %v2222, %v2210
        %v2811 = vpack.c.b16 %v2223, %v2211
        %v2812 = vpack.c.b16 %v2224, %v2212
        %v2813 = vpack.c.b16 %v2225, %v2213
        %v2814 = vpack.c.b16 %v2226, %v2214
        %v2815 = vpack.c.b16 %v2227, %v2215
        %v2816 = vpack.c.b16 %v2228, %v2216
        %v2817 = vpack.c.b16 %v2229, %v2217
        %v2818 = vpack.c.b16 %v2230, %v2218
        %v2819 = vpack.c.b16 %v2231, %v2219
        %v2820 = vpack.c.b16 %v2244, %v2232
        %v2821 = vpack.c.b16 %v2245, %v2233
        %v2822 = vpack.c.b16 %v2246, %v2234
        %v2823 = vpack.c.b16 %v2247, %v2235
        %v2824 = vpack.c.b16 %v2248, %v2236
        %v2825 = vpack.c.b16 %v2249, %v2237
        %v2826 = vpack.c.b16 %v2250, %v2238
        %v2827 = vpack.c.b16 %v2251, %v2239
        %v2828 = vpack.c.b16 %v2252, %v2240
        %v2829 = vpack.c.b16 %v2253, %v2241
        %v2830 = vpack.c.b16 %v2254, %v2242
        %v2831 = vpack.c.b16 %v2255, %v2243
        %v2832 = vpack.c.b16 %v2268, %v2256
        %v2833 = vpack.c.b16 %v2269, %v2257
        %v2834 = vpack.c.b16 %v2270, %v2258
        %v2835 = vpack.c.b16 %v2271, %v2259
        %v2836 = vpack.c.b16 %v2272, %v2260
        %v2837 = vpack.c.b16 %v2273, %v2261
        %v2838 = vpack.c.b16 %v2274, %v2262
        %v2839 = vpack.c.b16 %v2275, %v2263
        %v2840 = vpack.c.b16 %v2276, %v2264
        %v2841 = vpack.c.b16 %v2277, %v2265
        %v2842 = vpack.c.b16 %v2278, %v2266
        %v2843 = vpack.c.b16 %v2279, %v2267
        %v2844 = vpack.c.b16 %v2292, %v2280
        %v2845 = vpack.c.b16 %v2293, %v2281
        %v2846 = vpack.c.b16 %v2294, %v2282
        %v2847 = vpack.c.b16 %v2295, %v2283
        %v2848 = vpack.c.b16 %v2296, %v2284
        %v2849 = vpack.c.b16 %v2297, %v2285
        %v2850 = vpack.c.b16 %v2298, %v2286
        %v2851 = vpack.c.b16 %v2299, %v2287
        %v2852 = vpack.c.b16 %v2300, %v2288
        %v2853 = vpack.c.b16 %v2301, %v2289
        %v2854 = vpack.c.b16 %v2302, %v2290
        %v2855 = vpack.c.b16 %v2303, %v2291
        %v2856 = vpack.c.b16 %v2316, %v2304
        %v2857 = vpack.c.b16 %v2317, %v2305
        %v2858 = vpack.c.b16 %v2318, %v2306
        %v2859 = vpack.c.b16 %v2319, %v2307
        %v2860 = vpack.c.b16 %v2320, %v2308
        %v2861 = vpack.c.b16 %v2321, %v2309
        %v2862 = vpack.c.b16 %v2322, %v2310
        %v2863 = vpack.c.b16 %v2323, %v2311
        %v2864 = vpack.c.b16 %v2324, %v2312
        %v2865 = vpack.c.b16 %v2325, %v2313
        %v2866 = vpack.c.b16 %v2326, %v2314
        %v2867 = vpack.c.b16 %v2327, %v2315
        %v2868 = vpack.c.b16 %v2340, %v2328
        %v2869 = vpack.c.b16 %v2341, %v2329
        %v2870 = vpack.c.b16 %v2342, %v2330
        %v2871 = vpack.c.b16 %v2343, %v2331
        %v2872 = vpack.c.b16 %v2344, %v2332
        %v2873 = vpack.c.b16 %v2345, %v2333
        %v2874 = vpack.c.b16 %v2346, %v2334
        %v2875 = vpack.c.b16 %v2347, %v2335
        %v2876 = vpack.c.b16 %v2348, %v2336
        %v2877 = vpack.c.b16 %v2349, %v2337
        %v2878 = vpack.c.b16 %v2350, %v2338
        %v2879 = vpack.c.b16 %v2351, %v2339
        %v2880 = vpack.c.b16 %v2364, %v2352
        %v2881 = vpack.c.b16 %v2365, %v2353
        %v2882 = vpack.c.b16 %v2366, %v2354
        %v2883 = vpack.c.b16 %v2367, %v2355
        %v2884 = vpack.c.b16 %v2368, %v2356
        %v2885 = vpack.c.b16 %v2369, %v2357
        %v2886 = vpack.c.b16 %v2370, %v2358
        %v2887 = vpack.c.b16 %v2371, %v2359
        %v2888 = vpack.c.b16 %v2372, %v2360
        %v2889 = vpack.c.b16 %v2373, %v2361
        %v2890 = vpack.c.b16 %v2374, %v2362
        %v2891 = vpack.c.b16 %v2375, %v2363
        %v2892 = vpack.c.b16 %v2388, %v2376
        %v2893 = vpack.c.b16 %v2389, %v2377
        %v2894 = vpack.c.b16 %v2390, %v2378
        %v2895 = vpack.c.b16 %v2391, %v2379
        %v2896 = vpack.c.b16 %v2392, %v2380
        %v2897 = vpack.c.b16 %v2393, %v2381
        %v2898 = vpack.c.b16 %v2394, %v2382
        %v2899 = vpack.c.b16 %v2395, %v2383
        %v2900 = vpack.c.b16 %v2396, %v2384
        %v2901 = vpack.c.b16 %v2397, %v2385
        %v2902 = vpack.c.b16 %v2398, %v2386
        %v2903 = vpack.c.b16 %v2399, %v2387
        %v2904 = vpack.c.b16 %v2412, %v2400
        %v2905 = vpack.c.b16 %v2413, %v2401
        %v2906 = vpack.c.b16 %v2414, %v2402
        %v2907 = vpack.c.b16 %v2415, %v2403
        %v2908 = vpack.c.b16 %v2416, %v2404
        %v2909 = vpack.c.b16 %v2417, %v2405
        %v2910 = vpack.c.b16 %v2418, %v2406
        %v2911 = vpack.c.b16 %v2419, %v2407
        %v2912 = vpack.c.b16 %v2420, %v2408
        %v2913 = vpack.c.b16 %v2421, %v2409
        %v2914 = vpack.c.b16 %v2422, %v2410
        %v2915 = vpack.c.b16 %v2423, %v2411
        %v2916 = vpack.c.b16 %v2436, %v2424
        %v2917 = vpack.c.b16 %v2437, %v2425
        %v2918 = vpack.c.b16 %v2438, %v2426
        %v2919 = vpack.c.b16 %v2439, %v2427
        %v2920 = vpack.c.b16 %v2440, %v2428
        %v2921 = vpack.c.b16 %v2441, %v2429
        %v2922 = vpack.c.b16 %v2442, %v2430
        %v2923 = vpack.c.b16 %v2443, %v2431
        %v2924 = vpack.c.b16 %v2444, %v2432
        %v2925 = vpack.c.b16 %v2445, %v2433
        %v2926 = vpack.c.b16 %v2446, %v2434
        %v2927 = vpack.c.b16 %v2447, %v2435
        %v2928 = vpack.c.b16 %v2460, %v2448
        %v2929 = vpack.c.b16 %v2461, %v2449
        %v2930 = vpack.c.b16 %v2462, %v2450
        %v2931 = vpack.c.b16 %v2463, %v2451
        %v2932 = vpack.c.b16 %v2464, %v2452
        %v2933 = vpack.c.b16 %v2465, %v2453
        %v2934 = vpack.c.b16 %v2466, %v2454
        %v2935 = vpack.c.b16 %v2467, %v2455
        %v2936 = vpack.c.b16 %v2468, %v2456
        %v2937 = vpack.c.b16 %v2469, %v2457
        %v2938 = vpack.c.b16 %v2470, %v2458
        %v2939 = vpack.c.b16 %v2471, %v2459
        %v2940 = vpack.c.b16 %v2484, %v2472
        %v2941 = vpack.c.b16 %v2485, %v2473
        %v2942 = vpack.c.b16 %v2486, %v2474
        %v2943 = vpack.c.b16 %v2487, %v2475
        %v2944 = vpack.c.b16 %v2488, %v2476
        %v2945 = vpack.c.b16 %v2489, %v2477
        %v2946 = vpack.c.b16 %v2490, %v2478
        %v2947 = vpack.c.b16 %v2491, %v2479
        %v2948 = vpack.c.b16 %v2492, %v2480
        %v2949 = vpack.c.b16 %v2493, %v2481
        %v2950 = vpack.c.b16 %v2494, %v2482
        %v2951 = vpack.c.b16 %v2495, %v2483
        %v2952 = vpack.c.b16 %v2508, %v2496
        %v2953 = vpack.c.b16 %v2509, %v2497
        %v2954 = vpack.c.b16 %v2510, %v2498
        %v2955 = vpack.c.b16 %v2511, %v2499
        %v2956 = vpack.c.b16 %v2512, %v2500
        %v2957 = vpack.c.b16 %v2513, %v2501
        %v2958 = vpack.c.b16 %v2514, %v2502
        %v2959 = vpack.c.b16 %v2515, %v2503
        %v2960 = vpack.c.b16 %v2516, %v2504
        %v2961 = vpack.c.b16 %v2517, %v2505
        %v2962 = vpack.c.b16 %v2518, %v2506
        %v2963 = vpack.c.b16 %v2519, %v2507
        %v2964 = vpack.c.b16 %v2532, %v2520
        %v2965 = vpack.c.b16 %v2533, %v2521
        %v2966 = vpack.c.b16 %v2534, %v2522
        %v2967 = vpack.c.b16 %v2535, %v2523
        %v2968 = vpack.c.b16 %v2536, %v2524
        %v2969 = vpack.c.b16 %v2537, %v2525
        %v2970 = vpack.c.b16 %v2538, %v2526
        %v2971 = vpack.c.b16 %v2539, %v2527
        %v2972 = vpack.c.b16 %v2540, %v2528
        %v2973 = vpack.c.b16 %v2541, %v2529
        %v2974 = vpack.c.b16 %v2542, %v2530
        %v2975 = vpack.c.b16 %v2543, %v2531
        %v2976 = vpack.c.b16 %v2556, %v2544
        %v2977 = vpack.c.b16 %v2557, %v2545
        %v2978 = vpack.c.b16 %v2558, %v2546
        %v2979 = vpack.c.b16 %v2559, %v2547
        %v2980 = vpack.c.b16 %v2560, %v2548
        %v2981 = vpack.c.b16 %v2561, %v2549
        %v2982 = vpack.c.b16 %v2562, %v2550
        %v2983 = vpack.c.b16 %v2563, %v2551
        %v2984 = vpack.c.b16 %v2564, %v2552
        %v2985 = vpack.c.b16 %v2565, %v2553
        %v2986 = vpack.c.b16 %v2566, %v2554
        %v2987 = vpack.c.b16 %v2567, %v2555
        %v2988 = vpack.c.b16 %v2580, %v2568
        %v2989 = vpack.c.b16 %v2581, %v2569
        %v2990 = vpack.c.b16 %v2582, %v2570
        %v2991 = vpack.c.b16 %v2583, %v2571
        %v2992 = vpack.c.b16 %v2584, %v2572
        %v2993 = vpack.c.b16 %v2585, %v2573
        %v2994 = vpack.c.b16 %v2586, %v2574
        %v2995 = vpack.c.b16 %v2587, %v2575
        %v2996 = vpack.c.b16 %v2588, %v2576
        %v2997 = vpack.c.b16 %v2589, %v2577
        %v2998 = vpack.c.b16 %v2590, %v2578
        %v2999 = vpack.c.b16 %v2591, %v2579
        %v3000 = vpack.c.b16 %v2604, %v2592
        %v3001 = vpack.c.b16 %v2605, %v2593
        %v3002 = vpack.c.b16 %v2606, %v2594
        %v3003 = vpack.c.b16 %v2607, %v2595
        %v3004 = vpack.c.b16 %v2608, %v2596
        %v3005 = vpack.c.b16 %v2609, %v2597
        %v3006 = vpack.c.b16 %v2610, %v2598
        %v3007 = vpack.c.b16 %v2611, %v2599
        %v3008 = vpack.c.b16 %v2612, %v2600
        %v3009 = vpack.c.b16 %v2613, %v2601
        %v3010 = vpack.c.b16 %v2614, %v2602
        %v3011 = vpack.c.b16 %v2615, %v2603
        %v3012 = vpack.c.b16 %v2628, %v2616
        %v3013 = vpack.c.b16 %v2629, %v2617
        %v3014 = vpack.c.b16 %v2630, %v2618
        %v3015 = vpack.c.b16 %v2631, %v2619
        %v3016 = vpack.c.b16 %v2632, %v2620
        %v3017 = vpack.c.b16 %v2633, %v2621
        %v3018 = vpack.c.b16 %v2634, %v2622
        %v3019 = vpack.c.b16 %v2635, %v2623
        %v3020 = vpack.c.b16 %v2636, %v2624
        %v3021 = vpack.c.b16 %v2637, %v2625
        %v3022 = vpack.c.b16 %v2638, %v2626
        %v3023 = vpack.c.b16 %v2639, %v2627
        %3408 = vmatprep.subr.bf16.mxu0 %v2641
        %3409 = vmatpush1.bf16.msra.mxu0 %v2640
        %3410 = vmatprep.subr.bf16.mxu0 %v2653
        %3411 = vmatpush1.bf16.msra.mxu0 %v2652
        %3412 = vmatprep.subr.bf16.mxu0 %v2665
        %3413 = vmatpush1.bf16.msra.mxu0 %v2664
        %3414 = vmatprep.subr.bf16.mxu0 %v2677
        %3415 = vmatpush1.bf16.msra.mxu0 %v2676
        %3416 = vmatprep.subr.bf16.mxu0 %v2689
        %3417 = vmatpush1.bf16.msra.mxu0 %v2688
        %3418 = vmatprep.subr.bf16.mxu0 %v2701
        %3419 = vmatpush1.bf16.msra.mxu0 %v2700
        %3420 = vmatprep.subr.bf16.mxu0 %v2713
        %3421 = vmatpush1.bf16.msra.mxu0 %v2712
        %3422 = vmatprep.subr.bf16.mxu0 %v2725
        %3423 = vmatpush1.bf16.msra.mxu0 %v2724
        %3424 = vmatprep.subr.bf16.mxu0 %v2737
        %3425 = vmatpush1.bf16.msra.mxu0 %v2736
        %3426 = vmatprep.subr.bf16.mxu0 %v2749
        %3427 = vmatpush1.bf16.msra.mxu0 %v2748
        %3428 = vmatprep.subr.bf16.mxu0 %v2761
        %3429 = vmatpush1.bf16.msra.mxu0 %v2760
        %3430 = vmatprep.subr.bf16.mxu0 %v2773
        %3431 = vmatpush1.bf16.msra.mxu0 %v2772
        %3432 = vmatprep.subr.bf16.mxu0 %v2785
        %3433 = vmatpush1.bf16.msra.mxu0 %v2784
        %3434 = vmatprep.subr.bf16.mxu0 %v2797
        %3435 = vmatpush1.bf16.msra.mxu0 %v2796
        %3436 = vmatprep.subr.bf16.mxu0 %v2809
        %3437 = vmatpush1.bf16.msra.mxu0 %v2808
        %3438 = vmatprep.subr.bf16.mxu0 %v2821
        %3439 = vmatpush1.bf16.msra.mxu0 %v2820
        %3440 = vmatprep.mubr.bf16.mxu0 %v1037
        %3441 = vmatmul.mubr.bf16.gmra.mrb[0].mxu0 %v1036
        %v3442 = vpop.f32.mrb[0].mxu0
        %v3443 = vadd.f32 %v1431, %v3442
        %v3444 = vpop.f32.mrb[0].mxu0
        %v3445 = vadd.f32 %v1435, %v3444
        %v3446 = vpop.f32.mrb[0].mxu0
        %v3447 = vadd.f32 %v1431, %v3446
        %v3448 = vpop.f32.mrb[0].mxu0
        %v3449 = vadd.f32 %v1435, %v3448
        %3450 = vdwg.mxu0
        %3451 = vmatprep.subr.bf16.mxu0 %v2833
        %3452 = vmatpush1.bf16.msra.mxu0 %v2832
        %3453 = vmatprep.subr.bf16.mxu0 %v2845
        %3454 = vmatpush1.bf16.msra.mxu0 %v2844
        %3455 = vmatprep.subr.bf16.mxu0 %v2857
        %3456 = vmatpush1.bf16.msra.mxu0 %v2856
        %3457 = vmatprep.subr.bf16.mxu0 %v2869
        %3458 = vmatpush1.bf16.msra.mxu0 %v2868
        %3459 = vmatprep.subr.bf16.mxu0 %v2881
        %3460 = vmatpush1.bf16.msra.mxu0 %v2880
        %3461 = vmatprep.subr.bf16.mxu0 %v2893
        %3462 = vmatpush1.bf16.msra.mxu0 %v2892
        %3463 = vmatprep.subr.bf16.mxu0 %v2905
        %3464 = vmatpush1.bf16.msra.mxu0 %v2904
        %3465 = vmatprep.subr.bf16.mxu0 %v2917
        %3466 = vmatpush1.bf16.msra.mxu0 %v2916
        %3467 = vmatprep.subr.bf16.mxu0 %v2929
        %3468 = vmatpush1.bf16.msra.mxu0 %v2928
        %3469 = vmatprep.subr.bf16.mxu0 %v2941
        %3470 = vmatpush1.bf16.msra.mxu0 %v2940
        %3471 = vmatprep.subr.bf16.mxu0 %v2953
        %3472 = vmatpush1.bf16.msra.mxu0 %v2952
        %3473 = vmatprep.subr.bf16.mxu0 %v2965
        %3474 = vmatpush1.bf16.msra.mxu0 %v2964
        %3475 = vmatprep.subr.bf16.mxu0 %v2977
        %3476 = vmatpush1.bf16.msra.mxu0 %v2976
        %3477 = vmatprep.subr.bf16.mxu0 %v2989
        %3478 = vmatpush1.bf16.msra.mxu0 %v2988
        %3479 = vmatprep.subr.bf16.mxu0 %v3001
        %3480 = vmatpush1.bf16.msra.mxu0 %v3000
        %3481 = vmatprep.subr.bf16.mxu0 %v3013
        %3482 = vmatpush1.bf16.msra.mxu0 %v3012
        %3483 = vmatprep.mubr.bf16.mxu0 %v1039
        %3484 = vmatmul.mubr.bf16.gmra.mrb[0].mxu0 %v1038
        %v3485 = vpop.f32.mrb[0].mxu0
        %v3486 = vadd.f32 %v3443, %v3485
        %v3487 = vpop.f32.mrb[0].mxu0
        %v3488 = vadd.f32 %v3445, %v3487
        %v3489 = vpop.f32.mrb[0].mxu0
        %v3490 = vadd.f32 %v3447, %v3489
        %v3491 = vpop.f32.mrb[0].mxu0
        %v3492 = vadd.f32 %v3449, %v3491
        %3493 = vdwg.mxu0
        %3494 = vmatprep.subr.bf16.mxu0 %v2643
        %3495 = vmatpush1.bf16.msra.mxu0 %v2642
        %3496 = vmatprep.subr.bf16.mxu0 %v2655
        %3497 = vmatpush1.bf16.msra.mxu0 %v2654
        %3498 = vmatprep.subr.bf16.mxu0 %v2667
        %3499 = vmatpush1.bf16.msra.mxu0 %v2666
        %3500 = vmatprep.subr.bf16.mxu0 %v2679
        %3501 = vmatpush1.bf16.msra.mxu0 %v2678
        %3502 = vmatprep.subr.bf16.mxu0 %v2691
        %3503 = vmatpush1.bf16.msra.mxu0 %v2690
        %3504 = vmatprep.subr.bf16.mxu0 %v2703
        %3505 = vmatpush1.bf16.msra.mxu0 %v2702
        %3506 = vmatprep.subr.bf16.mxu0 %v2715
        %3507 = vmatpush1.bf16.msra.mxu0 %v2714
        %3508 = vmatprep.subr.bf16.mxu0 %v2727
        %3509 = vmatpush1.bf16.msra.mxu0 %v2726
        %3510 = vmatprep.subr.bf16.mxu0 %v2739
        %3511 = vmatpush1.bf16.msra.mxu0 %v2738
        %3512 = vmatprep.subr.bf16.mxu0 %v2751
        %3513 = vmatpush1.bf16.msra.mxu0 %v2750
        %3514 = vmatprep.subr.bf16.mxu0 %v2763
        %3515 = vmatpush1.bf16.msra.mxu0 %v2762
        %3516 = vmatprep.subr.bf16.mxu0 %v2775
        %3517 = vmatpush1.bf16.msra.mxu0 %v2774
        %3518 = vmatprep.subr.bf16.mxu0 %v2787
        %3519 = vmatpush1.bf16.msra.mxu0 %v2786
        %3520 = vmatprep.subr.bf16.mxu0 %v2799
        %3521 = vmatpush1.bf16.msra.mxu0 %v2798
        %3522 = vmatprep.subr.bf16.mxu0 %v2811
        %3523 = vmatpush1.bf16.msra.mxu0 %v2810
        %3524 = vmatprep.subr.bf16.mxu0 %v2823
        %3525 = vmatpush1.bf16.msra.mxu0 %v2822
        %3526 = vmatprep.mubr.bf16.mxu0 %v1037
        %3527 = vmatmul.mubr.bf16.gmra.mrb[0].mxu0 %v1036
        %v3528 = vpop.f32.mrb[0].mxu0
        %v3529 = vadd.f32 %v1439, %v3528
        %v3530 = vpop.f32.mrb[0].mxu0
        %v3531 = vadd.f32 %v1443, %v3530
        %v3532 = vpop.f32.mrb[0].mxu0
        %v3533 = vadd.f32 %v1439, %v3532
        %v3534 = vpop.f32.mrb[0].mxu0
        %v3535 = vadd.f32 %v1443, %v3534
        %3536 = vdwg.mxu0
        %3537 = vmatprep.subr.bf16.mxu0 %v2835
        %3538 = vmatpush1.bf16.msra.mxu0 %v2834
        %3539 = vmatprep.subr.bf16.mxu0 %v2847
        %3540 = vmatpush1.bf16.msra.mxu0 %v2846
        %3541 = vmatprep.subr.bf16.mxu0 %v2859
        %3542 = vmatpush1.bf16.msra.mxu0 %v2858
        %3543 = vmatprep.subr.bf16.mxu0 %v2871
        %3544 = vmatpush1.bf16.msra.mxu0 %v2870
        %3545 = vmatprep.subr.bf16.mxu0 %v2883
        %3546 = vmatpush1.bf16.msra.mxu0 %v2882
        %3547 = vmatprep.subr.bf16.mxu0 %v2895
        %3548 = vmatpush1.bf16.msra.mxu0 %v2894
        %3549 = vmatprep.subr.bf16.mxu0 %v2907
        %3550 = vmatpush1.bf16.msra.mxu0 %v2906
        %3551 = vmatprep.subr.bf16.mxu0 %v2919
        %3552 = vmatpush1.bf16.msra.mxu0 %v2918
        %3553 = vmatprep.subr.bf16.mxu0 %v2931
        %3554 = vmatpush1.bf16.msra.mxu0 %v2930
        %3555 = vmatprep.subr.bf16.mxu0 %v2943
        %3556 = vmatpush1.bf16.msra.mxu0 %v2942
        %3557 = vmatprep.subr.bf16.mxu0 %v2955
        %3558 = vmatpush1.bf16.msra.mxu0 %v2954
        %3559 = vmatprep.subr.bf16.mxu0 %v2967
        %3560 = vmatpush1.bf16.msra.mxu0 %v2966
        %3561 = vmatprep.subr.bf16.mxu0 %v2979
        %3562 = vmatpush1.bf16.msra.mxu0 %v2978
        %3563 = vmatprep.subr.bf16.mxu0 %v2991
        %3564 = vmatpush1.bf16.msra.mxu0 %v2990
        %3565 = vmatprep.subr.bf16.mxu0 %v3003
        %3566 = vmatpush1.bf16.msra.mxu0 %v3002
        %3567 = vmatprep.subr.bf16.mxu0 %v3015
        %3568 = vmatpush1.bf16.msra.mxu0 %v3014
        %3569 = vmatprep.mubr.bf16.mxu0 %v1039
        %3570 = vmatmul.mubr.bf16.gmra.mrb[0].mxu0 %v1038
        %v3571 = vpop.f32.mrb[0].mxu0
        %v3572 = vadd.f32 %v3529, %v3571
        %v3573 = vpop.f32.mrb[0].mxu0
        %v3574 = vadd.f32 %v3531, %v3573
        %v3575 = vpop.f32.mrb[0].mxu0
        %v3576 = vadd.f32 %v3533, %v3575
        %v3577 = vpop.f32.mrb[0].mxu0
        %v3578 = vadd.f32 %v3535, %v3577
        %3579 = vdwg.mxu0
        %3580 = vmatprep.subr.bf16.mxu0 %v2645
        %3581 = vmatpush1.bf16.msra.mxu0 %v2644
        %3582 = vmatprep.subr.bf16.mxu0 %v2657
        %3583 = vmatpush1.bf16.msra.mxu0 %v2656
        %3584 = vmatprep.subr.bf16.mxu0 %v2669
        %3585 = vmatpush1.bf16.msra.mxu0 %v2668
        %3586 = vmatprep.subr.bf16.mxu0 %v2681
        %3587 = vmatpush1.bf16.msra.mxu0 %v2680
        %3588 = vmatprep.subr.bf16.mxu0 %v2693
        %3589 = vmatpush1.bf16.msra.mxu0 %v2692
        %3590 = vmatprep.subr.bf16.mxu0 %v2705
        %3591 = vmatpush1.bf16.msra.mxu0 %v2704
        %3592 = vmatprep.subr.bf16.mxu0 %v2717
        %3593 = vmatpush1.bf16.msra.mxu0 %v2716
        %3594 = vmatprep.subr.bf16.mxu0 %v2729
        %3595 = vmatpush1.bf16.msra.mxu0 %v2728
        %3596 = vmatprep.subr.bf16.mxu0 %v2741
        %3597 = vmatpush1.bf16.msra.mxu0 %v2740
        %3598 = vmatprep.subr.bf16.mxu0 %v2753
        %3599 = vmatpush1.bf16.msra.mxu0 %v2752
        %3600 = vmatprep.subr.bf16.mxu0 %v2765
        %3601 = vmatpush1.bf16.msra.mxu0 %v2764
        %3602 = vmatprep.subr.bf16.mxu0 %v2777
        %3603 = vmatpush1.bf16.msra.mxu0 %v2776
        %3604 = vmatprep.subr.bf16.mxu0 %v2789
        %3605 = vmatpush1.bf16.msra.mxu0 %v2788
        %3606 = vmatprep.subr.bf16.mxu0 %v2801
        %3607 = vmatpush1.bf16.msra.mxu0 %v2800
        %3608 = vmatprep.subr.bf16.mxu0 %v2813
        %3609 = vmatpush1.bf16.msra.mxu0 %v2812
        %3610 = vmatprep.subr.bf16.mxu0 %v2825
        %3611 = vmatpush1.bf16.msra.mxu0 %v2824
        %3612 = vmatprep.mubr.bf16.mxu0 %v1037
        %3613 = vmatmul.mubr.bf16.gmra.mrb[0].mxu0 %v1036
        %v3614 = vpop.f32.mrb[0].mxu0
        %v3615 = vadd.f32 %v1447, %v3614
        %v3616 = vpop.f32.mrb[0].mxu0
        %v3617 = vadd.f32 %v1451, %v3616
        %v3618 = vpop.f32.mrb[0].mxu0
        %v3619 = vadd.f32 %v1447, %v3618
        %v3620 = vpop.f32.mrb[0].mxu0
        %v3621 = vadd.f32 %v1451, %v3620
        %3622 = vdwg.mxu0
        %3623 = vmatprep.subr.bf16.mxu0 %v2837
        %3624 = vmatpush1.bf16.msra.mxu0 %v2836
        %3625 = vmatprep.subr.bf16.mxu0 %v2849
        %3626 = vmatpush1.bf16.msra.mxu0 %v2848
        %3627 = vmatprep.subr.bf16.mxu0 %v2861
        %3628 = vmatpush1.bf16.msra.mxu0 %v2860
        %3629 = vmatprep.subr.bf16.mxu0 %v2873
        %3630 = vmatpush1.bf16.msra.mxu0 %v2872
        %3631 = vmatprep.subr.bf16.mxu0 %v2885
        %3632 = vmatpush1.bf16.msra.mxu0 %v2884
        %3633 = vmatprep.subr.bf16.mxu0 %v2897
        %3634 = vmatpush1.bf16.msra.mxu0 %v2896
        %3635 = vmatprep.subr.bf16.mxu0 %v2909
        %3636 = vmatpush1.bf16.msra.mxu0 %v2908
        %3637 = vmatprep.subr.bf16.mxu0 %v2921
        %3638 = vmatpush1.bf16.msra.mxu0 %v2920
        %3639 = vmatprep.subr.bf16.mxu0 %v2933
        %3640 = vmatpush1.bf16.msra.mxu0 %v2932
        %3641 = vmatprep.subr.bf16.mxu0 %v2945
        %3642 = vmatpush1.bf16.msra.mxu0 %v2944
        %3643 = vmatprep.subr.bf16.mxu0 %v2957
        %3644 = vmatpush1.bf16.msra.mxu0 %v2956
        %3645 = vmatprep.subr.bf16.mxu0 %v2969
        %3646 = vmatpush1.bf16.msra.mxu0 %v2968
        %3647 = vmatprep.subr.bf16.mxu0 %v2981
        %3648 = vmatpush1.bf16.msra.mxu0 %v2980
        %3649 = vmatprep.subr.bf16.mxu0 %v2993
        %3650 = vmatpush1.bf16.msra.mxu0 %v2992
        %3651 = vmatprep.subr.bf16.mxu0 %v3005
        %3652 = vmatpush1.bf16.msra.mxu0 %v3004
        %3653 = vmatprep.subr.bf16.mxu0 %v3017
        %3654 = vmatpush1.bf16.msra.mxu0 %v3016
        %3655 = vmatprep.mubr.bf16.mxu0 %v1039
        %3656 = vmatmul.mubr.bf16.gmra.mrb[0].mxu0 %v1038
        %v3657 = vpop.f32.mrb[0].mxu0
        %v3658 = vadd.f32 %v3615, %v3657
        %v3659 = vpop.f32.mrb[0].mxu0
        %v3660 = vadd.f32 %v3617, %v3659
        %v3661 = vpop.f32.mrb[0].mxu0
        %v3662 = vadd.f32 %v3619, %v3661
        %v3663 = vpop.f32.mrb[0].mxu0
        %v3664 = vadd.f32 %v3621, %v3663
        %3665 = vdwg.mxu0
        %3666 = vmatprep.subr.bf16.mxu0 %v2647
        %3667 = vmatpush1.bf16.msra.mxu0 %v2646
        %3668 = vmatprep.subr.bf16.mxu0 %v2659
        %3669 = vmatpush1.bf16.msra.mxu0 %v2658
        %3670 = vmatprep.subr.bf16.mxu0 %v2671
        %3671 = vmatpush1.bf16.msra.mxu0 %v2670
        %3672 = vmatprep.subr.bf16.mxu0 %v2683
        %3673 = vmatpush1.bf16.msra.mxu0 %v2682
        %3674 = vmatprep.subr.bf16.mxu0 %v2695
        %3675 = vmatpush1.bf16.msra.mxu0 %v2694
        %3676 = vmatprep.subr.bf16.mxu0 %v2707
        %3677 = vmatpush1.bf16.msra.mxu0 %v2706
        %3678 = vmatprep.subr.bf16.mxu0 %v2719
        %3679 = vmatpush1.bf16.msra.mxu0 %v2718
        %3680 = vmatprep.subr.bf16.mxu0 %v2731
        %3681 = vmatpush1.bf16.msra.mxu0 %v2730
        %3682 = vmatprep.subr.bf16.mxu0 %v2743
        %3683 = vmatpush1.bf16.msra.mxu0 %v2742
        %3684 = vmatprep.subr.bf16.mxu0 %v2755
        %3685 = vmatpush1.bf16.msra.mxu0 %v2754
        %3686 = vmatprep.subr.bf16.mxu0 %v2767
        %3687 = vmatpush1.bf16.msra.mxu0 %v2766
        %3688 = vmatprep.subr.bf16.mxu0 %v2779
        %3689 = vmatpush1.bf16.msra.mxu0 %v2778
        %3690 = vmatprep.subr.bf16.mxu0 %v2791
        %3691 = vmatpush1.bf16.msra.mxu0 %v2790
        %3692 = vmatprep.subr.bf16.mxu0 %v2803
        %3693 = vmatpush1.bf16.msra.mxu0 %v2802
        %3694 = vmatprep.subr.bf16.mxu0 %v2815
        %3695 = vmatpush1.bf16.msra.mxu0 %v2814
        %3696 = vmatprep.subr.bf16.mxu0 %v2827
        %3697 = vmatpush1.bf16.msra.mxu0 %v2826
        %3698 = vmatprep.mubr.bf16.mxu0 %v1037
        %3699 = vmatmul.mubr.bf16.gmra.mrb[0].mxu0 %v1036
        %v3700 = vpop.f32.mrb[0].mxu0
        %v3701 = vadd.f32 %v1455, %v3700
        %v3702 = vpop.f32.mrb[0].mxu0
        %v3703 = vadd.f32 %v1459, %v3702
        %v3704 = vpop.f32.mrb[0].mxu0
        %v3705 = vadd.f32 %v1455, %v3704
        %v3706 = vpop.f32.mrb[0].mxu0
        %v3707 = vadd.f32 %v1459, %v3706
        %3708 = vdwg.mxu0
        %3709 = vmatprep.subr.bf16.mxu0 %v2839
        %3710 = vmatpush1.bf16.msra.mxu0 %v2838
        %3711 = vmatprep.subr.bf16.mxu0 %v2851
        %3712 = vmatpush1.bf16.msra.mxu0 %v2850
        %3713 = vmatprep.subr.bf16.mxu0 %v2863
        %3714 = vmatpush1.bf16.msra.mxu0 %v2862
        %3715 = vmatprep.subr.bf16.mxu0 %v2875
        %3716 = vmatpush1.bf16.msra.mxu0 %v2874
        %3717 = vmatprep.subr.bf16.mxu0 %v2887
        %3718 = vmatpush1.bf16.msra.mxu0 %v2886
        %3719 = vmatprep.subr.bf16.mxu0 %v2899
        %3720 = vmatpush1.bf16.msra.mxu0 %v2898
        %3721 = vmatprep.subr.bf16.mxu0 %v2911
        %3722 = vmatpush1.bf16.msra.mxu0 %v2910
        %3723 = vmatprep.subr.bf16.mxu0 %v2923
        %3724 = vmatpush1.bf16.msra.mxu0 %v2922
        %3725 = vmatprep.subr.bf16.mxu0 %v2935
        %3726 = vmatpush1.bf16.msra.mxu0 %v2934
        %3727 = vmatprep.subr.bf16.mxu0 %v2947
        %3728 = vmatpush1.bf16.msra.mxu0 %v2946
        %3729 = vmatprep.subr.bf16.mxu0 %v2959
        %3730 = vmatpush1.bf16.msra.mxu0 %v2958
        %3731 = vmatprep.subr.bf16.mxu0 %v2971
        %3732 = vmatpush1.bf16.msra.mxu0 %v2970
        %3733 = vmatprep.subr.bf16.mxu0 %v2983
        %3734 = vmatpush1.bf16.msra.mxu0 %v2982
        %3735 = vmatprep.subr.bf16.mxu0 %v2995
        %3736 = vmatpush1.bf16.msra.mxu0 %v2994
        %3737 = vmatprep.subr.bf16.mxu0 %v3007
        %3738 = vmatpush1.bf16.msra.mxu0 %v3006
        %3739 = vmatprep.subr.bf16.mxu0 %v3019
        %3740 = vmatpush1.bf16.msra.mxu0 %v3018
        %3741 = vmatprep.mubr.bf16.mxu0 %v1039
        %3742 = vmatmul.mubr.bf16.gmra.mrb[0].mxu0 %v1038
        %v3743 = vpop.f32.mrb[0].mxu0
        %v3744 = vadd.f32 %v3701, %v3743
        %v3745 = vpop.f32.mrb[0].mxu0
        %v3746 = vadd.f32 %v3703, %v3745
        %v3747 = vpop.f32.mrb[0].mxu0
        %v3748 = vadd.f32 %v3705, %v3747
        %v3749 = vpop.f32.mrb[0].mxu0
        %v3750 = vadd.f32 %v3707, %v3749
        %3751 = vdwg.mxu0
        %3752 = vmatprep.subr.bf16.mxu0 %v2649
        %3753 = vmatpush1.bf16.msra.mxu0 %v2648
        %3754 = vmatprep.subr.bf16.mxu0 %v2661
        %3755 = vmatpush1.bf16.msra.mxu0 %v2660
        %3756 = vmatprep.subr.bf16.mxu0 %v2673
        %3757 = vmatpush1.bf16.msra.mxu0 %v2672
        %3758 = vmatprep.subr.bf16.mxu0 %v2685
        %3759 = vmatpush1.bf16.msra.mxu0 %v2684
        %3760 = vmatprep.subr.bf16.mxu0 %v2697
        %3761 = vmatpush1.bf16.msra.mxu0 %v2696
        %3762 = vmatprep.subr.bf16.mxu0 %v2709
        %3763 = vmatpush1.bf16.msra.mxu0 %v2708
        %3764 = vmatprep.subr.bf16.mxu0 %v2721
        %3765 = vmatpush1.bf16.msra.mxu0 %v2720
        %3766 = vmatprep.subr.bf16.mxu0 %v2733
        %3767 = vmatpush1.bf16.msra.mxu0 %v2732
        %3768 = vmatprep.subr.bf16.mxu0 %v2745
        %3769 = vmatpush1.bf16.msra.mxu0 %v2744
        %3770 = vmatprep.subr.bf16.mxu0 %v2757
        %3771 = vmatpush1.bf16.msra.mxu0 %v2756
        %3772 = vmatprep.subr.bf16.mxu0 %v2769
        %3773 = vmatpush1.bf16.msra.mxu0 %v2768
        %3774 = vmatprep.subr.bf16.mxu0 %v2781
        %3775 = vmatpush1.bf16.msra.mxu0 %v2780
        %3776 = vmatprep.subr.bf16.mxu0 %v2793
        %3777 = vmatpush1.bf16.msra.mxu0 %v2792
        %3778 = vmatprep.subr.bf16.mxu0 %v2805
        %3779 = vmatpush1.bf16.msra.mxu0 %v2804
        %3780 = vmatprep.subr.bf16.mxu0 %v2817
        %3781 = vmatpush1.bf16.msra.mxu0 %v2816
        %3782 = vmatprep.subr.bf16.mxu0 %v2829
        %3783 = vmatpush1.bf16.msra.mxu0 %v2828
        %3784 = vmatprep.mubr.bf16.mxu0 %v1037
        %3785 = vmatmul.mubr.bf16.gmra.mrb[0].mxu0 %v1036
        %v3786 = vpop.f32.mrb[0].mxu0
        %v3787 = vadd.f32 %v1463, %v3786
        %v3788 = vpop.f32.mrb[0].mxu0
        %v3789 = vadd.f32 %v1467, %v3788
        %v3790 = vpop.f32.mrb[0].mxu0
        %v3791 = vadd.f32 %v1463, %v3790
        %v3792 = vpop.f32.mrb[0].mxu0
        %v3793 = vadd.f32 %v1467, %v3792
        %3794 = vdwg.mxu0
        %3795 = vmatprep.subr.bf16.mxu0 %v2841
        %3796 = vmatpush1.bf16.msra.mxu0 %v2840
        %3797 = vmatprep.subr.bf16.mxu0 %v2853
        %3798 = vmatpush1.bf16.msra.mxu0 %v2852
        %3799 = vmatprep.subr.bf16.mxu0 %v2865
        %3800 = vmatpush1.bf16.msra.mxu0 %v2864
        %3801 = vmatprep.subr.bf16.mxu0 %v2877
        %3802 = vmatpush1.bf16.msra.mxu0 %v2876
        %3803 = vmatprep.subr.bf16.mxu0 %v2889
        %3804 = vmatpush1.bf16.msra.mxu0 %v2888
        %3805 = vmatprep.subr.bf16.mxu0 %v2901
        %3806 = vmatpush1.bf16.msra.mxu0 %v2900
        %3807 = vmatprep.subr.bf16.mxu0 %v2913
        %3808 = vmatpush1.bf16.msra.mxu0 %v2912
        %3809 = vmatprep.subr.bf16.mxu0 %v2925
        %3810 = vmatpush1.bf16.msra.mxu0 %v2924
        %3811 = vmatprep.subr.bf16.mxu0 %v2937
        %3812 = vmatpush1.bf16.msra.mxu0 %v2936
        %3813 = vmatprep.subr.bf16.mxu0 %v2949
        %3814 = vmatpush1.bf16.msra.mxu0 %v2948
        %3815 = vmatprep.subr.bf16.mxu0 %v2961
        %3816 = vmatpush1.bf16.msra.mxu0 %v2960
        %3817 = vmatprep.subr.bf16.mxu0 %v2973
        %3818 = vmatpush1.bf16.msra.mxu0 %v2972
        %3819 = vmatprep.subr.bf16.mxu0 %v2985
        %3820 = vmatpush1.bf16.msra.mxu0 %v2984
        %3821 = vmatprep.subr.bf16.mxu0 %v2997
        %3822 = vmatpush1.bf16.msra.mxu0 %v2996
        %3823 = vmatprep.subr.bf16.mxu0 %v3009
        %3824 = vmatpush1.bf16.msra.mxu0 %v3008
        %3825 = vmatprep.subr.bf16.mxu0 %v3021
        %3826 = vmatpush1.bf16.msra.mxu0 %v3020
        %3827 = vmatprep.mubr.bf16.mxu0 %v1039
        %3828 = vmatmul.mubr.bf16.gmra.mrb[0].mxu0 %v1038
        %v3829 = vpop.f32.mrb[0].mxu0
        %v3830 = vadd.f32 %v3787, %v3829
        %v3831 = vpop.f32.mrb[0].mxu0
        %v3832 = vadd.f32 %v3789, %v3831
        %v3833 = vpop.f32.mrb[0].mxu0
        %v3834 = vadd.f32 %v3791, %v3833
        %v3835 = vpop.f32.mrb[0].mxu0
        %v3836 = vadd.f32 %v3793, %v3835
        %3837 = vdwg.mxu0
        %3838 = vmatprep.subr.bf16.mxu0 %v2651
        %3839 = vmatpush1.bf16.msra.mxu0 %v2650
        %3840 = vmatprep.subr.bf16.mxu0 %v2663
        %3841 = vmatpush1.bf16.msra.mxu0 %v2662
        %3842 = vmatprep.subr.bf16.mxu0 %v2675
        %3843 = vmatpush1.bf16.msra.mxu0 %v2674
        %3844 = vmatprep.subr.bf16.mxu0 %v2687
        %3845 = vmatpush1.bf16.msra.mxu0 %v2686
        %3846 = vmatprep.subr.bf16.mxu0 %v2699
        %3847 = vmatpush1.bf16.msra.mxu0 %v2698
        %3848 = vmatprep.subr.bf16.mxu0 %v2711
        %3849 = vmatpush1.bf16.msra.mxu0 %v2710
        %3850 = vmatprep.subr.bf16.mxu0 %v2723
        %3851 = vmatpush1.bf16.msra.mxu0 %v2722
        %3852 = vmatprep.subr.bf16.mxu0 %v2735
        %3853 = vmatpush1.bf16.msra.mxu0 %v2734
        %3854 = vmatprep.subr.bf16.mxu0 %v2747
        %3855 = vmatpush1.bf16.msra.mxu0 %v2746
        %3856 = vmatprep.subr.bf16.mxu0 %v2759
        %3857 = vmatpush1.bf16.msra.mxu0 %v2758
        %3858 = vmatprep.subr.bf16.mxu0 %v2771
        %3859 = vmatpush1.bf16.msra.mxu0 %v2770
        %3860 = vmatprep.subr.bf16.mxu0 %v2783
        %3861 = vmatpush1.bf16.msra.mxu0 %v2782
        %3862 = vmatprep.subr.bf16.mxu0 %v2795
        %3863 = vmatpush1.bf16.msra.mxu0 %v2794
        %3864 = vmatprep.subr.bf16.mxu0 %v2807
        %3865 = vmatpush1.bf16.msra.mxu0 %v2806
        %3866 = vmatprep.subr.bf16.mxu0 %v2819
        %3867 = vmatpush1.bf16.msra.mxu0 %v2818
        %3868 = vmatprep.subr.bf16.mxu0 %v2831
        %3869 = vmatpush1.bf16.msra.mxu0 %v2830
        %3870 = vmatprep.mubr.bf16.mxu0 %v1037
        %3871 = vmatmul.mubr.bf16.gmra.mrb[0].mxu0 %v1036
        %v3872 = vpop.f32.mrb[0].mxu0
        %v3873 = vadd.f32 %v1471, %v3872
        %v3874 = vpop.f32.mrb[0].mxu0
        %v3875 = vadd.f32 %v1475, %v3874
        %v3876 = vpop.f32.mrb[0].mxu0
        %v3877 = vadd.f32 %v1471, %v3876
        %v3878 = vpop.f32.mrb[0].mxu0
        %v3879 = vadd.f32 %v1475, %v3878
        %3880 = vdwg.mxu0
        %3881 = vmatprep.subr.bf16.mxu0 %v2843
        %3882 = vmatpush1.bf16.msra.mxu0 %v2842
        %3883 = vmatprep.subr.bf16.mxu0 %v2855
        %3884 = vmatpush1.bf16.msra.mxu0 %v2854
        %3885 = vmatprep.subr.bf16.mxu0 %v2867
        %3886 = vmatpush1.bf16.msra.mxu0 %v2866
        %3887 = vmatprep.subr.bf16.mxu0 %v2879
        %3888 = vmatpush1.bf16.msra.mxu0 %v2878
        %3889 = vmatprep.subr.bf16.mxu0 %v2891
        %3890 = vmatpush1.bf16.msra.mxu0 %v2890
        %3891 = vmatprep.subr.bf16.mxu0 %v2903
        %3892 = vmatpush1.bf16.msra.mxu0 %v2902
        %3893 = vmatprep.subr.bf16.mxu0 %v2915
        %3894 = vmatpush1.bf16.msra.mxu0 %v2914
        %3895 = vmatprep.subr.bf16.mxu0 %v2927
        %3896 = vmatpush1.bf16.msra.mxu0 %v2926
        %3897 = vmatprep.subr.bf16.mxu0 %v2939
        %3898 = vmatpush1.bf16.msra.mxu0 %v2938
        %3899 = vmatprep.subr.bf16.mxu0 %v2951
        %3900 = vmatpush1.bf16.msra.mxu0 %v2950
        %3901 = vmatprep.subr.bf16.mxu0 %v2963
        %3902 = vmatpush1.bf16.msra.mxu0 %v2962
        %3903 = vmatprep.subr.bf16.mxu0 %v2975
        %3904 = vmatpush1.bf16.msra.mxu0 %v2974
        %3905 = vmatprep.subr.bf16.mxu0 %v2987
        %3906 = vmatpush1.bf16.msra.mxu0 %v2986
        %3907 = vmatprep.subr.bf16.mxu0 %v2999
        %3908 = vmatpush1.bf16.msra.mxu0 %v2998
        %3909 = vmatprep.subr.bf16.mxu0 %v3011
        %3910 = vmatpush1.bf16.msra.mxu0 %v3010
        %3911 = vmatprep.subr.bf16.mxu0 %v3023
        %3912 = vmatpush1.bf16.msra.mxu0 %v3022
        %3913 = vmatprep.mubr.bf16.mxu0 %v1039
        %3914 = vmatmul.mubr.bf16.gmra.mrb[0].mxu0 %v1038
        %v3915 = vpop.f32.mrb[0].mxu0
        %v3916 = vadd.f32 %v3873, %v3915
        %v3917 = vpop.f32.mrb[0].mxu0
        %v3918 = vadd.f32 %v3875, %v3917
        %v3919 = vpop.f32.mrb[0].mxu0
        %v3920 = vadd.f32 %v3877, %v3919
        %v3921 = vpop.f32.mrb[0].mxu0
        %v3922 = vadd.f32 %v3879, %v3921
        %3923 = vdwg.mxu0
        %v3924 = vld [vmem:[%s734] sm:$0xff]
        %v3925 = vld [vmem:[%s734 + $0x8] sm:$0xff]
        %v3926 = vld [vmem:[%s734 + $0x10] sm:$0xff]
        %v3927 = vld [vmem:[%s734 + $0x18] sm:$0xff]
        %v3928 = vld [vmem:[%s734 + $0x20] sm:$0xff]
        %v3929 = vld [vmem:[%s734 + $0x28] sm:$0xff]
        %v3930 = vld [vmem:[%s734 + $0x30] sm:$0xff]
        %v3931 = vld [vmem:[%s734 + $0x38] sm:$0xff]
        %v3932 = vld [vmem:[%s734 + $0x40] sm:$0xff]
        %v3933 = vld [vmem:[%s734 + $0x48] sm:$0xff]
        %v3934 = vld [vmem:[%s734 + $0x50] sm:$0xff]
        %v3935 = vld [vmem:[%s734 + $0x58] sm:$0xff]
        %v3936 = vld [vmem:[%s734 + $0x60] sm:$0xff]
        %v3937 = vld [vmem:[%s734 + $0x68] sm:$0xff]
        %v3938 = vld [vmem:[%s734 + $0x70] sm:$0xff]
        %v3939 = vld [vmem:[%s734 + $0x78] sm:$0xff]
        %v3940 = vld [vmem:[%s734 + $0x80] sm:$0xff]
        %v3941 = vld [vmem:[%s734 + $0x88] sm:$0xff]
        %v3942 = vld [vmem:[%s734 + $0x90] sm:$0xff]
        %v3943 = vld [vmem:[%s734 + $0x98] sm:$0xff]
        %v3944 = vld [vmem:[%s734 + $0xa0] sm:$0xff]
        %v3945 = vld [vmem:[%s734 + $0xa8] sm:$0xff]
        %v3946 = vld [vmem:[%s734 + $0xb0] sm:$0xff]
        %v3947 = vld [vmem:[%s734 + $0xb8] sm:$0xff]
        %v3948 = vld [vmem:[%s734 + $0xc0] sm:$0xff]
        %v3949 = vld [vmem:[%s734 + $0xc8] sm:$0xff]
        %v3950 = vld [vmem:[%s734 + $0xd0] sm:$0xff]
        %v3951 = vld [vmem:[%s734 + $0xd8] sm:$0xff]
        %v3952 = vld [vmem:[%s734 + $0xe0] sm:$0xff]
        %v3953 = vld [vmem:[%s734 + $0xe8] sm:$0xff]
        %v3954 = vld [vmem:[%s734 + $0xf0] sm:$0xff]
        %v3955 = vld [vmem:[%s734 + $0xf8] sm:$0xff]
        %v3956 = vld [vmem:[%s734 + $0x100] sm:$0xff]
        %v3957 = vld [vmem:[%s734 + $0x108] sm:$0xff]
        %v3958 = vld [vmem:[%s734 + $0x110] sm:$0xff]
        %v3959 = vld [vmem:[%s734 + $0x118] sm:$0xff]
        %v3960 = vld [vmem:[%s734 + $0x120] sm:$0xff]
        %v3961 = vld [vmem:[%s734 + $0x128] sm:$0xff]
        %v3962 = vld [vmem:[%s734 + $0x130] sm:$0xff]
        %v3963 = vld [vmem:[%s734 + $0x138] sm:$0xff]
        %v3964 = vld [vmem:[%s734 + $0x140] sm:$0xff]
        %v3965 = vld [vmem:[%s734 + $0x148] sm:$0xff]
        %v3966 = vld [vmem:[%s734 + $0x150] sm:$0xff]
        %v3967 = vld [vmem:[%s734 + $0x158] sm:$0xff]
        %v3968 = vld [vmem:[%s734 + $0x160] sm:$0xff]
        %v3969 = vld [vmem:[%s734 + $0x168] sm:$0xff]
        %v3970 = vld [vmem:[%s734 + $0x170] sm:$0xff]
        %v3971 = vld [vmem:[%s734 + $0x178] sm:$0xff]
        %v3972 = vld [vmem:[%s734 + $0x180] sm:$0xff]
        %v3973 = vld [vmem:[%s734 + $0x188] sm:$0xff]
        %v3974 = vld [vmem:[%s734 + $0x190] sm:$0xff]
        %v3975 = vld [vmem:[%s734 + $0x198] sm:$0xff]
        %v3976 = vld [vmem:[%s734 + $0x1a0] sm:$0xff]
        %v3977 = vld [vmem:[%s734 + $0x1a8] sm:$0xff]
        %v3978 = vld [vmem:[%s734 + $0x1b0] sm:$0xff]
        %v3979 = vld [vmem:[%s734 + $0x1b8] sm:$0xff]
        %v3980 = vld [vmem:[%s734 + $0x1c0] sm:$0xff]
        %v3981 = vld [vmem:[%s734 + $0x1c8] sm:$0xff]
        %v3982 = vld [vmem:[%s734 + $0x1d0] sm:$0xff]
        %v3983 = vld [vmem:[%s734 + $0x1d8] sm:$0xff]
        %v3984 = vld [vmem:[%s734 + $0x1e0] sm:$0xff]
        %v3985 = vld [vmem:[%s734 + $0x1e8] sm:$0xff]
        %v3986 = vld [vmem:[%s734 + $0x1f0] sm:$0xff]
        %v3987 = vld [vmem:[%s734 + $0x1f8] sm:$0xff]
        %v3988 = vld [vmem:[%s734 + $0x200] sm:$0xff]
        %v3989 = vld [vmem:[%s734 + $0x208] sm:$0xff]
        %v3990 = vld [vmem:[%s734 + $0x210] sm:$0xff]
        %v3991 = vld [vmem:[%s734 + $0x218] sm:$0xff]
        %v3992 = vld [vmem:[%s734 + $0x220] sm:$0xff]
        %v3993 = vld [vmem:[%s734 + $0x228] sm:$0xff]
        %v3994 = vld [vmem:[%s734 + $0x230] sm:$0xff]
        %v3995 = vld [vmem:[%s734 + $0x238] sm:$0xff]
        %v3996 = vld [vmem:[%s734 + $0x240] sm:$0xff]
        %v3997 = vld [vmem:[%s734 + $0x248] sm:$0xff]
        %v3998 = vld [vmem:[%s734 + $0x250] sm:$0xff]
        %v3999 = vld [vmem:[%s734 + $0x258] sm:$0xff]
        %v4000 = vld [vmem:[%s734 + $0x260] sm:$0xff]
        %v4001 = vld [vmem:[%s734 + $0x268] sm:$0xff]
        %v4002 = vld [vmem:[%s734 + $0x270] sm:$0xff]
        %v4003 = vld [vmem:[%s734 + $0x278] sm:$0xff]
        %v4004 = vld [vmem:[%s734 + $0x280] sm:$0xff]
        %v4005 = vld [vmem:[%s734 + $0x288] sm:$0xff]
        %v4006 = vld [vmem:[%s734 + $0x290] sm:$0xff]
        %v4007 = vld [vmem:[%s734 + $0x298] sm:$0xff]
        %v4008 = vld [vmem:[%s734 + $0x2a0] sm:$0xff]
        %v4009 = vld [vmem:[%s734 + $0x2a8] sm:$0xff]
        %v4010 = vld [vmem:[%s734 + $0x2b0] sm:$0xff]
        %v4011 = vld [vmem:[%s734 + $0x2b8] sm:$0xff]
        %v4012 = vld [vmem:[%s734 + $0x2c0] sm:$0xff]
        %v4013 = vld [vmem:[%s734 + $0x2c8] sm:$0xff]
        %v4014 = vld [vmem:[%s734 + $0x2d0] sm:$0xff]
        %v4015 = vld [vmem:[%s734 + $0x2d8] sm:$0xff]
        %v4016 = vld [vmem:[%s734 + $0x2e0] sm:$0xff]
        %v4017 = vld [vmem:[%s734 + $0x2e8] sm:$0xff]
        %v4018 = vld [vmem:[%s734 + $0x2f0] sm:$0xff]
        %v4019 = vld [vmem:[%s734 + $0x2f8] sm:$0xff]
        %v4020 = vld [vmem:[%s734 + $0x300] sm:$0xff]
        %v4021 = vld [vmem:[%s734 + $0x308] sm:$0xff]
        %v4022 = vld [vmem:[%s734 + $0x310] sm:$0xff]
        %v4023 = vld [vmem:[%s734 + $0x318] sm:$0xff]
        %v4024 = vld [vmem:[%s734 + $0x320] sm:$0xff]
        %v4025 = vld [vmem:[%s734 + $0x328] sm:$0xff]
        %v4026 = vld [vmem:[%s734 + $0x330] sm:$0xff]
        %v4027 = vld [vmem:[%s734 + $0x338] sm:$0xff]
        %v4028 = vld [vmem:[%s734 + $0x340] sm:$0xff]
        %v4029 = vld [vmem:[%s734 + $0x348] sm:$0xff]
        %v4030 = vld [vmem:[%s734 + $0x350] sm:$0xff]
        %v4031 = vld [vmem:[%s734 + $0x358] sm:$0xff]
        %v4032 = vld [vmem:[%s734 + $0x360] sm:$0xff]
        %v4033 = vld [vmem:[%s734 + $0x368] sm:$0xff]
        %v4034 = vld [vmem:[%s734 + $0x370] sm:$0xff]
        %v4035 = vld [vmem:[%s734 + $0x378] sm:$0xff]
        %v4036 = vld [vmem:[%s734 + $0x380] sm:$0xff]
        %v4037 = vld [vmem:[%s734 + $0x388] sm:$0xff]
        %v4038 = vld [vmem:[%s734 + $0x390] sm:$0xff]
        %v4039 = vld [vmem:[%s734 + $0x398] sm:$0xff]
        %v4040 = vld [vmem:[%s734 + $0x3a0] sm:$0xff]
        %v4041 = vld [vmem:[%s734 + $0x3a8] sm:$0xff]
        %v4042 = vld [vmem:[%s734 + $0x3b0] sm:$0xff]
        %v4043 = vld [vmem:[%s734 + $0x3b8] sm:$0xff]
        %v4044 = vld [vmem:[%s734 + $0x3c0] sm:$0xff]
        %v4045 = vld [vmem:[%s734 + $0x3c8] sm:$0xff]
        %v4046 = vld [vmem:[%s734 + $0x3d0] sm:$0xff]
        %v4047 = vld [vmem:[%s734 + $0x3d8] sm:$0xff]
        %v4048 = vld [vmem:[%s734 + $0x3e0] sm:$0xff]
        %v4049 = vld [vmem:[%s734 + $0x3e8] sm:$0xff]
        %v4050 = vld [vmem:[%s734 + $0x3f0] sm:$0xff]
        %v4051 = vld [vmem:[%s734 + $0x3f8] sm:$0xff]
        %v4052 = vmul.f32 %v3486, 0.125
        %v4053 = vmul.f32 %v3490, 0.125
        %v4054 = vpack.c.bf16 %v4052, %v4052
        %v4055 = vpack.c.bf16 %v4053, %v4053
        %v4056 = vpack.c.bf16 %v3658, %v3658
        %v4057 = vpack.c.bf16 %v3662, %v3662
        %vm4058 = vcmask 523264
        %v4060 = vsel %vm4058, %v4054, 0
        %v4063 = vsel %vm4058, %v4056, 0
        %4065 = vmatprep.subr.bf16.mxu0 0
        %4066 = vmatpush1.bf16.xpose.msra.mxu0 %v4063
        %4067 = vmatprep.subr.bf16.mxu0 0
        %4068 = vmatpush1.bf16.xpose.msra.mxu0 0
        %4069 = vmatprep.subr.bf16.mxu0 0
        %4070 = vmatpush1.bf16.xpose.msra.mxu0 0
        %4071 = vmatprep.subr.bf16.mxu0 0
        %4072 = vmatpush1.bf16.xpose.msra.mxu0 0
        %4073 = vmatprep.subr.bf16.mxu0 0
        %4074 = vmatpush1.bf16.xpose.msra.mxu0 0
        %4075 = vmatprep.subr.bf16.mxu0 0
        %4076 = vmatpush1.bf16.xpose.msra.mxu0 0
        %4077 = vmatprep.subr.bf16.mxu0 0
        %4078 = vmatpush1.bf16.xpose.msra.mxu0 0
        %4079 = vmatprep.subr.bf16.mxu0 0
        %4080 = vmatpush1.bf16.xpose.msra.mxu0 0
        %4081 = vmatprep.subr.bf16.mxu0 0
        %4082 = vmatpush1.bf16.xpose.msra.mxu0 0
        %4083 = vmatprep.subr.bf16.mxu0 0
        %4084 = vmatpush1.bf16.xpose.msra.mxu0 0
        %4085 = vmatprep.subr.bf16.mxu0 0
        %4086 = vmatpush1.bf16.xpose.msra.mxu0 0
        %4087 = vmatprep.subr.bf16.mxu0 0
        %4088 = vmatpush1.bf16.xpose.msra.mxu0 0
        %4089 = vmatprep.subr.bf16.mxu0 0
        %4090 = vmatpush1.bf16.xpose.msra.mxu0 0
        %4091 = vmatprep.subr.bf16.mxu0 0
        %4092 = vmatpush1.bf16.xpose.msra.mxu0 0
        %4093 = vmatprep.subr.bf16.mxu0 0
        %4094 = vmatpush1.bf16.xpose.msra.mxu0 0
        %4095 = vmatprep.subr.bf16.mxu0 0
        %4096 = vmatpush1.bf16.xpose.msra.mxu0 0
        %4097 = vmatprep.mubr.bf16.mxu0 0
        %4098 = vmatmul.mubr.bf16.gmra.mrb[0].mxu0 %v4060
        %v4099 = vpop.f32.mrb[0].mxu0
        %v4100 = vadd.f32 %v921, %v4099
        %v4101 = vpop.f32.mrb[0].mxu0
        %v4102 = vpop.f32.mrb[0].mxu0
        %v4103 = vpop.f32.mrb[0].mxu0
        %4104 = vdwg.mxu0
        %v4106 = vsel %vm4058, %v4055, 0
        %v4109 = vsel %vm4058, %v4057, 0
        %4111 = vmatprep.subr.bf16.mxu0 0
        %4112 = vmatpush1.bf16.xpose.msra.mxu0 %v4109
        %4113 = vmatprep.subr.bf16.mxu0 0
        %4114 = vmatpush1.bf16.xpose.msra.mxu0 0
        %4115 = vmatprep.subr.bf16.mxu0 0
        %4116 = vmatpush1.bf16.xpose.msra.mxu0 0
        %4117 = vmatprep.subr.bf16.mxu0 0
        %4118 = vmatpush1.bf16.xpose.msra.mxu0 0
        %4119 = vmatprep.subr.bf16.mxu0 0
        %4120 = vmatpush1.bf16.xpose.msra.mxu0 0
        %4121 = vmatprep.subr.bf16.mxu0 0
        %4122 = vmatpush1.bf16.xpose.msra.mxu0 0
        %4123 = vmatprep.subr.bf16.mxu0 0
        %4124 = vmatpush1.bf16.xpose.msra.mxu0 0
        %4125 = vmatprep.subr.bf16.mxu0 0
        %4126 = vmatpush1.bf16.xpose.msra.mxu0 0
        %4127 = vmatprep.subr.bf16.mxu0 0
        %4128 = vmatpush1.bf16.xpose.msra.mxu0 0
        %4129 = vmatprep.subr.bf16.mxu0 0
        %4130 = vmatpush1.bf16.xpose.msra.mxu0 0
        %4131 = vmatprep.subr.bf16.mxu0 0
        %4132 = vmatpush1.bf16.xpose.msra.mxu0 0
        %4133 = vmatprep.subr.bf16.mxu0 0
        %4134 = vmatpush1.bf16.xpose.msra.mxu0 0
        %4135 = vmatprep.subr.bf16.mxu0 0
        %4136 = vmatpush1.bf16.xpose.msra.mxu0 0
        %4137 = vmatprep.subr.bf16.mxu0 0
        %4138 = vmatpush1.bf16.xpose.msra.mxu0 0
        %4139 = vmatprep.subr.bf16.mxu0 0
        %4140 = vmatpush1.bf16.xpose.msra.mxu0 0
        %4141 = vmatprep.subr.bf16.mxu0 0
        %4142 = vmatpush1.bf16.xpose.msra.mxu0 0
        %4143 = vmatprep.mubr.bf16.mxu0 0
        %4144 = vmatmul.mubr.bf16.gmra.mrb[0].mxu0 %v4106
        %v4145 = vpop.f32.mrb[0].mxu0
        %v4146 = vadd.f32 %v922, %v4145
        %v4147 = vpop.f32.mrb[0].mxu0
        %v4148 = vpop.f32.mrb[0].mxu0
        %v4149 = vpop.f32.mrb[0].mxu0
        %4150 = vdwg.mxu0
        %vm4151 = vcmask 64512
        %v4152 = vsel %vm4151, %v4100, -inf
        %4153 = vmax.xlane.f32.xlu0 %v4152
        %v4154 = vpop.xlane.xlu0 %4153
        %v4155 = vsel %vm4151, %v4146, -inf
        %4156 = vmax.xlane.f32.xlu0 %v4155
        %v4157 = vpop.xlane.xlu0 %4156
        %v4158 = vsub.f32 %v4100, %v4154
        %v4159 = vsub.f32 %v4146, %v4157
        %v4160 = vmul.f32 %v4158, 1.442695
        %v4161 = vpow.pop %v4160
        %v4162 = vmul.f32 %v4159, 1.442695
        %v4163 = vpow.pop %v4162
        %v4164 = vsel %vm4151, %v4161, 0.0
        %4165 = vadd.xlane.f32.xlu0 %v4164
        %v4166 = vpop.xlane.xlu0 %4165
        %v4167 = vsel %vm4151, %v4163, 0.0
        %4168 = vadd.xlane.f32.xlu0 %v4167
        %v4169 = vpop.xlane.xlu0 %4168
        %v4170 = vrcp.pop %v4166
        %v4171 = vrcp.pop %v4169
        %v4172 = vmul.f32 %v4161, %v4170
        %v4173 = vmul.f32 %v4163, %v4171
        %v4174 = vpack.c.bf16 %v4172, %v4172
        %v4175 = vpack.c.bf16 %v4173, %v4173
        %v4176 = vpack.c.bf16 %v3830, %v3830
        %v4177 = vpack.c.bf16 %v3834, %v3834
        %v4179 = vsel %vm4151, %v4174, 0
        %vm4181 = vcmask 1043456
        %v4183 = vsel %vm4181, %v4176, 0
        %4185 = vmatprep.subr.bf16.mxu0 0
        %4186 = vmatpush1.bf16.msra.mxu0 %v4183
        %4187 = vmatprep.subr.bf16.mxu0 0
        %4188 = vmatpush1.bf16.msra.mxu0 0
        %4189 = vmatprep.subr.bf16.mxu0 0
        %4190 = vmatpush1.bf16.msra.mxu0 0
        %4191 = vmatprep.subr.bf16.mxu0 0
        %4192 = vmatpush1.bf16.msra.mxu0 0
        %4193 = vmatprep.subr.bf16.mxu0 0
        %4194 = vmatpush1.bf16.msra.mxu0 0
        %4195 = vmatprep.subr.bf16.mxu0 0
        %4196 = vmatpush1.bf16.msra.mxu0 0
        %4197 = vmatprep.subr.bf16.mxu0 0
        %4198 = vmatpush1.bf16.msra.mxu0 0
        %4199 = vmatprep.subr.bf16.mxu0 0
        %4200 = vmatpush1.bf16.msra.mxu0 0
        %4201 = vmatprep.subr.bf16.mxu0 0
        %4202 = vmatpush1.bf16.msra.mxu0 0
        %4203 = vmatprep.subr.bf16.mxu0 0
        %4204 = vmatpush1.bf16.msra.mxu0 0
        %4205 = vmatprep.subr.bf16.mxu0 0
        %4206 = vmatpush1.bf16.msra.mxu0 0
        %4207 = vmatprep.subr.bf16.mxu0 0
        %4208 = vmatpush1.bf16.msra.mxu0 0
        %4209 = vmatprep.subr.bf16.mxu0 0
        %4210 = vmatpush1.bf16.msra.mxu0 0
        %4211 = vmatprep.subr.bf16.mxu0 0
        %4212 = vmatpush1.bf16.msra.mxu0 0
        %4213 = vmatprep.subr.bf16.mxu0 0
        %4214 = vmatpush1.bf16.msra.mxu0 0
        %4215 = vmatprep.subr.bf16.mxu0 0
        %4216 = vmatpush1.bf16.msra.mxu0 0
        %4217 = vmatprep.mubr.bf16.mxu0 0
        %4218 = vmatmul.mubr.bf16.gmra.mrb[0].mxu0 %v4179
        %v4219 = vpop.f32.mrb[0].mxu0
        %v4220 = vadd.f32 0.0, %v4219
        %v4221 = vpop.f32.mrb[0].mxu0
        %v4222 = vpop.f32.mrb[0].mxu0
        %v4223 = vpop.f32.mrb[0].mxu0
        %4224 = vdwg.mxu0
        %v4226 = vsel %vm4151, %v4175, 0
        %v4229 = vsel %vm4181, %v4177, 0
        %4231 = vmatprep.subr.bf16.mxu0 0
        %4232 = vmatpush1.bf16.msra.mxu0 %v4229
        %4233 = vmatprep.subr.bf16.mxu0 0
        %4234 = vmatpush1.bf16.msra.mxu0 0
        %4235 = vmatprep.subr.bf16.mxu0 0
        %4236 = vmatpush1.bf16.msra.mxu0 0
        %4237 = vmatprep.subr.bf16.mxu0 0
        %4238 = vmatpush1.bf16.msra.mxu0 0
        %4239 = vmatprep.subr.bf16.mxu0 0
        %4240 = vmatpush1.bf16.msra.mxu0 0
        %4241 = vmatprep.subr.bf16.mxu0 0
        %4242 = vmatpush1.bf16.msra.mxu0 0
        %4243 = vmatprep.subr.bf16.mxu0 0
        %4244 = vmatpush1.bf16.msra.mxu0 0
        %4245 = vmatprep.subr.bf16.mxu0 0
        %4246 = vmatpush1.bf16.msra.mxu0 0
        %4247 = vmatprep.subr.bf16.mxu0 0
        %4248 = vmatpush1.bf16.msra.mxu0 0
        %4249 = vmatprep.subr.bf16.mxu0 0
        %4250 = vmatpush1.bf16.msra.mxu0 0
        %4251 = vmatprep.subr.bf16.mxu0 0
        %4252 = vmatpush1.bf16.msra.mxu0 0
        %4253 = vmatprep.subr.bf16.mxu0 0
        %4254 = vmatpush1.bf16.msra.mxu0 0
        %4255 = vmatprep.subr.bf16.mxu0 0
        %4256 = vmatpush1.bf16.msra.mxu0 0
        %4257 = vmatprep.subr.bf16.mxu0 0
        %4258 = vmatpush1.bf16.msra.mxu0 0
        %4259 = vmatprep.subr.bf16.mxu0 0
        %4260 = vmatpush1.bf16.msra.mxu0 0
        %4261 = vmatprep.subr.bf16.mxu0 0
        %4262 = vmatpush1.bf16.msra.mxu0 0
        %4263 = vmatprep.mubr.bf16.mxu0 0
        %4264 = vmatmul.mubr.bf16.gmra.mrb[0].mxu0 %v4226
        %v4265 = vpop.f32.mrb[0].mxu0
        %v4266 = vadd.f32 0.0, %v4265
        %v4267 = vpop.f32.mrb[0].mxu0
        %v4268 = vpop.f32.mrb[0].mxu0
        %v4269 = vpop.f32.mrb[0].mxu0
        %4270 = vdwg.mxu0
        %v4271 = vpack.c.bf16 %v4266, %v4220
        %4273 = vrot.lane.b32.xlu0 %v4054, 64
        %v4274 = vpop.permute.xlu0 %4273
        %4276 = vrot.lane.b32.xlu0 %v4056, 64
        %v4277 = vpop.permute.xlu0 %4276
        %v4279 = vsel %vm4058, %v4274, 0
        %v4282 = vsel %vm4058, %v4277, 0
        %4284 = vmatprep.subr.bf16.mxu0 0
        %4285 = vmatpush1.bf16.xpose.msra.mxu0 %v4282
        %4286 = vmatprep.subr.bf16.mxu0 0
        %4287 = vmatpush1.bf16.xpose.msra.mxu0 0
        %4288 = vmatprep.subr.bf16.mxu0 0
        %4289 = vmatpush1.bf16.xpose.msra.mxu0 0
        %4290 = vmatprep.subr.bf16.mxu0 0
        %4291 = vmatpush1.bf16.xpose.msra.mxu0 0
        %4292 = vmatprep.subr.bf16.mxu0 0
        %4293 = vmatpush1.bf16.xpose.msra.mxu0 0
        %4294 = vmatprep.subr.bf16.mxu0 0
        %4295 = vmatpush1.bf16.xpose.msra.mxu0 0
        %4296 = vmatprep.subr.bf16.mxu0 0
        %4297 = vmatpush1.bf16.xpose.msra.mxu0 0
        %4298 = vmatprep.subr.bf16.mxu0 0
        %4299 = vmatpush1.bf16.xpose.msra.mxu0 0
        %4300 = vmatprep.subr.bf16.mxu0 0
        %4301 = vmatpush1.bf16.xpose.msra.mxu0 0
        %4302 = vmatprep.subr.bf16.mxu0 0
        %4303 = vmatpush1.bf16.xpose.msra.mxu0 0
        %4304 = vmatprep.subr.bf16.mxu0 0
        %4305 = vmatpush1.bf16.xpose.msra.mxu0 0
        %4306 = vmatprep.subr.bf16.mxu0 0
        %4307 = vmatpush1.bf16.xpose.msra.mxu0 0
        %4308 = vmatprep.subr.bf16.mxu0 0
        %4309 = vmatpush1.bf16.xpose.msra.mxu0 0
        %4310 = vmatprep.subr.bf16.mxu0 0
        %4311 = vmatpush1.bf16.xpose.msra.mxu0 0
        %4312 = vmatprep.subr.bf16.mxu0 0
        %4313 = vmatpush1.bf16.xpose.msra.mxu0 0
        %4314 = vmatprep.subr.bf16.mxu0 0
        %4315 = vmatpush1.bf16.xpose.msra.mxu0 0
        %4316 = vmatprep.mubr.bf16.mxu0 0
        %4317 = vmatmul.mubr.bf16.gmra.mrb[0].mxu0 %v4279
        %v4318 = vpop.f32.mrb[0].mxu0
        %v4319 = vadd.f32 %v921, %v4318
        %v4320 = vpop.f32.mrb[0].mxu0
        %v4321 = vpop.f32.mrb[0].mxu0
        %v4322 = vpop.f32.mrb[0].mxu0
        %4323 = vdwg.mxu0
        %4325 = vrot.lane.b32.xlu0 %v4055, 64
        %v4326 = vpop.permute.xlu0 %4325
        %4328 = vrot.lane.b32.xlu0 %v4057, 64
        %v4329 = vpop.permute.xlu0 %4328
        %v4331 = vsel %vm4058, %v4326, 0
        %v4334 = vsel %vm4058, %v4329, 0
        %4336 = vmatprep.subr.bf16.mxu0 0
        %4337 = vmatpush1.bf16.xpose.msra.mxu0 %v4334
        %4338 = vmatprep.subr.bf16.mxu0 0
        %4339 = vmatpush1.bf16.xpose.msra.mxu0 0
        %4340 = vmatprep.subr.bf16.mxu0 0
        %4341 = vmatpush1.bf16.xpose.msra.mxu0 0
        %4342 = vmatprep.subr.bf16.mxu0 0
        %4343 = vmatpush1.bf16.xpose.msra.mxu0 0
        %4344 = vmatprep.subr.bf16.mxu0 0
        %4345 = vmatpush1.bf16.xpose.msra.mxu0 0
        %4346 = vmatprep.subr.bf16.mxu0 0
        %4347 = vmatpush1.bf16.xpose.msra.mxu0 0
        %4348 = vmatprep.subr.bf16.mxu0 0
        %4349 = vmatpush1.bf16.xpose.msra.mxu0 0
        %4350 = vmatprep.subr.bf16.mxu0 0
        %4351 = vmatpush1.bf16.xpose.msra.mxu0 0
        %4352 = vmatprep.subr.bf16.mxu0 0
        %4353 = vmatpush1.bf16.xpose.msra.mxu0 0
        %4354 = vmatprep.subr.bf16.mxu0 0
        %4355 = vmatpush1.bf16.xpose.msra.mxu0 0
        %4356 = vmatprep.subr.bf16.mxu0 0
        %4357 = vmatpush1.bf16.xpose.msra.mxu0 0
        %4358 = vmatprep.subr.bf16.mxu0 0
        %4359 = vmatpush1.bf16.xpose.msra.mxu0 0
        %4360 = vmatprep.subr.bf16.mxu0 0
        %4361 = vmatpush1.bf16.xpose.msra.mxu0 0
        %4362 = vmatprep.subr.bf16.mxu0 0
        %4363 = vmatpush1.bf16.xpose.msra.mxu0 0
        %4364 = vmatprep.subr.bf16.mxu0 0
        %4365 = vmatpush1.bf16.xpose.msra.mxu0 0
        %4366 = vmatprep.subr.bf16.mxu0 0
        %4367 = vmatpush1.bf16.xpose.msra.mxu0 0
        %4368 = vmatprep.mubr.bf16.mxu0 0
        %4369 = vmatmul.mubr.bf16.gmra.mrb[0].mxu0 %v4331
        %v4370 = vpop.f32.mrb[0].mxu0
        %v4371 = vadd.f32 %v922, %v4370
        %v4372 = vpop.f32.mrb[0].mxu0
        %v4373 = vpop.f32.mrb[0].mxu0
        %v4374 = vpop.f32.mrb[0].mxu0
        %4375 = vdwg.mxu0
        %v4376 = vsel %vm4151, %v4319, -inf
        %4377 = vmax.xlane.f32.xlu0 %v4376
        %v4378 = vpop.xlane.xlu0 %4377
        %v4379 = vsel %vm4151, %v4371, -inf
        %4380 = vmax.xlane.f32.xlu0 %v4379
        %v4381 = vpop.xlane.xlu0 %4380
        %v4382 = vsub.f32 %v4319, %v4378
        %v4383 = vsub.f32 %v4371, %v4381
        %v4384 = vmul.f32 %v4382, 1.442695
        %v4385 = vpow.pop %v4384
        %v4386 = vmul.f32 %v4383, 1.442695
        %v4387 = vpow.pop %v4386
        %v4388 = vsel %vm4151, %v4385, 0.0
        %4389 = vadd.xlane.f32.xlu0 %v4388
        %v4390 = vpop.xlane.xlu0 %4389
        %v4391 = vsel %vm4151, %v4387, 0.0
        %4392 = vadd.xlane.f32.xlu0 %v4391
        %v4393 = vpop.xlane.xlu0 %4392
        %v4394 = vrcp.pop %v4390
        %v4395 = vrcp.pop %v4393
        %v4396 = vmul.f32 %v4385, %v4394
        %v4397 = vmul.f32 %v4387, %v4395
        %v4398 = vpack.c.bf16 %v4396, %v4396
        %v4399 = vpack.c.bf16 %v4397, %v4397
        %4401 = vrot.lane.b32.xlu0 %v4176, 64
        %v4402 = vpop.permute.xlu0 %4401
        %v4404 = vsel %vm4151, %v4398, 0
        %v4407 = vsel %vm4181, %v4402, 0
        %4409 = vmatprep.subr.bf16.mxu0 0
        %4410 = vmatpush1.bf16.msra.mxu0 %v4407
        %4411 = vmatprep.subr.bf16.mxu0 0
        %4412 = vmatpush1.bf16.msra.mxu0 0
        %4413 = vmatprep.subr.bf16.mxu0 0
        %4414 = vmatpush1.bf16.msra.mxu0 0
        %4415 = vmatprep.subr.bf16.mxu0 0
        %4416 = vmatpush1.bf16.msra.mxu0 0
        %4417 = vmatprep.subr.bf16.mxu0 0
        %4418 = vmatpush1.bf16.msra.mxu0 0
        %4419 = vmatprep.subr.bf16.mxu0 0
        %4420 = vmatpush1.bf16.msra.mxu0 0
        %4421 = vmatprep.subr.bf16.mxu0 0
        %4422 = vmatpush1.bf16.msra.mxu0 0
        %4423 = vmatprep.subr.bf16.mxu0 0
        %4424 = vmatpush1.bf16.msra.mxu0 0
        %4425 = vmatprep.subr.bf16.mxu0 0
        %4426 = vmatpush1.bf16.msra.mxu0 0
        %4427 = vmatprep.subr.bf16.mxu0 0
        %4428 = vmatpush1.bf16.msra.mxu0 0
        %4429 = vmatprep.subr.bf16.mxu0 0
        %4430 = vmatpush1.bf16.msra.mxu0 0
        %4431 = vmatprep.subr.bf16.mxu0 0
        %4432 = vmatpush1.bf16.msra.mxu0 0
        %4433 = vmatprep.subr.bf16.mxu0 0
        %4434 = vmatpush1.bf16.msra.mxu0 0
        %4435 = vmatprep.subr.bf16.mxu0 0
        %4436 = vmatpush1.bf16.msra.mxu0 0
        %4437 = vmatprep.subr.bf16.mxu0 0
        %4438 = vmatpush1.bf16.msra.mxu0 0
        %4439 = vmatprep.subr.bf16.mxu0 0
        %4440 = vmatpush1.bf16.msra.mxu0 0
        %4441 = vmatprep.mubr.bf16.mxu0 0
        %4442 = vmatmul.mubr.bf16.gmra.mrb[0].mxu0 %v4404
        %v4443 = vpop.f32.mrb[0].mxu0
        %v4444 = vadd.f32 0.0, %v4443
        %v4445 = vpop.f32.mrb[0].mxu0
        %v4446 = vpop.f32.mrb[0].mxu0
        %v4447 = vpop.f32.mrb[0].mxu0
        %4448 = vdwg.mxu0
        %4450 = vrot.lane.b32.xlu0 %v4177, 64
        %v4451 = vpop.permute.xlu0 %4450
        %v4453 = vsel %vm4151, %v4399, 0
        %v4456 = vsel %vm4181, %v4451, 0
        %4458 = vmatprep.subr.bf16.mxu0 0
        %4459 = vmatpush1.bf16.msra.mxu0 %v4456
        %4460 = vmatprep.subr.bf16.mxu0 0
        %4461 = vmatpush1.bf16.msra.mxu0 0
        %4462 = vmatprep.subr.bf16.mxu0 0
        %4463 = vmatpush1.bf16.msra.mxu0 0
        %4464 = vmatprep.subr.bf16.mxu0 0
        %4465 = vmatpush1.bf16.msra.mxu0 0
        %4466 = vmatprep.subr.bf16.mxu0 0
        %4467 = vmatpush1.bf16.msra.mxu0 0
        %4468 = vmatprep.subr.bf16.mxu0 0
        %4469 = vmatpush1.bf16.msra.mxu0 0
        %4470 = vmatprep.subr.bf16.mxu0 0
        %4471 = vmatpush1.bf16.msra.mxu0 0
        %4472 = vmatprep.subr.bf16.mxu0 0
        %4473 = vmatpush1.bf16.msra.mxu0 0
        %4474 = vmatprep.subr.bf16.mxu0 0
        %4475 = vmatpush1.bf16.msra.mxu0 0
        %4476 = vmatprep.subr.bf16.mxu0 0
        %4477 = vmatpush1.bf16.msra.mxu0 0
        %4478 = vmatprep.subr.bf16.mxu0 0
        %4479 = vmatpush1.bf16.msra.mxu0 0
        %4480 = vmatprep.subr.bf16.mxu0 0
        %4481 = vmatpush1.bf16.msra.mxu0 0
        %4482 = vmatprep.subr.bf16.mxu0 0
        %4483 = vmatpush1.bf16.msra.mxu0 0
        %4484 = vmatprep.subr.bf16.mxu0 0
        %4485 = vmatpush1.bf16.msra.mxu0 0
        %4486 = vmatprep.subr.bf16.mxu0 0
        %4487 = vmatpush1.bf16.msra.mxu0 0
        %4488 = vmatprep.subr.bf16.mxu0 0
        %4489 = vmatpush1.bf16.msra.mxu0 0
        %4490 = vmatprep.mubr.bf16.mxu0 0
        %4491 = vmatmul.mubr.bf16.gmra.mrb[0].mxu0 %v4453
        %v4492 = vpop.f32.mrb[0].mxu0
        %v4493 = vadd.f32 0.0, %v4492
        %v4494 = vpop.f32.mrb[0].mxu0
        %v4495 = vpop.f32.mrb[0].mxu0
        %v4496 = vpop.f32.mrb[0].mxu0
        %4497 = vdwg.mxu0
        %v4498 = vpack.c.bf16 %v4493, %v4444
        %v4515 = vunpack.c.l.b16 %v3940
        %v4516 = vunpack.c.h.b16 %v3940
        %v4517 = vunpack.c.l.b16 %v3941
        %v4518 = vunpack.c.h.b16 %v3941
        %v4519 = vunpack.c.l.b16 %v3942
        %v4520 = vunpack.c.h.b16 %v3942
        %v4521 = vunpack.c.l.b16 %v3943
        %v4522 = vunpack.c.h.b16 %v3943
        %v4523 = vunpack.c.l.b16 %v3944
        %v4524 = vunpack.c.h.b16 %v3944
        %v4525 = vunpack.c.l.b16 %v3945
        %v4526 = vunpack.c.h.b16 %v3945
        %v4527 = vunpack.c.l.b16 %v3946
        %v4528 = vunpack.c.h.b16 %v3946
        %v4529 = vunpack.c.l.b16 %v3947
        %v4530 = vunpack.c.h.b16 %v3947
        %v4531 = vunpack.c.l.b16 %v3948
        %v4532 = vunpack.c.h.b16 %v3948
        %v4533 = vunpack.c.l.b16 %v3949
        %v4534 = vunpack.c.h.b16 %v3949
        %v4535 = vunpack.c.l.b16 %v3950
        %v4536 = vunpack.c.h.b16 %v3950
        %v4537 = vunpack.c.l.b16 %v3951
        %v4538 = vunpack.c.h.b16 %v3951
        %v4539 = vunpack.c.l.b16 %v3952
        %v4540 = vunpack.c.h.b16 %v3952
        %v4541 = vunpack.c.l.b16 %v3953
        %v4542 = vunpack.c.h.b16 %v3953
        %v4543 = vunpack.c.l.b16 %v3954
        %v4544 = vunpack.c.h.b16 %v3954
        %v4545 = vunpack.c.l.b16 %v3955
        %v4546 = vunpack.c.h.b16 %v3955
        %v4547 = vpack.c.b16 %v4519, %v4515
        %v4548 = vpack.c.b16 %v4520, %v4516
        %v4549 = vpack.c.b16 %v4521, %v4517
        %v4550 = vpack.c.b16 %v4522, %v4518
        %v4551 = vpack.c.b16 %v4527, %v4523
        %v4552 = vpack.c.b16 %v4528, %v4524
        %v4553 = vpack.c.b16 %v4529, %v4525
        %v4554 = vpack.c.b16 %v4530, %v4526
        %v4555 = vpack.c.b16 %v4535, %v4531
        %v4556 = vpack.c.b16 %v4536, %v4532
        %v4557 = vpack.c.b16 %v4537, %v4533
        %v4558 = vpack.c.b16 %v4538, %v4534
        %v4559 = vpack.c.b16 %v4543, %v4539
        %v4560 = vpack.c.b16 %v4544, %v4540
        %v4561 = vpack.c.b16 %v4545, %v4541
        %v4562 = vpack.c.b16 %v4546, %v4542
        %v4580 = vsel %vm4058, %v4498, 0
        %4582 = vmatprep.subr.bf16.mxu0 %v4548
        %4583 = vmatpush1.bf16.msra.mxu0 %v4547
        %4584 = vmatprep.subr.bf16.mxu0 %v4552
        %4585 = vmatpush1.bf16.msra.mxu0 %v4551
        %4586 = vmatprep.subr.bf16.mxu0 %v4556
        %4587 = vmatpush1.bf16.msra.mxu0 %v4555
        %4588 = vmatprep.subr.bf16.mxu0 %v4560
        %4589 = vmatpush1.bf16.msra.mxu0 %v4559
        %4590 = vmatprep.subr.bf16.mxu0 0
        %4591 = vmatpush1.bf16.msra.mxu0 0
        %4592 = vmatprep.subr.bf16.mxu0 0
        %4593 = vmatpush1.bf16.msra.mxu0 0
        %4594 = vmatprep.subr.bf16.mxu0 0
        %4595 = vmatpush1.bf16.msra.mxu0 0
        %4596 = vmatprep.subr.bf16.mxu0 0
        %4597 = vmatpush1.bf16.msra.mxu0 0
        %4598 = vmatprep.subr.bf16.mxu0 0
        %4599 = vmatpush1.bf16.msra.mxu0 0
        %4600 = vmatprep.subr.bf16.mxu0 0
        %4601 = vmatpush1.bf16.msra.mxu0 0
        %4602 = vmatprep.subr.bf16.mxu0 0
        %4603 = vmatpush1.bf16.msra.mxu0 0
        %4604 = vmatprep.subr.bf16.mxu0 0
        %4605 = vmatpush1.bf16.msra.mxu0 0
        %4606 = vmatprep.subr.bf16.mxu0 0
        %4607 = vmatpush1.bf16.msra.mxu0 0
        %4608 = vmatprep.subr.bf16.mxu0 0
        %4609 = vmatpush1.bf16.msra.mxu0 0
        %4610 = vmatprep.subr.bf16.mxu0 0
        %4611 = vmatpush1.bf16.msra.mxu0 0
        %4612 = vmatprep.subr.bf16.mxu0 0
        %4613 = vmatpush1.bf16.msra.mxu0 0
        %4614 = vmatprep.mubr.bf16.mxu0 0
        %4615 = vmatmul.mubr.bf16.gmra.mrb[0].mxu0 %v4580
        %v4616 = vpop.f32.mrb[0].mxu0
        %v4617 = vadd.f32 0.0, %v4616
        %v4618 = vpop.f32.mrb[0].mxu0
        %v4619 = vadd.f32 0.0, %v4618
        %v4620 = vpop.f32.mrb[0].mxu0
        %v4621 = vadd.f32 0.0, %v4620
        %v4622 = vpop.f32.mrb[0].mxu0
        %v4623 = vadd.f32 0.0, %v4622
        %4624 = vdwg.mxu0
        %4625 = vmatprep.subr.bf16.mxu0 %v4550
        %4626 = vmatpush1.bf16.msra.mxu0 %v4549
        %4627 = vmatprep.subr.bf16.mxu0 %v4554
        %4628 = vmatpush1.bf16.msra.mxu0 %v4553
        %4629 = vmatprep.subr.bf16.mxu0 %v4558
        %4630 = vmatpush1.bf16.msra.mxu0 %v4557
        %4631 = vmatprep.subr.bf16.mxu0 %v4562
        %4632 = vmatpush1.bf16.msra.mxu0 %v4561
        %4633 = vmatprep.subr.bf16.mxu0 0
        %4634 = vmatpush1.bf16.msra.mxu0 0
        %4635 = vmatprep.subr.bf16.mxu0 0
        %4636 = vmatpush1.bf16.msra.mxu0 0
        %4637 = vmatprep.subr.bf16.mxu0 0
        %4638 = vmatpush1.bf16.msra.mxu0 0
        %4639 = vmatprep.subr.bf16.mxu0 0
        %4640 = vmatpush1.bf16.msra.mxu0 0
        %4641 = vmatprep.subr.bf16.mxu0 0
        %4642 = vmatpush1.bf16.msra.mxu0 0
        %4643 = vmatprep.subr.bf16.mxu0 0
        %4644 = vmatpush1.bf16.msra.mxu0 0
        %4645 = vmatprep.subr.bf16.mxu0 0
        %4646 = vmatpush1.bf16.msra.mxu0 0
        %4647 = vmatprep.subr.bf16.mxu0 0
        %4648 = vmatpush1.bf16.msra.mxu0 0
        %4649 = vmatprep.subr.bf16.mxu0 0
        %4650 = vmatpush1.bf16.msra.mxu0 0
        %4651 = vmatprep.subr.bf16.mxu0 0
        %4652 = vmatpush1.bf16.msra.mxu0 0
        %4653 = vmatprep.subr.bf16.mxu0 0
        %4654 = vmatpush1.bf16.msra.mxu0 0
        %4655 = vmatprep.subr.bf16.mxu0 0
        %4656 = vmatpush1.bf16.msra.mxu0 0
        %4657 = vmatprep.mubr.bf16.mxu0 0
        %4658 = vmatmul.mubr.bf16.gmra.mrb[0].mxu0 %v4580
        %v4659 = vpop.f32.mrb[0].mxu0
        %v4660 = vadd.f32 0.0, %v4659
        %v4661 = vpop.f32.mrb[0].mxu0
        %v4662 = vadd.f32 0.0, %v4661
        %v4663 = vpop.f32.mrb[0].mxu0
        %v4664 = vadd.f32 0.0, %v4663
        %v4665 = vpop.f32.mrb[0].mxu0
        %v4666 = vadd.f32 0.0, %v4665
        %4667 = vdwg.mxu0
        %v4684 = vunpack.c.l.b16 %v3924
        %v4685 = vunpack.c.h.b16 %v3924
        %v4686 = vunpack.c.l.b16 %v3925
        %v4687 = vunpack.c.h.b16 %v3925
        %v4688 = vunpack.c.l.b16 %v3926
        %v4689 = vunpack.c.h.b16 %v3926
        %v4690 = vunpack.c.l.b16 %v3927
        %v4691 = vunpack.c.h.b16 %v3927
        %v4692 = vunpack.c.l.b16 %v3928
        %v4693 = vunpack.c.h.b16 %v3928
        %v4694 = vunpack.c.l.b16 %v3929
        %v4695 = vunpack.c.h.b16 %v3929
        %v4696 = vunpack.c.l.b16 %v3930
        %v4697 = vunpack.c.h.b16 %v3930
        %v4698 = vunpack.c.l.b16 %v3931
        %v4699 = vunpack.c.h.b16 %v3931
        %v4700 = vunpack.c.l.b16 %v3932
        %v4701 = vunpack.c.h.b16 %v3932
        %v4702 = vunpack.c.l.b16 %v3933
        %v4703 = vunpack.c.h.b16 %v3933
        %v4704 = vunpack.c.l.b16 %v3934
        %v4705 = vunpack.c.h.b16 %v3934
        %v4706 = vunpack.c.l.b16 %v3935
        %v4707 = vunpack.c.h.b16 %v3935
        %v4708 = vunpack.c.l.b16 %v3936
        %v4709 = vunpack.c.h.b16 %v3936
        %v4710 = vunpack.c.l.b16 %v3937
        %v4711 = vunpack.c.h.b16 %v3937
        %v4712 = vunpack.c.l.b16 %v3938
        %v4713 = vunpack.c.h.b16 %v3938
        %v4714 = vunpack.c.l.b16 %v3939
        %v4715 = vunpack.c.h.b16 %v3939
        %v4716 = vpack.c.b16 %v4688, %v4684
        %v4717 = vpack.c.b16 %v4689, %v4685
        %v4718 = vpack.c.b16 %v4690, %v4686
        %v4719 = vpack.c.b16 %v4691, %v4687
        %v4720 = vpack.c.b16 %v4696, %v4692
        %v4721 = vpack.c.b16 %v4697, %v4693
        %v4722 = vpack.c.b16 %v4698, %v4694
        %v4723 = vpack.c.b16 %v4699, %v4695
        %v4724 = vpack.c.b16 %v4704, %v4700
        %v4725 = vpack.c.b16 %v4705, %v4701
        %v4726 = vpack.c.b16 %v4706, %v4702
        %v4727 = vpack.c.b16 %v4707, %v4703
        %v4728 = vpack.c.b16 %v4712, %v4708
        %v4729 = vpack.c.b16 %v4713, %v4709
        %v4730 = vpack.c.b16 %v4714, %v4710
        %v4731 = vpack.c.b16 %v4715, %v4711
        %v4749 = vsel %vm4058, %v4271, 0
        %4751 = vmatprep.subr.bf16.mxu0 %v4717
        %4752 = vmatpush1.bf16.msra.mxu0 %v4716
        %4753 = vmatprep.subr.bf16.mxu0 %v4721
        %4754 = vmatpush1.bf16.msra.mxu0 %v4720
        %4755 = vmatprep.subr.bf16.mxu0 %v4725
        %4756 = vmatpush1.bf16.msra.mxu0 %v4724
        %4757 = vmatprep.subr.bf16.mxu0 %v4729
        %4758 = vmatpush1.bf16.msra.mxu0 %v4728
        %4759 = vmatprep.subr.bf16.mxu0 0
        %4760 = vmatpush1.bf16.msra.mxu0 0
        %4761 = vmatprep.subr.bf16.mxu0 0
        %4762 = vmatpush1.bf16.msra.mxu0 0
        %4763 = vmatprep.subr.bf16.mxu0 0
        %4764 = vmatpush1.bf16.msra.mxu0 0
        %4765 = vmatprep.subr.bf16.mxu0 0
        %4766 = vmatpush1.bf16.msra.mxu0 0
        %4767 = vmatprep.subr.bf16.mxu0 0
        %4768 = vmatpush1.bf16.msra.mxu0 0
        %4769 = vmatprep.subr.bf16.mxu0 0
        %4770 = vmatpush1.bf16.msra.mxu0 0
        %4771 = vmatprep.subr.bf16.mxu0 0
        %4772 = vmatpush1.bf16.msra.mxu0 0
        %4773 = vmatprep.subr.bf16.mxu0 0
        %4774 = vmatpush1.bf16.msra.mxu0 0
        %4775 = vmatprep.subr.bf16.mxu0 0
        %4776 = vmatpush1.bf16.msra.mxu0 0
        %4777 = vmatprep.subr.bf16.mxu0 0
        %4778 = vmatpush1.bf16.msra.mxu0 0
        %4779 = vmatprep.subr.bf16.mxu0 0
        %4780 = vmatpush1.bf16.msra.mxu0 0
        %4781 = vmatprep.subr.bf16.mxu0 0
        %4782 = vmatpush1.bf16.msra.mxu0 0
        %4783 = vmatprep.mubr.bf16.mxu0 0
        %4784 = vmatmul.mubr.bf16.gmra.mrb[0].mxu0 %v4749
        %v4785 = vpop.f32.mrb[0].mxu0
        %v4786 = vadd.f32 %v4617, %v4785
        %v4787 = vpop.f32.mrb[0].mxu0
        %v4788 = vadd.f32 %v4619, %v4787
        %v4789 = vpop.f32.mrb[0].mxu0
        %v4790 = vadd.f32 %v4621, %v4789
        %v4791 = vpop.f32.mrb[0].mxu0
        %v4792 = vadd.f32 %v4623, %v4791
        %4793 = vdwg.mxu0
        %4794 = vmatprep.subr.bf16.mxu0 %v4719
        %4795 = vmatpush1.bf16.msra.mxu0 %v4718
        %4796 = vmatprep.subr.bf16.mxu0 %v4723
        %4797 = vmatpush1.bf16.msra.mxu0 %v4722
        %4798 = vmatprep.subr.bf16.mxu0 %v4727
        %4799 = vmatpush1.bf16.msra.mxu0 %v4726
        %4800 = vmatprep.subr.bf16.mxu0 %v4731
        %4801 = vmatpush1.bf16.msra.mxu0 %v4730
        %4802 = vmatprep.subr.bf16.mxu0 0
        %4803 = vmatpush1.bf16.msra.mxu0 0
        %4804 = vmatprep.subr.bf16.mxu0 0
        %4805 = vmatpush1.bf16.msra.mxu0 0
        %4806 = vmatprep.subr.bf16.mxu0 0
        %4807 = vmatpush1.bf16.msra.mxu0 0
        %4808 = vmatprep.subr.bf16.mxu0 0
        %4809 = vmatpush1.bf16.msra.mxu0 0
        %4810 = vmatprep.subr.bf16.mxu0 0
        %4811 = vmatpush1.bf16.msra.mxu0 0
        %4812 = vmatprep.subr.bf16.mxu0 0
        %4813 = vmatpush1.bf16.msra.mxu0 0
        %4814 = vmatprep.subr.bf16.mxu0 0
        %4815 = vmatpush1.bf16.msra.mxu0 0
        %4816 = vmatprep.subr.bf16.mxu0 0
        %4817 = vmatpush1.bf16.msra.mxu0 0
        %4818 = vmatprep.subr.bf16.mxu0 0
        %4819 = vmatpush1.bf16.msra.mxu0 0
        %4820 = vmatprep.subr.bf16.mxu0 0
        %4821 = vmatpush1.bf16.msra.mxu0 0
        %4822 = vmatprep.subr.bf16.mxu0 0
        %4823 = vmatpush1.bf16.msra.mxu0 0
        %4824 = vmatprep.subr.bf16.mxu0 0
        %4825 = vmatpush1.bf16.msra.mxu0 0
        %4826 = vmatprep.mubr.bf16.mxu0 0
        %4827 = vmatmul.mubr.bf16.gmra.mrb[0].mxu0 %v4749
        %v4828 = vpop.f32.mrb[0].mxu0
        %v4829 = vadd.f32 %v4660, %v4828
        %v4830 = vpop.f32.mrb[0].mxu0
        %v4831 = vadd.f32 %v4662, %v4830
        %v4832 = vpop.f32.mrb[0].mxu0
        %v4833 = vadd.f32 %v4664, %v4832
        %v4834 = vpop.f32.mrb[0].mxu0
        %v4835 = vadd.f32 %v4666, %v4834
        %4836 = vdwg.mxu0
        %v4837 = vmul.f32 %v3488, 0.125
        %v4838 = vmul.f32 %v3492, 0.125
        %v4839 = vpack.c.bf16 %v4837, %v4837
        %v4840 = vpack.c.bf16 %v4838, %v4838
        %v4841 = vpack.c.bf16 %v3660, %v3660
        %v4842 = vpack.c.bf16 %v3664, %v3664
        %v4844 = vsel %vm4058, %v4839, 0
        %v4847 = vsel %vm4058, %v4841, 0
        %4849 = vmatprep.subr.bf16.mxu0 0
        %4850 = vmatpush1.bf16.xpose.msra.mxu0 %v4847
        %4851 = vmatprep.subr.bf16.mxu0 0
        %4852 = vmatpush1.bf16.xpose.msra.mxu0 0
        %4853 = vmatprep.subr.bf16.mxu0 0
        %4854 = vmatpush1.bf16.xpose.msra.mxu0 0
        %4855 = vmatprep.subr.bf16.mxu0 0
        %4856 = vmatpush1.bf16.xpose.msra.mxu0 0
        %4857 = vmatprep.subr.bf16.mxu0 0
        %4858 = vmatpush1.bf16.xpose.msra.mxu0 0
        %4859 = vmatprep.subr.bf16.mxu0 0
        %4860 = vmatpush1.bf16.xpose.msra.mxu0 0
        %4861 = vmatprep.subr.bf16.mxu0 0
        %4862 = vmatpush1.bf16.xpose.msra.mxu0 0
        %4863 = vmatprep.subr.bf16.mxu0 0
        %4864 = vmatpush1.bf16.xpose.msra.mxu0 0
        %4865 = vmatprep.subr.bf16.mxu0 0
        %4866 = vmatpush1.bf16.xpose.msra.mxu0 0
        %4867 = vmatprep.subr.bf16.mxu0 0
        %4868 = vmatpush1.bf16.xpose.msra.mxu0 0
        %4869 = vmatprep.subr.bf16.mxu0 0
        %4870 = vmatpush1.bf16.xpose.msra.mxu0 0
        %4871 = vmatprep.subr.bf16.mxu0 0
        %4872 = vmatpush1.bf16.xpose.msra.mxu0 0
        %4873 = vmatprep.subr.bf16.mxu0 0
        %4874 = vmatpush1.bf16.xpose.msra.mxu0 0
        %4875 = vmatprep.subr.bf16.mxu0 0
        %4876 = vmatpush1.bf16.xpose.msra.mxu0 0
        %4877 = vmatprep.subr.bf16.mxu0 0
        %4878 = vmatpush1.bf16.xpose.msra.mxu0 0
        %4879 = vmatprep.subr.bf16.mxu0 0
        %4880 = vmatpush1.bf16.xpose.msra.mxu0 0
        %4881 = vmatprep.mubr.bf16.mxu0 0
        %4882 = vmatmul.mubr.bf16.gmra.mrb[0].mxu0 %v4844
        %v4883 = vpop.f32.mrb[0].mxu0
        %v4884 = vadd.f32 %v921, %v4883
        %v4885 = vpop.f32.mrb[0].mxu0
        %v4886 = vpop.f32.mrb[0].mxu0
        %v4887 = vpop.f32.mrb[0].mxu0
        %4888 = vdwg.mxu0
        %v4890 = vsel %vm4058, %v4840, 0
        %v4893 = vsel %vm4058, %v4842, 0
        %4895 = vmatprep.subr.bf16.mxu0 0
        %4896 = vmatpush1.bf16.xpose.msra.mxu0 %v4893
        %4897 = vmatprep.subr.bf16.mxu0 0
        %4898 = vmatpush1.bf16.xpose.msra.mxu0 0
        %4899 = vmatprep.subr.bf16.mxu0 0
        %4900 = vmatpush1.bf16.xpose.msra.mxu0 0
        %4901 = vmatprep.subr.bf16.mxu0 0
        %4902 = vmatpush1.bf16.xpose.msra.mxu0 0
        %4903 = vmatprep.subr.bf16.mxu0 0
        %4904 = vmatpush1.bf16.xpose.msra.mxu0 0
        %4905 = vmatprep.subr.bf16.mxu0 0
        %4906 = vmatpush1.bf16.xpose.msra.mxu0 0
        %4907 = vmatprep.subr.bf16.mxu0 0
        %4908 = vmatpush1.bf16.xpose.msra.mxu0 0
        %4909 = vmatprep.subr.bf16.mxu0 0
        %4910 = vmatpush1.bf16.xpose.msra.mxu0 0
        %4911 = vmatprep.subr.bf16.mxu0 0
        %4912 = vmatpush1.bf16.xpose.msra.mxu0 0
        %4913 = vmatprep.subr.bf16.mxu0 0
        %4914 = vmatpush1.bf16.xpose.msra.mxu0 0
        %4915 = vmatprep.subr.bf16.mxu0 0
        %4916 = vmatpush1.bf16.xpose.msra.mxu0 0
        %4917 = vmatprep.subr.bf16.mxu0 0
        %4918 = vmatpush1.bf16.xpose.msra.mxu0 0
        %4919 = vmatprep.subr.bf16.mxu0 0
        %4920 = vmatpush1.bf16.xpose.msra.mxu0 0
        %4921 = vmatprep.subr.bf16.mxu0 0
        %4922 = vmatpush1.bf16.xpose.msra.mxu0 0
        %4923 = vmatprep.subr.bf16.mxu0 0
        %4924 = vmatpush1.bf16.xpose.msra.mxu0 0
        %4925 = vmatprep.subr.bf16.mxu0 0
        %4926 = vmatpush1.bf16.xpose.msra.mxu0 0
        %4927 = vmatprep.mubr.bf16.mxu0 0
        %4928 = vmatmul.mubr.bf16.gmra.mrb[0].mxu0 %v4890
        %v4929 = vpop.f32.mrb[0].mxu0
        %v4930 = vadd.f32 %v922, %v4929
        %v4931 = vpop.f32.mrb[0].mxu0
        %v4932 = vpop.f32.mrb[0].mxu0
        %v4933 = vpop.f32.mrb[0].mxu0
        %4934 = vdwg.mxu0
        %v4935 = vsel %vm4151, %v4884, -inf
        %4936 = vmax.xlane.f32.xlu0 %v4935
        %v4937 = vpop.xlane.xlu0 %4936
        %v4938 = vsel %vm4151, %v4930, -inf
        %4939 = vmax.xlane.f32.xlu0 %v4938
        %v4940 = vpop.xlane.xlu0 %4939
        %v4941 = vsub.f32 %v4884, %v4937
        %v4942 = vsub.f32 %v4930, %v4940
        %v4943 = vmul.f32 %v4941, 1.442695
        %v4944 = vpow.pop %v4943
        %v4945 = vmul.f32 %v4942, 1.442695
        %v4946 = vpow.pop %v4945
        %v4947 = vsel %vm4151, %v4944, 0.0
        %4948 = vadd.xlane.f32.xlu0 %v4947
        %v4949 = vpop.xlane.xlu0 %4948
        %v4950 = vsel %vm4151, %v4946, 0.0
        %4951 = vadd.xlane.f32.xlu0 %v4950
        %v4952 = vpop.xlane.xlu0 %4951
        %v4953 = vrcp.pop %v4949
        %v4954 = vrcp.pop %v4952
        %v4955 = vmul.f32 %v4944, %v4953
        %v4956 = vmul.f32 %v4946, %v4954
        %v4957 = vpack.c.bf16 %v4955, %v4955
        %v4958 = vpack.c.bf16 %v4956, %v4956
        %v4959 = vpack.c.bf16 %v3832, %v3832
        %v4960 = vpack.c.bf16 %v3836, %v3836
        %v4962 = vsel %vm4151, %v4957, 0
        %v4965 = vsel %vm4181, %v4959, 0
        %4967 = vmatprep.subr.bf16.mxu0 0
        %4968 = vmatpush1.bf16.msra.mxu0 %v4965
        %4969 = vmatprep.subr.bf16.mxu0 0
        %4970 = vmatpush1.bf16.msra.mxu0 0
        %4971 = vmatprep.subr.bf16.mxu0 0
        %4972 = vmatpush1.bf16.msra.mxu0 0
        %4973 = vmatprep.subr.bf16.mxu0 0
        %4974 = vmatpush1.bf16.msra.mxu0 0
        %4975 = vmatprep.subr.bf16.mxu0 0
        %4976 = vmatpush1.bf16.msra.mxu0 0
        %4977 = vmatprep.subr.bf16.mxu0 0
        %4978 = vmatpush1.bf16.msra.mxu0 0
        %4979 = vmatprep.subr.bf16.mxu0 0
        %4980 = vmatpush1.bf16.msra.mxu0 0
        %4981 = vmatprep.subr.bf16.mxu0 0
        %4982 = vmatpush1.bf16.msra.mxu0 0
        %4983 = vmatprep.subr.bf16.mxu0 0
        %4984 = vmatpush1.bf16.msra.mxu0 0
        %4985 = vmatprep.subr.bf16.mxu0 0
        %4986 = vmatpush1.bf16.msra.mxu0 0
        %4987 = vmatprep.subr.bf16.mxu0 0
        %4988 = vmatpush1.bf16.msra.mxu0 0
        %4989 = vmatprep.subr.bf16.mxu0 0
        %4990 = vmatpush1.bf16.msra.mxu0 0
        %4991 = vmatprep.subr.bf16.mxu0 0
        %4992 = vmatpush1.bf16.msra.mxu0 0
        %4993 = vmatprep.subr.bf16.mxu0 0
        %4994 = vmatpush1.bf16.msra.mxu0 0
        %4995 = vmatprep.subr.bf16.mxu0 0
        %4996 = vmatpush1.bf16.msra.mxu0 0
        %4997 = vmatprep.subr.bf16.mxu0 0
        %4998 = vmatpush1.bf16.msra.mxu0 0
        %4999 = vmatprep.mubr.bf16.mxu0 0
        %5000 = vmatmul.mubr.bf16.gmra.mrb[0].mxu0 %v4962
        %v5001 = vpop.f32.mrb[0].mxu0
        %v5002 = vadd.f32 0.0, %v5001
        %v5003 = vpop.f32.mrb[0].mxu0
        %v5004 = vpop.f32.mrb[0].mxu0
        %v5005 = vpop.f32.mrb[0].mxu0
        %5006 = vdwg.mxu0
        %v5008 = vsel %vm4151, %v4958, 0
        %v5011 = vsel %vm4181, %v4960, 0
        %5013 = vmatprep.subr.bf16.mxu0 0
        %5014 = vmatpush1.bf16.msra.mxu0 %v5011
        %5015 = vmatprep.subr.bf16.mxu0 0
        %5016 = vmatpush1.bf16.msra.mxu0 0
        %5017 = vmatprep.subr.bf16.mxu0 0
        %5018 = vmatpush1.bf16.msra.mxu0 0
        %5019 = vmatprep.subr.bf16.mxu0 0
        %5020 = vmatpush1.bf16.msra.mxu0 0
        %5021 = vmatprep.subr.bf16.mxu0 0
        %5022 = vmatpush1.bf16.msra.mxu0 0
        %5023 = vmatprep.subr.bf16.mxu0 0
        %5024 = vmatpush1.bf16.msra.mxu0 0
        %5025 = vmatprep.subr.bf16.mxu0 0
        %5026 = vmatpush1.bf16.msra.mxu0 0
        %5027 = vmatprep.subr.bf16.mxu0 0
        %5028 = vmatpush1.bf16.msra.mxu0 0
        %5029 = vmatprep.subr.bf16.mxu0 0
        %5030 = vmatpush1.bf16.msra.mxu0 0
        %5031 = vmatprep.subr.bf16.mxu0 0
        %5032 = vmatpush1.bf16.msra.mxu0 0
        %5033 = vmatprep.subr.bf16.mxu0 0
        %5034 = vmatpush1.bf16.msra.mxu0 0
        %5035 = vmatprep.subr.bf16.mxu0 0
        %5036 = vmatpush1.bf16.msra.mxu0 0
        %5037 = vmatprep.subr.bf16.mxu0 0
        %5038 = vmatpush1.bf16.msra.mxu0 0
        %5039 = vmatprep.subr.bf16.mxu0 0
        %5040 = vmatpush1.bf16.msra.mxu0 0
        %5041 = vmatprep.subr.bf16.mxu0 0
        %5042 = vmatpush1.bf16.msra.mxu0 0
        %5043 = vmatprep.subr.bf16.mxu0 0
        %5044 = vmatpush1.bf16.msra.mxu0 0
        %5045 = vmatprep.mubr.bf16.mxu0 0
        %5046 = vmatmul.mubr.bf16.gmra.mrb[0].mxu0 %v5008
        %v5047 = vpop.f32.mrb[0].mxu0
        %v5048 = vadd.f32 0.0, %v5047
        %v5049 = vpop.f32.mrb[0].mxu0
        %v5050 = vpop.f32.mrb[0].mxu0
        %v5051 = vpop.f32.mrb[0].mxu0
        %5052 = vdwg.mxu0
        %v5053 = vpack.c.bf16 %v5048, %v5002
        %v5070 = vunpack.c.l.b16 %v3956
        %v5071 = vunpack.c.h.b16 %v3956
        %v5072 = vunpack.c.l.b16 %v3957
        %v5073 = vunpack.c.h.b16 %v3957
        %v5074 = vunpack.c.l.b16 %v3958
        %v5075 = vunpack.c.h.b16 %v3958
        %v5076 = vunpack.c.l.b16 %v3959
        %v5077 = vunpack.c.h.b16 %v3959
        %v5078 = vunpack.c.l.b16 %v3960
        %v5079 = vunpack.c.h.b16 %v3960
        %v5080 = vunpack.c.l.b16 %v3961
        %v5081 = vunpack.c.h.b16 %v3961
        %v5082 = vunpack.c.l.b16 %v3962
        %v5083 = vunpack.c.h.b16 %v3962
        %v5084 = vunpack.c.l.b16 %v3963
        %v5085 = vunpack.c.h.b16 %v3963
        %v5086 = vunpack.c.l.b16 %v3964
        %v5087 = vunpack.c.h.b16 %v3964
        %v5088 = vunpack.c.l.b16 %v3965
        %v5089 = vunpack.c.h.b16 %v3965
        %v5090 = vunpack.c.l.b16 %v3966
        %v5091 = vunpack.c.h.b16 %v3966
        %v5092 = vunpack.c.l.b16 %v3967
        %v5093 = vunpack.c.h.b16 %v3967
        %v5094 = vunpack.c.l.b16 %v3968
        %v5095 = vunpack.c.h.b16 %v3968
        %v5096 = vunpack.c.l.b16 %v3969
        %v5097 = vunpack.c.h.b16 %v3969
        %v5098 = vunpack.c.l.b16 %v3970
        %v5099 = vunpack.c.h.b16 %v3970
        %v5100 = vunpack.c.l.b16 %v3971
        %v5101 = vunpack.c.h.b16 %v3971
        %v5102 = vpack.c.b16 %v5074, %v5070
        %v5103 = vpack.c.b16 %v5075, %v5071
        %v5104 = vpack.c.b16 %v5076, %v5072
        %v5105 = vpack.c.b16 %v5077, %v5073
        %v5106 = vpack.c.b16 %v5082, %v5078
        %v5107 = vpack.c.b16 %v5083, %v5079
        %v5108 = vpack.c.b16 %v5084, %v5080
        %v5109 = vpack.c.b16 %v5085, %v5081
        %v5110 = vpack.c.b16 %v5090, %v5086
        %v5111 = vpack.c.b16 %v5091, %v5087
        %v5112 = vpack.c.b16 %v5092, %v5088
        %v5113 = vpack.c.b16 %v5093, %v5089
        %v5114 = vpack.c.b16 %v5098, %v5094
        %v5115 = vpack.c.b16 %v5099, %v5095
        %v5116 = vpack.c.b16 %v5100, %v5096
        %v5117 = vpack.c.b16 %v5101, %v5097
        %v5135 = vsel %vm4058, %v5053, 0
        %5137 = vmatprep.subr.bf16.mxu0 %v5103
        %5138 = vmatpush1.bf16.msra.mxu0 %v5102
        %5139 = vmatprep.subr.bf16.mxu0 %v5107
        %5140 = vmatpush1.bf16.msra.mxu0 %v5106
        %5141 = vmatprep.subr.bf16.mxu0 %v5111
        %5142 = vmatpush1.bf16.msra.mxu0 %v5110
        %5143 = vmatprep.subr.bf16.mxu0 %v5115
        %5144 = vmatpush1.bf16.msra.mxu0 %v5114
        %5145 = vmatprep.subr.bf16.mxu0 0
        %5146 = vmatpush1.bf16.msra.mxu0 0
        %5147 = vmatprep.subr.bf16.mxu0 0
        %5148 = vmatpush1.bf16.msra.mxu0 0
        %5149 = vmatprep.subr.bf16.mxu0 0
        %5150 = vmatpush1.bf16.msra.mxu0 0
        %5151 = vmatprep.subr.bf16.mxu0 0
        %5152 = vmatpush1.bf16.msra.mxu0 0
        %5153 = vmatprep.subr.bf16.mxu0 0
        %5154 = vmatpush1.bf16.msra.mxu0 0
        %5155 = vmatprep.subr.bf16.mxu0 0
        %5156 = vmatpush1.bf16.msra.mxu0 0
        %5157 = vmatprep.subr.bf16.mxu0 0
        %5158 = vmatpush1.bf16.msra.mxu0 0
        %5159 = vmatprep.subr.bf16.mxu0 0
        %5160 = vmatpush1.bf16.msra.mxu0 0
        %5161 = vmatprep.subr.bf16.mxu0 0
        %5162 = vmatpush1.bf16.msra.mxu0 0
        %5163 = vmatprep.subr.bf16.mxu0 0
        %5164 = vmatpush1.bf16.msra.mxu0 0
        %5165 = vmatprep.subr.bf16.mxu0 0
        %5166 = vmatpush1.bf16.msra.mxu0 0
        %5167 = vmatprep.subr.bf16.mxu0 0
        %5168 = vmatpush1.bf16.msra.mxu0 0
        %5169 = vmatprep.mubr.bf16.mxu0 0
        %5170 = vmatmul.mubr.bf16.gmra.mrb[0].mxu0 %v5135
        %v5171 = vpop.f32.mrb[0].mxu0
        %v5172 = vadd.f32 0.0, %v5171
        %v5173 = vpop.f32.mrb[0].mxu0
        %v5174 = vadd.f32 0.0, %v5173
        %v5175 = vpop.f32.mrb[0].mxu0
        %v5176 = vadd.f32 0.0, %v5175
        %v5177 = vpop.f32.mrb[0].mxu0
        %v5178 = vadd.f32 0.0, %v5177
        %5179 = vdwg.mxu0
        %5180 = vmatprep.subr.bf16.mxu0 %v5105
        %5181 = vmatpush1.bf16.msra.mxu0 %v5104
        %5182 = vmatprep.subr.bf16.mxu0 %v5109
        %5183 = vmatpush1.bf16.msra.mxu0 %v5108
        %5184 = vmatprep.subr.bf16.mxu0 %v5113
        %5185 = vmatpush1.bf16.msra.mxu0 %v5112
        %5186 = vmatprep.subr.bf16.mxu0 %v5117
        %5187 = vmatpush1.bf16.msra.mxu0 %v5116
        %5188 = vmatprep.subr.bf16.mxu0 0
        %5189 = vmatpush1.bf16.msra.mxu0 0
        %5190 = vmatprep.subr.bf16.mxu0 0
        %5191 = vmatpush1.bf16.msra.mxu0 0
        %5192 = vmatprep.subr.bf16.mxu0 0
        %5193 = vmatpush1.bf16.msra.mxu0 0
        %5194 = vmatprep.subr.bf16.mxu0 0
        %5195 = vmatpush1.bf16.msra.mxu0 0
        %5196 = vmatprep.subr.bf16.mxu0 0
        %5197 = vmatpush1.bf16.msra.mxu0 0
        %5198 = vmatprep.subr.bf16.mxu0 0
        %5199 = vmatpush1.bf16.msra.mxu0 0
        %5200 = vmatprep.subr.bf16.mxu0 0
        %5201 = vmatpush1.bf16.msra.mxu0 0
        %5202 = vmatprep.subr.bf16.mxu0 0
        %5203 = vmatpush1.bf16.msra.mxu0 0
        %5204 = vmatprep.subr.bf16.mxu0 0
        %5205 = vmatpush1.bf16.msra.mxu0 0
        %5206 = vmatprep.subr.bf16.mxu0 0
        %5207 = vmatpush1.bf16.msra.mxu0 0
        %5208 = vmatprep.subr.bf16.mxu0 0
        %5209 = vmatpush1.bf16.msra.mxu0 0
        %5210 = vmatprep.subr.bf16.mxu0 0
        %5211 = vmatpush1.bf16.msra.mxu0 0
        %5212 = vmatprep.mubr.bf16.mxu0 0
        %5213 = vmatmul.mubr.bf16.gmra.mrb[0].mxu0 %v5135
        %v5214 = vpop.f32.mrb[0].mxu0
        %v5215 = vadd.f32 0.0, %v5214
        %v5216 = vpop.f32.mrb[0].mxu0
        %v5217 = vadd.f32 0.0, %v5216
        %v5218 = vpop.f32.mrb[0].mxu0
        %v5219 = vadd.f32 0.0, %v5218
        %v5220 = vpop.f32.mrb[0].mxu0
        %v5221 = vadd.f32 0.0, %v5220
        %5222 = vdwg.mxu0
        %v5223 = vadd.f32 %v4786, %v5172
        %v5224 = vadd.f32 %v4788, %v5174
        %v5225 = vadd.f32 %v4829, %v5215
        %v5226 = vadd.f32 %v4831, %v5217
        %v5227 = vadd.f32 %v4790, %v5176
        %v5228 = vadd.f32 %v4792, %v5178
        %v5229 = vadd.f32 %v4833, %v5219
        %v5230 = vadd.f32 %v4835, %v5221
        %5232 = vrot.lane.b32.xlu0 %v4839, 64
        %v5233 = vpop.permute.xlu0 %5232
        %5235 = vrot.lane.b32.xlu0 %v4841, 64
        %v5236 = vpop.permute.xlu0 %5235
        %v5238 = vsel %vm4058, %v5233, 0
        %v5241 = vsel %vm4058, %v5236, 0
        %5243 = vmatprep.subr.bf16.mxu0 0
        %5244 = vmatpush1.bf16.xpose.msra.mxu0 %v5241
        %5245 = vmatprep.subr.bf16.mxu0 0
        %5246 = vmatpush1.bf16.xpose.msra.mxu0 0
        %5247 = vmatprep.subr.bf16.mxu0 0
        %5248 = vmatpush1.bf16.xpose.msra.mxu0 0
        %5249 = vmatprep.subr.bf16.mxu0 0
        %5250 = vmatpush1.bf16.xpose.msra.mxu0 0
        %5251 = vmatprep.subr.bf16.mxu0 0
        %5252 = vmatpush1.bf16.xpose.msra.mxu0 0
        %5253 = vmatprep.subr.bf16.mxu0 0
        %5254 = vmatpush1.bf16.xpose.msra.mxu0 0
        %5255 = vmatprep.subr.bf16.mxu0 0
        %5256 = vmatpush1.bf16.xpose.msra.mxu0 0
        %5257 = vmatprep.subr.bf16.mxu0 0
        %5258 = vmatpush1.bf16.xpose.msra.mxu0 0
        %5259 = vmatprep.subr.bf16.mxu0 0
        %5260 = vmatpush1.bf16.xpose.msra.mxu0 0
        %5261 = vmatprep.subr.bf16.mxu0 0
        %5262 = vmatpush1.bf16.xpose.msra.mxu0 0
        %5263 = vmatprep.subr.bf16.mxu0 0
        %5264 = vmatpush1.bf16.xpose.msra.mxu0 0
        %5265 = vmatprep.subr.bf16.mxu0 0
        %5266 = vmatpush1.bf16.xpose.msra.mxu0 0
        %5267 = vmatprep.subr.bf16.mxu0 0
        %5268 = vmatpush1.bf16.xpose.msra.mxu0 0
        %5269 = vmatprep.subr.bf16.mxu0 0
        %5270 = vmatpush1.bf16.xpose.msra.mxu0 0
        %5271 = vmatprep.subr.bf16.mxu0 0
        %5272 = vmatpush1.bf16.xpose.msra.mxu0 0
        %5273 = vmatprep.subr.bf16.mxu0 0
        %5274 = vmatpush1.bf16.xpose.msra.mxu0 0
        %5275 = vmatprep.mubr.bf16.mxu0 0
        %5276 = vmatmul.mubr.bf16.gmra.mrb[0].mxu0 %v5238
        %v5277 = vpop.f32.mrb[0].mxu0
        %v5278 = vadd.f32 %v921, %v5277
        %v5279 = vpop.f32.mrb[0].mxu0
        %v5280 = vpop.f32.mrb[0].mxu0
        %v5281 = vpop.f32.mrb[0].mxu0
        %5282 = vdwg.mxu0
        %5284 = vrot.lane.b32.xlu0 %v4840, 64
        %v5285 = vpop.permute.xlu0 %5284
        %5287 = vrot.lane.b32.xlu0 %v4842, 64
        %v5288 = vpop.permute.xlu0 %5287
        %v5290 = vsel %vm4058, %v5285, 0
        %v5293 = vsel %vm4058, %v5288, 0
        %5295 = vmatprep.subr.bf16.mxu0 0
        %5296 = vmatpush1.bf16.xpose.msra.mxu0 %v5293
        %5297 = vmatprep.subr.bf16.mxu0 0
        %5298 = vmatpush1.bf16.xpose.msra.mxu0 0
        %5299 = vmatprep.subr.bf16.mxu0 0
        %5300 = vmatpush1.bf16.xpose.msra.mxu0 0
        %5301 = vmatprep.subr.bf16.mxu0 0
        %5302 = vmatpush1.bf16.xpose.msra.mxu0 0
        %5303 = vmatprep.subr.bf16.mxu0 0
        %5304 = vmatpush1.bf16.xpose.msra.mxu0 0
        %5305 = vmatprep.subr.bf16.mxu0 0
        %5306 = vmatpush1.bf16.xpose.msra.mxu0 0
        %5307 = vmatprep.subr.bf16.mxu0 0
        %5308 = vmatpush1.bf16.xpose.msra.mxu0 0
        %5309 = vmatprep.subr.bf16.mxu0 0
        %5310 = vmatpush1.bf16.xpose.msra.mxu0 0
        %5311 = vmatprep.subr.bf16.mxu0 0
        %5312 = vmatpush1.bf16.xpose.msra.mxu0 0
        %5313 = vmatprep.subr.bf16.mxu0 0
        %5314 = vmatpush1.bf16.xpose.msra.mxu0 0
        %5315 = vmatprep.subr.bf16.mxu0 0
        %5316 = vmatpush1.bf16.xpose.msra.mxu0 0
        %5317 = vmatprep.subr.bf16.mxu0 0
        %5318 = vmatpush1.bf16.xpose.msra.mxu0 0
        %5319 = vmatprep.subr.bf16.mxu0 0
        %5320 = vmatpush1.bf16.xpose.msra.mxu0 0
        %5321 = vmatprep.subr.bf16.mxu0 0
        %5322 = vmatpush1.bf16.xpose.msra.mxu0 0
        %5323 = vmatprep.subr.bf16.mxu0 0
        %5324 = vmatpush1.bf16.xpose.msra.mxu0 0
        %5325 = vmatprep.subr.bf16.mxu0 0
        %5326 = vmatpush1.bf16.xpose.msra.mxu0 0
        %5327 = vmatprep.mubr.bf16.mxu0 0
        %5328 = vmatmul.mubr.bf16.gmra.mrb[0].mxu0 %v5290
        %v5329 = vpop.f32.mrb[0].mxu0
        %v5330 = vadd.f32 %v922, %v5329
        %v5331 = vpop.f32.mrb[0].mxu0
        %v5332 = vpop.f32.mrb[0].mxu0
        %v5333 = vpop.f32.mrb[0].mxu0
        %5334 = vdwg.mxu0
        %v5335 = vsel %vm4151, %v5278, -inf
        %5336 = vmax.xlane.f32.xlu0 %v5335
        %v5337 = vpop.xlane.xlu0 %5336
        %v5338 = vsel %vm4151, %v5330, -inf
        %5339 = vmax.xlane.f32.xlu0 %v5338
        %v5340 = vpop.xlane.xlu0 %5339
        %v5341 = vsub.f32 %v5278, %v5337
        %v5342 = vsub.f32 %v5330, %v5340
        %v5343 = vmul.f32 %v5341, 1.442695
        %v5344 = vpow.pop %v5343
        %v5345 = vmul.f32 %v5342, 1.442695
        %v5346 = vpow.pop %v5345
        %v5347 = vsel %vm4151, %v5344, 0.0
        %5348 = vadd.xlane.f32.xlu0 %v5347
        %v5349 = vpop.xlane.xlu0 %5348
        %v5350 = vsel %vm4151, %v5346, 0.0
        %5351 = vadd.xlane.f32.xlu0 %v5350
        %v5352 = vpop.xlane.xlu0 %5351
        %v5353 = vrcp.pop %v5349
        %v5354 = vrcp.pop %v5352
        %v5355 = vmul.f32 %v5344, %v5353
        %v5356 = vmul.f32 %v5346, %v5354
        %v5357 = vpack.c.bf16 %v5355, %v5355
        %v5358 = vpack.c.bf16 %v5356, %v5356
        %5360 = vrot.lane.b32.xlu0 %v4959, 64
        %v5361 = vpop.permute.xlu0 %5360
        %v5363 = vsel %vm4151, %v5357, 0
        %v5366 = vsel %vm4181, %v5361, 0
        %5368 = vmatprep.subr.bf16.mxu0 0
        %5369 = vmatpush1.bf16.msra.mxu0 %v5366
        %5370 = vmatprep.subr.bf16.mxu0 0
        %5371 = vmatpush1.bf16.msra.mxu0 0
        %5372 = vmatprep.subr.bf16.mxu0 0
        %5373 = vmatpush1.bf16.msra.mxu0 0
        %5374 = vmatprep.subr.bf16.mxu0 0
        %5375 = vmatpush1.bf16.msra.mxu0 0
        %5376 = vmatprep.subr.bf16.mxu0 0
        %5377 = vmatpush1.bf16.msra.mxu0 0
        %5378 = vmatprep.subr.bf16.mxu0 0
        %5379 = vmatpush1.bf16.msra.mxu0 0
        %5380 = vmatprep.subr.bf16.mxu0 0
        %5381 = vmatpush1.bf16.msra.mxu0 0
        %5382 = vmatprep.subr.bf16.mxu0 0
        %5383 = vmatpush1.bf16.msra.mxu0 0
        %5384 = vmatprep.subr.bf16.mxu0 0
        %5385 = vmatpush1.bf16.msra.mxu0 0
        %5386 = vmatprep.subr.bf16.mxu0 0
        %5387 = vmatpush1.bf16.msra.mxu0 0
        %5388 = vmatprep.subr.bf16.mxu0 0
        %5389 = vmatpush1.bf16.msra.mxu0 0
        %5390 = vmatprep.subr.bf16.mxu0 0
        %5391 = vmatpush1.bf16.msra.mxu0 0
        %5392 = vmatprep.subr.bf16.mxu0 0
        %5393 = vmatpush1.bf16.msra.mxu0 0
        %5394 = vmatprep.subr.bf16.mxu0 0
        %5395 = vmatpush1.bf16.msra.mxu0 0
        %5396 = vmatprep.subr.bf16.mxu0 0
        %5397 = vmatpush1.bf16.msra.mxu0 0
        %5398 = vmatprep.subr.bf16.mxu0 0
        %5399 = vmatpush1.bf16.msra.mxu0 0
        %5400 = vmatprep.mubr.bf16.mxu0 0
        %5401 = vmatmul.mubr.bf16.gmra.mrb[0].mxu0 %v5363
        %v5402 = vpop.f32.mrb[0].mxu0
        %v5403 = vadd.f32 0.0, %v5402
        %v5404 = vpop.f32.mrb[0].mxu0
        %v5405 = vpop.f32.mrb[0].mxu0
        %v5406 = vpop.f32.mrb[0].mxu0
        %5407 = vdwg.mxu0
        %5409 = vrot.lane.b32.xlu0 %v4960, 64
        %v5410 = vpop.permute.xlu0 %5409
        %v5412 = vsel %vm4151, %v5358, 0
        %v5415 = vsel %vm4181, %v5410, 0
        %5417 = vmatprep.subr.bf16.mxu0 0
        %5418 = vmatpush1.bf16.msra.mxu0 %v5415
        %5419 = vmatprep.subr.bf16.mxu0 0
        %5420 = vmatpush1.bf16.msra.mxu0 0
        %5421 = vmatprep.subr.bf16.mxu0 0
        %5422 = vmatpush1.bf16.msra.mxu0 0
        %5423 = vmatprep.subr.bf16.mxu0 0
        %5424 = vmatpush1.bf16.msra.mxu0 0
        %5425 = vmatprep.subr.bf16.mxu0 0
        %5426 = vmatpush1.bf16.msra.mxu0 0
        %5427 = vmatprep.subr.bf16.mxu0 0
        %5428 = vmatpush1.bf16.msra.mxu0 0
        %5429 = vmatprep.subr.bf16.mxu0 0
        %5430 = vmatpush1.bf16.msra.mxu0 0
        %5431 = vmatprep.subr.bf16.mxu0 0
        %5432 = vmatpush1.bf16.msra.mxu0 0
        %5433 = vmatprep.subr.bf16.mxu0 0
        %5434 = vmatpush1.bf16.msra.mxu0 0
        %5435 = vmatprep.subr.bf16.mxu0 0
        %5436 = vmatpush1.bf16.msra.mxu0 0
        %5437 = vmatprep.subr.bf16.mxu0 0
        %5438 = vmatpush1.bf16.msra.mxu0 0
        %5439 = vmatprep.subr.bf16.mxu0 0
        %5440 = vmatpush1.bf16.msra.mxu0 0
        %5441 = vmatprep.subr.bf16.mxu0 0
        %5442 = vmatpush1.bf16.msra.mxu0 0
        %5443 = vmatprep.subr.bf16.mxu0 0
        %5444 = vmatpush1.bf16.msra.mxu0 0
        %5445 = vmatprep.subr.bf16.mxu0 0
        %5446 = vmatpush1.bf16.msra.mxu0 0
        %5447 = vmatprep.subr.bf16.mxu0 0
        %5448 = vmatpush1.bf16.msra.mxu0 0
        %5449 = vmatprep.mubr.bf16.mxu0 0
        %5450 = vmatmul.mubr.bf16.gmra.mrb[0].mxu0 %v5412
        %v5451 = vpop.f32.mrb[0].mxu0
        %v5452 = vadd.f32 0.0, %v5451
        %v5453 = vpop.f32.mrb[0].mxu0
        %v5454 = vpop.f32.mrb[0].mxu0
        %v5455 = vpop.f32.mrb[0].mxu0
        %5456 = vdwg.mxu0
        %v5457 = vpack.c.bf16 %v5452, %v5403
        %v5474 = vunpack.c.l.b16 %v3972
        %v5475 = vunpack.c.h.b16 %v3972
        %v5476 = vunpack.c.l.b16 %v3973
        %v5477 = vunpack.c.h.b16 %v3973
        %v5478 = vunpack.c.l.b16 %v3974
        %v5479 = vunpack.c.h.b16 %v3974
        %v5480 = vunpack.c.l.b16 %v3975
        %v5481 = vunpack.c.h.b16 %v3975
        %v5482 = vunpack.c.l.b16 %v3976
        %v5483 = vunpack.c.h.b16 %v3976
        %v5484 = vunpack.c.l.b16 %v3977
        %v5485 = vunpack.c.h.b16 %v3977
        %v5486 = vunpack.c.l.b16 %v3978
        %v5487 = vunpack.c.h.b16 %v3978
        %v5488 = vunpack.c.l.b16 %v3979
        %v5489 = vunpack.c.h.b16 %v3979
        %v5490 = vunpack.c.l.b16 %v3980
        %v5491 = vunpack.c.h.b16 %v3980
        %v5492 = vunpack.c.l.b16 %v3981
        %v5493 = vunpack.c.h.b16 %v3981
        %v5494 = vunpack.c.l.b16 %v3982
        %v5495 = vunpack.c.h.b16 %v3982
        %v5496 = vunpack.c.l.b16 %v3983
        %v5497 = vunpack.c.h.b16 %v3983
        %v5498 = vunpack.c.l.b16 %v3984
        %v5499 = vunpack.c.h.b16 %v3984
        %v5500 = vunpack.c.l.b16 %v3985
        %v5501 = vunpack.c.h.b16 %v3985
        %v5502 = vunpack.c.l.b16 %v3986
        %v5503 = vunpack.c.h.b16 %v3986
        %v5504 = vunpack.c.l.b16 %v3987
        %v5505 = vunpack.c.h.b16 %v3987
        %v5506 = vpack.c.b16 %v5478, %v5474
        %v5507 = vpack.c.b16 %v5479, %v5475
        %v5508 = vpack.c.b16 %v5480, %v5476
        %v5509 = vpack.c.b16 %v5481, %v5477
        %v5510 = vpack.c.b16 %v5486, %v5482
        %v5511 = vpack.c.b16 %v5487, %v5483
        %v5512 = vpack.c.b16 %v5488, %v5484
        %v5513 = vpack.c.b16 %v5489, %v5485
        %v5514 = vpack.c.b16 %v5494, %v5490
        %v5515 = vpack.c.b16 %v5495, %v5491
        %v5516 = vpack.c.b16 %v5496, %v5492
        %v5517 = vpack.c.b16 %v5497, %v5493
        %v5518 = vpack.c.b16 %v5502, %v5498
        %v5519 = vpack.c.b16 %v5503, %v5499
        %v5520 = vpack.c.b16 %v5504, %v5500
        %v5521 = vpack.c.b16 %v5505, %v5501
        %v5539 = vsel %vm4058, %v5457, 0
        %5541 = vmatprep.subr.bf16.mxu0 %v5507
        %5542 = vmatpush1.bf16.msra.mxu0 %v5506
        %5543 = vmatprep.subr.bf16.mxu0 %v5511
        %5544 = vmatpush1.bf16.msra.mxu0 %v5510
        %5545 = vmatprep.subr.bf16.mxu0 %v5515
        %5546 = vmatpush1.bf16.msra.mxu0 %v5514
        %5547 = vmatprep.subr.bf16.mxu0 %v5519
        %5548 = vmatpush1.bf16.msra.mxu0 %v5518
        %5549 = vmatprep.subr.bf16.mxu0 0
        %5550 = vmatpush1.bf16.msra.mxu0 0
        %5551 = vmatprep.subr.bf16.mxu0 0
        %5552 = vmatpush1.bf16.msra.mxu0 0
        %5553 = vmatprep.subr.bf16.mxu0 0
        %5554 = vmatpush1.bf16.msra.mxu0 0
        %5555 = vmatprep.subr.bf16.mxu0 0
        %5556 = vmatpush1.bf16.msra.mxu0 0
        %5557 = vmatprep.subr.bf16.mxu0 0
        %5558 = vmatpush1.bf16.msra.mxu0 0
        %5559 = vmatprep.subr.bf16.mxu0 0
        %5560 = vmatpush1.bf16.msra.mxu0 0
        %5561 = vmatprep.subr.bf16.mxu0 0
        %5562 = vmatpush1.bf16.msra.mxu0 0
        %5563 = vmatprep.subr.bf16.mxu0 0
        %5564 = vmatpush1.bf16.msra.mxu0 0
        %5565 = vmatprep.subr.bf16.mxu0 0
        %5566 = vmatpush1.bf16.msra.mxu0 0
        %5567 = vmatprep.subr.bf16.mxu0 0
        %5568 = vmatpush1.bf16.msra.mxu0 0
        %5569 = vmatprep.subr.bf16.mxu0 0
        %5570 = vmatpush1.bf16.msra.mxu0 0
        %5571 = vmatprep.subr.bf16.mxu0 0
        %5572 = vmatpush1.bf16.msra.mxu0 0
        %5573 = vmatprep.mubr.bf16.mxu0 0
        %5574 = vmatmul.mubr.bf16.gmra.mrb[0].mxu0 %v5539
        %v5575 = vpop.f32.mrb[0].mxu0
        %v5576 = vadd.f32 0.0, %v5575
        %v5577 = vpop.f32.mrb[0].mxu0
        %v5578 = vadd.f32 0.0, %v5577
        %v5579 = vpop.f32.mrb[0].mxu0
        %v5580 = vadd.f32 0.0, %v5579
        %v5581 = vpop.f32.mrb[0].mxu0
        %v5582 = vadd.f32 0.0, %v5581
        %5583 = vdwg.mxu0
        %5584 = vmatprep.subr.bf16.mxu0 %v5509
        %5585 = vmatpush1.bf16.msra.mxu0 %v5508
        %5586 = vmatprep.subr.bf16.mxu0 %v5513
        %5587 = vmatpush1.bf16.msra.mxu0 %v5512
        %5588 = vmatprep.subr.bf16.mxu0 %v5517
        %5589 = vmatpush1.bf16.msra.mxu0 %v5516
        %5590 = vmatprep.subr.bf16.mxu0 %v5521
        %5591 = vmatpush1.bf16.msra.mxu0 %v5520
        %5592 = vmatprep.subr.bf16.mxu0 0
        %5593 = vmatpush1.bf16.msra.mxu0 0
        %5594 = vmatprep.subr.bf16.mxu0 0
        %5595 = vmatpush1.bf16.msra.mxu0 0
        %5596 = vmatprep.subr.bf16.mxu0 0
        %5597 = vmatpush1.bf16.msra.mxu0 0
        %5598 = vmatprep.subr.bf16.mxu0 0
        %5599 = vmatpush1.bf16.msra.mxu0 0
        %5600 = vmatprep.subr.bf16.mxu0 0
        %5601 = vmatpush1.bf16.msra.mxu0 0
        %5602 = vmatprep.subr.bf16.mxu0 0
        %5603 = vmatpush1.bf16.msra.mxu0 0
        %5604 = vmatprep.subr.bf16.mxu0 0
        %5605 = vmatpush1.bf16.msra.mxu0 0
        %5606 = vmatprep.subr.bf16.mxu0 0
        %5607 = vmatpush1.bf16.msra.mxu0 0
        %5608 = vmatprep.subr.bf16.mxu0 0
        %5609 = vmatpush1.bf16.msra.mxu0 0
        %5610 = vmatprep.subr.bf16.mxu0 0
        %5611 = vmatpush1.bf16.msra.mxu0 0
        %5612 = vmatprep.subr.bf16.mxu0 0
        %5613 = vmatpush1.bf16.msra.mxu0 0
        %5614 = vmatprep.subr.bf16.mxu0 0
        %5615 = vmatpush1.bf16.msra.mxu0 0
        %5616 = vmatprep.mubr.bf16.mxu0 0
        %5617 = vmatmul.mubr.bf16.gmra.mrb[0].mxu0 %v5539
        %v5618 = vpop.f32.mrb[0].mxu0
        %v5619 = vadd.f32 0.0, %v5618
        %v5620 = vpop.f32.mrb[0].mxu0
        %v5621 = vadd.f32 0.0, %v5620
        %v5622 = vpop.f32.mrb[0].mxu0
        %v5623 = vadd.f32 0.0, %v5622
        %v5624 = vpop.f32.mrb[0].mxu0
        %v5625 = vadd.f32 0.0, %v5624
        %5626 = vdwg.mxu0
        %v5627 = vadd.f32 %v5223, %v5576
        %v5628 = vadd.f32 %v5224, %v5578
        %v5629 = vadd.f32 %v5225, %v5619
        %v5630 = vadd.f32 %v5226, %v5621
        %v5631 = vadd.f32 %v5227, %v5580
        %v5632 = vadd.f32 %v5228, %v5582
        %v5633 = vadd.f32 %v5229, %v5623
        %v5634 = vadd.f32 %v5230, %v5625
        %v5635 = vmul.f32 %v3572, 0.125
        %v5636 = vmul.f32 %v3576, 0.125
        %v5637 = vpack.c.bf16 %v5635, %v5635
        %v5638 = vpack.c.bf16 %v5636, %v5636
        %v5639 = vpack.c.bf16 %v3744, %v3744
        %v5640 = vpack.c.bf16 %v3748, %v3748
        %v5642 = vsel %vm4058, %v5637, 0
        %v5645 = vsel %vm4058, %v5639, 0
        %5647 = vmatprep.subr.bf16.mxu0 0
        %5648 = vmatpush1.bf16.xpose.msra.mxu0 %v5645
        %5649 = vmatprep.subr.bf16.mxu0 0
        %5650 = vmatpush1.bf16.xpose.msra.mxu0 0
        %5651 = vmatprep.subr.bf16.mxu0 0
        %5652 = vmatpush1.bf16.xpose.msra.mxu0 0
        %5653 = vmatprep.subr.bf16.mxu0 0
        %5654 = vmatpush1.bf16.xpose.msra.mxu0 0
        %5655 = vmatprep.subr.bf16.mxu0 0
        %5656 = vmatpush1.bf16.xpose.msra.mxu0 0
        %5657 = vmatprep.subr.bf16.mxu0 0
        %5658 = vmatpush1.bf16.xpose.msra.mxu0 0
        %5659 = vmatprep.subr.bf16.mxu0 0
        %5660 = vmatpush1.bf16.xpose.msra.mxu0 0
        %5661 = vmatprep.subr.bf16.mxu0 0
        %5662 = vmatpush1.bf16.xpose.msra.mxu0 0
        %5663 = vmatprep.subr.bf16.mxu0 0
        %5664 = vmatpush1.bf16.xpose.msra.mxu0 0
        %5665 = vmatprep.subr.bf16.mxu0 0
        %5666 = vmatpush1.bf16.xpose.msra.mxu0 0
        %5667 = vmatprep.subr.bf16.mxu0 0
        %5668 = vmatpush1.bf16.xpose.msra.mxu0 0
        %5669 = vmatprep.subr.bf16.mxu0 0
        %5670 = vmatpush1.bf16.xpose.msra.mxu0 0
        %5671 = vmatprep.subr.bf16.mxu0 0
        %5672 = vmatpush1.bf16.xpose.msra.mxu0 0
        %5673 = vmatprep.subr.bf16.mxu0 0
        %5674 = vmatpush1.bf16.xpose.msra.mxu0 0
        %5675 = vmatprep.subr.bf16.mxu0 0
        %5676 = vmatpush1.bf16.xpose.msra.mxu0 0
        %5677 = vmatprep.subr.bf16.mxu0 0
        %5678 = vmatpush1.bf16.xpose.msra.mxu0 0
        %5679 = vmatprep.mubr.bf16.mxu0 0
        %5680 = vmatmul.mubr.bf16.gmra.mrb[0].mxu0 %v5642
        %v5681 = vpop.f32.mrb[0].mxu0
        %v5682 = vadd.f32 %v921, %v5681
        %v5683 = vpop.f32.mrb[0].mxu0
        %v5684 = vpop.f32.mrb[0].mxu0
        %v5685 = vpop.f32.mrb[0].mxu0
        %5686 = vdwg.mxu0
        %v5688 = vsel %vm4058, %v5638, 0
        %v5691 = vsel %vm4058, %v5640, 0
        %5693 = vmatprep.subr.bf16.mxu0 0
        %5694 = vmatpush1.bf16.xpose.msra.mxu0 %v5691
        %5695 = vmatprep.subr.bf16.mxu0 0
        %5696 = vmatpush1.bf16.xpose.msra.mxu0 0
        %5697 = vmatprep.subr.bf16.mxu0 0
        %5698 = vmatpush1.bf16.xpose.msra.mxu0 0
        %5699 = vmatprep.subr.bf16.mxu0 0
        %5700 = vmatpush1.bf16.xpose.msra.mxu0 0
        %5701 = vmatprep.subr.bf16.mxu0 0
        %5702 = vmatpush1.bf16.xpose.msra.mxu0 0
        %5703 = vmatprep.subr.bf16.mxu0 0
        %5704 = vmatpush1.bf16.xpose.msra.mxu0 0
        %5705 = vmatprep.subr.bf16.mxu0 0
        %5706 = vmatpush1.bf16.xpose.msra.mxu0 0
        %5707 = vmatprep.subr.bf16.mxu0 0
        %5708 = vmatpush1.bf16.xpose.msra.mxu0 0
        %5709 = vmatprep.subr.bf16.mxu0 0
        %5710 = vmatpush1.bf16.xpose.msra.mxu0 0
        %5711 = vmatprep.subr.bf16.mxu0 0
        %5712 = vmatpush1.bf16.xpose.msra.mxu0 0
        %5713 = vmatprep.subr.bf16.mxu0 0
        %5714 = vmatpush1.bf16.xpose.msra.mxu0 0
        %5715 = vmatprep.subr.bf16.mxu0 0
        %5716 = vmatpush1.bf16.xpose.msra.mxu0 0
        %5717 = vmatprep.subr.bf16.mxu0 0
        %5718 = vmatpush1.bf16.xpose.msra.mxu0 0
        %5719 = vmatprep.subr.bf16.mxu0 0
        %5720 = vmatpush1.bf16.xpose.msra.mxu0 0
        %5721 = vmatprep.subr.bf16.mxu0 0
        %5722 = vmatpush1.bf16.xpose.msra.mxu0 0
        %5723 = vmatprep.subr.bf16.mxu0 0
        %5724 = vmatpush1.bf16.xpose.msra.mxu0 0
        %5725 = vmatprep.mubr.bf16.mxu0 0
        %5726 = vmatmul.mubr.bf16.gmra.mrb[0].mxu0 %v5688
        %v5727 = vpop.f32.mrb[0].mxu0
        %v5728 = vadd.f32 %v922, %v5727
        %v5729 = vpop.f32.mrb[0].mxu0
        %v5730 = vpop.f32.mrb[0].mxu0
        %v5731 = vpop.f32.mrb[0].mxu0
        %5732 = vdwg.mxu0
        %v5733 = vsel %vm4151, %v5682, -inf
        %5734 = vmax.xlane.f32.xlu0 %v5733
        %v5735 = vpop.xlane.xlu0 %5734
        %v5736 = vsel %vm4151, %v5728, -inf
        %5737 = vmax.xlane.f32.xlu0 %v5736
        %v5738 = vpop.xlane.xlu0 %5737
        %v5739 = vsub.f32 %v5682, %v5735
        %v5740 = vsub.f32 %v5728, %v5738
        %v5741 = vmul.f32 %v5739, 1.442695
        %v5742 = vpow.pop %v5741
        %v5743 = vmul.f32 %v5740, 1.442695
        %v5744 = vpow.pop %v5743
        %v5745 = vsel %vm4151, %v5742, 0.0
        %5746 = vadd.xlane.f32.xlu0 %v5745
        %v5747 = vpop.xlane.xlu0 %5746
        %v5748 = vsel %vm4151, %v5744, 0.0
        %5749 = vadd.xlane.f32.xlu0 %v5748
        %v5750 = vpop.xlane.xlu0 %5749
        %v5751 = vrcp.pop %v5747
        %v5752 = vrcp.pop %v5750
        %v5753 = vmul.f32 %v5742, %v5751
        %v5754 = vmul.f32 %v5744, %v5752
        %v5755 = vpack.c.bf16 %v5753, %v5753
        %v5756 = vpack.c.bf16 %v5754, %v5754
        %v5757 = vpack.c.bf16 %v3916, %v3916
        %v5758 = vpack.c.bf16 %v3920, %v3920
        %v5760 = vsel %vm4151, %v5755, 0
        %v5763 = vsel %vm4181, %v5757, 0
        %5765 = vmatprep.subr.bf16.mxu0 0
        %5766 = vmatpush1.bf16.msra.mxu0 %v5763
        %5767 = vmatprep.subr.bf16.mxu0 0
        %5768 = vmatpush1.bf16.msra.mxu0 0
        %5769 = vmatprep.subr.bf16.mxu0 0
        %5770 = vmatpush1.bf16.msra.mxu0 0
        %5771 = vmatprep.subr.bf16.mxu0 0
        %5772 = vmatpush1.bf16.msra.mxu0 0
        %5773 = vmatprep.subr.bf16.mxu0 0
        %5774 = vmatpush1.bf16.msra.mxu0 0
        %5775 = vmatprep.subr.bf16.mxu0 0
        %5776 = vmatpush1.bf16.msra.mxu0 0
        %5777 = vmatprep.subr.bf16.mxu0 0
        %5778 = vmatpush1.bf16.msra.mxu0 0
        %5779 = vmatprep.subr.bf16.mxu0 0
        %5780 = vmatpush1.bf16.msra.mxu0 0
        %5781 = vmatprep.subr.bf16.mxu0 0
        %5782 = vmatpush1.bf16.msra.mxu0 0
        %5783 = vmatprep.subr.bf16.mxu0 0
        %5784 = vmatpush1.bf16.msra.mxu0 0
        %5785 = vmatprep.subr.bf16.mxu0 0
        %5786 = vmatpush1.bf16.msra.mxu0 0
        %5787 = vmatprep.subr.bf16.mxu0 0
        %5788 = vmatpush1.bf16.msra.mxu0 0
        %5789 = vmatprep.subr.bf16.mxu0 0
        %5790 = vmatpush1.bf16.msra.mxu0 0
        %5791 = vmatprep.subr.bf16.mxu0 0
        %5792 = vmatpush1.bf16.msra.mxu0 0
        %5793 = vmatprep.subr.bf16.mxu0 0
        %5794 = vmatpush1.bf16.msra.mxu0 0
        %5795 = vmatprep.subr.bf16.mxu0 0
        %5796 = vmatpush1.bf16.msra.mxu0 0
        %5797 = vmatprep.mubr.bf16.mxu0 0
        %5798 = vmatmul.mubr.bf16.gmra.mrb[0].mxu0 %v5760
        %v5799 = vpop.f32.mrb[0].mxu0
        %v5800 = vadd.f32 0.0, %v5799
        %v5801 = vpop.f32.mrb[0].mxu0
        %v5802 = vpop.f32.mrb[0].mxu0
        %v5803 = vpop.f32.mrb[0].mxu0
        %5804 = vdwg.mxu0
        %v5806 = vsel %vm4151, %v5756, 0
        %v5809 = vsel %vm4181, %v5758, 0
        %5811 = vmatprep.subr.bf16.mxu0 0
        %5812 = vmatpush1.bf16.msra.mxu0 %v5809
        %5813 = vmatprep.subr.bf16.mxu0 0
        %5814 = vmatpush1.bf16.msra.mxu0 0
        %5815 = vmatprep.subr.bf16.mxu0 0
        %5816 = vmatpush1.bf16.msra.mxu0 0
        %5817 = vmatprep.subr.bf16.mxu0 0
        %5818 = vmatpush1.bf16.msra.mxu0 0
        %5819 = vmatprep.subr.bf16.mxu0 0
        %5820 = vmatpush1.bf16.msra.mxu0 0
        %5821 = vmatprep.subr.bf16.mxu0 0
        %5822 = vmatpush1.bf16.msra.mxu0 0
        %5823 = vmatprep.subr.bf16.mxu0 0
        %5824 = vmatpush1.bf16.msra.mxu0 0
        %5825 = vmatprep.subr.bf16.mxu0 0
        %5826 = vmatpush1.bf16.msra.mxu0 0
        %5827 = vmatprep.subr.bf16.mxu0 0
        %5828 = vmatpush1.bf16.msra.mxu0 0
        %5829 = vmatprep.subr.bf16.mxu0 0
        %5830 = vmatpush1.bf16.msra.mxu0 0
        %5831 = vmatprep.subr.bf16.mxu0 0
        %5832 = vmatpush1.bf16.msra.mxu0 0
        %5833 = vmatprep.subr.bf16.mxu0 0
        %5834 = vmatpush1.bf16.msra.mxu0 0
        %5835 = vmatprep.subr.bf16.mxu0 0
        %5836 = vmatpush1.bf16.msra.mxu0 0
        %5837 = vmatprep.subr.bf16.mxu0 0
        %5838 = vmatpush1.bf16.msra.mxu0 0
        %5839 = vmatprep.subr.bf16.mxu0 0
        %5840 = vmatpush1.bf16.msra.mxu0 0
        %5841 = vmatprep.subr.bf16.mxu0 0
        %5842 = vmatpush1.bf16.msra.mxu0 0
        %5843 = vmatprep.mubr.bf16.mxu0 0
        %5844 = vmatmul.mubr.bf16.gmra.mrb[0].mxu0 %v5806
        %v5845 = vpop.f32.mrb[0].mxu0
        %v5846 = vadd.f32 0.0, %v5845
        %v5847 = vpop.f32.mrb[0].mxu0
        %v5848 = vpop.f32.mrb[0].mxu0
        %v5849 = vpop.f32.mrb[0].mxu0
        %5850 = vdwg.mxu0
        %v5851 = vpack.c.bf16 %v5846, %v5800
        %v5868 = vunpack.c.l.b16 %v3988
        %v5869 = vunpack.c.h.b16 %v3988
        %v5870 = vunpack.c.l.b16 %v3989
        %v5871 = vunpack.c.h.b16 %v3989
        %v5872 = vunpack.c.l.b16 %v3990
        %v5873 = vunpack.c.h.b16 %v3990
        %v5874 = vunpack.c.l.b16 %v3991
        %v5875 = vunpack.c.h.b16 %v3991
        %v5876 = vunpack.c.l.b16 %v3992
        %v5877 = vunpack.c.h.b16 %v3992
        %v5878 = vunpack.c.l.b16 %v3993
        %v5879 = vunpack.c.h.b16 %v3993
        %v5880 = vunpack.c.l.b16 %v3994
        %v5881 = vunpack.c.h.b16 %v3994
        %v5882 = vunpack.c.l.b16 %v3995
        %v5883 = vunpack.c.h.b16 %v3995
        %v5884 = vunpack.c.l.b16 %v3996
        %v5885 = vunpack.c.h.b16 %v3996
        %v5886 = vunpack.c.l.b16 %v3997
        %v5887 = vunpack.c.h.b16 %v3997
        %v5888 = vunpack.c.l.b16 %v3998
        %v5889 = vunpack.c.h.b16 %v3998
        %v5890 = vunpack.c.l.b16 %v3999
        %v5891 = vunpack.c.h.b16 %v3999
        %v5892 = vunpack.c.l.b16 %v4000
        %v5893 = vunpack.c.h.b16 %v4000
        %v5894 = vunpack.c.l.b16 %v4001
        %v5895 = vunpack.c.h.b16 %v4001
        %v5896 = vunpack.c.l.b16 %v4002
        %v5897 = vunpack.c.h.b16 %v4002
        %v5898 = vunpack.c.l.b16 %v4003
        %v5899 = vunpack.c.h.b16 %v4003
        %v5900 = vpack.c.b16 %v5872, %v5868
        %v5901 = vpack.c.b16 %v5873, %v5869
        %v5902 = vpack.c.b16 %v5874, %v5870
        %v5903 = vpack.c.b16 %v5875, %v5871
        %v5904 = vpack.c.b16 %v5880, %v5876
        %v5905 = vpack.c.b16 %v5881, %v5877
        %v5906 = vpack.c.b16 %v5882, %v5878
        %v5907 = vpack.c.b16 %v5883, %v5879
        %v5908 = vpack.c.b16 %v5888, %v5884
        %v5909 = vpack.c.b16 %v5889, %v5885
        %v5910 = vpack.c.b16 %v5890, %v5886
        %v5911 = vpack.c.b16 %v5891, %v5887
        %v5912 = vpack.c.b16 %v5896, %v5892
        %v5913 = vpack.c.b16 %v5897, %v5893
        %v5914 = vpack.c.b16 %v5898, %v5894
        %v5915 = vpack.c.b16 %v5899, %v5895
        %v5933 = vsel %vm4058, %v5851, 0
        %5935 = vmatprep.subr.bf16.mxu0 %v5901
        %5936 = vmatpush1.bf16.msra.mxu0 %v5900
        %5937 = vmatprep.subr.bf16.mxu0 %v5905
        %5938 = vmatpush1.bf16.msra.mxu0 %v5904
        %5939 = vmatprep.subr.bf16.mxu0 %v5909
        %5940 = vmatpush1.bf16.msra.mxu0 %v5908
        %5941 = vmatprep.subr.bf16.mxu0 %v5913
        %5942 = vmatpush1.bf16.msra.mxu0 %v5912
        %5943 = vmatprep.subr.bf16.mxu0 0
        %5944 = vmatpush1.bf16.msra.mxu0 0
        %5945 = vmatprep.subr.bf16.mxu0 0
        %5946 = vmatpush1.bf16.msra.mxu0 0
        %5947 = vmatprep.subr.bf16.mxu0 0
        %5948 = vmatpush1.bf16.msra.mxu0 0
        %5949 = vmatprep.subr.bf16.mxu0 0
        %5950 = vmatpush1.bf16.msra.mxu0 0
        %5951 = vmatprep.subr.bf16.mxu0 0
        %5952 = vmatpush1.bf16.msra.mxu0 0
        %5953 = vmatprep.subr.bf16.mxu0 0
        %5954 = vmatpush1.bf16.msra.mxu0 0
        %5955 = vmatprep.subr.bf16.mxu0 0
        %5956 = vmatpush1.bf16.msra.mxu0 0
        %5957 = vmatprep.subr.bf16.mxu0 0
        %5958 = vmatpush1.bf16.msra.mxu0 0
        %5959 = vmatprep.subr.bf16.mxu0 0
        %5960 = vmatpush1.bf16.msra.mxu0 0
        %5961 = vmatprep.subr.bf16.mxu0 0
        %5962 = vmatpush1.bf16.msra.mxu0 0
        %5963 = vmatprep.subr.bf16.mxu0 0
        %5964 = vmatpush1.bf16.msra.mxu0 0
        %5965 = vmatprep.subr.bf16.mxu0 0
        %5966 = vmatpush1.bf16.msra.mxu0 0
        %5967 = vmatprep.mubr.bf16.mxu0 0
        %5968 = vmatmul.mubr.bf16.gmra.mrb[0].mxu0 %v5933
        %v5969 = vpop.f32.mrb[0].mxu0
        %v5970 = vadd.f32 0.0, %v5969
        %v5971 = vpop.f32.mrb[0].mxu0
        %v5972 = vadd.f32 0.0, %v5971
        %v5973 = vpop.f32.mrb[0].mxu0
        %v5974 = vadd.f32 0.0, %v5973
        %v5975 = vpop.f32.mrb[0].mxu0
        %v5976 = vadd.f32 0.0, %v5975
        %5977 = vdwg.mxu0
        %5978 = vmatprep.subr.bf16.mxu0 %v5903
        %5979 = vmatpush1.bf16.msra.mxu0 %v5902
        %5980 = vmatprep.subr.bf16.mxu0 %v5907
        %5981 = vmatpush1.bf16.msra.mxu0 %v5906
        %5982 = vmatprep.subr.bf16.mxu0 %v5911
        %5983 = vmatpush1.bf16.msra.mxu0 %v5910
        %5984 = vmatprep.subr.bf16.mxu0 %v5915
        %5985 = vmatpush1.bf16.msra.mxu0 %v5914
        %5986 = vmatprep.subr.bf16.mxu0 0
        %5987 = vmatpush1.bf16.msra.mxu0 0
        %5988 = vmatprep.subr.bf16.mxu0 0
        %5989 = vmatpush1.bf16.msra.mxu0 0
        %5990 = vmatprep.subr.bf16.mxu0 0
        %5991 = vmatpush1.bf16.msra.mxu0 0
        %5992 = vmatprep.subr.bf16.mxu0 0
        %5993 = vmatpush1.bf16.msra.mxu0 0
        %5994 = vmatprep.subr.bf16.mxu0 0
        %5995 = vmatpush1.bf16.msra.mxu0 0
        %5996 = vmatprep.subr.bf16.mxu0 0
        %5997 = vmatpush1.bf16.msra.mxu0 0
        %5998 = vmatprep.subr.bf16.mxu0 0
        %5999 = vmatpush1.bf16.msra.mxu0 0
        %6000 = vmatprep.subr.bf16.mxu0 0
        %6001 = vmatpush1.bf16.msra.mxu0 0
        %6002 = vmatprep.subr.bf16.mxu0 0
        %6003 = vmatpush1.bf16.msra.mxu0 0
        %6004 = vmatprep.subr.bf16.mxu0 0
        %6005 = vmatpush1.bf16.msra.mxu0 0
        %6006 = vmatprep.subr.bf16.mxu0 0
        %6007 = vmatpush1.bf16.msra.mxu0 0
        %6008 = vmatprep.subr.bf16.mxu0 0
        %6009 = vmatpush1.bf16.msra.mxu0 0
        %6010 = vmatprep.mubr.bf16.mxu0 0
        %6011 = vmatmul.mubr.bf16.gmra.mrb[0].mxu0 %v5933
        %v6012 = vpop.f32.mrb[0].mxu0
        %v6013 = vadd.f32 0.0, %v6012
        %v6014 = vpop.f32.mrb[0].mxu0
        %v6015 = vadd.f32 0.0, %v6014
        %v6016 = vpop.f32.mrb[0].mxu0
        %v6017 = vadd.f32 0.0, %v6016
        %v6018 = vpop.f32.mrb[0].mxu0
        %v6019 = vadd.f32 0.0, %v6018
        %6020 = vdwg.mxu0
        %v6021 = vadd.f32 %v5627, %v5970
        %v6022 = vadd.f32 %v5628, %v5972
        %v6023 = vadd.f32 %v5629, %v6013
        %v6024 = vadd.f32 %v5630, %v6015
        %v6025 = vadd.f32 %v5631, %v5974
        %v6026 = vadd.f32 %v5632, %v5976
        %v6027 = vadd.f32 %v5633, %v6017
        %v6028 = vadd.f32 %v5634, %v6019
        %6030 = vrot.lane.b32.xlu0 %v5637, 64
        %v6031 = vpop.permute.xlu0 %6030
        %6033 = vrot.lane.b32.xlu0 %v5639, 64
        %v6034 = vpop.permute.xlu0 %6033
        %v6036 = vsel %vm4058, %v6031, 0
        %v6039 = vsel %vm4058, %v6034, 0
        %6041 = vmatprep.subr.bf16.mxu0 0
        %6042 = vmatpush1.bf16.xpose.msra.mxu0 %v6039
        %6043 = vmatprep.subr.bf16.mxu0 0
        %6044 = vmatpush1.bf16.xpose.msra.mxu0 0
        %6045 = vmatprep.subr.bf16.mxu0 0
        %6046 = vmatpush1.bf16.xpose.msra.mxu0 0
        %6047 = vmatprep.subr.bf16.mxu0 0
        %6048 = vmatpush1.bf16.xpose.msra.mxu0 0
        %6049 = vmatprep.subr.bf16.mxu0 0
        %6050 = vmatpush1.bf16.xpose.msra.mxu0 0
        %6051 = vmatprep.subr.bf16.mxu0 0
        %6052 = vmatpush1.bf16.xpose.msra.mxu0 0
        %6053 = vmatprep.subr.bf16.mxu0 0
        %6054 = vmatpush1.bf16.xpose.msra.mxu0 0
        %6055 = vmatprep.subr.bf16.mxu0 0
        %6056 = vmatpush1.bf16.xpose.msra.mxu0 0
        %6057 = vmatprep.subr.bf16.mxu0 0
        %6058 = vmatpush1.bf16.xpose.msra.mxu0 0
        %6059 = vmatprep.subr.bf16.mxu0 0
        %6060 = vmatpush1.bf16.xpose.msra.mxu0 0
        %6061 = vmatprep.subr.bf16.mxu0 0
        %6062 = vmatpush1.bf16.xpose.msra.mxu0 0
        %6063 = vmatprep.subr.bf16.mxu0 0
        %6064 = vmatpush1.bf16.xpose.msra.mxu0 0
        %6065 = vmatprep.subr.bf16.mxu0 0
        %6066 = vmatpush1.bf16.xpose.msra.mxu0 0
        %6067 = vmatprep.subr.bf16.mxu0 0
        %6068 = vmatpush1.bf16.xpose.msra.mxu0 0
        %6069 = vmatprep.subr.bf16.mxu0 0
        %6070 = vmatpush1.bf16.xpose.msra.mxu0 0
        %6071 = vmatprep.subr.bf16.mxu0 0
        %6072 = vmatpush1.bf16.xpose.msra.mxu0 0
        %6073 = vmatprep.mubr.bf16.mxu0 0
        %6074 = vmatmul.mubr.bf16.gmra.mrb[0].mxu0 %v6036
        %v6075 = vpop.f32.mrb[0].mxu0
        %v6076 = vadd.f32 %v921, %v6075
        %v6077 = vpop.f32.mrb[0].mxu0
        %v6078 = vpop.f32.mrb[0].mxu0
        %v6079 = vpop.f32.mrb[0].mxu0
        %6080 = vdwg.mxu0
        %6082 = vrot.lane.b32.xlu0 %v5638, 64
        %v6083 = vpop.permute.xlu0 %6082
        %6085 = vrot.lane.b32.xlu0 %v5640, 64
        %v6086 = vpop.permute.xlu0 %6085
        %v6088 = vsel %vm4058, %v6083, 0
        %v6091 = vsel %vm4058, %v6086, 0
        %6093 = vmatprep.subr.bf16.mxu0 0
        %6094 = vmatpush1.bf16.xpose.msra.mxu0 %v6091
        %6095 = vmatprep.subr.bf16.mxu0 0
        %6096 = vmatpush1.bf16.xpose.msra.mxu0 0
        %6097 = vmatprep.subr.bf16.mxu0 0
        %6098 = vmatpush1.bf16.xpose.msra.mxu0 0
        %6099 = vmatprep.subr.bf16.mxu0 0
        %6100 = vmatpush1.bf16.xpose.msra.mxu0 0
        %6101 = vmatprep.subr.bf16.mxu0 0
        %6102 = vmatpush1.bf16.xpose.msra.mxu0 0
        %6103 = vmatprep.subr.bf16.mxu0 0
        %6104 = vmatpush1.bf16.xpose.msra.mxu0 0
        %6105 = vmatprep.subr.bf16.mxu0 0
        %6106 = vmatpush1.bf16.xpose.msra.mxu0 0
        %6107 = vmatprep.subr.bf16.mxu0 0
        %6108 = vmatpush1.bf16.xpose.msra.mxu0 0
        %6109 = vmatprep.subr.bf16.mxu0 0
        %6110 = vmatpush1.bf16.xpose.msra.mxu0 0
        %6111 = vmatprep.subr.bf16.mxu0 0
        %6112 = vmatpush1.bf16.xpose.msra.mxu0 0
        %6113 = vmatprep.subr.bf16.mxu0 0
        %6114 = vmatpush1.bf16.xpose.msra.mxu0 0
        %6115 = vmatprep.subr.bf16.mxu0 0
        %6116 = vmatpush1.bf16.xpose.msra.mxu0 0
        %6117 = vmatprep.subr.bf16.mxu0 0
        %6118 = vmatpush1.bf16.xpose.msra.mxu0 0
        %6119 = vmatprep.subr.bf16.mxu0 0
        %6120 = vmatpush1.bf16.xpose.msra.mxu0 0
        %6121 = vmatprep.subr.bf16.mxu0 0
        %6122 = vmatpush1.bf16.xpose.msra.mxu0 0
        %6123 = vmatprep.subr.bf16.mxu0 0
        %6124 = vmatpush1.bf16.xpose.msra.mxu0 0
        %6125 = vmatprep.mubr.bf16.mxu0 0
        %6126 = vmatmul.mubr.bf16.gmra.mrb[0].mxu0 %v6088
        %v6127 = vpop.f32.mrb[0].mxu0
        %v6128 = vadd.f32 %v922, %v6127
        %v6129 = vpop.f32.mrb[0].mxu0
        %v6130 = vpop.f32.mrb[0].mxu0
        %v6131 = vpop.f32.mrb[0].mxu0
        %6132 = vdwg.mxu0
        %v6133 = vsel %vm4151, %v6076, -inf
        %6134 = vmax.xlane.f32.xlu0 %v6133
        %v6135 = vpop.xlane.xlu0 %6134
        %v6136 = vsel %vm4151, %v6128, -inf
        %6137 = vmax.xlane.f32.xlu0 %v6136
        %v6138 = vpop.xlane.xlu0 %6137
        %v6139 = vsub.f32 %v6076, %v6135
        %v6140 = vsub.f32 %v6128, %v6138
        %v6141 = vmul.f32 %v6139, 1.442695
        %v6142 = vpow.pop %v6141
        %v6143 = vmul.f32 %v6140, 1.442695
        %v6144 = vpow.pop %v6143
        %v6145 = vsel %vm4151, %v6142, 0.0
        %6146 = vadd.xlane.f32.xlu0 %v6145
        %v6147 = vpop.xlane.xlu0 %6146
        %v6148 = vsel %vm4151, %v6144, 0.0
        %6149 = vadd.xlane.f32.xlu0 %v6148
        %v6150 = vpop.xlane.xlu0 %6149
        %v6151 = vrcp.pop %v6147
        %v6152 = vrcp.pop %v6150
        %v6153 = vmul.f32 %v6142, %v6151
        %v6154 = vmul.f32 %v6144, %v6152
        %v6155 = vpack.c.bf16 %v6153, %v6153
        %v6156 = vpack.c.bf16 %v6154, %v6154
        %6158 = vrot.lane.b32.xlu0 %v5757, 64
        %v6159 = vpop.permute.xlu0 %6158
        %v6161 = vsel %vm4151, %v6155, 0
        %v6164 = vsel %vm4181, %v6159, 0
        %6166 = vmatprep.subr.bf16.mxu0 0
        %6167 = vmatpush1.bf16.msra.mxu0 %v6164
        %6168 = vmatprep.subr.bf16.mxu0 0
        %6169 = vmatpush1.bf16.msra.mxu0 0
        %6170 = vmatprep.subr.bf16.mxu0 0
        %6171 = vmatpush1.bf16.msra.mxu0 0
        %6172 = vmatprep.subr.bf16.mxu0 0
        %6173 = vmatpush1.bf16.msra.mxu0 0
        %6174 = vmatprep.subr.bf16.mxu0 0
        %6175 = vmatpush1.bf16.msra.mxu0 0
        %6176 = vmatprep.subr.bf16.mxu0 0
        %6177 = vmatpush1.bf16.msra.mxu0 0
        %6178 = vmatprep.subr.bf16.mxu0 0
        %6179 = vmatpush1.bf16.msra.mxu0 0
        %6180 = vmatprep.subr.bf16.mxu0 0
        %6181 = vmatpush1.bf16.msra.mxu0 0
        %6182 = vmatprep.subr.bf16.mxu0 0
        %6183 = vmatpush1.bf16.msra.mxu0 0
        %6184 = vmatprep.subr.bf16.mxu0 0
        %6185 = vmatpush1.bf16.msra.mxu0 0
        %6186 = vmatprep.subr.bf16.mxu0 0
        %6187 = vmatpush1.bf16.msra.mxu0 0
        %6188 = vmatprep.subr.bf16.mxu0 0
        %6189 = vmatpush1.bf16.msra.mxu0 0
        %6190 = vmatprep.subr.bf16.mxu0 0
        %6191 = vmatpush1.bf16.msra.mxu0 0
        %6192 = vmatprep.subr.bf16.mxu0 0
        %6193 = vmatpush1.bf16.msra.mxu0 0
        %6194 = vmatprep.subr.bf16.mxu0 0
        %6195 = vmatpush1.bf16.msra.mxu0 0
        %6196 = vmatprep.subr.bf16.mxu0 0
        %6197 = vmatpush1.bf16.msra.mxu0 0
        %6198 = vmatprep.mubr.bf16.mxu0 0
        %6199 = vmatmul.mubr.bf16.gmra.mrb[0].mxu0 %v6161
        %v6200 = vpop.f32.mrb[0].mxu0
        %v6201 = vadd.f32 0.0, %v6200
        %v6202 = vpop.f32.mrb[0].mxu0
        %v6203 = vpop.f32.mrb[0].mxu0
        %v6204 = vpop.f32.mrb[0].mxu0
        %6205 = vdwg.mxu0
        %6207 = vrot.lane.b32.xlu0 %v5758, 64
        %v6208 = vpop.permute.xlu0 %6207
        %v6210 = vsel %vm4151, %v6156, 0
        %v6213 = vsel %vm4181, %v6208, 0
        %6215 = vmatprep.subr.bf16.mxu0 0
        %6216 = vmatpush1.bf16.msra.mxu0 %v6213
        %6217 = vmatprep.subr.bf16.mxu0 0
        %6218 = vmatpush1.bf16.msra.mxu0 0
        %6219 = vmatprep.subr.bf16.mxu0 0
        %6220 = vmatpush1.bf16.msra.mxu0 0
        %6221 = vmatprep.subr.bf16.mxu0 0
        %6222 = vmatpush1.bf16.msra.mxu0 0
        %6223 = vmatprep.subr.bf16.mxu0 0
        %6224 = vmatpush1.bf16.msra.mxu0 0
        %6225 = vmatprep.subr.bf16.mxu0 0
        %6226 = vmatpush1.bf16.msra.mxu0 0
        %6227 = vmatprep.subr.bf16.mxu0 0
        %6228 = vmatpush1.bf16.msra.mxu0 0
        %6229 = vmatprep.subr.bf16.mxu0 0
        %6230 = vmatpush1.bf16.msra.mxu0 0
        %6231 = vmatprep.subr.bf16.mxu0 0
        %6232 = vmatpush1.bf16.msra.mxu0 0
        %6233 = vmatprep.subr.bf16.mxu0 0
        %6234 = vmatpush1.bf16.msra.mxu0 0
        %6235 = vmatprep.subr.bf16.mxu0 0
        %6236 = vmatpush1.bf16.msra.mxu0 0
        %6237 = vmatprep.subr.bf16.mxu0 0
        %6238 = vmatpush1.bf16.msra.mxu0 0
        %6239 = vmatprep.subr.bf16.mxu0 0
        %6240 = vmatpush1.bf16.msra.mxu0 0
        %6241 = vmatprep.subr.bf16.mxu0 0
        %6242 = vmatpush1.bf16.msra.mxu0 0
        %6243 = vmatprep.subr.bf16.mxu0 0
        %6244 = vmatpush1.bf16.msra.mxu0 0
        %6245 = vmatprep.subr.bf16.mxu0 0
        %6246 = vmatpush1.bf16.msra.mxu0 0
        %6247 = vmatprep.mubr.bf16.mxu0 0
        %6248 = vmatmul.mubr.bf16.gmra.mrb[0].mxu0 %v6210
        %v6249 = vpop.f32.mrb[0].mxu0
        %v6250 = vadd.f32 0.0, %v6249
        %v6251 = vpop.f32.mrb[0].mxu0
        %v6252 = vpop.f32.mrb[0].mxu0
        %v6253 = vpop.f32.mrb[0].mxu0
        %6254 = vdwg.mxu0
        %v6255 = vpack.c.bf16 %v6250, %v6201
        %v6272 = vunpack.c.l.b16 %v4004
        %v6273 = vunpack.c.h.b16 %v4004
        %v6274 = vunpack.c.l.b16 %v4005
        %v6275 = vunpack.c.h.b16 %v4005
        %v6276 = vunpack.c.l.b16 %v4006
        %v6277 = vunpack.c.h.b16 %v4006
        %v6278 = vunpack.c.l.b16 %v4007
        %v6279 = vunpack.c.h.b16 %v4007
        %v6280 = vunpack.c.l.b16 %v4008
        %v6281 = vunpack.c.h.b16 %v4008
        %v6282 = vunpack.c.l.b16 %v4009
        %v6283 = vunpack.c.h.b16 %v4009
        %v6284 = vunpack.c.l.b16 %v4010
        %v6285 = vunpack.c.h.b16 %v4010
        %v6286 = vunpack.c.l.b16 %v4011
        %v6287 = vunpack.c.h.b16 %v4011
        %v6288 = vunpack.c.l.b16 %v4012
        %v6289 = vunpack.c.h.b16 %v4012
        %v6290 = vunpack.c.l.b16 %v4013
        %v6291 = vunpack.c.h.b16 %v4013
        %v6292 = vunpack.c.l.b16 %v4014
        %v6293 = vunpack.c.h.b16 %v4014
        %v6294 = vunpack.c.l.b16 %v4015
        %v6295 = vunpack.c.h.b16 %v4015
        %v6296 = vunpack.c.l.b16 %v4016
        %v6297 = vunpack.c.h.b16 %v4016
        %v6298 = vunpack.c.l.b16 %v4017
        %v6299 = vunpack.c.h.b16 %v4017
        %v6300 = vunpack.c.l.b16 %v4018
        %v6301 = vunpack.c.h.b16 %v4018
        %v6302 = vunpack.c.l.b16 %v4019
        %v6303 = vunpack.c.h.b16 %v4019
        %v6304 = vpack.c.b16 %v6276, %v6272
        %v6305 = vpack.c.b16 %v6277, %v6273
        %v6306 = vpack.c.b16 %v6278, %v6274
        %v6307 = vpack.c.b16 %v6279, %v6275
        %v6308 = vpack.c.b16 %v6284, %v6280
        %v6309 = vpack.c.b16 %v6285, %v6281
        %v6310 = vpack.c.b16 %v6286, %v6282
        %v6311 = vpack.c.b16 %v6287, %v6283
        %v6312 = vpack.c.b16 %v6292, %v6288
        %v6313 = vpack.c.b16 %v6293, %v6289
        %v6314 = vpack.c.b16 %v6294, %v6290
        %v6315 = vpack.c.b16 %v6295, %v6291
        %v6316 = vpack.c.b16 %v6300, %v6296
        %v6317 = vpack.c.b16 %v6301, %v6297
        %v6318 = vpack.c.b16 %v6302, %v6298
        %v6319 = vpack.c.b16 %v6303, %v6299
        %v6337 = vsel %vm4058, %v6255, 0
        %6339 = vmatprep.subr.bf16.mxu0 %v6305
        %6340 = vmatpush1.bf16.msra.mxu0 %v6304
        %6341 = vmatprep.subr.bf16.mxu0 %v6309
        %6342 = vmatpush1.bf16.msra.mxu0 %v6308
        %6343 = vmatprep.subr.bf16.mxu0 %v6313
        %6344 = vmatpush1.bf16.msra.mxu0 %v6312
        %6345 = vmatprep.subr.bf16.mxu0 %v6317
        %6346 = vmatpush1.bf16.msra.mxu0 %v6316
        %6347 = vmatprep.subr.bf16.mxu0 0
        %6348 = vmatpush1.bf16.msra.mxu0 0
        %6349 = vmatprep.subr.bf16.mxu0 0
        %6350 = vmatpush1.bf16.msra.mxu0 0
        %6351 = vmatprep.subr.bf16.mxu0 0
        %6352 = vmatpush1.bf16.msra.mxu0 0
        %6353 = vmatprep.subr.bf16.mxu0 0
        %6354 = vmatpush1.bf16.msra.mxu0 0
        %6355 = vmatprep.subr.bf16.mxu0 0
        %6356 = vmatpush1.bf16.msra.mxu0 0
        %6357 = vmatprep.subr.bf16.mxu0 0
        %6358 = vmatpush1.bf16.msra.mxu0 0
        %6359 = vmatprep.subr.bf16.mxu0 0
        %6360 = vmatpush1.bf16.msra.mxu0 0
        %6361 = vmatprep.subr.bf16.mxu0 0
        %6362 = vmatpush1.bf16.msra.mxu0 0
        %6363 = vmatprep.subr.bf16.mxu0 0
        %6364 = vmatpush1.bf16.msra.mxu0 0
        %6365 = vmatprep.subr.bf16.mxu0 0
        %6366 = vmatpush1.bf16.msra.mxu0 0
        %6367 = vmatprep.subr.bf16.mxu0 0
        %6368 = vmatpush1.bf16.msra.mxu0 0
        %6369 = vmatprep.subr.bf16.mxu0 0
        %6370 = vmatpush1.bf16.msra.mxu0 0
        %6371 = vmatprep.mubr.bf16.mxu0 0
        %6372 = vmatmul.mubr.bf16.gmra.mrb[0].mxu0 %v6337
        %v6373 = vpop.f32.mrb[0].mxu0
        %v6374 = vadd.f32 0.0, %v6373
        %v6375 = vpop.f32.mrb[0].mxu0
        %v6376 = vadd.f32 0.0, %v6375
        %v6377 = vpop.f32.mrb[0].mxu0
        %v6378 = vadd.f32 0.0, %v6377
        %v6379 = vpop.f32.mrb[0].mxu0
        %v6380 = vadd.f32 0.0, %v6379
        %6381 = vdwg.mxu0
        %6382 = vmatprep.subr.bf16.mxu0 %v6307
        %6383 = vmatpush1.bf16.msra.mxu0 %v6306
        %6384 = vmatprep.subr.bf16.mxu0 %v6311
        %6385 = vmatpush1.bf16.msra.mxu0 %v6310
        %6386 = vmatprep.subr.bf16.mxu0 %v6315
        %6387 = vmatpush1.bf16.msra.mxu0 %v6314
        %6388 = vmatprep.subr.bf16.mxu0 %v6319
        %6389 = vmatpush1.bf16.msra.mxu0 %v6318
        %6390 = vmatprep.subr.bf16.mxu0 0
        %6391 = vmatpush1.bf16.msra.mxu0 0
        %6392 = vmatprep.subr.bf16.mxu0 0
        %6393 = vmatpush1.bf16.msra.mxu0 0
        %6394 = vmatprep.subr.bf16.mxu0 0
        %6395 = vmatpush1.bf16.msra.mxu0 0
        %6396 = vmatprep.subr.bf16.mxu0 0
        %6397 = vmatpush1.bf16.msra.mxu0 0
        %6398 = vmatprep.subr.bf16.mxu0 0
        %6399 = vmatpush1.bf16.msra.mxu0 0
        %6400 = vmatprep.subr.bf16.mxu0 0
        %6401 = vmatpush1.bf16.msra.mxu0 0
        %6402 = vmatprep.subr.bf16.mxu0 0
        %6403 = vmatpush1.bf16.msra.mxu0 0
        %6404 = vmatprep.subr.bf16.mxu0 0
        %6405 = vmatpush1.bf16.msra.mxu0 0
        %6406 = vmatprep.subr.bf16.mxu0 0
        %6407 = vmatpush1.bf16.msra.mxu0 0
        %6408 = vmatprep.subr.bf16.mxu0 0
        %6409 = vmatpush1.bf16.msra.mxu0 0
        %6410 = vmatprep.subr.bf16.mxu0 0
        %6411 = vmatpush1.bf16.msra.mxu0 0
        %6412 = vmatprep.subr.bf16.mxu0 0
        %6413 = vmatpush1.bf16.msra.mxu0 0
        %6414 = vmatprep.mubr.bf16.mxu0 0
        %6415 = vmatmul.mubr.bf16.gmra.mrb[0].mxu0 %v6337
        %v6416 = vpop.f32.mrb[0].mxu0
        %v6417 = vadd.f32 0.0, %v6416
        %v6418 = vpop.f32.mrb[0].mxu0
        %v6419 = vadd.f32 0.0, %v6418
        %v6420 = vpop.f32.mrb[0].mxu0
        %v6421 = vadd.f32 0.0, %v6420
        %v6422 = vpop.f32.mrb[0].mxu0
        %v6423 = vadd.f32 0.0, %v6422
        %6424 = vdwg.mxu0
        %v6425 = vadd.f32 %v6021, %v6374
        %v6426 = vadd.f32 %v6022, %v6376
        %v6427 = vadd.f32 %v6023, %v6417
        %v6428 = vadd.f32 %v6024, %v6419
        %v6429 = vadd.f32 %v6025, %v6378
        %v6430 = vadd.f32 %v6026, %v6380
        %v6431 = vadd.f32 %v6027, %v6421
        %v6432 = vadd.f32 %v6028, %v6423
        %v6433 = vmul.f32 %v3574, 0.125
        %v6434 = vmul.f32 %v3578, 0.125
        %v6435 = vpack.c.bf16 %v6433, %v6433
        %v6436 = vpack.c.bf16 %v6434, %v6434
        %v6437 = vpack.c.bf16 %v3746, %v3746
        %v6438 = vpack.c.bf16 %v3750, %v3750
        %v6440 = vsel %vm4058, %v6435, 0
        %v6443 = vsel %vm4058, %v6437, 0
        %6445 = vmatprep.subr.bf16.mxu0 0
        %6446 = vmatpush1.bf16.xpose.msra.mxu0 %v6443
        %6447 = vmatprep.subr.bf16.mxu0 0
        %6448 = vmatpush1.bf16.xpose.msra.mxu0 0
        %6449 = vmatprep.subr.bf16.mxu0 0
        %6450 = vmatpush1.bf16.xpose.msra.mxu0 0
        %6451 = vmatprep.subr.bf16.mxu0 0
        %6452 = vmatpush1.bf16.xpose.msra.mxu0 0
        %6453 = vmatprep.subr.bf16.mxu0 0
        %6454 = vmatpush1.bf16.xpose.msra.mxu0 0
        %6455 = vmatprep.subr.bf16.mxu0 0
        %6456 = vmatpush1.bf16.xpose.msra.mxu0 0
        %6457 = vmatprep.subr.bf16.mxu0 0
        %6458 = vmatpush1.bf16.xpose.msra.mxu0 0
        %6459 = vmatprep.subr.bf16.mxu0 0
        %6460 = vmatpush1.bf16.xpose.msra.mxu0 0
        %6461 = vmatprep.subr.bf16.mxu0 0
        %6462 = vmatpush1.bf16.xpose.msra.mxu0 0
        %6463 = vmatprep.subr.bf16.mxu0 0
        %6464 = vmatpush1.bf16.xpose.msra.mxu0 0
        %6465 = vmatprep.subr.bf16.mxu0 0
        %6466 = vmatpush1.bf16.xpose.msra.mxu0 0
        %6467 = vmatprep.subr.bf16.mxu0 0
        %6468 = vmatpush1.bf16.xpose.msra.mxu0 0
        %6469 = vmatprep.subr.bf16.mxu0 0
        %6470 = vmatpush1.bf16.xpose.msra.mxu0 0
        %6471 = vmatprep.subr.bf16.mxu0 0
        %6472 = vmatpush1.bf16.xpose.msra.mxu0 0
        %6473 = vmatprep.subr.bf16.mxu0 0
        %6474 = vmatpush1.bf16.xpose.msra.mxu0 0
        %6475 = vmatprep.subr.bf16.mxu0 0
        %6476 = vmatpush1.bf16.xpose.msra.mxu0 0
        %6477 = vmatprep.mubr.bf16.mxu0 0
        %6478 = vmatmul.mubr.bf16.gmra.mrb[0].mxu0 %v6440
        %v6479 = vpop.f32.mrb[0].mxu0
        %v6480 = vadd.f32 %v921, %v6479
        %v6481 = vpop.f32.mrb[0].mxu0
        %v6482 = vpop.f32.mrb[0].mxu0
        %v6483 = vpop.f32.mrb[0].mxu0
        %6484 = vdwg.mxu0
        %v6486 = vsel %vm4058, %v6436, 0
        %v6489 = vsel %vm4058, %v6438, 0
        %6491 = vmatprep.subr.bf16.mxu0 0
        %6492 = vmatpush1.bf16.xpose.msra.mxu0 %v6489
        %6493 = vmatprep.subr.bf16.mxu0 0
        %6494 = vmatpush1.bf16.xpose.msra.mxu0 0
        %6495 = vmatprep.subr.bf16.mxu0 0
        %6496 = vmatpush1.bf16.xpose.msra.mxu0 0
        %6497 = vmatprep.subr.bf16.mxu0 0
        %6498 = vmatpush1.bf16.xpose.msra.mxu0 0
        %6499 = vmatprep.subr.bf16.mxu0 0
        %6500 = vmatpush1.bf16.xpose.msra.mxu0 0
        %6501 = vmatprep.subr.bf16.mxu0 0
        %6502 = vmatpush1.bf16.xpose.msra.mxu0 0
        %6503 = vmatprep.subr.bf16.mxu0 0
        %6504 = vmatpush1.bf16.xpose.msra.mxu0 0
        %6505 = vmatprep.subr.bf16.mxu0 0
        %6506 = vmatpush1.bf16.xpose.msra.mxu0 0
        %6507 = vmatprep.subr.bf16.mxu0 0
        %6508 = vmatpush1.bf16.xpose.msra.mxu0 0
        %6509 = vmatprep.subr.bf16.mxu0 0
        %6510 = vmatpush1.bf16.xpose.msra.mxu0 0
        %6511 = vmatprep.subr.bf16.mxu0 0
        %6512 = vmatpush1.bf16.xpose.msra.mxu0 0
        %6513 = vmatprep.subr.bf16.mxu0 0
        %6514 = vmatpush1.bf16.xpose.msra.mxu0 0
        %6515 = vmatprep.subr.bf16.mxu0 0
        %6516 = vmatpush1.bf16.xpose.msra.mxu0 0
        %6517 = vmatprep.subr.bf16.mxu0 0
        %6518 = vmatpush1.bf16.xpose.msra.mxu0 0
        %6519 = vmatprep.subr.bf16.mxu0 0
        %6520 = vmatpush1.bf16.xpose.msra.mxu0 0
        %6521 = vmatprep.subr.bf16.mxu0 0
        %6522 = vmatpush1.bf16.xpose.msra.mxu0 0
        %6523 = vmatprep.mubr.bf16.mxu0 0
        %6524 = vmatmul.mubr.bf16.gmra.mrb[0].mxu0 %v6486
        %v6525 = vpop.f32.mrb[0].mxu0
        %v6526 = vadd.f32 %v922, %v6525
        %v6527 = vpop.f32.mrb[0].mxu0
        %v6528 = vpop.f32.mrb[0].mxu0
        %v6529 = vpop.f32.mrb[0].mxu0
        %6530 = vdwg.mxu0
        %v6531 = vsel %vm4151, %v6480, -inf
        %6532 = vmax.xlane.f32.xlu0 %v6531
        %v6533 = vpop.xlane.xlu0 %6532
        %v6534 = vsel %vm4151, %v6526, -inf
        %6535 = vmax.xlane.f32.xlu0 %v6534
        %v6536 = vpop.xlane.xlu0 %6535
        %v6537 = vsub.f32 %v6480, %v6533
        %v6538 = vsub.f32 %v6526, %v6536
        %v6539 = vmul.f32 %v6537, 1.442695
        %v6540 = vpow.pop %v6539
        %v6541 = vmul.f32 %v6538, 1.442695
        %v6542 = vpow.pop %v6541
        %v6543 = vsel %vm4151, %v6540, 0.0
        %6544 = vadd.xlane.f32.xlu0 %v6543
        %v6545 = vpop.xlane.xlu0 %6544
        %v6546 = vsel %vm4151, %v6542, 0.0
        %6547 = vadd.xlane.f32.xlu0 %v6546
        %v6548 = vpop.xlane.xlu0 %6547
        %v6549 = vrcp.pop %v6545
        %v6550 = vrcp.pop %v6548
        %v6551 = vmul.f32 %v6540, %v6549
        %v6552 = vmul.f32 %v6542, %v6550
        %v6553 = vpack.c.bf16 %v6551, %v6551
        %v6554 = vpack.c.bf16 %v6552, %v6552
        %v6555 = vpack.c.bf16 %v3918, %v3918
        %v6556 = vpack.c.bf16 %v3922, %v3922
        %v6558 = vsel %vm4151, %v6553, 0
        %v6561 = vsel %vm4181, %v6555, 0
        %6563 = vmatprep.subr.bf16.mxu0 0
        %6564 = vmatpush1.bf16.msra.mxu0 %v6561
        %6565 = vmatprep.subr.bf16.mxu0 0
        %6566 = vmatpush1.bf16.msra.mxu0 0
        %6567 = vmatprep.subr.bf16.mxu0 0
        %6568 = vmatpush1.bf16.msra.mxu0 0
        %6569 = vmatprep.subr.bf16.mxu0 0
        %6570 = vmatpush1.bf16.msra.mxu0 0
        %6571 = vmatprep.subr.bf16.mxu0 0
        %6572 = vmatpush1.bf16.msra.mxu0 0
        %6573 = vmatprep.subr.bf16.mxu0 0
        %6574 = vmatpush1.bf16.msra.mxu0 0
        %6575 = vmatprep.subr.bf16.mxu0 0
        %6576 = vmatpush1.bf16.msra.mxu0 0
        %6577 = vmatprep.subr.bf16.mxu0 0
        %6578 = vmatpush1.bf16.msra.mxu0 0
        %6579 = vmatprep.subr.bf16.mxu0 0
        %6580 = vmatpush1.bf16.msra.mxu0 0
        %6581 = vmatprep.subr.bf16.mxu0 0
        %6582 = vmatpush1.bf16.msra.mxu0 0
        %6583 = vmatprep.subr.bf16.mxu0 0
        %6584 = vmatpush1.bf16.msra.mxu0 0
        %6585 = vmatprep.subr.bf16.mxu0 0
        %6586 = vmatpush1.bf16.msra.mxu0 0
        %6587 = vmatprep.subr.bf16.mxu0 0
        %6588 = vmatpush1.bf16.msra.mxu0 0
        %6589 = vmatprep.subr.bf16.mxu0 0
        %6590 = vmatpush1.bf16.msra.mxu0 0
        %6591 = vmatprep.subr.bf16.mxu0 0
        %6592 = vmatpush1.bf16.msra.mxu0 0
        %6593 = vmatprep.subr.bf16.mxu0 0
        %6594 = vmatpush1.bf16.msra.mxu0 0
        %6595 = vmatprep.mubr.bf16.mxu0 0
        %6596 = vmatmul.mubr.bf16.gmra.mrb[0].mxu0 %v6558
        %v6597 = vpop.f32.mrb[0].mxu0
        %v6598 = vadd.f32 0.0, %v6597
        %v6599 = vpop.f32.mrb[0].mxu0
        %v6600 = vpop.f32.mrb[0].mxu0
        %v6601 = vpop.f32.mrb[0].mxu0
        %6602 = vdwg.mxu0
        %v6604 = vsel %vm4151, %v6554, 0
        %v6607 = vsel %vm4181, %v6556, 0
        %6609 = vmatprep.subr.bf16.mxu0 0
        %6610 = vmatpush1.bf16.msra.mxu0 %v6607
        %6611 = vmatprep.subr.bf16.mxu0 0
        %6612 = vmatpush1.bf16.msra.mxu0 0
        %6613 = vmatprep.subr.bf16.mxu0 0
        %6614 = vmatpush1.bf16.msra.mxu0 0
        %6615 = vmatprep.subr.bf16.mxu0 0
        %6616 = vmatpush1.bf16.msra.mxu0 0
        %6617 = vmatprep.subr.bf16.mxu0 0
        %6618 = vmatpush1.bf16.msra.mxu0 0
        %6619 = vmatprep.subr.bf16.mxu0 0
        %6620 = vmatpush1.bf16.msra.mxu0 0
        %6621 = vmatprep.subr.bf16.mxu0 0
        %6622 = vmatpush1.bf16.msra.mxu0 0
        %6623 = vmatprep.subr.bf16.mxu0 0
        %6624 = vmatpush1.bf16.msra.mxu0 0
        %6625 = vmatprep.subr.bf16.mxu0 0
        %6626 = vmatpush1.bf16.msra.mxu0 0
        %6627 = vmatprep.subr.bf16.mxu0 0
        %6628 = vmatpush1.bf16.msra.mxu0 0
        %6629 = vmatprep.subr.bf16.mxu0 0
        %6630 = vmatpush1.bf16.msra.mxu0 0
        %6631 = vmatprep.subr.bf16.mxu0 0
        %6632 = vmatpush1.bf16.msra.mxu0 0
        %6633 = vmatprep.subr.bf16.mxu0 0
        %6634 = vmatpush1.bf16.msra.mxu0 0
        %6635 = vmatprep.subr.bf16.mxu0 0
        %6636 = vmatpush1.bf16.msra.mxu0 0
        %6637 = vmatprep.subr.bf16.mxu0 0
        %6638 = vmatpush1.bf16.msra.mxu0 0
        %6639 = vmatprep.subr.bf16.mxu0 0
        %6640 = vmatpush1.bf16.msra.mxu0 0
        %6641 = vmatprep.mubr.bf16.mxu0 0
        %6642 = vmatmul.mubr.bf16.gmra.mrb[0].mxu0 %v6604
        %v6643 = vpop.f32.mrb[0].mxu0
        %v6644 = vadd.f32 0.0, %v6643
        %v6645 = vpop.f32.mrb[0].mxu0
        %v6646 = vpop.f32.mrb[0].mxu0
        %v6647 = vpop.f32.mrb[0].mxu0
        %6648 = vdwg.mxu0
        %v6649 = vpack.c.bf16 %v6644, %v6598
        %v6666 = vunpack.c.l.b16 %v4020
        %v6667 = vunpack.c.h.b16 %v4020
        %v6668 = vunpack.c.l.b16 %v4021
        %v6669 = vunpack.c.h.b16 %v4021
        %v6670 = vunpack.c.l.b16 %v4022
        %v6671 = vunpack.c.h.b16 %v4022
        %v6672 = vunpack.c.l.b16 %v4023
        %v6673 = vunpack.c.h.b16 %v4023
        %v6674 = vunpack.c.l.b16 %v4024
        %v6675 = vunpack.c.h.b16 %v4024
        %v6676 = vunpack.c.l.b16 %v4025
        %v6677 = vunpack.c.h.b16 %v4025
        %v6678 = vunpack.c.l.b16 %v4026
        %v6679 = vunpack.c.h.b16 %v4026
        %v6680 = vunpack.c.l.b16 %v4027
        %v6681 = vunpack.c.h.b16 %v4027
        %v6682 = vunpack.c.l.b16 %v4028
        %v6683 = vunpack.c.h.b16 %v4028
        %v6684 = vunpack.c.l.b16 %v4029
        %v6685 = vunpack.c.h.b16 %v4029
        %v6686 = vunpack.c.l.b16 %v4030
        %v6687 = vunpack.c.h.b16 %v4030
        %v6688 = vunpack.c.l.b16 %v4031
        %v6689 = vunpack.c.h.b16 %v4031
        %v6690 = vunpack.c.l.b16 %v4032
        %v6691 = vunpack.c.h.b16 %v4032
        %v6692 = vunpack.c.l.b16 %v4033
        %v6693 = vunpack.c.h.b16 %v4033
        %v6694 = vunpack.c.l.b16 %v4034
        %v6695 = vunpack.c.h.b16 %v4034
        %v6696 = vunpack.c.l.b16 %v4035
        %v6697 = vunpack.c.h.b16 %v4035
        %v6698 = vpack.c.b16 %v6670, %v6666
        %v6699 = vpack.c.b16 %v6671, %v6667
        %v6700 = vpack.c.b16 %v6672, %v6668
        %v6701 = vpack.c.b16 %v6673, %v6669
        %v6702 = vpack.c.b16 %v6678, %v6674
        %v6703 = vpack.c.b16 %v6679, %v6675
        %v6704 = vpack.c.b16 %v6680, %v6676
        %v6705 = vpack.c.b16 %v6681, %v6677
        %v6706 = vpack.c.b16 %v6686, %v6682
        %v6707 = vpack.c.b16 %v6687, %v6683
        %v6708 = vpack.c.b16 %v6688, %v6684
        %v6709 = vpack.c.b16 %v6689, %v6685
        %v6710 = vpack.c.b16 %v6694, %v6690
        %v6711 = vpack.c.b16 %v6695, %v6691
        %v6712 = vpack.c.b16 %v6696, %v6692
        %v6713 = vpack.c.b16 %v6697, %v6693
        %v6731 = vsel %vm4058, %v6649, 0
        %6733 = vmatprep.subr.bf16.mxu0 %v6699
        %6734 = vmatpush1.bf16.msra.mxu0 %v6698
        %6735 = vmatprep.subr.bf16.mxu0 %v6703
        %6736 = vmatpush1.bf16.msra.mxu0 %v6702
        %6737 = vmatprep.subr.bf16.mxu0 %v6707
        %6738 = vmatpush1.bf16.msra.mxu0 %v6706
        %6739 = vmatprep.subr.bf16.mxu0 %v6711
        %6740 = vmatpush1.bf16.msra.mxu0 %v6710
        %6741 = vmatprep.subr.bf16.mxu0 0
        %6742 = vmatpush1.bf16.msra.mxu0 0
        %6743 = vmatprep.subr.bf16.mxu0 0
        %6744 = vmatpush1.bf16.msra.mxu0 0
        %6745 = vmatprep.subr.bf16.mxu0 0
        %6746 = vmatpush1.bf16.msra.mxu0 0
        %6747 = vmatprep.subr.bf16.mxu0 0
        %6748 = vmatpush1.bf16.msra.mxu0 0
        %6749 = vmatprep.subr.bf16.mxu0 0
        %6750 = vmatpush1.bf16.msra.mxu0 0
        %6751 = vmatprep.subr.bf16.mxu0 0
        %6752 = vmatpush1.bf16.msra.mxu0 0
        %6753 = vmatprep.subr.bf16.mxu0 0
        %6754 = vmatpush1.bf16.msra.mxu0 0
        %6755 = vmatprep.subr.bf16.mxu0 0
        %6756 = vmatpush1.bf16.msra.mxu0 0
        %6757 = vmatprep.subr.bf16.mxu0 0
        %6758 = vmatpush1.bf16.msra.mxu0 0
        %6759 = vmatprep.subr.bf16.mxu0 0
        %6760 = vmatpush1.bf16.msra.mxu0 0
        %6761 = vmatprep.subr.bf16.mxu0 0
        %6762 = vmatpush1.bf16.msra.mxu0 0
        %6763 = vmatprep.subr.bf16.mxu0 0
        %6764 = vmatpush1.bf16.msra.mxu0 0
        %6765 = vmatprep.mubr.bf16.mxu0 0
        %6766 = vmatmul.mubr.bf16.gmra.mrb[0].mxu0 %v6731
        %v6767 = vpop.f32.mrb[0].mxu0
        %v6768 = vadd.f32 0.0, %v6767
        %v6769 = vpop.f32.mrb[0].mxu0
        %v6770 = vadd.f32 0.0, %v6769
        %v6771 = vpop.f32.mrb[0].mxu0
        %v6772 = vadd.f32 0.0, %v6771
        %v6773 = vpop.f32.mrb[0].mxu0
        %v6774 = vadd.f32 0.0, %v6773
        %6775 = vdwg.mxu0
        %6776 = vmatprep.subr.bf16.mxu0 %v6701
        %6777 = vmatpush1.bf16.msra.mxu0 %v6700
        %6778 = vmatprep.subr.bf16.mxu0 %v6705
        %6779 = vmatpush1.bf16.msra.mxu0 %v6704
        %6780 = vmatprep.subr.bf16.mxu0 %v6709
        %6781 = vmatpush1.bf16.msra.mxu0 %v6708
        %6782 = vmatprep.subr.bf16.mxu0 %v6713
        %6783 = vmatpush1.bf16.msra.mxu0 %v6712
        %6784 = vmatprep.subr.bf16.mxu0 0
        %6785 = vmatpush1.bf16.msra.mxu0 0
        %6786 = vmatprep.subr.bf16.mxu0 0
        %6787 = vmatpush1.bf16.msra.mxu0 0
        %6788 = vmatprep.subr.bf16.mxu0 0
        %6789 = vmatpush1.bf16.msra.mxu0 0
        %6790 = vmatprep.subr.bf16.mxu0 0
        %6791 = vmatpush1.bf16.msra.mxu0 0
        %6792 = vmatprep.subr.bf16.mxu0 0
        %6793 = vmatpush1.bf16.msra.mxu0 0
        %6794 = vmatprep.subr.bf16.mxu0 0
        %6795 = vmatpush1.bf16.msra.mxu0 0
        %6796 = vmatprep.subr.bf16.mxu0 0
        %6797 = vmatpush1.bf16.msra.mxu0 0
        %6798 = vmatprep.subr.bf16.mxu0 0
        %6799 = vmatpush1.bf16.msra.mxu0 0
        %6800 = vmatprep.subr.bf16.mxu0 0
        %6801 = vmatpush1.bf16.msra.mxu0 0
        %6802 = vmatprep.subr.bf16.mxu0 0
        %6803 = vmatpush1.bf16.msra.mxu0 0
        %6804 = vmatprep.subr.bf16.mxu0 0
        %6805 = vmatpush1.bf16.msra.mxu0 0
        %6806 = vmatprep.subr.bf16.mxu0 0
        %6807 = vmatpush1.bf16.msra.mxu0 0
        %6808 = vmatprep.mubr.bf16.mxu0 0
        %6809 = vmatmul.mubr.bf16.gmra.mrb[0].mxu0 %v6731
        %v6810 = vpop.f32.mrb[0].mxu0
        %v6811 = vadd.f32 0.0, %v6810
        %v6812 = vpop.f32.mrb[0].mxu0
        %v6813 = vadd.f32 0.0, %v6812
        %v6814 = vpop.f32.mrb[0].mxu0
        %v6815 = vadd.f32 0.0, %v6814
        %v6816 = vpop.f32.mrb[0].mxu0
        %v6817 = vadd.f32 0.0, %v6816
        %6818 = vdwg.mxu0
        %v6819 = vadd.f32 %v6425, %v6768
        %v6820 = vadd.f32 %v6426, %v6770
        %v6821 = vadd.f32 %v6427, %v6811
        %v6822 = vadd.f32 %v6428, %v6813
        %v6823 = vadd.f32 %v6429, %v6772
        %v6824 = vadd.f32 %v6430, %v6774
        %v6825 = vadd.f32 %v6431, %v6815
        %v6826 = vadd.f32 %v6432, %v6817
        %6828 = vrot.lane.b32.xlu0 %v6435, 64
        %v6829 = vpop.permute.xlu0 %6828
        %6831 = vrot.lane.b32.xlu0 %v6437, 64
        %v6832 = vpop.permute.xlu0 %6831
        %v6834 = vsel %vm4058, %v6829, 0
        %v6837 = vsel %vm4058, %v6832, 0
        %6839 = vmatprep.subr.bf16.mxu0 0
        %6840 = vmatpush1.bf16.xpose.msra.mxu0 %v6837
        %6841 = vmatprep.subr.bf16.mxu0 0
        %6842 = vmatpush1.bf16.xpose.msra.mxu0 0
        %6843 = vmatprep.subr.bf16.mxu0 0
        %6844 = vmatpush1.bf16.xpose.msra.mxu0 0
        %6845 = vmatprep.subr.bf16.mxu0 0
        %6846 = vmatpush1.bf16.xpose.msra.mxu0 0
        %6847 = vmatprep.subr.bf16.mxu0 0
        %6848 = vmatpush1.bf16.xpose.msra.mxu0 0
        %6849 = vmatprep.subr.bf16.mxu0 0
        %6850 = vmatpush1.bf16.xpose.msra.mxu0 0
        %6851 = vmatprep.subr.bf16.mxu0 0
        %6852 = vmatpush1.bf16.xpose.msra.mxu0 0
        %6853 = vmatprep.subr.bf16.mxu0 0
        %6854 = vmatpush1.bf16.xpose.msra.mxu0 0
        %6855 = vmatprep.subr.bf16.mxu0 0
        %6856 = vmatpush1.bf16.xpose.msra.mxu0 0
        %6857 = vmatprep.subr.bf16.mxu0 0
        %6858 = vmatpush1.bf16.xpose.msra.mxu0 0
        %6859 = vmatprep.subr.bf16.mxu0 0
        %6860 = vmatpush1.bf16.xpose.msra.mxu0 0
        %6861 = vmatprep.subr.bf16.mxu0 0
        %6862 = vmatpush1.bf16.xpose.msra.mxu0 0
        %6863 = vmatprep.subr.bf16.mxu0 0
        %6864 = vmatpush1.bf16.xpose.msra.mxu0 0
        %6865 = vmatprep.subr.bf16.mxu0 0
        %6866 = vmatpush1.bf16.xpose.msra.mxu0 0
        %6867 = vmatprep.subr.bf16.mxu0 0
        %6868 = vmatpush1.bf16.xpose.msra.mxu0 0
        %6869 = vmatprep.subr.bf16.mxu0 0
        %6870 = vmatpush1.bf16.xpose.msra.mxu0 0
        %6871 = vmatprep.mubr.bf16.mxu0 0
        %6872 = vmatmul.mubr.bf16.gmra.mrb[0].mxu0 %v6834
        %v6873 = vpop.f32.mrb[0].mxu0
        %v6874 = vadd.f32 %v921, %v6873
        %v6875 = vpop.f32.mrb[0].mxu0
        %v6876 = vpop.f32.mrb[0].mxu0
        %v6877 = vpop.f32.mrb[0].mxu0
        %6878 = vdwg.mxu0
        %6880 = vrot.lane.b32.xlu0 %v6436, 64
        %v6881 = vpop.permute.xlu0 %6880
        %6883 = vrot.lane.b32.xlu0 %v6438, 64
        %v6884 = vpop.permute.xlu0 %6883
        %v6886 = vsel %vm4058, %v6881, 0
        %v6889 = vsel %vm4058, %v6884, 0
        %6891 = vmatprep.subr.bf16.mxu0 0
        %6892 = vmatpush1.bf16.xpose.msra.mxu0 %v6889
        %6893 = vmatprep.subr.bf16.mxu0 0
        %6894 = vmatpush1.bf16.xpose.msra.mxu0 0
        %6895 = vmatprep.subr.bf16.mxu0 0
        %6896 = vmatpush1.bf16.xpose.msra.mxu0 0
        %6897 = vmatprep.subr.bf16.mxu0 0
        %6898 = vmatpush1.bf16.xpose.msra.mxu0 0
        %6899 = vmatprep.subr.bf16.mxu0 0
        %6900 = vmatpush1.bf16.xpose.msra.mxu0 0
        %6901 = vmatprep.subr.bf16.mxu0 0
        %6902 = vmatpush1.bf16.xpose.msra.mxu0 0
        %6903 = vmatprep.subr.bf16.mxu0 0
        %6904 = vmatpush1.bf16.xpose.msra.mxu0 0
        %6905 = vmatprep.subr.bf16.mxu0 0
        %6906 = vmatpush1.bf16.xpose.msra.mxu0 0
        %6907 = vmatprep.subr.bf16.mxu0 0
        %6908 = vmatpush1.bf16.xpose.msra.mxu0 0
        %6909 = vmatprep.subr.bf16.mxu0 0
        %6910 = vmatpush1.bf16.xpose.msra.mxu0 0
        %6911 = vmatprep.subr.bf16.mxu0 0
        %6912 = vmatpush1.bf16.xpose.msra.mxu0 0
        %6913 = vmatprep.subr.bf16.mxu0 0
        %6914 = vmatpush1.bf16.xpose.msra.mxu0 0
        %6915 = vmatprep.subr.bf16.mxu0 0
        %6916 = vmatpush1.bf16.xpose.msra.mxu0 0
        %6917 = vmatprep.subr.bf16.mxu0 0
        %6918 = vmatpush1.bf16.xpose.msra.mxu0 0
        %6919 = vmatprep.subr.bf16.mxu0 0
        %6920 = vmatpush1.bf16.xpose.msra.mxu0 0
        %6921 = vmatprep.subr.bf16.mxu0 0
        %6922 = vmatpush1.bf16.xpose.msra.mxu0 0
        %6923 = vmatprep.mubr.bf16.mxu0 0
        %6924 = vmatmul.mubr.bf16.gmra.mrb[0].mxu0 %v6886
        %v6925 = vpop.f32.mrb[0].mxu0
        %v6926 = vadd.f32 %v922, %v6925
        %v6927 = vpop.f32.mrb[0].mxu0
        %v6928 = vpop.f32.mrb[0].mxu0
        %v6929 = vpop.f32.mrb[0].mxu0
        %6930 = vdwg.mxu0
        %v6931 = vsel %vm4151, %v6874, -inf
        %6932 = vmax.xlane.f32.xlu0 %v6931
        %v6933 = vpop.xlane.xlu0 %6932
        %v6934 = vsel %vm4151, %v6926, -inf
        %6935 = vmax.xlane.f32.xlu0 %v6934
        %v6936 = vpop.xlane.xlu0 %6935
        %v6937 = vsub.f32 %v6874, %v6933
        %v6938 = vsub.f32 %v6926, %v6936
        %v6939 = vmul.f32 %v6937, 1.442695
        %v6940 = vpow.pop %v6939
        %v6941 = vmul.f32 %v6938, 1.442695
        %v6942 = vpow.pop %v6941
        %v6943 = vsel %vm4151, %v6940, 0.0
        %6944 = vadd.xlane.f32.xlu0 %v6943
        %v6945 = vpop.xlane.xlu0 %6944
        %v6946 = vsel %vm4151, %v6942, 0.0
        %6947 = vadd.xlane.f32.xlu0 %v6946
        %v6948 = vpop.xlane.xlu0 %6947
        %v6949 = vrcp.pop %v6945
        %v6950 = vrcp.pop %v6948
        %v6951 = vmul.f32 %v6940, %v6949
        %v6952 = vmul.f32 %v6942, %v6950
        %v6953 = vpack.c.bf16 %v6951, %v6951
        %v6954 = vpack.c.bf16 %v6952, %v6952
        %6956 = vrot.lane.b32.xlu0 %v6555, 64
        %v6957 = vpop.permute.xlu0 %6956
        %v6959 = vsel %vm4151, %v6953, 0
        %v6962 = vsel %vm4181, %v6957, 0
        %6964 = vmatprep.subr.bf16.mxu0 0
        %6965 = vmatpush1.bf16.msra.mxu0 %v6962
        %6966 = vmatprep.subr.bf16.mxu0 0
        %6967 = vmatpush1.bf16.msra.mxu0 0
        %6968 = vmatprep.subr.bf16.mxu0 0
        %6969 = vmatpush1.bf16.msra.mxu0 0
        %6970 = vmatprep.subr.bf16.mxu0 0
        %6971 = vmatpush1.bf16.msra.mxu0 0
        %6972 = vmatprep.subr.bf16.mxu0 0
        %6973 = vmatpush1.bf16.msra.mxu0 0
        %6974 = vmatprep.subr.bf16.mxu0 0
        %6975 = vmatpush1.bf16.msra.mxu0 0
        %6976 = vmatprep.subr.bf16.mxu0 0
        %6977 = vmatpush1.bf16.msra.mxu0 0
        %6978 = vmatprep.subr.bf16.mxu0 0
        %6979 = vmatpush1.bf16.msra.mxu0 0
        %6980 = vmatprep.subr.bf16.mxu0 0
        %6981 = vmatpush1.bf16.msra.mxu0 0
        %6982 = vmatprep.subr.bf16.mxu0 0
        %6983 = vmatpush1.bf16.msra.mxu0 0
        %6984 = vmatprep.subr.bf16.mxu0 0
        %6985 = vmatpush1.bf16.msra.mxu0 0
        %6986 = vmatprep.subr.bf16.mxu0 0
        %6987 = vmatpush1.bf16.msra.mxu0 0
        %6988 = vmatprep.subr.bf16.mxu0 0
        %6989 = vmatpush1.bf16.msra.mxu0 0
        %6990 = vmatprep.subr.bf16.mxu0 0
        %6991 = vmatpush1.bf16.msra.mxu0 0
        %6992 = vmatprep.subr.bf16.mxu0 0
        %6993 = vmatpush1.bf16.msra.mxu0 0
        %6994 = vmatprep.subr.bf16.mxu0 0
        %6995 = vmatpush1.bf16.msra.mxu0 0
        %6996 = vmatprep.mubr.bf16.mxu0 0
        %6997 = vmatmul.mubr.bf16.gmra.mrb[0].mxu0 %v6959
        %v6998 = vpop.f32.mrb[0].mxu0
        %v6999 = vadd.f32 0.0, %v6998
        %v7000 = vpop.f32.mrb[0].mxu0
        %v7001 = vpop.f32.mrb[0].mxu0
        %v7002 = vpop.f32.mrb[0].mxu0
        %7003 = vdwg.mxu0
        %7005 = vrot.lane.b32.xlu0 %v6556, 64
        %v7006 = vpop.permute.xlu0 %7005
        %v7008 = vsel %vm4151, %v6954, 0
        %v7011 = vsel %vm4181, %v7006, 0
        %7013 = vmatprep.subr.bf16.mxu0 0
        %7014 = vmatpush1.bf16.msra.mxu0 %v7011
        %7015 = vmatprep.subr.bf16.mxu0 0
        %7016 = vmatpush1.bf16.msra.mxu0 0
        %7017 = vmatprep.subr.bf16.mxu0 0
        %7018 = vmatpush1.bf16.msra.mxu0 0
        %7019 = vmatprep.subr.bf16.mxu0 0
        %7020 = vmatpush1.bf16.msra.mxu0 0
        %7021 = vmatprep.subr.bf16.mxu0 0
        %7022 = vmatpush1.bf16.msra.mxu0 0
        %7023 = vmatprep.subr.bf16.mxu0 0
        %7024 = vmatpush1.bf16.msra.mxu0 0
        %7025 = vmatprep.subr.bf16.mxu0 0
        %7026 = vmatpush1.bf16.msra.mxu0 0
        %7027 = vmatprep.subr.bf16.mxu0 0
        %7028 = vmatpush1.bf16.msra.mxu0 0
        %7029 = vmatprep.subr.bf16.mxu0 0
        %7030 = vmatpush1.bf16.msra.mxu0 0
        %7031 = vmatprep.subr.bf16.mxu0 0
        %7032 = vmatpush1.bf16.msra.mxu0 0
        %7033 = vmatprep.subr.bf16.mxu0 0
        %7034 = vmatpush1.bf16.msra.mxu0 0
        %7035 = vmatprep.subr.bf16.mxu0 0
        %7036 = vmatpush1.bf16.msra.mxu0 0
        %7037 = vmatprep.subr.bf16.mxu0 0
        %7038 = vmatpush1.bf16.msra.mxu0 0
        %7039 = vmatprep.subr.bf16.mxu0 0
        %7040 = vmatpush1.bf16.msra.mxu0 0
        %7041 = vmatprep.subr.bf16.mxu0 0
        %7042 = vmatpush1.bf16.msra.mxu0 0
        %7043 = vmatprep.subr.bf16.mxu0 0
        %7044 = vmatpush1.bf16.msra.mxu0 0
        %7045 = vmatprep.mubr.bf16.mxu0 0
        %7046 = vmatmul.mubr.bf16.gmra.mrb[0].mxu0 %v7008
        %v7047 = vpop.f32.mrb[0].mxu0
        %v7048 = vadd.f32 0.0, %v7047
        %v7049 = vpop.f32.mrb[0].mxu0
        %v7050 = vpop.f32.mrb[0].mxu0
        %v7051 = vpop.f32.mrb[0].mxu0
        %7052 = vdwg.mxu0
        %v7053 = vpack.c.bf16 %v7048, %v6999
        %v7070 = vunpack.c.l.b16 %v4036
        %v7071 = vunpack.c.h.b16 %v4036
        %v7072 = vunpack.c.l.b16 %v4037
        %v7073 = vunpack.c.h.b16 %v4037
        %v7074 = vunpack.c.l.b16 %v4038
        %v7075 = vunpack.c.h.b16 %v4038
        %v7076 = vunpack.c.l.b16 %v4039
        %v7077 = vunpack.c.h.b16 %v4039
        %v7078 = vunpack.c.l.b16 %v4040
        %v7079 = vunpack.c.h.b16 %v4040
        %v7080 = vunpack.c.l.b16 %v4041
        %v7081 = vunpack.c.h.b16 %v4041
        %v7082 = vunpack.c.l.b16 %v4042
        %v7083 = vunpack.c.h.b16 %v4042
        %v7084 = vunpack.c.l.b16 %v4043
        %v7085 = vunpack.c.h.b16 %v4043
        %v7086 = vunpack.c.l.b16 %v4044
        %v7087 = vunpack.c.h.b16 %v4044
        %v7088 = vunpack.c.l.b16 %v4045
        %v7089 = vunpack.c.h.b16 %v4045
        %v7090 = vunpack.c.l.b16 %v4046
        %v7091 = vunpack.c.h.b16 %v4046
        %v7092 = vunpack.c.l.b16 %v4047
        %v7093 = vunpack.c.h.b16 %v4047
        %v7094 = vunpack.c.l.b16 %v4048
        %v7095 = vunpack.c.h.b16 %v4048
        %v7096 = vunpack.c.l.b16 %v4049
        %v7097 = vunpack.c.h.b16 %v4049
        %v7098 = vunpack.c.l.b16 %v4050
        %v7099 = vunpack.c.h.b16 %v4050
        %v7100 = vunpack.c.l.b16 %v4051
        %v7101 = vunpack.c.h.b16 %v4051
        %v7102 = vpack.c.b16 %v7074, %v7070
        %v7103 = vpack.c.b16 %v7075, %v7071
        %v7104 = vpack.c.b16 %v7076, %v7072
        %v7105 = vpack.c.b16 %v7077, %v7073
        %v7106 = vpack.c.b16 %v7082, %v7078
        %v7107 = vpack.c.b16 %v7083, %v7079
        %v7108 = vpack.c.b16 %v7084, %v7080
        %v7109 = vpack.c.b16 %v7085, %v7081
        %v7110 = vpack.c.b16 %v7090, %v7086
        %v7111 = vpack.c.b16 %v7091, %v7087
        %v7112 = vpack.c.b16 %v7092, %v7088
        %v7113 = vpack.c.b16 %v7093, %v7089
        %v7114 = vpack.c.b16 %v7098, %v7094
        %v7115 = vpack.c.b16 %v7099, %v7095
        %v7116 = vpack.c.b16 %v7100, %v7096
        %v7117 = vpack.c.b16 %v7101, %v7097
        %v7135 = vsel %vm4058, %v7053, 0
        %7137 = vmatprep.subr.bf16.mxu0 %v7103
        %7138 = vmatpush1.bf16.msra.mxu0 %v7102
        %7139 = vmatprep.subr.bf16.mxu0 %v7107
        %7140 = vmatpush1.bf16.msra.mxu0 %v7106
        %7141 = vmatprep.subr.bf16.mxu0 %v7111
        %7142 = vmatpush1.bf16.msra.mxu0 %v7110
        %7143 = vmatprep.subr.bf16.mxu0 %v7115
        %7144 = vmatpush1.bf16.msra.mxu0 %v7114
        %7145 = vmatprep.subr.bf16.mxu0 0
        %7146 = vmatpush1.bf16.msra.mxu0 0
        %7147 = vmatprep.subr.bf16.mxu0 0
        %7148 = vmatpush1.bf16.msra.mxu0 0
        %7149 = vmatprep.subr.bf16.mxu0 0
        %7150 = vmatpush1.bf16.msra.mxu0 0
        %7151 = vmatprep.subr.bf16.mxu0 0
        %7152 = vmatpush1.bf16.msra.mxu0 0
        %7153 = vmatprep.subr.bf16.mxu0 0
        %7154 = vmatpush1.bf16.msra.mxu0 0
        %7155 = vmatprep.subr.bf16.mxu0 0
        %7156 = vmatpush1.bf16.msra.mxu0 0
        %7157 = vmatprep.subr.bf16.mxu0 0
        %7158 = vmatpush1.bf16.msra.mxu0 0
        %7159 = vmatprep.subr.bf16.mxu0 0
        %7160 = vmatpush1.bf16.msra.mxu0 0
        %7161 = vmatprep.subr.bf16.mxu0 0
        %7162 = vmatpush1.bf16.msra.mxu0 0
        %7163 = vmatprep.subr.bf16.mxu0 0
        %7164 = vmatpush1.bf16.msra.mxu0 0
        %7165 = vmatprep.subr.bf16.mxu0 0
        %7166 = vmatpush1.bf16.msra.mxu0 0
        %7167 = vmatprep.subr.bf16.mxu0 0
        %7168 = vmatpush1.bf16.msra.mxu0 0
        %7169 = vmatprep.mubr.bf16.mxu0 0
        %7170 = vmatmul.mubr.bf16.gmra.mrb[0].mxu0 %v7135
        %v7171 = vpop.f32.mrb[0].mxu0
        %v7172 = vadd.f32 0.0, %v7171
        %v7173 = vpop.f32.mrb[0].mxu0
        %v7174 = vadd.f32 0.0, %v7173
        %v7175 = vpop.f32.mrb[0].mxu0
        %v7176 = vadd.f32 0.0, %v7175
        %v7177 = vpop.f32.mrb[0].mxu0
        %v7178 = vadd.f32 0.0, %v7177
        %7179 = vdwg.mxu0
        %7180 = vmatprep.subr.bf16.mxu0 %v7105
        %7181 = vmatpush1.bf16.msra.mxu0 %v7104
        %7182 = vmatprep.subr.bf16.mxu0 %v7109
        %7183 = vmatpush1.bf16.msra.mxu0 %v7108
        %7184 = vmatprep.subr.bf16.mxu0 %v7113
        %7185 = vmatpush1.bf16.msra.mxu0 %v7112
        %7186 = vmatprep.subr.bf16.mxu0 %v7117
        %7187 = vmatpush1.bf16.msra.mxu0 %v7116
        %7188 = vmatprep.subr.bf16.mxu0 0
        %7189 = vmatpush1.bf16.msra.mxu0 0
        %7190 = vmatprep.subr.bf16.mxu0 0
        %7191 = vmatpush1.bf16.msra.mxu0 0
        %7192 = vmatprep.subr.bf16.mxu0 0
        %7193 = vmatpush1.bf16.msra.mxu0 0
        %7194 = vmatprep.subr.bf16.mxu0 0
        %7195 = vmatpush1.bf16.msra.mxu0 0
        %7196 = vmatprep.subr.bf16.mxu0 0
        %7197 = vmatpush1.bf16.msra.mxu0 0
        %7198 = vmatprep.subr.bf16.mxu0 0
        %7199 = vmatpush1.bf16.msra.mxu0 0
        %7200 = vmatprep.subr.bf16.mxu0 0
        %7201 = vmatpush1.bf16.msra.mxu0 0
        %7202 = vmatprep.subr.bf16.mxu0 0
        %7203 = vmatpush1.bf16.msra.mxu0 0
        %7204 = vmatprep.subr.bf16.mxu0 0
        %7205 = vmatpush1.bf16.msra.mxu0 0
        %7206 = vmatprep.subr.bf16.mxu0 0
        %7207 = vmatpush1.bf16.msra.mxu0 0
        %7208 = vmatprep.subr.bf16.mxu0 0
        %7209 = vmatpush1.bf16.msra.mxu0 0
        %7210 = vmatprep.subr.bf16.mxu0 0
        %7211 = vmatpush1.bf16.msra.mxu0 0
        %7212 = vmatprep.mubr.bf16.mxu0 0
        %7213 = vmatmul.mubr.bf16.gmra.mrb[0].mxu0 %v7135
        %v7214 = vpop.f32.mrb[0].mxu0
        %v7215 = vadd.f32 0.0, %v7214
        %v7216 = vpop.f32.mrb[0].mxu0
        %v7217 = vadd.f32 0.0, %v7216
        %v7218 = vpop.f32.mrb[0].mxu0
        %v7219 = vadd.f32 0.0, %v7218
        %v7220 = vpop.f32.mrb[0].mxu0
        %v7221 = vadd.f32 0.0, %v7220
        %7222 = vdwg.mxu0
        %v7223 = vadd.f32 %v6819, %v7172
        %v7224 = vadd.f32 %v6820, %v7174
        %v7225 = vadd.f32 %v6821, %v7215
        %v7226 = vadd.f32 %v6822, %v7217
        %v7227 = vadd.f32 %v6823, %v7176
        %v7228 = vadd.f32 %v6824, %v7178
        %v7229 = vadd.f32 %v6825, %v7219
        %v7230 = vadd.f32 %v6826, %v7221
        %v7231 = vadd.f32 %v913, %v7223
        %v7232 = vadd.f32 %v914, %v7224
        %v7233 = vadd.f32 %v915, %v7225
        %v7234 = vadd.f32 %v916, %v7226
        %v7235 = vadd.f32 %v917, %v7227
        %v7236 = vadd.f32 %v918, %v7228
        %v7237 = vadd.f32 %v919, %v7229
        %v7238 = vadd.f32 %v920, %v7230
        %v7239 = vld [vmem:[%s743] sm:$0xf]
        %v7241 = vlaneseq
        %v7242 = vshrl.u32 %v7241, 7
        %v7243 = vsub.s32 0, %v7242
        %v7244 = vrot.slane %v7239, %v7243
        %v7245 = vlaneseq
        %v7246 = vshrl.u32 %v7245, 7
        %v7247 = vsub.s32 1, %v7246
        %v7248 = vrot.slane %v7239, %v7247
        %v7249 = vlaneseq
        %v7250 = vshrl.u32 %v7249, 7
        %v7251 = vsub.s32 2, %v7250
        %v7252 = vrot.slane %v7239, %v7251
        %v7253 = vlaneseq
        %v7254 = vshrl.u32 %v7253, 7
        %v7255 = vsub.s32 3, %v7254
        %v7256 = vrot.slane %v7239, %v7255
        %v7261 = vadd.f32 %v7231, %v7244
        %v7262 = vadd.f32 %v7232, %v7248
        %v7263 = vadd.f32 %v7233, %v7252
        %v7264 = vadd.f32 %v7234, %v7256
        %v7265 = vadd.f32 %v7235, %v7244
        %v7266 = vadd.f32 %v7236, %v7248
        %v7267 = vadd.f32 %v7237, %v7252
        %v7268 = vadd.f32 %v7238, %v7256
        %v7269 = vld [vmem:[%s752] sm:$0xf]
        %v7270 = vld [vmem:[%s761] sm:$0xf]
        %v7271 = vadd.f32 %v7261, %v7262
        %v7272 = vadd.f32 %v7271, %v7263
        %v7273 = vadd.f32 %v7272, %v7264
        %7274 = vadd.xlane.f32.xlu0 %v7273
        %v7275 = vpop.xlane.xlu0 %7274
        %v7276 = vadd.f32 %v7265, %v7266
        %v7277 = vadd.f32 %v7276, %v7267
        %v7278 = vadd.f32 %v7277, %v7268
        %7279 = vadd.xlane.f32.xlu0 %v7278
        %v7280 = vpop.xlane.xlu0 %7279
        %v7281 = vmul.f32 %v7275, %v935
        %v7282 = vmul.f32 %v7280, %v935
        %v7283 = vsub.f32 %v7261, %v7281
        %v7284 = vsub.f32 %v7262, %v7281
        %v7285 = vsub.f32 %v7263, %v7281
        %v7286 = vsub.f32 %v7264, %v7281
        %v7287 = vsub.f32 %v7265, %v7282
        %v7288 = vsub.f32 %v7266, %v7282
        %v7289 = vsub.f32 %v7267, %v7282
        %v7290 = vsub.f32 %v7268, %v7282
        %v7291 = vmul.f32 %v7283, %v7283
        %v7292 = vmul.f32 %v7284, %v7284
        %v7293 = vmul.f32 %v7285, %v7285
        %v7294 = vmul.f32 %v7286, %v7286
        %v7295 = vmul.f32 %v7287, %v7287
        %v7296 = vmul.f32 %v7288, %v7288
        %v7297 = vmul.f32 %v7289, %v7289
        %v7298 = vmul.f32 %v7290, %v7290
        %v7299 = vadd.f32 %v7291, %v7292
        %v7300 = vadd.f32 %v7299, %v7293
        %v7301 = vadd.f32 %v7300, %v7294
        %7302 = vadd.xlane.f32.xlu0 %v7301
        %v7303 = vpop.xlane.xlu0 %7302
        %v7304 = vadd.f32 %v7295, %v7296
        %v7305 = vadd.f32 %v7304, %v7297
        %v7306 = vadd.f32 %v7305, %v7298
        %7307 = vadd.xlane.f32.xlu0 %v7306
        %v7308 = vpop.xlane.xlu0 %7307
        %v7309 = vmul.f32 %v7303, %v935
        %v7310 = vmul.f32 %v7308, %v935
        %v7311 = vadd.f32 %v7309, 1e-05
        %v7312 = vadd.f32 %v7310, 1e-05
        %v7313 = vrsqrt.pop %v7311
        %v7314 = vrsqrt.pop %v7312
        %v7315 = vmul.f32 %v7283, %v7313
        %v7316 = vmul.f32 %v7284, %v7313
        %v7317 = vmul.f32 %v7285, %v7313
        %v7318 = vmul.f32 %v7286, %v7313
        %v7319 = vmul.f32 %v7287, %v7314
        %v7320 = vmul.f32 %v7288, %v7314
        %v7321 = vmul.f32 %v7289, %v7314
        %v7322 = vmul.f32 %v7290, %v7314
        %v7324 = vlaneseq
        %v7325 = vshrl.u32 %v7324, 7
        %v7326 = vsub.s32 0, %v7325
        %v7327 = vrot.slane %v7269, %v7326
        %v7328 = vlaneseq
        %v7329 = vshrl.u32 %v7328, 7
        %v7330 = vsub.s32 1, %v7329
        %v7331 = vrot.slane %v7269, %v7330
        %v7332 = vlaneseq
        %v7333 = vshrl.u32 %v7332, 7
        %v7334 = vsub.s32 2, %v7333
        %v7335 = vrot.slane %v7269, %v7334
        %v7336 = vlaneseq
        %v7337 = vshrl.u32 %v7336, 7
        %v7338 = vsub.s32 3, %v7337
        %v7339 = vrot.slane %v7269, %v7338
        %v7344 = vmul.f32 %v7315, %v7327
        %v7345 = vmul.f32 %v7316, %v7331
        %v7346 = vmul.f32 %v7317, %v7335
        %v7347 = vmul.f32 %v7318, %v7339
        %v7348 = vmul.f32 %v7319, %v7327
        %v7349 = vmul.f32 %v7320, %v7331
        %v7350 = vmul.f32 %v7321, %v7335
        %v7351 = vmul.f32 %v7322, %v7339
        %v7353 = vlaneseq
        %v7354 = vshrl.u32 %v7353, 7
        %v7355 = vsub.s32 0, %v7354
        %v7356 = vrot.slane %v7270, %v7355
        %v7357 = vlaneseq
        %v7358 = vshrl.u32 %v7357, 7
        %v7359 = vsub.s32 1, %v7358
        %v7360 = vrot.slane %v7270, %v7359
        %v7361 = vlaneseq
        %v7362 = vshrl.u32 %v7361, 7
        %v7363 = vsub.s32 2, %v7362
        %v7364 = vrot.slane %v7270, %v7363
        %v7365 = vlaneseq
        %v7366 = vshrl.u32 %v7365, 7
        %v7367 = vsub.s32 3, %v7366
        %v7368 = vrot.slane %v7270, %v7367
        %v7373 = vadd.f32 %v7344, %v7356
        %v7374 = vadd.f32 %v7345, %v7360
        %v7375 = vadd.f32 %v7346, %v7364
        %v7376 = vadd.f32 %v7347, %v7368
        %v7377 = vadd.f32 %v7348, %v7356
        %v7378 = vadd.f32 %v7349, %v7360
        %v7379 = vadd.f32 %v7350, %v7364
        %v7380 = vadd.f32 %v7351, %v7368
        %v7381 = vpack.c.bf16 %v7377, %v7373
        %v7382 = vpack.c.bf16 %v7378, %v7374
        %v7383 = vpack.c.bf16 %v7379, %v7375
        %v7384 = vpack.c.bf16 %v7380, %v7376
        %v7385 = vld [vmem:[%s770] sm:$0xff]
        %v7386 = vld [vmem:[%s770 + $0x8] sm:$0xff]
        %v7387 = vld [vmem:[%s770 + $0x10] sm:$0xff]
        %v7388 = vld [vmem:[%s770 + $0x18] sm:$0xff]
        %v7389 = vld [vmem:[%s770 + $0x20] sm:$0xff]
        %v7390 = vld [vmem:[%s770 + $0x28] sm:$0xff]
        %v7391 = vld [vmem:[%s770 + $0x30] sm:$0xff]
        %v7392 = vld [vmem:[%s770 + $0x38] sm:$0xff]
        %v7393 = vld [vmem:[%s770 + $0x40] sm:$0xff]
        %v7394 = vld [vmem:[%s770 + $0x48] sm:$0xff]
        %v7395 = vld [vmem:[%s770 + $0x50] sm:$0xff]
        %v7396 = vld [vmem:[%s770 + $0x58] sm:$0xff]
        %v7397 = vld [vmem:[%s770 + $0x60] sm:$0xff]
        %v7398 = vld [vmem:[%s770 + $0x68] sm:$0xff]
        %v7399 = vld [vmem:[%s770 + $0x70] sm:$0xff]
        %v7400 = vld [vmem:[%s770 + $0x78] sm:$0xff]
        %v7401 = vld [vmem:[%s770 + $0x80] sm:$0xff]
        %v7402 = vld [vmem:[%s770 + $0x88] sm:$0xff]
        %v7403 = vld [vmem:[%s770 + $0x90] sm:$0xff]
        %v7404 = vld [vmem:[%s770 + $0x98] sm:$0xff]
        %v7405 = vld [vmem:[%s770 + $0xa0] sm:$0xff]
        %v7406 = vld [vmem:[%s770 + $0xa8] sm:$0xff]
        %v7407 = vld [vmem:[%s770 + $0xb0] sm:$0xff]
        %v7408 = vld [vmem:[%s770 + $0xb8] sm:$0xff]
        %v7409 = vld [vmem:[%s770 + $0xc0] sm:$0xff]
        %v7410 = vld [vmem:[%s770 + $0xc8] sm:$0xff]
        %v7411 = vld [vmem:[%s770 + $0xd0] sm:$0xff]
        %v7412 = vld [vmem:[%s770 + $0xd8] sm:$0xff]
        %v7413 = vld [vmem:[%s770 + $0xe0] sm:$0xff]
        %v7414 = vld [vmem:[%s770 + $0xe8] sm:$0xff]
        %v7415 = vld [vmem:[%s770 + $0xf0] sm:$0xff]
        %v7416 = vld [vmem:[%s770 + $0xf8] sm:$0xff]
        %v7417 = vld [vmem:[%s770 + $0x100] sm:$0xff]
        %v7418 = vld [vmem:[%s770 + $0x108] sm:$0xff]
        %v7419 = vld [vmem:[%s770 + $0x110] sm:$0xff]
        %v7420 = vld [vmem:[%s770 + $0x118] sm:$0xff]
        %v7421 = vld [vmem:[%s770 + $0x120] sm:$0xff]
        %v7422 = vld [vmem:[%s770 + $0x128] sm:$0xff]
        %v7423 = vld [vmem:[%s770 + $0x130] sm:$0xff]
        %v7424 = vld [vmem:[%s770 + $0x138] sm:$0xff]
        %v7425 = vld [vmem:[%s770 + $0x140] sm:$0xff]
        %v7426 = vld [vmem:[%s770 + $0x148] sm:$0xff]
        %v7427 = vld [vmem:[%s770 + $0x150] sm:$0xff]
        %v7428 = vld [vmem:[%s770 + $0x158] sm:$0xff]
        %v7429 = vld [vmem:[%s770 + $0x160] sm:$0xff]
        %v7430 = vld [vmem:[%s770 + $0x168] sm:$0xff]
        %v7431 = vld [vmem:[%s770 + $0x170] sm:$0xff]
        %v7432 = vld [vmem:[%s770 + $0x178] sm:$0xff]
        %v7433 = vld [vmem:[%s770 + $0x180] sm:$0xff]
        %v7434 = vld [vmem:[%s770 + $0x188] sm:$0xff]
        %v7435 = vld [vmem:[%s770 + $0x190] sm:$0xff]
        %v7436 = vld [vmem:[%s770 + $0x198] sm:$0xff]
        %v7437 = vld [vmem:[%s770 + $0x1a0] sm:$0xff]
        %v7438 = vld [vmem:[%s770 + $0x1a8] sm:$0xff]
        %v7439 = vld [vmem:[%s770 + $0x1b0] sm:$0xff]
        %v7440 = vld [vmem:[%s770 + $0x1b8] sm:$0xff]
        %v7441 = vld [vmem:[%s770 + $0x1c0] sm:$0xff]
        %v7442 = vld [vmem:[%s770 + $0x1c8] sm:$0xff]
        %v7443 = vld [vmem:[%s770 + $0x1d0] sm:$0xff]
        %v7444 = vld [vmem:[%s770 + $0x1d8] sm:$0xff]
        %v7445 = vld [vmem:[%s770 + $0x1e0] sm:$0xff]
        %v7446 = vld [vmem:[%s770 + $0x1e8] sm:$0xff]
        %v7447 = vld [vmem:[%s770 + $0x1f0] sm:$0xff]
        %v7448 = vld [vmem:[%s770 + $0x1f8] sm:$0xff]
        %v7449 = vld [vmem:[%s770 + $0x200] sm:$0xff]
        %v7450 = vld [vmem:[%s770 + $0x208] sm:$0xff]
        %v7451 = vld [vmem:[%s770 + $0x210] sm:$0xff]
        %v7452 = vld [vmem:[%s770 + $0x218] sm:$0xff]
        %v7453 = vld [vmem:[%s770 + $0x220] sm:$0xff]
        %v7454 = vld [vmem:[%s770 + $0x228] sm:$0xff]
        %v7455 = vld [vmem:[%s770 + $0x230] sm:$0xff]
        %v7456 = vld [vmem:[%s770 + $0x238] sm:$0xff]
        %v7457 = vld [vmem:[%s770 + $0x240] sm:$0xff]
        %v7458 = vld [vmem:[%s770 + $0x248] sm:$0xff]
        %v7459 = vld [vmem:[%s770 + $0x250] sm:$0xff]
        %v7460 = vld [vmem:[%s770 + $0x258] sm:$0xff]
        %v7461 = vld [vmem:[%s770 + $0x260] sm:$0xff]
        %v7462 = vld [vmem:[%s770 + $0x268] sm:$0xff]
        %v7463 = vld [vmem:[%s770 + $0x270] sm:$0xff]
        %v7464 = vld [vmem:[%s770 + $0x278] sm:$0xff]
        %v7465 = vld [vmem:[%s770 + $0x280] sm:$0xff]
        %v7466 = vld [vmem:[%s770 + $0x288] sm:$0xff]
        %v7467 = vld [vmem:[%s770 + $0x290] sm:$0xff]
        %v7468 = vld [vmem:[%s770 + $0x298] sm:$0xff]
        %v7469 = vld [vmem:[%s770 + $0x2a0] sm:$0xff]
        %v7470 = vld [vmem:[%s770 + $0x2a8] sm:$0xff]
        %v7471 = vld [vmem:[%s770 + $0x2b0] sm:$0xff]
        %v7472 = vld [vmem:[%s770 + $0x2b8] sm:$0xff]
        %v7473 = vld [vmem:[%s770 + $0x2c0] sm:$0xff]
        %v7474 = vld [vmem:[%s770 + $0x2c8] sm:$0xff]
        %v7475 = vld [vmem:[%s770 + $0x2d0] sm:$0xff]
        %v7476 = vld [vmem:[%s770 + $0x2d8] sm:$0xff]
        %v7477 = vld [vmem:[%s770 + $0x2e0] sm:$0xff]
        %v7478 = vld [vmem:[%s770 + $0x2e8] sm:$0xff]
        %v7479 = vld [vmem:[%s770 + $0x2f0] sm:$0xff]
        %v7480 = vld [vmem:[%s770 + $0x2f8] sm:$0xff]
        %v7481 = vld [vmem:[%s770 + $0x300] sm:$0xff]
        %v7482 = vld [vmem:[%s770 + $0x308] sm:$0xff]
        %v7483 = vld [vmem:[%s770 + $0x310] sm:$0xff]
        %v7484 = vld [vmem:[%s770 + $0x318] sm:$0xff]
        %v7485 = vld [vmem:[%s770 + $0x320] sm:$0xff]
        %v7486 = vld [vmem:[%s770 + $0x328] sm:$0xff]
        %v7487 = vld [vmem:[%s770 + $0x330] sm:$0xff]
        %v7488 = vld [vmem:[%s770 + $0x338] sm:$0xff]
        %v7489 = vld [vmem:[%s770 + $0x340] sm:$0xff]
        %v7490 = vld [vmem:[%s770 + $0x348] sm:$0xff]
        %v7491 = vld [vmem:[%s770 + $0x350] sm:$0xff]
        %v7492 = vld [vmem:[%s770 + $0x358] sm:$0xff]
        %v7493 = vld [vmem:[%s770 + $0x360] sm:$0xff]
        %v7494 = vld [vmem:[%s770 + $0x368] sm:$0xff]
        %v7495 = vld [vmem:[%s770 + $0x370] sm:$0xff]
        %v7496 = vld [vmem:[%s770 + $0x378] sm:$0xff]
        %v7497 = vld [vmem:[%s770 + $0x380] sm:$0xff]
        %v7498 = vld [vmem:[%s770 + $0x388] sm:$0xff]
        %v7499 = vld [vmem:[%s770 + $0x390] sm:$0xff]
        %v7500 = vld [vmem:[%s770 + $0x398] sm:$0xff]
        %v7501 = vld [vmem:[%s770 + $0x3a0] sm:$0xff]
        %v7502 = vld [vmem:[%s770 + $0x3a8] sm:$0xff]
        %v7503 = vld [vmem:[%s770 + $0x3b0] sm:$0xff]
        %v7504 = vld [vmem:[%s770 + $0x3b8] sm:$0xff]
        %v7505 = vld [vmem:[%s770 + $0x3c0] sm:$0xff]
        %v7506 = vld [vmem:[%s770 + $0x3c8] sm:$0xff]
        %v7507 = vld [vmem:[%s770 + $0x3d0] sm:$0xff]
        %v7508 = vld [vmem:[%s770 + $0x3d8] sm:$0xff]
        %v7509 = vld [vmem:[%s770 + $0x3e0] sm:$0xff]
        %v7510 = vld [vmem:[%s770 + $0x3e8] sm:$0xff]
        %v7511 = vld [vmem:[%s770 + $0x3f0] sm:$0xff]
        %v7512 = vld [vmem:[%s770 + $0x3f8] sm:$0xff]
        %v7513 = vld [vmem:[%s779] sm:$0xf]
        %v7515 = vlaneseq
        %v7516 = vshrl.u32 %v7515, 7
        %v7517 = vsub.s32 0, %v7516
        %v7518 = vrot.slane %v7513, %v7517
        %v7519 = vlaneseq
        %v7520 = vshrl.u32 %v7519, 7
        %v7521 = vsub.s32 1, %v7520
        %v7522 = vrot.slane %v7513, %v7521
        %v7523 = vlaneseq
        %v7524 = vshrl.u32 %v7523, 7
        %v7525 = vsub.s32 2, %v7524
        %v7526 = vrot.slane %v7513, %v7525
        %v7527 = vlaneseq
        %v7528 = vshrl.u32 %v7527, 7
        %v7529 = vsub.s32 3, %v7528
        %v7530 = vrot.slane %v7513, %v7529
        %v7663 = vunpack.c.l.b16 %v7385
        %v7664 = vunpack.c.h.b16 %v7385
        %v7665 = vunpack.c.l.b16 %v7386
        %v7666 = vunpack.c.h.b16 %v7386
        %v7667 = vunpack.c.l.b16 %v7387
        %v7668 = vunpack.c.h.b16 %v7387
        %v7669 = vunpack.c.l.b16 %v7388
        %v7670 = vunpack.c.h.b16 %v7388
        %v7671 = vunpack.c.l.b16 %v7389
        %v7672 = vunpack.c.h.b16 %v7389
        %v7673 = vunpack.c.l.b16 %v7390
        %v7674 = vunpack.c.h.b16 %v7390
        %v7675 = vunpack.c.l.b16 %v7391
        %v7676 = vunpack.c.h.b16 %v7391
        %v7677 = vunpack.c.l.b16 %v7392
        %v7678 = vunpack.c.h.b16 %v7392
        %v7679 = vunpack.c.l.b16 %v7393
        %v7680 = vunpack.c.h.b16 %v7393
        %v7681 = vunpack.c.l.b16 %v7394
        %v7682 = vunpack.c.h.b16 %v7394
        %v7683 = vunpack.c.l.b16 %v7395
        %v7684 = vunpack.c.h.b16 %v7395
        %v7685 = vunpack.c.l.b16 %v7396
        %v7686 = vunpack.c.h.b16 %v7396
        %v7687 = vunpack.c.l.b16 %v7397
        %v7688 = vunpack.c.h.b16 %v7397
        %v7689 = vunpack.c.l.b16 %v7398
        %v7690 = vunpack.c.h.b16 %v7398
        %v7691 = vunpack.c.l.b16 %v7399
        %v7692 = vunpack.c.h.b16 %v7399
        %v7693 = vunpack.c.l.b16 %v7400
        %v7694 = vunpack.c.h.b16 %v7400
        %v7695 = vunpack.c.l.b16 %v7401
        %v7696 = vunpack.c.h.b16 %v7401
        %v7697 = vunpack.c.l.b16 %v7402
        %v7698 = vunpack.c.h.b16 %v7402
        %v7699 = vunpack.c.l.b16 %v7403
        %v7700 = vunpack.c.h.b16 %v7403
        %v7701 = vunpack.c.l.b16 %v7404
        %v7702 = vunpack.c.h.b16 %v7404
        %v7703 = vunpack.c.l.b16 %v7405
        %v7704 = vunpack.c.h.b16 %v7405
        %v7705 = vunpack.c.l.b16 %v7406
        %v7706 = vunpack.c.h.b16 %v7406
        %v7707 = vunpack.c.l.b16 %v7407
        %v7708 = vunpack.c.h.b16 %v7407
        %v7709 = vunpack.c.l.b16 %v7408
        %v7710 = vunpack.c.h.b16 %v7408
        %v7711 = vunpack.c.l.b16 %v7409
        %v7712 = vunpack.c.h.b16 %v7409
        %v7713 = vunpack.c.l.b16 %v7410
        %v7714 = vunpack.c.h.b16 %v7410
        %v7715 = vunpack.c.l.b16 %v7411
        %v7716 = vunpack.c.h.b16 %v7411
        %v7717 = vunpack.c.l.b16 %v7412
        %v7718 = vunpack.c.h.b16 %v7412
        %v7719 = vunpack.c.l.b16 %v7413
        %v7720 = vunpack.c.h.b16 %v7413
        %v7721 = vunpack.c.l.b16 %v7414
        %v7722 = vunpack.c.h.b16 %v7414
        %v7723 = vunpack.c.l.b16 %v7415
        %v7724 = vunpack.c.h.b16 %v7415
        %v7725 = vunpack.c.l.b16 %v7416
        %v7726 = vunpack.c.h.b16 %v7416
        %v7727 = vunpack.c.l.b16 %v7417
        %v7728 = vunpack.c.h.b16 %v7417
        %v7729 = vunpack.c.l.b16 %v7418
        %v7730 = vunpack.c.h.b16 %v7418
        %v7731 = vunpack.c.l.b16 %v7419
        %v7732 = vunpack.c.h.b16 %v7419
        %v7733 = vunpack.c.l.b16 %v7420
        %v7734 = vunpack.c.h.b16 %v7420
        %v7735 = vunpack.c.l.b16 %v7421
        %v7736 = vunpack.c.h.b16 %v7421
        %v7737 = vunpack.c.l.b16 %v7422
        %v7738 = vunpack.c.h.b16 %v7422
        %v7739 = vunpack.c.l.b16 %v7423
        %v7740 = vunpack.c.h.b16 %v7423
        %v7741 = vunpack.c.l.b16 %v7424
        %v7742 = vunpack.c.h.b16 %v7424
        %v7743 = vunpack.c.l.b16 %v7425
        %v7744 = vunpack.c.h.b16 %v7425
        %v7745 = vunpack.c.l.b16 %v7426
        %v7746 = vunpack.c.h.b16 %v7426
        %v7747 = vunpack.c.l.b16 %v7427
        %v7748 = vunpack.c.h.b16 %v7427
        %v7749 = vunpack.c.l.b16 %v7428
        %v7750 = vunpack.c.h.b16 %v7428
        %v7751 = vunpack.c.l.b16 %v7429
        %v7752 = vunpack.c.h.b16 %v7429
        %v7753 = vunpack.c.l.b16 %v7430
        %v7754 = vunpack.c.h.b16 %v7430
        %v7755 = vunpack.c.l.b16 %v7431
        %v7756 = vunpack.c.h.b16 %v7431
        %v7757 = vunpack.c.l.b16 %v7432
        %v7758 = vunpack.c.h.b16 %v7432
        %v7759 = vunpack.c.l.b16 %v7433
        %v7760 = vunpack.c.h.b16 %v7433
        %v7761 = vunpack.c.l.b16 %v7434
        %v7762 = vunpack.c.h.b16 %v7434
        %v7763 = vunpack.c.l.b16 %v7435
        %v7764 = vunpack.c.h.b16 %v7435
        %v7765 = vunpack.c.l.b16 %v7436
        %v7766 = vunpack.c.h.b16 %v7436
        %v7767 = vunpack.c.l.b16 %v7437
        %v7768 = vunpack.c.h.b16 %v7437
        %v7769 = vunpack.c.l.b16 %v7438
        %v7770 = vunpack.c.h.b16 %v7438
        %v7771 = vunpack.c.l.b16 %v7439
        %v7772 = vunpack.c.h.b16 %v7439
        %v7773 = vunpack.c.l.b16 %v7440
        %v7774 = vunpack.c.h.b16 %v7440
        %v7775 = vunpack.c.l.b16 %v7441
        %v7776 = vunpack.c.h.b16 %v7441
        %v7777 = vunpack.c.l.b16 %v7442
        %v7778 = vunpack.c.h.b16 %v7442
        %v7779 = vunpack.c.l.b16 %v7443
        %v7780 = vunpack.c.h.b16 %v7443
        %v7781 = vunpack.c.l.b16 %v7444
        %v7782 = vunpack.c.h.b16 %v7444
        %v7783 = vunpack.c.l.b16 %v7445
        %v7784 = vunpack.c.h.b16 %v7445
        %v7785 = vunpack.c.l.b16 %v7446
        %v7786 = vunpack.c.h.b16 %v7446
        %v7787 = vunpack.c.l.b16 %v7447
        %v7788 = vunpack.c.h.b16 %v7447
        %v7789 = vunpack.c.l.b16 %v7448
        %v7790 = vunpack.c.h.b16 %v7448
        %v7791 = vunpack.c.l.b16 %v7449
        %v7792 = vunpack.c.h.b16 %v7449
        %v7793 = vunpack.c.l.b16 %v7450
        %v7794 = vunpack.c.h.b16 %v7450
        %v7795 = vunpack.c.l.b16 %v7451
        %v7796 = vunpack.c.h.b16 %v7451
        %v7797 = vunpack.c.l.b16 %v7452
        %v7798 = vunpack.c.h.b16 %v7452
        %v7799 = vunpack.c.l.b16 %v7453
        %v7800 = vunpack.c.h.b16 %v7453
        %v7801 = vunpack.c.l.b16 %v7454
        %v7802 = vunpack.c.h.b16 %v7454
        %v7803 = vunpack.c.l.b16 %v7455
        %v7804 = vunpack.c.h.b16 %v7455
        %v7805 = vunpack.c.l.b16 %v7456
        %v7806 = vunpack.c.h.b16 %v7456
        %v7807 = vunpack.c.l.b16 %v7457
        %v7808 = vunpack.c.h.b16 %v7457
        %v7809 = vunpack.c.l.b16 %v7458
        %v7810 = vunpack.c.h.b16 %v7458
        %v7811 = vunpack.c.l.b16 %v7459
        %v7812 = vunpack.c.h.b16 %v7459
        %v7813 = vunpack.c.l.b16 %v7460
        %v7814 = vunpack.c.h.b16 %v7460
        %v7815 = vunpack.c.l.b16 %v7461
        %v7816 = vunpack.c.h.b16 %v7461
        %v7817 = vunpack.c.l.b16 %v7462
        %v7818 = vunpack.c.h.b16 %v7462
        %v7819 = vunpack.c.l.b16 %v7463
        %v7820 = vunpack.c.h.b16 %v7463
        %v7821 = vunpack.c.l.b16 %v7464
        %v7822 = vunpack.c.h.b16 %v7464
        %v7823 = vunpack.c.l.b16 %v7465
        %v7824 = vunpack.c.h.b16 %v7465
        %v7825 = vunpack.c.l.b16 %v7466
        %v7826 = vunpack.c.h.b16 %v7466
        %v7827 = vunpack.c.l.b16 %v7467
        %v7828 = vunpack.c.h.b16 %v7467
        %v7829 = vunpack.c.l.b16 %v7468
        %v7830 = vunpack.c.h.b16 %v7468
        %v7831 = vunpack.c.l.b16 %v7469
        %v7832 = vunpack.c.h.b16 %v7469
        %v7833 = vunpack.c.l.b16 %v7470
        %v7834 = vunpack.c.h.b16 %v7470
        %v7835 = vunpack.c.l.b16 %v7471
        %v7836 = vunpack.c.h.b16 %v7471
        %v7837 = vunpack.c.l.b16 %v7472
        %v7838 = vunpack.c.h.b16 %v7472
        %v7839 = vunpack.c.l.b16 %v7473
        %v7840 = vunpack.c.h.b16 %v7473
        %v7841 = vunpack.c.l.b16 %v7474
        %v7842 = vunpack.c.h.b16 %v7474
        %v7843 = vunpack.c.l.b16 %v7475
        %v7844 = vunpack.c.h.b16 %v7475
        %v7845 = vunpack.c.l.b16 %v7476
        %v7846 = vunpack.c.h.b16 %v7476
        %v7847 = vunpack.c.l.b16 %v7477
        %v7848 = vunpack.c.h.b16 %v7477
        %v7849 = vunpack.c.l.b16 %v7478
        %v7850 = vunpack.c.h.b16 %v7478
        %v7851 = vunpack.c.l.b16 %v7479
        %v7852 = vunpack.c.h.b16 %v7479
        %v7853 = vunpack.c.l.b16 %v7480
        %v7854 = vunpack.c.h.b16 %v7480
        %v7855 = vunpack.c.l.b16 %v7481
        %v7856 = vunpack.c.h.b16 %v7481
        %v7857 = vunpack.c.l.b16 %v7482
        %v7858 = vunpack.c.h.b16 %v7482
        %v7859 = vunpack.c.l.b16 %v7483
        %v7860 = vunpack.c.h.b16 %v7483
        %v7861 = vunpack.c.l.b16 %v7484
        %v7862 = vunpack.c.h.b16 %v7484
        %v7863 = vunpack.c.l.b16 %v7485
        %v7864 = vunpack.c.h.b16 %v7485
        %v7865 = vunpack.c.l.b16 %v7486
        %v7866 = vunpack.c.h.b16 %v7486
        %v7867 = vunpack.c.l.b16 %v7487
        %v7868 = vunpack.c.h.b16 %v7487
        %v7869 = vunpack.c.l.b16 %v7488
        %v7870 = vunpack.c.h.b16 %v7488
        %v7871 = vunpack.c.l.b16 %v7489
        %v7872 = vunpack.c.h.b16 %v7489
        %v7873 = vunpack.c.l.b16 %v7490
        %v7874 = vunpack.c.h.b16 %v7490
        %v7875 = vunpack.c.l.b16 %v7491
        %v7876 = vunpack.c.h.b16 %v7491
        %v7877 = vunpack.c.l.b16 %v7492
        %v7878 = vunpack.c.h.b16 %v7492
        %v7879 = vunpack.c.l.b16 %v7493
        %v7880 = vunpack.c.h.b16 %v7493
        %v7881 = vunpack.c.l.b16 %v7494
        %v7882 = vunpack.c.h.b16 %v7494
        %v7883 = vunpack.c.l.b16 %v7495
        %v7884 = vunpack.c.h.b16 %v7495
        %v7885 = vunpack.c.l.b16 %v7496
        %v7886 = vunpack.c.h.b16 %v7496
        %v7887 = vunpack.c.l.b16 %v7497
        %v7888 = vunpack.c.h.b16 %v7497
        %v7889 = vunpack.c.l.b16 %v7498
        %v7890 = vunpack.c.h.b16 %v7498
        %v7891 = vunpack.c.l.b16 %v7499
        %v7892 = vunpack.c.h.b16 %v7499
        %v7893 = vunpack.c.l.b16 %v7500
        %v7894 = vunpack.c.h.b16 %v7500
        %v7895 = vunpack.c.l.b16 %v7501
        %v7896 = vunpack.c.h.b16 %v7501
        %v7897 = vunpack.c.l.b16 %v7502
        %v7898 = vunpack.c.h.b16 %v7502
        %v7899 = vunpack.c.l.b16 %v7503
        %v7900 = vunpack.c.h.b16 %v7503
        %v7901 = vunpack.c.l.b16 %v7504
        %v7902 = vunpack.c.h.b16 %v7504
        %v7903 = vunpack.c.l.b16 %v7505
        %v7904 = vunpack.c.h.b16 %v7505
        %v7905 = vunpack.c.l.b16 %v7506
        %v7906 = vunpack.c.h.b16 %v7506
        %v7907 = vunpack.c.l.b16 %v7507
        %v7908 = vunpack.c.h.b16 %v7507
        %v7909 = vunpack.c.l.b16 %v7508
        %v7910 = vunpack.c.h.b16 %v7508
        %v7911 = vunpack.c.l.b16 %v7509
        %v7912 = vunpack.c.h.b16 %v7509
        %v7913 = vunpack.c.l.b16 %v7510
        %v7914 = vunpack.c.h.b16 %v7510
        %v7915 = vunpack.c.l.b16 %v7511
        %v7916 = vunpack.c.h.b16 %v7511
        %v7917 = vunpack.c.l.b16 %v7512
        %v7918 = vunpack.c.h.b16 %v7512
        %v7919 = vpack.c.b16 %v7667, %v7663
        %v7920 = vpack.c.b16 %v7668, %v7664
        %v7921 = vpack.c.b16 %v7669, %v7665
        %v7922 = vpack.c.b16 %v7670, %v7666
        %v7923 = vpack.c.b16 %v7675, %v7671
        %v7924 = vpack.c.b16 %v7676, %v7672
        %v7925 = vpack.c.b16 %v7677, %v7673
        %v7926 = vpack.c.b16 %v7678, %v7674
        %v7927 = vpack.c.b16 %v7683, %v7679
        %v7928 = vpack.c.b16 %v7684, %v7680
        %v7929 = vpack.c.b16 %v7685, %v7681
        %v7930 = vpack.c.b16 %v7686, %v7682
        %v7931 = vpack.c.b16 %v7691, %v7687
        %v7932 = vpack.c.b16 %v7692, %v7688
        %v7933 = vpack.c.b16 %v7693, %v7689
        %v7934 = vpack.c.b16 %v7694, %v7690
        %v7935 = vpack.c.b16 %v7699, %v7695
        %v7936 = vpack.c.b16 %v7700, %v7696
        %v7937 = vpack.c.b16 %v7701, %v7697
        %v7938 = vpack.c.b16 %v7702, %v7698
        %v7939 = vpack.c.b16 %v7707, %v7703
        %v7940 = vpack.c.b16 %v7708, %v7704
        %v7941 = vpack.c.b16 %v7709, %v7705
        %v7942 = vpack.c.b16 %v7710, %v7706
        %v7943 = vpack.c.b16 %v7715, %v7711
        %v7944 = vpack.c.b16 %v7716, %v7712
        %v7945 = vpack.c.b16 %v7717, %v7713
        %v7946 = vpack.c.b16 %v7718, %v7714
        %v7947 = vpack.c.b16 %v7723, %v7719
        %v7948 = vpack.c.b16 %v7724, %v7720
        %v7949 = vpack.c.b16 %v7725, %v7721
        %v7950 = vpack.c.b16 %v7726, %v7722
        %v7951 = vpack.c.b16 %v7731, %v7727
        %v7952 = vpack.c.b16 %v7732, %v7728
        %v7953 = vpack.c.b16 %v7733, %v7729
        %v7954 = vpack.c.b16 %v7734, %v7730
        %v7955 = vpack.c.b16 %v7739, %v7735
        %v7956 = vpack.c.b16 %v7740, %v7736
        %v7957 = vpack.c.b16 %v7741, %v7737
        %v7958 = vpack.c.b16 %v7742, %v7738
        %v7959 = vpack.c.b16 %v7747, %v7743
        %v7960 = vpack.c.b16 %v7748, %v7744
        %v7961 = vpack.c.b16 %v7749, %v7745
        %v7962 = vpack.c.b16 %v7750, %v7746
        %v7963 = vpack.c.b16 %v7755, %v7751
        %v7964 = vpack.c.b16 %v7756, %v7752
        %v7965 = vpack.c.b16 %v7757, %v7753
        %v7966 = vpack.c.b16 %v7758, %v7754
        %v7967 = vpack.c.b16 %v7763, %v7759
        %v7968 = vpack.c.b16 %v7764, %v7760
        %v7969 = vpack.c.b16 %v7765, %v7761
        %v7970 = vpack.c.b16 %v7766, %v7762
        %v7971 = vpack.c.b16 %v7771, %v7767
        %v7972 = vpack.c.b16 %v7772, %v7768
        %v7973 = vpack.c.b16 %v7773, %v7769
        %v7974 = vpack.c.b16 %v7774, %v7770
        %v7975 = vpack.c.b16 %v7779, %v7775
        %v7976 = vpack.c.b16 %v7780, %v7776
        %v7977 = vpack.c.b16 %v7781, %v7777
        %v7978 = vpack.c.b16 %v7782, %v7778
        %v7979 = vpack.c.b16 %v7787, %v7783
        %v7980 = vpack.c.b16 %v7788, %v7784
        %v7981 = vpack.c.b16 %v7789, %v7785
        %v7982 = vpack.c.b16 %v7790, %v7786
        %v7983 = vpack.c.b16 %v7795, %v7791
        %v7984 = vpack.c.b16 %v7796, %v7792
        %v7985 = vpack.c.b16 %v7797, %v7793
        %v7986 = vpack.c.b16 %v7798, %v7794
        %v7987 = vpack.c.b16 %v7803, %v7799
        %v7988 = vpack.c.b16 %v7804, %v7800
        %v7989 = vpack.c.b16 %v7805, %v7801
        %v7990 = vpack.c.b16 %v7806, %v7802
        %v7991 = vpack.c.b16 %v7811, %v7807
        %v7992 = vpack.c.b16 %v7812, %v7808
        %v7993 = vpack.c.b16 %v7813, %v7809
        %v7994 = vpack.c.b16 %v7814, %v7810
        %v7995 = vpack.c.b16 %v7819, %v7815
        %v7996 = vpack.c.b16 %v7820, %v7816
        %v7997 = vpack.c.b16 %v7821, %v7817
        %v7998 = vpack.c.b16 %v7822, %v7818
        %v7999 = vpack.c.b16 %v7827, %v7823
        %v8000 = vpack.c.b16 %v7828, %v7824
        %v8001 = vpack.c.b16 %v7829, %v7825
        %v8002 = vpack.c.b16 %v7830, %v7826
        %v8003 = vpack.c.b16 %v7835, %v7831
        %v8004 = vpack.c.b16 %v7836, %v7832
        %v8005 = vpack.c.b16 %v7837, %v7833
        %v8006 = vpack.c.b16 %v7838, %v7834
        %v8007 = vpack.c.b16 %v7843, %v7839
        %v8008 = vpack.c.b16 %v7844, %v7840
        %v8009 = vpack.c.b16 %v7845, %v7841
        %v8010 = vpack.c.b16 %v7846, %v7842
        %v8011 = vpack.c.b16 %v7851, %v7847
        %v8012 = vpack.c.b16 %v7852, %v7848
        %v8013 = vpack.c.b16 %v7853, %v7849
        %v8014 = vpack.c.b16 %v7854, %v7850
        %v8015 = vpack.c.b16 %v7859, %v7855
        %v8016 = vpack.c.b16 %v7860, %v7856
        %v8017 = vpack.c.b16 %v7861, %v7857
        %v8018 = vpack.c.b16 %v7862, %v7858
        %v8019 = vpack.c.b16 %v7867, %v7863
        %v8020 = vpack.c.b16 %v7868, %v7864
        %v8021 = vpack.c.b16 %v7869, %v7865
        %v8022 = vpack.c.b16 %v7870, %v7866
        %v8023 = vpack.c.b16 %v7875, %v7871
        %v8024 = vpack.c.b16 %v7876, %v7872
        %v8025 = vpack.c.b16 %v7877, %v7873
        %v8026 = vpack.c.b16 %v7878, %v7874
        %v8027 = vpack.c.b16 %v7883, %v7879
        %v8028 = vpack.c.b16 %v7884, %v7880
        %v8029 = vpack.c.b16 %v7885, %v7881
        %v8030 = vpack.c.b16 %v7886, %v7882
        %v8031 = vpack.c.b16 %v7891, %v7887
        %v8032 = vpack.c.b16 %v7892, %v7888
        %v8033 = vpack.c.b16 %v7893, %v7889
        %v8034 = vpack.c.b16 %v7894, %v7890
        %v8035 = vpack.c.b16 %v7899, %v7895
        %v8036 = vpack.c.b16 %v7900, %v7896
        %v8037 = vpack.c.b16 %v7901, %v7897
        %v8038 = vpack.c.b16 %v7902, %v7898
        %v8039 = vpack.c.b16 %v7907, %v7903
        %v8040 = vpack.c.b16 %v7908, %v7904
        %v8041 = vpack.c.b16 %v7909, %v7905
        %v8042 = vpack.c.b16 %v7910, %v7906
        %v8043 = vpack.c.b16 %v7915, %v7911
        %v8044 = vpack.c.b16 %v7916, %v7912
        %v8045 = vpack.c.b16 %v7917, %v7913
        %v8046 = vpack.c.b16 %v7918, %v7914
        %8175 = vmatprep.subr.bf16.mxu0 %v7920
        %8176 = vmatpush1.bf16.msra.mxu0 %v7919
        %8177 = vmatprep.subr.bf16.mxu0 %v7924
        %8178 = vmatpush1.bf16.msra.mxu0 %v7923
        %8179 = vmatprep.subr.bf16.mxu0 %v7928
        %8180 = vmatpush1.bf16.msra.mxu0 %v7927
        %8181 = vmatprep.subr.bf16.mxu0 %v7932
        %8182 = vmatpush1.bf16.msra.mxu0 %v7931
        %8183 = vmatprep.subr.bf16.mxu0 %v7936
        %8184 = vmatpush1.bf16.msra.mxu0 %v7935
        %8185 = vmatprep.subr.bf16.mxu0 %v7940
        %8186 = vmatpush1.bf16.msra.mxu0 %v7939
        %8187 = vmatprep.subr.bf16.mxu0 %v7944
        %8188 = vmatpush1.bf16.msra.mxu0 %v7943
        %8189 = vmatprep.subr.bf16.mxu0 %v7948
        %8190 = vmatpush1.bf16.msra.mxu0 %v7947
        %8191 = vmatprep.subr.bf16.mxu0 %v7952
        %8192 = vmatpush1.bf16.msra.mxu0 %v7951
        %8193 = vmatprep.subr.bf16.mxu0 %v7956
        %8194 = vmatpush1.bf16.msra.mxu0 %v7955
        %8195 = vmatprep.subr.bf16.mxu0 %v7960
        %8196 = vmatpush1.bf16.msra.mxu0 %v7959
        %8197 = vmatprep.subr.bf16.mxu0 %v7964
        %8198 = vmatpush1.bf16.msra.mxu0 %v7963
        %8199 = vmatprep.subr.bf16.mxu0 %v7968
        %8200 = vmatpush1.bf16.msra.mxu0 %v7967
        %8201 = vmatprep.subr.bf16.mxu0 %v7972
        %8202 = vmatpush1.bf16.msra.mxu0 %v7971
        %8203 = vmatprep.subr.bf16.mxu0 %v7976
        %8204 = vmatpush1.bf16.msra.mxu0 %v7975
        %8205 = vmatprep.subr.bf16.mxu0 %v7980
        %8206 = vmatpush1.bf16.msra.mxu0 %v7979
        %8207 = vmatprep.mubr.bf16.mxu0 %v7382
        %8208 = vmatmul.mubr.bf16.gmra.mrb[0].mxu0 %v7381
        %v8209 = vpop.f32.mrb[0].mxu0
        %v8210 = vadd.f32 %v7518, %v8209
        %v8211 = vpop.f32.mrb[0].mxu0
        %v8212 = vadd.f32 %v7522, %v8211
        %v8213 = vpop.f32.mrb[0].mxu0
        %v8214 = vadd.f32 %v7518, %v8213
        %v8215 = vpop.f32.mrb[0].mxu0
        %v8216 = vadd.f32 %v7522, %v8215
        %8217 = vdwg.mxu0
        %8218 = vmatprep.subr.bf16.mxu0 %v7984
        %8219 = vmatpush1.bf16.msra.mxu0 %v7983
        %8220 = vmatprep.subr.bf16.mxu0 %v7988
        %8221 = vmatpush1.bf16.msra.mxu0 %v7987
        %8222 = vmatprep.subr.bf16.mxu0 %v7992
        %8223 = vmatpush1.bf16.msra.mxu0 %v7991
        %8224 = vmatprep.subr.bf16.mxu0 %v7996
        %8225 = vmatpush1.bf16.msra.mxu0 %v7995
        %8226 = vmatprep.subr.bf16.mxu0 %v8000
        %8227 = vmatpush1.bf16.msra.mxu0 %v7999
        %8228 = vmatprep.subr.bf16.mxu0 %v8004
        %8229 = vmatpush1.bf16.msra.mxu0 %v8003
        %8230 = vmatprep.subr.bf16.mxu0 %v8008
        %8231 = vmatpush1.bf16.msra.mxu0 %v8007
        %8232 = vmatprep.subr.bf16.mxu0 %v8012
        %8233 = vmatpush1.bf16.msra.mxu0 %v8011
        %8234 = vmatprep.subr.bf16.mxu0 %v8016
        %8235 = vmatpush1.bf16.msra.mxu0 %v8015
        %8236 = vmatprep.subr.bf16.mxu0 %v8020
        %8237 = vmatpush1.bf16.msra.mxu0 %v8019
        %8238 = vmatprep.subr.bf16.mxu0 %v8024
        %8239 = vmatpush1.bf16.msra.mxu0 %v8023
        %8240 = vmatprep.subr.bf16.mxu0 %v8028
        %8241 = vmatpush1.bf16.msra.mxu0 %v8027
        %8242 = vmatprep.subr.bf16.mxu0 %v8032
        %8243 = vmatpush1.bf16.msra.mxu0 %v8031
        %8244 = vmatprep.subr.bf16.mxu0 %v8036
        %8245 = vmatpush1.bf16.msra.mxu0 %v8035
        %8246 = vmatprep.subr.bf16.mxu0 %v8040
        %8247 = vmatpush1.bf16.msra.mxu0 %v8039
        %8248 = vmatprep.subr.bf16.mxu0 %v8044
        %8249 = vmatpush1.bf16.msra.mxu0 %v8043
        %8250 = vmatprep.mubr.bf16.mxu0 %v7384
        %8251 = vmatmul.mubr.bf16.gmra.mrb[0].mxu0 %v7383
        %v8252 = vpop.f32.mrb[0].mxu0
        %v8253 = vadd.f32 %v8210, %v8252
        %v8254 = vpop.f32.mrb[0].mxu0
        %v8255 = vadd.f32 %v8212, %v8254
        %v8256 = vpop.f32.mrb[0].mxu0
        %v8257 = vadd.f32 %v8214, %v8256
        %v8258 = vpop.f32.mrb[0].mxu0
        %v8259 = vadd.f32 %v8216, %v8258
        %8260 = vdwg.mxu0
        %8261 = vmatprep.subr.bf16.mxu0 %v7922
        %8262 = vmatpush1.bf16.msra.mxu0 %v7921
        %8263 = vmatprep.subr.bf16.mxu0 %v7926
        %8264 = vmatpush1.bf16.msra.mxu0 %v7925
        %8265 = vmatprep.subr.bf16.mxu0 %v7930
        %8266 = vmatpush1.bf16.msra.mxu0 %v7929
        %8267 = vmatprep.subr.bf16.mxu0 %v7934
        %8268 = vmatpush1.bf16.msra.mxu0 %v7933
        %8269 = vmatprep.subr.bf16.mxu0 %v7938
        %8270 = vmatpush1.bf16.msra.mxu0 %v7937
        %8271 = vmatprep.subr.bf16.mxu0 %v7942
        %8272 = vmatpush1.bf16.msra.mxu0 %v7941
        %8273 = vmatprep.subr.bf16.mxu0 %v7946
        %8274 = vmatpush1.bf16.msra.mxu0 %v7945
        %8275 = vmatprep.subr.bf16.mxu0 %v7950
        %8276 = vmatpush1.bf16.msra.mxu0 %v7949
        %8277 = vmatprep.subr.bf16.mxu0 %v7954
        %8278 = vmatpush1.bf16.msra.mxu0 %v7953
        %8279 = vmatprep.subr.bf16.mxu0 %v7958
        %8280 = vmatpush1.bf16.msra.mxu0 %v7957
        %8281 = vmatprep.subr.bf16.mxu0 %v7962
        %8282 = vmatpush1.bf16.msra.mxu0 %v7961
        %8283 = vmatprep.subr.bf16.mxu0 %v7966
        %8284 = vmatpush1.bf16.msra.mxu0 %v7965
        %8285 = vmatprep.subr.bf16.mxu0 %v7970
        %8286 = vmatpush1.bf16.msra.mxu0 %v7969
        %8287 = vmatprep.subr.bf16.mxu0 %v7974
        %8288 = vmatpush1.bf16.msra.mxu0 %v7973
        %8289 = vmatprep.subr.bf16.mxu0 %v7978
        %8290 = vmatpush1.bf16.msra.mxu0 %v7977
        %8291 = vmatprep.subr.bf16.mxu0 %v7982
        %8292 = vmatpush1.bf16.msra.mxu0 %v7981
        %8293 = vmatprep.mubr.bf16.mxu0 %v7382
        %8294 = vmatmul.mubr.bf16.gmra.mrb[0].mxu0 %v7381
        %v8295 = vpop.f32.mrb[0].mxu0
        %v8296 = vadd.f32 %v7526, %v8295
        %v8297 = vpop.f32.mrb[0].mxu0
        %v8298 = vadd.f32 %v7530, %v8297
        %v8299 = vpop.f32.mrb[0].mxu0
        %v8300 = vadd.f32 %v7526, %v8299
        %v8301 = vpop.f32.mrb[0].mxu0
        %v8302 = vadd.f32 %v7530, %v8301
        %8303 = vdwg.mxu0
        %8304 = vmatprep.subr.bf16.mxu0 %v7986
        %8305 = vmatpush1.bf16.msra.mxu0 %v7985
        %8306 = vmatprep.subr.bf16.mxu0 %v7990
        %8307 = vmatpush1.bf16.msra.mxu0 %v7989
        %8308 = vmatprep.subr.bf16.mxu0 %v7994
        %8309 = vmatpush1.bf16.msra.mxu0 %v7993
        %8310 = vmatprep.subr.bf16.mxu0 %v7998
        %8311 = vmatpush1.bf16.msra.mxu0 %v7997
        %8312 = vmatprep.subr.bf16.mxu0 %v8002
        %8313 = vmatpush1.bf16.msra.mxu0 %v8001
        %8314 = vmatprep.subr.bf16.mxu0 %v8006
        %8315 = vmatpush1.bf16.msra.mxu0 %v8005
        %8316 = vmatprep.subr.bf16.mxu0 %v8010
        %8317 = vmatpush1.bf16.msra.mxu0 %v8009
        %8318 = vmatprep.subr.bf16.mxu0 %v8014
        %8319 = vmatpush1.bf16.msra.mxu0 %v8013
        %8320 = vmatprep.subr.bf16.mxu0 %v8018
        %8321 = vmatpush1.bf16.msra.mxu0 %v8017
        %8322 = vmatprep.subr.bf16.mxu0 %v8022
        %8323 = vmatpush1.bf16.msra.mxu0 %v8021
        %8324 = vmatprep.subr.bf16.mxu0 %v8026
        %8325 = vmatpush1.bf16.msra.mxu0 %v8025
        %8326 = vmatprep.subr.bf16.mxu0 %v8030
        %8327 = vmatpush1.bf16.msra.mxu0 %v8029
        %8328 = vmatprep.subr.bf16.mxu0 %v8034
        %8329 = vmatpush1.bf16.msra.mxu0 %v8033
        %8330 = vmatprep.subr.bf16.mxu0 %v8038
        %8331 = vmatpush1.bf16.msra.mxu0 %v8037
        %8332 = vmatprep.subr.bf16.mxu0 %v8042
        %8333 = vmatpush1.bf16.msra.mxu0 %v8041
        %8334 = vmatprep.subr.bf16.mxu0 %v8046
        %8335 = vmatpush1.bf16.msra.mxu0 %v8045
        %8336 = vmatprep.mubr.bf16.mxu0 %v7384
        %8337 = vmatmul.mubr.bf16.gmra.mrb[0].mxu0 %v7383
        %v8338 = vpop.f32.mrb[0].mxu0
        %v8339 = vadd.f32 %v8296, %v8338
        %v8340 = vpop.f32.mrb[0].mxu0
        %v8341 = vadd.f32 %v8298, %v8340
        %v8342 = vpop.f32.mrb[0].mxu0
        %v8343 = vadd.f32 %v8300, %v8342
        %v8344 = vpop.f32.mrb[0].mxu0
        %v8345 = vadd.f32 %v8302, %v8344
        %8346 = vdwg.mxu0
        %v8347 = vmax.f32 %v8253, 0.0
        %v8348 = vmax.f32 %v8255, 0.0
        %v8349 = vmax.f32 %v8339, 0.0
        %v8350 = vmax.f32 %v8341, 0.0
        %v8351 = vmax.f32 %v8257, 0.0
        %v8352 = vmax.f32 %v8259, 0.0
        %v8353 = vmax.f32 %v8343, 0.0
        %v8354 = vmax.f32 %v8345, 0.0
        %v8355 = vpack.c.bf16 %v8351, %v8347
        %v8356 = vpack.c.bf16 %v8352, %v8348
        %v8357 = vpack.c.bf16 %v8353, %v8349
        %v8358 = vpack.c.bf16 %v8354, %v8350
        %v8359 = vld [vmem:[%s788] sm:$0xff]
        %v8360 = vld [vmem:[%s788 + $0x8] sm:$0xff]
        %v8361 = vld [vmem:[%s788 + $0x10] sm:$0xff]
        %v8362 = vld [vmem:[%s788 + $0x18] sm:$0xff]
        %v8363 = vld [vmem:[%s788 + $0x20] sm:$0xff]
        %v8364 = vld [vmem:[%s788 + $0x28] sm:$0xff]
        %v8365 = vld [vmem:[%s788 + $0x30] sm:$0xff]
        %v8366 = vld [vmem:[%s788 + $0x38] sm:$0xff]
        %v8367 = vld [vmem:[%s788 + $0x40] sm:$0xff]
        %v8368 = vld [vmem:[%s788 + $0x48] sm:$0xff]
        %v8369 = vld [vmem:[%s788 + $0x50] sm:$0xff]
        %v8370 = vld [vmem:[%s788 + $0x58] sm:$0xff]
        %v8371 = vld [vmem:[%s788 + $0x60] sm:$0xff]
        %v8372 = vld [vmem:[%s788 + $0x68] sm:$0xff]
        %v8373 = vld [vmem:[%s788 + $0x70] sm:$0xff]
        %v8374 = vld [vmem:[%s788 + $0x78] sm:$0xff]
        %v8375 = vld [vmem:[%s788 + $0x80] sm:$0xff]
        %v8376 = vld [vmem:[%s788 + $0x88] sm:$0xff]
        %v8377 = vld [vmem:[%s788 + $0x90] sm:$0xff]
        %v8378 = vld [vmem:[%s788 + $0x98] sm:$0xff]
        %v8379 = vld [vmem:[%s788 + $0xa0] sm:$0xff]
        %v8380 = vld [vmem:[%s788 + $0xa8] sm:$0xff]
        %v8381 = vld [vmem:[%s788 + $0xb0] sm:$0xff]
        %v8382 = vld [vmem:[%s788 + $0xb8] sm:$0xff]
        %v8383 = vld [vmem:[%s788 + $0xc0] sm:$0xff]
        %v8384 = vld [vmem:[%s788 + $0xc8] sm:$0xff]
        %v8385 = vld [vmem:[%s788 + $0xd0] sm:$0xff]
        %v8386 = vld [vmem:[%s788 + $0xd8] sm:$0xff]
        %v8387 = vld [vmem:[%s788 + $0xe0] sm:$0xff]
        %v8388 = vld [vmem:[%s788 + $0xe8] sm:$0xff]
        %v8389 = vld [vmem:[%s788 + $0xf0] sm:$0xff]
        %v8390 = vld [vmem:[%s788 + $0xf8] sm:$0xff]
        %v8391 = vld [vmem:[%s788 + $0x100] sm:$0xff]
        %v8392 = vld [vmem:[%s788 + $0x108] sm:$0xff]
        %v8393 = vld [vmem:[%s788 + $0x110] sm:$0xff]
        %v8394 = vld [vmem:[%s788 + $0x118] sm:$0xff]
        %v8395 = vld [vmem:[%s788 + $0x120] sm:$0xff]
        %v8396 = vld [vmem:[%s788 + $0x128] sm:$0xff]
        %v8397 = vld [vmem:[%s788 + $0x130] sm:$0xff]
        %v8398 = vld [vmem:[%s788 + $0x138] sm:$0xff]
        %v8399 = vld [vmem:[%s788 + $0x140] sm:$0xff]
        %v8400 = vld [vmem:[%s788 + $0x148] sm:$0xff]
        %v8401 = vld [vmem:[%s788 + $0x150] sm:$0xff]
        %v8402 = vld [vmem:[%s788 + $0x158] sm:$0xff]
        %v8403 = vld [vmem:[%s788 + $0x160] sm:$0xff]
        %v8404 = vld [vmem:[%s788 + $0x168] sm:$0xff]
        %v8405 = vld [vmem:[%s788 + $0x170] sm:$0xff]
        %v8406 = vld [vmem:[%s788 + $0x178] sm:$0xff]
        %v8407 = vld [vmem:[%s788 + $0x180] sm:$0xff]
        %v8408 = vld [vmem:[%s788 + $0x188] sm:$0xff]
        %v8409 = vld [vmem:[%s788 + $0x190] sm:$0xff]
        %v8410 = vld [vmem:[%s788 + $0x198] sm:$0xff]
        %v8411 = vld [vmem:[%s788 + $0x1a0] sm:$0xff]
        %v8412 = vld [vmem:[%s788 + $0x1a8] sm:$0xff]
        %v8413 = vld [vmem:[%s788 + $0x1b0] sm:$0xff]
        %v8414 = vld [vmem:[%s788 + $0x1b8] sm:$0xff]
        %v8415 = vld [vmem:[%s788 + $0x1c0] sm:$0xff]
        %v8416 = vld [vmem:[%s788 + $0x1c8] sm:$0xff]
        %v8417 = vld [vmem:[%s788 + $0x1d0] sm:$0xff]
        %v8418 = vld [vmem:[%s788 + $0x1d8] sm:$0xff]
        %v8419 = vld [vmem:[%s788 + $0x1e0] sm:$0xff]
        %v8420 = vld [vmem:[%s788 + $0x1e8] sm:$0xff]
        %v8421 = vld [vmem:[%s788 + $0x1f0] sm:$0xff]
        %v8422 = vld [vmem:[%s788 + $0x1f8] sm:$0xff]
        %v8423 = vld [vmem:[%s788 + $0x200] sm:$0xff]
        %v8424 = vld [vmem:[%s788 + $0x208] sm:$0xff]
        %v8425 = vld [vmem:[%s788 + $0x210] sm:$0xff]
        %v8426 = vld [vmem:[%s788 + $0x218] sm:$0xff]
        %v8427 = vld [vmem:[%s788 + $0x220] sm:$0xff]
        %v8428 = vld [vmem:[%s788 + $0x228] sm:$0xff]
        %v8429 = vld [vmem:[%s788 + $0x230] sm:$0xff]
        %v8430 = vld [vmem:[%s788 + $0x238] sm:$0xff]
        %v8431 = vld [vmem:[%s788 + $0x240] sm:$0xff]
        %v8432 = vld [vmem:[%s788 + $0x248] sm:$0xff]
        %v8433 = vld [vmem:[%s788 + $0x250] sm:$0xff]
        %v8434 = vld [vmem:[%s788 + $0x258] sm:$0xff]
        %v8435 = vld [vmem:[%s788 + $0x260] sm:$0xff]
        %v8436 = vld [vmem:[%s788 + $0x268] sm:$0xff]
        %v8437 = vld [vmem:[%s788 + $0x270] sm:$0xff]
        %v8438 = vld [vmem:[%s788 + $0x278] sm:$0xff]
        %v8439 = vld [vmem:[%s788 + $0x280] sm:$0xff]
        %v8440 = vld [vmem:[%s788 + $0x288] sm:$0xff]
        %v8441 = vld [vmem:[%s788 + $0x290] sm:$0xff]
        %v8442 = vld [vmem:[%s788 + $0x298] sm:$0xff]
        %v8443 = vld [vmem:[%s788 + $0x2a0] sm:$0xff]
        %v8444 = vld [vmem:[%s788 + $0x2a8] sm:$0xff]
        %v8445 = vld [vmem:[%s788 + $0x2b0] sm:$0xff]
        %v8446 = vld [vmem:[%s788 + $0x2b8] sm:$0xff]
        %v8447 = vld [vmem:[%s788 + $0x2c0] sm:$0xff]
        %v8448 = vld [vmem:[%s788 + $0x2c8] sm:$0xff]
        %v8449 = vld [vmem:[%s788 + $0x2d0] sm:$0xff]
        %v8450 = vld [vmem:[%s788 + $0x2d8] sm:$0xff]
        %v8451 = vld [vmem:[%s788 + $0x2e0] sm:$0xff]
        %v8452 = vld [vmem:[%s788 + $0x2e8] sm:$0xff]
        %v8453 = vld [vmem:[%s788 + $0x2f0] sm:$0xff]
        %v8454 = vld [vmem:[%s788 + $0x2f8] sm:$0xff]
        %v8455 = vld [vmem:[%s788 + $0x300] sm:$0xff]
        %v8456 = vld [vmem:[%s788 + $0x308] sm:$0xff]
        %v8457 = vld [vmem:[%s788 + $0x310] sm:$0xff]
        %v8458 = vld [vmem:[%s788 + $0x318] sm:$0xff]
        %v8459 = vld [vmem:[%s788 + $0x320] sm:$0xff]
        %v8460 = vld [vmem:[%s788 + $0x328] sm:$0xff]
        %v8461 = vld [vmem:[%s788 + $0x330] sm:$0xff]
        %v8462 = vld [vmem:[%s788 + $0x338] sm:$0xff]
        %v8463 = vld [vmem:[%s788 + $0x340] sm:$0xff]
        %v8464 = vld [vmem:[%s788 + $0x348] sm:$0xff]
        %v8465 = vld [vmem:[%s788 + $0x350] sm:$0xff]
        %v8466 = vld [vmem:[%s788 + $0x358] sm:$0xff]
        %v8467 = vld [vmem:[%s788 + $0x360] sm:$0xff]
        %v8468 = vld [vmem:[%s788 + $0x368] sm:$0xff]
        %v8469 = vld [vmem:[%s788 + $0x370] sm:$0xff]
        %v8470 = vld [vmem:[%s788 + $0x378] sm:$0xff]
        %v8471 = vld [vmem:[%s788 + $0x380] sm:$0xff]
        %v8472 = vld [vmem:[%s788 + $0x388] sm:$0xff]
        %v8473 = vld [vmem:[%s788 + $0x390] sm:$0xff]
        %v8474 = vld [vmem:[%s788 + $0x398] sm:$0xff]
        %v8475 = vld [vmem:[%s788 + $0x3a0] sm:$0xff]
        %v8476 = vld [vmem:[%s788 + $0x3a8] sm:$0xff]
        %v8477 = vld [vmem:[%s788 + $0x3b0] sm:$0xff]
        %v8478 = vld [vmem:[%s788 + $0x3b8] sm:$0xff]
        %v8479 = vld [vmem:[%s788 + $0x3c0] sm:$0xff]
        %v8480 = vld [vmem:[%s788 + $0x3c8] sm:$0xff]
        %v8481 = vld [vmem:[%s788 + $0x3d0] sm:$0xff]
        %v8482 = vld [vmem:[%s788 + $0x3d8] sm:$0xff]
        %v8483 = vld [vmem:[%s788 + $0x3e0] sm:$0xff]
        %v8484 = vld [vmem:[%s788 + $0x3e8] sm:$0xff]
        %v8485 = vld [vmem:[%s788 + $0x3f0] sm:$0xff]
        %v8486 = vld [vmem:[%s788 + $0x3f8] sm:$0xff]
        %v8487 = vld [vmem:[%s797] sm:$0xf]
        %v8489 = vlaneseq
        %v8490 = vshrl.u32 %v8489, 7
        %v8491 = vsub.s32 0, %v8490
        %v8492 = vrot.slane %v8487, %v8491
        %v8493 = vlaneseq
        %v8494 = vshrl.u32 %v8493, 7
        %v8495 = vsub.s32 1, %v8494
        %v8496 = vrot.slane %v8487, %v8495
        %v8497 = vlaneseq
        %v8498 = vshrl.u32 %v8497, 7
        %v8499 = vsub.s32 2, %v8498
        %v8500 = vrot.slane %v8487, %v8499
        %v8501 = vlaneseq
        %v8502 = vshrl.u32 %v8501, 7
        %v8503 = vsub.s32 3, %v8502
        %v8504 = vrot.slane %v8487, %v8503
        %v8637 = vunpack.c.l.b16 %v8359
        %v8638 = vunpack.c.h.b16 %v8359
        %v8639 = vunpack.c.l.b16 %v8360
        %v8640 = vunpack.c.h.b16 %v8360
        %v8641 = vunpack.c.l.b16 %v8361
        %v8642 = vunpack.c.h.b16 %v8361
        %v8643 = vunpack.c.l.b16 %v8362
        %v8644 = vunpack.c.h.b16 %v8362
        %v8645 = vunpack.c.l.b16 %v8363
        %v8646 = vunpack.c.h.b16 %v8363
        %v8647 = vunpack.c.l.b16 %v8364
        %v8648 = vunpack.c.h.b16 %v8364
        %v8649 = vunpack.c.l.b16 %v8365
        %v8650 = vunpack.c.h.b16 %v8365
        %v8651 = vunpack.c.l.b16 %v8366
        %v8652 = vunpack.c.h.b16 %v8366
        %v8653 = vunpack.c.l.b16 %v8367
        %v8654 = vunpack.c.h.b16 %v8367
        %v8655 = vunpack.c.l.b16 %v8368
        %v8656 = vunpack.c.h.b16 %v8368
        %v8657 = vunpack.c.l.b16 %v8369
        %v8658 = vunpack.c.h.b16 %v8369
        %v8659 = vunpack.c.l.b16 %v8370
        %v8660 = vunpack.c.h.b16 %v8370
        %v8661 = vunpack.c.l.b16 %v8371
        %v8662 = vunpack.c.h.b16 %v8371
        %v8663 = vunpack.c.l.b16 %v8372
        %v8664 = vunpack.c.h.b16 %v8372
        %v8665 = vunpack.c.l.b16 %v8373
        %v8666 = vunpack.c.h.b16 %v8373
        %v8667 = vunpack.c.l.b16 %v8374
        %v8668 = vunpack.c.h.b16 %v8374
        %v8669 = vunpack.c.l.b16 %v8375
        %v8670 = vunpack.c.h.b16 %v8375
        %v8671 = vunpack.c.l.b16 %v8376
        %v8672 = vunpack.c.h.b16 %v8376
        %v8673 = vunpack.c.l.b16 %v8377
        %v8674 = vunpack.c.h.b16 %v8377
        %v8675 = vunpack.c.l.b16 %v8378
        %v8676 = vunpack.c.h.b16 %v8378
        %v8677 = vunpack.c.l.b16 %v8379
        %v8678 = vunpack.c.h.b16 %v8379
        %v8679 = vunpack.c.l.b16 %v8380
        %v8680 = vunpack.c.h.b16 %v8380
        %v8681 = vunpack.c.l.b16 %v8381
        %v8682 = vunpack.c.h.b16 %v8381
        %v8683 = vunpack.c.l.b16 %v8382
        %v8684 = vunpack.c.h.b16 %v8382
        %v8685 = vunpack.c.l.b16 %v8383
        %v8686 = vunpack.c.h.b16 %v8383
        %v8687 = vunpack.c.l.b16 %v8384
        %v8688 = vunpack.c.h.b16 %v8384
        %v8689 = vunpack.c.l.b16 %v8385
        %v8690 = vunpack.c.h.b16 %v8385
        %v8691 = vunpack.c.l.b16 %v8386
        %v8692 = vunpack.c.h.b16 %v8386
        %v8693 = vunpack.c.l.b16 %v8387
        %v8694 = vunpack.c.h.b16 %v8387
        %v8695 = vunpack.c.l.b16 %v8388
        %v8696 = vunpack.c.h.b16 %v8388
        %v8697 = vunpack.c.l.b16 %v8389
        %v8698 = vunpack.c.h.b16 %v8389
        %v8699 = vunpack.c.l.b16 %v8390
        %v8700 = vunpack.c.h.b16 %v8390
        %v8701 = vunpack.c.l.b16 %v8391
        %v8702 = vunpack.c.h.b16 %v8391
        %v8703 = vunpack.c.l.b16 %v8392
        %v8704 = vunpack.c.h.b16 %v8392
        %v8705 = vunpack.c.l.b16 %v8393
        %v8706 = vunpack.c.h.b16 %v8393
        %v8707 = vunpack.c.l.b16 %v8394
        %v8708 = vunpack.c.h.b16 %v8394
        %v8709 = vunpack.c.l.b16 %v8395
        %v8710 = vunpack.c.h.b16 %v8395
        %v8711 = vunpack.c.l.b16 %v8396
        %v8712 = vunpack.c.h.b16 %v8396
        %v8713 = vunpack.c.l.b16 %v8397
        %v8714 = vunpack.c.h.b16 %v8397
        %v8715 = vunpack.c.l.b16 %v8398
        %v8716 = vunpack.c.h.b16 %v8398
        %v8717 = vunpack.c.l.b16 %v8399
        %v8718 = vunpack.c.h.b16 %v8399
        %v8719 = vunpack.c.l.b16 %v8400
        %v8720 = vunpack.c.h.b16 %v8400
        %v8721 = vunpack.c.l.b16 %v8401
        %v8722 = vunpack.c.h.b16 %v8401
        %v8723 = vunpack.c.l.b16 %v8402
        %v8724 = vunpack.c.h.b16 %v8402
        %v8725 = vunpack.c.l.b16 %v8403
        %v8726 = vunpack.c.h.b16 %v8403
        %v8727 = vunpack.c.l.b16 %v8404
        %v8728 = vunpack.c.h.b16 %v8404
        %v8729 = vunpack.c.l.b16 %v8405
        %v8730 = vunpack.c.h.b16 %v8405
        %v8731 = vunpack.c.l.b16 %v8406
        %v8732 = vunpack.c.h.b16 %v8406
        %v8733 = vunpack.c.l.b16 %v8407
        %v8734 = vunpack.c.h.b16 %v8407
        %v8735 = vunpack.c.l.b16 %v8408
        %v8736 = vunpack.c.h.b16 %v8408
        %v8737 = vunpack.c.l.b16 %v8409
        %v8738 = vunpack.c.h.b16 %v8409
        %v8739 = vunpack.c.l.b16 %v8410
        %v8740 = vunpack.c.h.b16 %v8410
        %v8741 = vunpack.c.l.b16 %v8411
        %v8742 = vunpack.c.h.b16 %v8411
        %v8743 = vunpack.c.l.b16 %v8412
        %v8744 = vunpack.c.h.b16 %v8412
        %v8745 = vunpack.c.l.b16 %v8413
        %v8746 = vunpack.c.h.b16 %v8413
        %v8747 = vunpack.c.l.b16 %v8414
        %v8748 = vunpack.c.h.b16 %v8414
        %v8749 = vunpack.c.l.b16 %v8415
        %v8750 = vunpack.c.h.b16 %v8415
        %v8751 = vunpack.c.l.b16 %v8416
        %v8752 = vunpack.c.h.b16 %v8416
        %v8753 = vunpack.c.l.b16 %v8417
        %v8754 = vunpack.c.h.b16 %v8417
        %v8755 = vunpack.c.l.b16 %v8418
        %v8756 = vunpack.c.h.b16 %v8418
        %v8757 = vunpack.c.l.b16 %v8419
        %v8758 = vunpack.c.h.b16 %v8419
        %v8759 = vunpack.c.l.b16 %v8420
        %v8760 = vunpack.c.h.b16 %v8420
        %v8761 = vunpack.c.l.b16 %v8421
        %v8762 = vunpack.c.h.b16 %v8421
        %v8763 = vunpack.c.l.b16 %v8422
        %v8764 = vunpack.c.h.b16 %v8422
        %v8765 = vunpack.c.l.b16 %v8423
        %v8766 = vunpack.c.h.b16 %v8423
        %v8767 = vunpack.c.l.b16 %v8424
        %v8768 = vunpack.c.h.b16 %v8424
        %v8769 = vunpack.c.l.b16 %v8425
        %v8770 = vunpack.c.h.b16 %v8425
        %v8771 = vunpack.c.l.b16 %v8426
        %v8772 = vunpack.c.h.b16 %v8426
        %v8773 = vunpack.c.l.b16 %v8427
        %v8774 = vunpack.c.h.b16 %v8427
        %v8775 = vunpack.c.l.b16 %v8428
        %v8776 = vunpack.c.h.b16 %v8428
        %v8777 = vunpack.c.l.b16 %v8429
        %v8778 = vunpack.c.h.b16 %v8429
        %v8779 = vunpack.c.l.b16 %v8430
        %v8780 = vunpack.c.h.b16 %v8430
        %v8781 = vunpack.c.l.b16 %v8431
        %v8782 = vunpack.c.h.b16 %v8431
        %v8783 = vunpack.c.l.b16 %v8432
        %v8784 = vunpack.c.h.b16 %v8432
        %v8785 = vunpack.c.l.b16 %v8433
        %v8786 = vunpack.c.h.b16 %v8433
        %v8787 = vunpack.c.l.b16 %v8434
        %v8788 = vunpack.c.h.b16 %v8434
        %v8789 = vunpack.c.l.b16 %v8435
        %v8790 = vunpack.c.h.b16 %v8435
        %v8791 = vunpack.c.l.b16 %v8436
        %v8792 = vunpack.c.h.b16 %v8436
        %v8793 = vunpack.c.l.b16 %v8437
        %v8794 = vunpack.c.h.b16 %v8437
        %v8795 = vunpack.c.l.b16 %v8438
        %v8796 = vunpack.c.h.b16 %v8438
        %v8797 = vunpack.c.l.b16 %v8439
        %v8798 = vunpack.c.h.b16 %v8439
        %v8799 = vunpack.c.l.b16 %v8440
        %v8800 = vunpack.c.h.b16 %v8440
        %v8801 = vunpack.c.l.b16 %v8441
        %v8802 = vunpack.c.h.b16 %v8441
        %v8803 = vunpack.c.l.b16 %v8442
        %v8804 = vunpack.c.h.b16 %v8442
        %v8805 = vunpack.c.l.b16 %v8443
        %v8806 = vunpack.c.h.b16 %v8443
        %v8807 = vunpack.c.l.b16 %v8444
        %v8808 = vunpack.c.h.b16 %v8444
        %v8809 = vunpack.c.l.b16 %v8445
        %v8810 = vunpack.c.h.b16 %v8445
        %v8811 = vunpack.c.l.b16 %v8446
        %v8812 = vunpack.c.h.b16 %v8446
        %v8813 = vunpack.c.l.b16 %v8447
        %v8814 = vunpack.c.h.b16 %v8447
        %v8815 = vunpack.c.l.b16 %v8448
        %v8816 = vunpack.c.h.b16 %v8448
        %v8817 = vunpack.c.l.b16 %v8449
        %v8818 = vunpack.c.h.b16 %v8449
        %v8819 = vunpack.c.l.b16 %v8450
        %v8820 = vunpack.c.h.b16 %v8450
        %v8821 = vunpack.c.l.b16 %v8451
        %v8822 = vunpack.c.h.b16 %v8451
        %v8823 = vunpack.c.l.b16 %v8452
        %v8824 = vunpack.c.h.b16 %v8452
        %v8825 = vunpack.c.l.b16 %v8453
        %v8826 = vunpack.c.h.b16 %v8453
        %v8827 = vunpack.c.l.b16 %v8454
        %v8828 = vunpack.c.h.b16 %v8454
        %v8829 = vunpack.c.l.b16 %v8455
        %v8830 = vunpack.c.h.b16 %v8455
        %v8831 = vunpack.c.l.b16 %v8456
        %v8832 = vunpack.c.h.b16 %v8456
        %v8833 = vunpack.c.l.b16 %v8457
        %v8834 = vunpack.c.h.b16 %v8457
        %v8835 = vunpack.c.l.b16 %v8458
        %v8836 = vunpack.c.h.b16 %v8458
        %v8837 = vunpack.c.l.b16 %v8459
        %v8838 = vunpack.c.h.b16 %v8459
        %v8839 = vunpack.c.l.b16 %v8460
        %v8840 = vunpack.c.h.b16 %v8460
        %v8841 = vunpack.c.l.b16 %v8461
        %v8842 = vunpack.c.h.b16 %v8461
        %v8843 = vunpack.c.l.b16 %v8462
        %v8844 = vunpack.c.h.b16 %v8462
        %v8845 = vunpack.c.l.b16 %v8463
        %v8846 = vunpack.c.h.b16 %v8463
        %v8847 = vunpack.c.l.b16 %v8464
        %v8848 = vunpack.c.h.b16 %v8464
        %v8849 = vunpack.c.l.b16 %v8465
        %v8850 = vunpack.c.h.b16 %v8465
        %v8851 = vunpack.c.l.b16 %v8466
        %v8852 = vunpack.c.h.b16 %v8466
        %v8853 = vunpack.c.l.b16 %v8467
        %v8854 = vunpack.c.h.b16 %v8467
        %v8855 = vunpack.c.l.b16 %v8468
        %v8856 = vunpack.c.h.b16 %v8468
        %v8857 = vunpack.c.l.b16 %v8469
        %v8858 = vunpack.c.h.b16 %v8469
        %v8859 = vunpack.c.l.b16 %v8470
        %v8860 = vunpack.c.h.b16 %v8470
        %v8861 = vunpack.c.l.b16 %v8471
        %v8862 = vunpack.c.h.b16 %v8471
        %v8863 = vunpack.c.l.b16 %v8472
        %v8864 = vunpack.c.h.b16 %v8472
        %v8865 = vunpack.c.l.b16 %v8473
        %v8866 = vunpack.c.h.b16 %v8473
        %v8867 = vunpack.c.l.b16 %v8474
        %v8868 = vunpack.c.h.b16 %v8474
        %v8869 = vunpack.c.l.b16 %v8475
        %v8870 = vunpack.c.h.b16 %v8475
        %v8871 = vunpack.c.l.b16 %v8476
        %v8872 = vunpack.c.h.b16 %v8476
        %v8873 = vunpack.c.l.b16 %v8477
        %v8874 = vunpack.c.h.b16 %v8477
        %v8875 = vunpack.c.l.b16 %v8478
        %v8876 = vunpack.c.h.b16 %v8478
        %v8877 = vunpack.c.l.b16 %v8479
        %v8878 = vunpack.c.h.b16 %v8479
        %v8879 = vunpack.c.l.b16 %v8480
        %v8880 = vunpack.c.h.b16 %v8480
        %v8881 = vunpack.c.l.b16 %v8481
        %v8882 = vunpack.c.h.b16 %v8481
        %v8883 = vunpack.c.l.b16 %v8482
        %v8884 = vunpack.c.h.b16 %v8482
        %v8885 = vunpack.c.l.b16 %v8483
        %v8886 = vunpack.c.h.b16 %v8483
        %v8887 = vunpack.c.l.b16 %v8484
        %v8888 = vunpack.c.h.b16 %v8484
        %v8889 = vunpack.c.l.b16 %v8485
        %v8890 = vunpack.c.h.b16 %v8485
        %v8891 = vunpack.c.l.b16 %v8486
        %v8892 = vunpack.c.h.b16 %v8486
        %v8893 = vpack.c.b16 %v8641, %v8637
        %v8894 = vpack.c.b16 %v8642, %v8638
        %v8895 = vpack.c.b16 %v8643, %v8639
        %v8896 = vpack.c.b16 %v8644, %v8640
        %v8897 = vpack.c.b16 %v8649, %v8645
        %v8898 = vpack.c.b16 %v8650, %v8646
        %v8899 = vpack.c.b16 %v8651, %v8647
        %v8900 = vpack.c.b16 %v8652, %v8648
        %v8901 = vpack.c.b16 %v8657, %v8653
        %v8902 = vpack.c.b16 %v8658, %v8654
        %v8903 = vpack.c.b16 %v8659, %v8655
        %v8904 = vpack.c.b16 %v8660, %v8656
        %v8905 = vpack.c.b16 %v8665, %v8661
        %v8906 = vpack.c.b16 %v8666, %v8662
        %v8907 = vpack.c.b16 %v8667, %v8663
        %v8908 = vpack.c.b16 %v8668, %v8664
        %v8909 = vpack.c.b16 %v8673, %v8669
        %v8910 = vpack.c.b16 %v8674, %v8670
        %v8911 = vpack.c.b16 %v8675, %v8671
        %v8912 = vpack.c.b16 %v8676, %v8672
        %v8913 = vpack.c.b16 %v8681, %v8677
        %v8914 = vpack.c.b16 %v8682, %v8678
        %v8915 = vpack.c.b16 %v8683, %v8679
        %v8916 = vpack.c.b16 %v8684, %v8680
        %v8917 = vpack.c.b16 %v8689, %v8685
        %v8918 = vpack.c.b16 %v8690, %v8686
        %v8919 = vpack.c.b16 %v8691, %v8687
        %v8920 = vpack.c.b16 %v8692, %v8688
        %v8921 = vpack.c.b16 %v8697, %v8693
        %v8922 = vpack.c.b16 %v8698, %v8694
        %v8923 = vpack.c.b16 %v8699, %v8695
        %v8924 = vpack.c.b16 %v8700, %v8696
        %v8925 = vpack.c.b16 %v8705, %v8701
        %v8926 = vpack.c.b16 %v8706, %v8702
        %v8927 = vpack.c.b16 %v8707, %v8703
        %v8928 = vpack.c.b16 %v8708, %v8704
        %v8929 = vpack.c.b16 %v8713, %v8709
        %v8930 = vpack.c.b16 %v8714, %v8710
        %v8931 = vpack.c.b16 %v8715, %v8711
        %v8932 = vpack.c.b16 %v8716, %v8712
        %v8933 = vpack.c.b16 %v8721, %v8717
        %v8934 = vpack.c.b16 %v8722, %v8718
        %v8935 = vpack.c.b16 %v8723, %v8719
        %v8936 = vpack.c.b16 %v8724, %v8720
        %v8937 = vpack.c.b16 %v8729, %v8725
        %v8938 = vpack.c.b16 %v8730, %v8726
        %v8939 = vpack.c.b16 %v8731, %v8727
        %v8940 = vpack.c.b16 %v8732, %v8728
        %v8941 = vpack.c.b16 %v8737, %v8733
        %v8942 = vpack.c.b16 %v8738, %v8734
        %v8943 = vpack.c.b16 %v8739, %v8735
        %v8944 = vpack.c.b16 %v8740, %v8736
        %v8945 = vpack.c.b16 %v8745, %v8741
        %v8946 = vpack.c.b16 %v8746, %v8742
        %v8947 = vpack.c.b16 %v8747, %v8743
        %v8948 = vpack.c.b16 %v8748, %v8744
        %v8949 = vpack.c.b16 %v8753, %v8749
        %v8950 = vpack.c.b16 %v8754, %v8750
        %v8951 = vpack.c.b16 %v8755, %v8751
        %v8952 = vpack.c.b16 %v8756, %v8752
        %v8953 = vpack.c.b16 %v8761, %v8757
        %v8954 = vpack.c.b16 %v8762, %v8758
        %v8955 = vpack.c.b16 %v8763, %v8759
        %v8956 = vpack.c.b16 %v8764, %v8760
        %v8957 = vpack.c.b16 %v8769, %v8765
        %v8958 = vpack.c.b16 %v8770, %v8766
        %v8959 = vpack.c.b16 %v8771, %v8767
        %v8960 = vpack.c.b16 %v8772, %v8768
        %v8961 = vpack.c.b16 %v8777, %v8773
        %v8962 = vpack.c.b16 %v8778, %v8774
        %v8963 = vpack.c.b16 %v8779, %v8775
        %v8964 = vpack.c.b16 %v8780, %v8776
        %v8965 = vpack.c.b16 %v8785, %v8781
        %v8966 = vpack.c.b16 %v8786, %v8782
        %v8967 = vpack.c.b16 %v8787, %v8783
        %v8968 = vpack.c.b16 %v8788, %v8784
        %v8969 = vpack.c.b16 %v8793, %v8789
        %v8970 = vpack.c.b16 %v8794, %v8790
        %v8971 = vpack.c.b16 %v8795, %v8791
        %v8972 = vpack.c.b16 %v8796, %v8792
        %v8973 = vpack.c.b16 %v8801, %v8797
        %v8974 = vpack.c.b16 %v8802, %v8798
        %v8975 = vpack.c.b16 %v8803, %v8799
        %v8976 = vpack.c.b16 %v8804, %v8800
        %v8977 = vpack.c.b16 %v8809, %v8805
        %v8978 = vpack.c.b16 %v8810, %v8806
        %v8979 = vpack.c.b16 %v8811, %v8807
        %v8980 = vpack.c.b16 %v8812, %v8808
        %v8981 = vpack.c.b16 %v8817, %v8813
        %v8982 = vpack.c.b16 %v8818, %v8814
        %v8983 = vpack.c.b16 %v8819, %v8815
        %v8984 = vpack.c.b16 %v8820, %v8816
        %v8985 = vpack.c.b16 %v8825, %v8821
        %v8986 = vpack.c.b16 %v8826, %v8822
        %v8987 = vpack.c.b16 %v8827, %v8823
        %v8988 = vpack.c.b16 %v8828, %v8824
        %v8989 = vpack.c.b16 %v8833, %v8829
        %v8990 = vpack.c.b16 %v8834, %v8830
        %v8991 = vpack.c.b16 %v8835, %v8831
        %v8992 = vpack.c.b16 %v8836, %v8832
        %v8993 = vpack.c.b16 %v8841, %v8837
        %v8994 = vpack.c.b16 %v8842, %v8838
        %v8995 = vpack.c.b16 %v8843, %v8839
        %v8996 = vpack.c.b16 %v8844, %v8840
        %v8997 = vpack.c.b16 %v8849, %v8845
        %v8998 = vpack.c.b16 %v8850, %v8846
        %v8999 = vpack.c.b16 %v8851, %v8847
        %v9000 = vpack.c.b16 %v8852, %v8848
        %v9001 = vpack.c.b16 %v8857, %v8853
        %v9002 = vpack.c.b16 %v8858, %v8854
        %v9003 = vpack.c.b16 %v8859, %v8855
        %v9004 = vpack.c.b16 %v8860, %v8856
        %v9005 = vpack.c.b16 %v8865, %v8861
        %v9006 = vpack.c.b16 %v8866, %v8862
        %v9007 = vpack.c.b16 %v8867, %v8863
        %v9008 = vpack.c.b16 %v8868, %v8864
        %v9009 = vpack.c.b16 %v8873, %v8869
        %v9010 = vpack.c.b16 %v8874, %v8870
        %v9011 = vpack.c.b16 %v8875, %v8871
        %v9012 = vpack.c.b16 %v8876, %v8872
        %v9013 = vpack.c.b16 %v8881, %v8877
        %v9014 = vpack.c.b16 %v8882, %v8878
        %v9015 = vpack.c.b16 %v8883, %v8879
        %v9016 = vpack.c.b16 %v8884, %v8880
        %v9017 = vpack.c.b16 %v8889, %v8885
        %v9018 = vpack.c.b16 %v8890, %v8886
        %v9019 = vpack.c.b16 %v8891, %v8887
        %v9020 = vpack.c.b16 %v8892, %v8888
        %9149 = vmatprep.subr.bf16.mxu0 %v8894
        %9150 = vmatpush1.bf16.msra.mxu0 %v8893
        %9151 = vmatprep.subr.bf16.mxu0 %v8898
        %9152 = vmatpush1.bf16.msra.mxu0 %v8897
        %9153 = vmatprep.subr.bf16.mxu0 %v8902
        %9154 = vmatpush1.bf16.msra.mxu0 %v8901
        %9155 = vmatprep.subr.bf16.mxu0 %v8906
        %9156 = vmatpush1.bf16.msra.mxu0 %v8905
        %9157 = vmatprep.subr.bf16.mxu0 %v8910
        %9158 = vmatpush1.bf16.msra.mxu0 %v8909
        %9159 = vmatprep.subr.bf16.mxu0 %v8914
        %9160 = vmatpush1.bf16.msra.mxu0 %v8913
        %9161 = vmatprep.subr.bf16.mxu0 %v8918
        %9162 = vmatpush1.bf16.msra.mxu0 %v8917
        %9163 = vmatprep.subr.bf16.mxu0 %v8922
        %9164 = vmatpush1.bf16.msra.mxu0 %v8921
        %9165 = vmatprep.subr.bf16.mxu0 %v8926
        %9166 = vmatpush1.bf16.msra.mxu0 %v8925
        %9167 = vmatprep.subr.bf16.mxu0 %v8930
        %9168 = vmatpush1.bf16.msra.mxu0 %v8929
        %9169 = vmatprep.subr.bf16.mxu0 %v8934
        %9170 = vmatpush1.bf16.msra.mxu0 %v8933
        %9171 = vmatprep.subr.bf16.mxu0 %v8938
        %9172 = vmatpush1.bf16.msra.mxu0 %v8937
        %9173 = vmatprep.subr.bf16.mxu0 %v8942
        %9174 = vmatpush1.bf16.msra.mxu0 %v8941
        %9175 = vmatprep.subr.bf16.mxu0 %v8946
        %9176 = vmatpush1.bf16.msra.mxu0 %v8945
        %9177 = vmatprep.subr.bf16.mxu0 %v8950
        %9178 = vmatpush1.bf16.msra.mxu0 %v8949
        %9179 = vmatprep.subr.bf16.mxu0 %v8954
        %9180 = vmatpush1.bf16.msra.mxu0 %v8953
        %9181 = vmatprep.mubr.bf16.mxu0 %v8356
        %9182 = vmatmul.mubr.bf16.gmra.mrb[0].mxu0 %v8355
        %v9183 = vpop.f32.mrb[0].mxu0
        %v9184 = vadd.f32 %v8492, %v9183
        %v9185 = vpop.f32.mrb[0].mxu0
        %v9186 = vadd.f32 %v8496, %v9185
        %v9187 = vpop.f32.mrb[0].mxu0
        %v9188 = vadd.f32 %v8492, %v9187
        %v9189 = vpop.f32.mrb[0].mxu0
        %v9190 = vadd.f32 %v8496, %v9189
        %9191 = vdwg.mxu0
        %9192 = vmatprep.subr.bf16.mxu0 %v8958
        %9193 = vmatpush1.bf16.msra.mxu0 %v8957
        %9194 = vmatprep.subr.bf16.mxu0 %v8962
        %9195 = vmatpush1.bf16.msra.mxu0 %v8961
        %9196 = vmatprep.subr.bf16.mxu0 %v8966
        %9197 = vmatpush1.bf16.msra.mxu0 %v8965
        %9198 = vmatprep.subr.bf16.mxu0 %v8970
        %9199 = vmatpush1.bf16.msra.mxu0 %v8969
        %9200 = vmatprep.subr.bf16.mxu0 %v8974
        %9201 = vmatpush1.bf16.msra.mxu0 %v8973
        %9202 = vmatprep.subr.bf16.mxu0 %v8978
        %9203 = vmatpush1.bf16.msra.mxu0 %v8977
        %9204 = vmatprep.subr.bf16.mxu0 %v8982
        %9205 = vmatpush1.bf16.msra.mxu0 %v8981
        %9206 = vmatprep.subr.bf16.mxu0 %v8986
        %9207 = vmatpush1.bf16.msra.mxu0 %v8985
        %9208 = vmatprep.subr.bf16.mxu0 %v8990
        %9209 = vmatpush1.bf16.msra.mxu0 %v8989
        %9210 = vmatprep.subr.bf16.mxu0 %v8994
        %9211 = vmatpush1.bf16.msra.mxu0 %v8993
        %9212 = vmatprep.subr.bf16.mxu0 %v8998
        %9213 = vmatpush1.bf16.msra.mxu0 %v8997
        %9214 = vmatprep.subr.bf16.mxu0 %v9002
        %9215 = vmatpush1.bf16.msra.mxu0 %v9001
        %9216 = vmatprep.subr.bf16.mxu0 %v9006
        %9217 = vmatpush1.bf16.msra.mxu0 %v9005
        %9218 = vmatprep.subr.bf16.mxu0 %v9010
        %9219 = vmatpush1.bf16.msra.mxu0 %v9009
        %9220 = vmatprep.subr.bf16.mxu0 %v9014
        %9221 = vmatpush1.bf16.msra.mxu0 %v9013
        %9222 = vmatprep.subr.bf16.mxu0 %v9018
        %9223 = vmatpush1.bf16.msra.mxu0 %v9017
        %9224 = vmatprep.mubr.bf16.mxu0 %v8358
        %9225 = vmatmul.mubr.bf16.gmra.mrb[0].mxu0 %v8357
        %v9226 = vpop.f32.mrb[0].mxu0
        %v9227 = vadd.f32 %v9184, %v9226
        %v9228 = vpop.f32.mrb[0].mxu0
        %v9229 = vadd.f32 %v9186, %v9228
        %v9230 = vpop.f32.mrb[0].mxu0
        %v9231 = vadd.f32 %v9188, %v9230
        %v9232 = vpop.f32.mrb[0].mxu0
        %v9233 = vadd.f32 %v9190, %v9232
        %9234 = vdwg.mxu0
        %9235 = vmatprep.subr.bf16.mxu0 %v8896
        %9236 = vmatpush1.bf16.msra.mxu0 %v8895
        %9237 = vmatprep.subr.bf16.mxu0 %v8900
        %9238 = vmatpush1.bf16.msra.mxu0 %v8899
        %9239 = vmatprep.subr.bf16.mxu0 %v8904
        %9240 = vmatpush1.bf16.msra.mxu0 %v8903
        %9241 = vmatprep.subr.bf16.mxu0 %v8908
        %9242 = vmatpush1.bf16.msra.mxu0 %v8907
        %9243 = vmatprep.subr.bf16.mxu0 %v8912
        %9244 = vmatpush1.bf16.msra.mxu0 %v8911
        %9245 = vmatprep.subr.bf16.mxu0 %v8916
        %9246 = vmatpush1.bf16.msra.mxu0 %v8915
        %9247 = vmatprep.subr.bf16.mxu0 %v8920
        %9248 = vmatpush1.bf16.msra.mxu0 %v8919
        %9249 = vmatprep.subr.bf16.mxu0 %v8924
        %9250 = vmatpush1.bf16.msra.mxu0 %v8923
        %9251 = vmatprep.subr.bf16.mxu0 %v8928
        %9252 = vmatpush1.bf16.msra.mxu0 %v8927
        %9253 = vmatprep.subr.bf16.mxu0 %v8932
        %9254 = vmatpush1.bf16.msra.mxu0 %v8931
        %9255 = vmatprep.subr.bf16.mxu0 %v8936
        %9256 = vmatpush1.bf16.msra.mxu0 %v8935
        %9257 = vmatprep.subr.bf16.mxu0 %v8940
        %9258 = vmatpush1.bf16.msra.mxu0 %v8939
        %9259 = vmatprep.subr.bf16.mxu0 %v8944
        %9260 = vmatpush1.bf16.msra.mxu0 %v8943
        %9261 = vmatprep.subr.bf16.mxu0 %v8948
        %9262 = vmatpush1.bf16.msra.mxu0 %v8947
        %9263 = vmatprep.subr.bf16.mxu0 %v8952
        %9264 = vmatpush1.bf16.msra.mxu0 %v8951
        %9265 = vmatprep.subr.bf16.mxu0 %v8956
        %9266 = vmatpush1.bf16.msra.mxu0 %v8955
        %9267 = vmatprep.mubr.bf16.mxu0 %v8356
        %9268 = vmatmul.mubr.bf16.gmra.mrb[0].mxu0 %v8355
        %v9269 = vpop.f32.mrb[0].mxu0
        %v9270 = vadd.f32 %v8500, %v9269
        %v9271 = vpop.f32.mrb[0].mxu0
        %v9272 = vadd.f32 %v8504, %v9271
        %v9273 = vpop.f32.mrb[0].mxu0
        %v9274 = vadd.f32 %v8500, %v9273
        %v9275 = vpop.f32.mrb[0].mxu0
        %v9276 = vadd.f32 %v8504, %v9275
        %9277 = vdwg.mxu0
        %9278 = vmatprep.subr.bf16.mxu0 %v8960
        %9279 = vmatpush1.bf16.msra.mxu0 %v8959
        %9280 = vmatprep.subr.bf16.mxu0 %v8964
        %9281 = vmatpush1.bf16.msra.mxu0 %v8963
        %9282 = vmatprep.subr.bf16.mxu0 %v8968
        %9283 = vmatpush1.bf16.msra.mxu0 %v8967
        %9284 = vmatprep.subr.bf16.mxu0 %v8972
        %9285 = vmatpush1.bf16.msra.mxu0 %v8971
        %9286 = vmatprep.subr.bf16.mxu0 %v8976
        %9287 = vmatpush1.bf16.msra.mxu0 %v8975
        %9288 = vmatprep.subr.bf16.mxu0 %v8980
        %9289 = vmatpush1.bf16.msra.mxu0 %v8979
        %9290 = vmatprep.subr.bf16.mxu0 %v8984
        %9291 = vmatpush1.bf16.msra.mxu0 %v8983
        %9292 = vmatprep.subr.bf16.mxu0 %v8988
        %9293 = vmatpush1.bf16.msra.mxu0 %v8987
        %9294 = vmatprep.subr.bf16.mxu0 %v8992
        %9295 = vmatpush1.bf16.msra.mxu0 %v8991
        %9296 = vmatprep.subr.bf16.mxu0 %v8996
        %9297 = vmatpush1.bf16.msra.mxu0 %v8995
        %9298 = vmatprep.subr.bf16.mxu0 %v9000
        %9299 = vmatpush1.bf16.msra.mxu0 %v8999
        %9300 = vmatprep.subr.bf16.mxu0 %v9004
        %9301 = vmatpush1.bf16.msra.mxu0 %v9003
        %9302 = vmatprep.subr.bf16.mxu0 %v9008
        %9303 = vmatpush1.bf16.msra.mxu0 %v9007
        %9304 = vmatprep.subr.bf16.mxu0 %v9012
        %9305 = vmatpush1.bf16.msra.mxu0 %v9011
        %9306 = vmatprep.subr.bf16.mxu0 %v9016
        %9307 = vmatpush1.bf16.msra.mxu0 %v9015
        %9308 = vmatprep.subr.bf16.mxu0 %v9020
        %9309 = vmatpush1.bf16.msra.mxu0 %v9019
        %9310 = vmatprep.mubr.bf16.mxu0 %v8358
        %9311 = vmatmul.mubr.bf16.gmra.mrb[0].mxu0 %v8357
        %v9312 = vpop.f32.mrb[0].mxu0
        %v9313 = vadd.f32 %v9270, %v9312
        %v9314 = vpop.f32.mrb[0].mxu0
        %v9315 = vadd.f32 %v9272, %v9314
        %v9316 = vpop.f32.mrb[0].mxu0
        %v9317 = vadd.f32 %v9274, %v9316
        %v9318 = vpop.f32.mrb[0].mxu0
        %v9319 = vadd.f32 %v9276, %v9318
        %9320 = vdwg.mxu0
        %v9321 = vadd.f32 %v7261, %v9227
        %v9322 = vadd.f32 %v7262, %v9229
        %v9323 = vadd.f32 %v7263, %v9313
        %v9324 = vadd.f32 %v7264, %v9315
        %v9325 = vadd.f32 %v7265, %v9231
        %v9326 = vadd.f32 %v7266, %v9233
        %v9327 = vadd.f32 %v7267, %v9317
        %v9328 = vadd.f32 %v7268, %v9319
        %9329 = vst [vmem:[#allocation19] sm:$0xff] %v9321
        %9330 = vst [vmem:[#allocation19 + $0x8] sm:$0xff] %v9322
        %9331 = vst [vmem:[#allocation19 + $0x10] sm:$0xff] %v9323
        %9332 = vst [vmem:[#allocation19 + $0x18] sm:$0xff] %v9324
        %9333 = vst [vmem:[#allocation19 + $0x20] sm:$0xff] %v9325
        %9334 = vst [vmem:[#allocation19 + $0x28] sm:$0xff] %v9326
        %9335 = vst [vmem:[#allocation19 + $0x30] sm:$0xff] %v9327
        %9336 = vst [vmem:[#allocation19 + $0x38] sm:$0xff] %v9328
        // Predicated region
        $region137: #{tpu_custom_call.1} parent=75 // pred_check
          %p9337 = pneg %p395
        $region138: #{tpu_custom_call.1} parent=75 // pred_check_branch
          %9339 = sbr.rel (%p9337) target = $region140
        $region139: #{tpu_custom_call.1} parent=75 // pred_region
          %s9341 = ssub.s32 1024, 1024
          %9342 = vsyncadd [#allocation4], %s9341
          %s9343 = sshll.u32 [#allocation19], 4
          %s9344 = int_to_ptr.vmem [resolvable:$true] %s9343
          %9349 = dma.vmem_to_hbm [thread:$0]  %s9344, 1024, %s14, [#allocation4], 512, 512, 32
        $region140: #{tpu_custom_call.1} parent=75 // pred_fallthru
          _
        // Predicated region
        $region141: #{tpu_custom_call.1} parent=75 // pred_check
          %p9350 = pneg %p395
        $region142: #{tpu_custom_call.1} parent=75 // pred_check_branch
          %9352 = sbr.rel (%p9350) target = $region144
        $region143: #{tpu_custom_call.1} parent=75 // pred_region
          %9353 = dma.done [#allocation4], 1024
        $region144: #{tpu_custom_call.1} parent=75 // pred_fallthru
          _
      $region76: #{tpu_custom_call.1} parent=5 // pred_fallthru
        _
      %p9354 = scmp.le.s32.totalorder 2, %s23
      // Predicated region
      $region145: #{tpu_custom_call.1} parent=5 // pred_check
        %p9355 = pneg %p9354
      $region146: #{tpu_custom_call.1} parent=5 // pred_check_branch
        %9357 = sbr.rel (%p9355) target = $region148
      $region147: #{tpu_custom_call.1} parent=5 // pred_region
        %s9358 = ssub.s32 %s23, 2
      $region148: #{tpu_custom_call.1} parent=5 // pred_fallthru
        _
    $region6: #{tpu_custom_call.1} parent=1 // loop_footer
      %s27 = sadd.s32 1, %s23
    $region7: #{tpu_custom_call.1} parent=1 // loop_footer_branch
      %22 = sbr.rel target = $region3
    $region8: #{tpu_custom_call.1} parent=1 // loop_exit
      _
    %9359 = vsyncpa [#allocation3], 1
    %s9360 = scalar_lea.sflag [#allocation3], 1
    %9361 = vsyncpa %s9360, 1
    %9362 = vsyncpa [#allocation6], 1
    %9363 = vsyncpa [#allocation4], 1
    %s9364 = scalar_lea.sflag [#allocation4], 1
    %9365 = vsyncpa %s9364, 1

</llo_original>
